<compile_context>
chip_gen: v5e
topology: v5e:2x2
jax: 0.10.0
libtpu: 0.0.40
codegen_flags: <defaults>
</compile_context>

<pallas_src>
import functools
import math

import jax
import jax.numpy as jnp
from jax.experimental import pallas as pl
from jax.experimental.pallas import tpu as pltpu


# ----------------------------- small helpers ---------------------------------

def _round_up(x, m):
    return ((x + m - 1) // m) * m


def _vmem_limit_bytes(request=100 << 20, headroom=8 << 20):
    """Explicit scoped-VMEM limit: the defaults (16-32 MiB) reject/cripple the 2-deep
    weight pipeline at BERT-base sizes.  Capped below physical VMEM (64 MiB on v7x,
    128 MiB on v5e/v6e)."""
    cap = 128 << 20
    try:
        cap = int(getattr(pltpu.get_tpu_info(), "vmem_capacity_bytes", cap))
    except Exception:
        pass
    return int(min(request, cap - headroom))


# ----------------------------- traced math helpers ----------------------------

def _layernorm(x, gamma, beta, eps=1e-5):
    # matches the module: BertLayerNorm(..., eps=1e-05)
    mu = jnp.mean(x, axis=-1, keepdims=True)
    var = jnp.mean((x - mu) ** 2, axis=-1, keepdims=True)
    return (x - mu) * jax.lax.rsqrt(var + eps) * gamma + beta


def _gelu(x):
    # exact gelu used by ACT2FN['gelu']: x * 0.5 * (1 + erf(x / sqrt(2)))
    return x * 0.5 * (1.0 + jax.lax.erf(x / math.sqrt(2.0)))


# ----------------------------- kernels ---------------------------------------

def encoder_kernel(words_ref, pos_ref, types_ref, eg_ref, eb_ref, mask_ref,
                   wqkv_ref, bqkv_ref, wo_ref, bo_ref, g1_ref, be1_ref,
                   wi_ref, bi_ref, wo2_ref, bo2_ref, g2_ref, be2_ref,
                   wt_ref, bt_ref, gt_ref, bet_ref,
                   o_ref, h_scr, ctx_scr, *, num_heads, bt_rows, batched_heads):
    """Embeddings(add+LN) + all L post-LN BERT layers + MLM transform for one batch block.

    grid = (B // Bt, L): bb = program_id(0) ("parallel"), l = program_id(1) ("arbitrary").
    The f32 residual stream for the Bt rows is carried across l in `h_scr`; stacked
    per-layer weights are streamed by the BlockSpec pipeline.
    """
    l = pl.program_id(1)
    S, H = words_ref.shape[1], words_ref.shape[2]
    nh = num_heads
    dh = H // nh
    scale = 1.0 / math.sqrt(dh)

    @pl.when(l == 0)
    def _():
        # fused embedding sum + LayerNorm, once per batch block (per-row 2-D stores,
        # lane-dense, no 3-D value reshapes)
        for b in range(bt_rows):
            emb = words_ref[b] + types_ref[b] + pos_ref[0]        # (S, H) f32
            h_scr[b * S:(b + 1) * S, :] = _layernorm(emb, eg_ref[...], eb_ref[...])

    x = h_scr[...]                                                # (Bt*S, H) f32 residual
    xb = x.astype(jnp.bfloat16)

    # --- fused QKV projection: one (Bt*S, H) @ (H, 3H) MXU pass ---
    qkv = jnp.dot(xb, wqkv_ref[0], preferred_element_type=jnp.float32) + bqkv_ref[0]

    for b in range(bt_rows):                                      # static, small batch block
        rows = slice(b * S, (b + 1) * S)
        q = qkv[rows, 0:H].astype(jnp.bfloat16)
        k = qkv[rows, H:2 * H].astype(jnp.bfloat16)
        v = qkv[rows, 2 * H:3 * H].astype(jnp.bfloat16)
        m = mask_ref[b]                                           # (1, S) additive mask

        if batched_heads:
            # one batched MXU pass over all heads + a single lane-dense (S, H) context store
            qh = pltpu.einshape("shd->hsd", q.reshape(S, nh, dh))
            kh = pltpu.einshape("shd->hsd", k.reshape(S, nh, dh))
            vh = pltpu.einshape("shd->hsd", v.reshape(S, nh, dh))
            s = jnp.einsum("hqd,hkd->hqk", qh, kh,
                           preferred_element_type=jnp.float32) * scale
            s = s + m                                             # (nh,S,S) + (1,S)
            s = s - jnp.max(s, axis=-1, keepdims=True)
            e = jnp.exp(s)
            p = (e * pl.reciprocal(jnp.sum(e, axis=-1, keepdims=True),
                                   approx=True)).astype(jnp.bfloat16)
            ctx = jnp.einsum("hqk,hkd->hqd", p, vh,
                             preferred_element_type=jnp.float32).astype(jnp.bfloat16)
            ctx_scr[rows, :] = pltpu.einshape("hsd->shd", ctx).reshape(S, H)
        else:
            # fallback: per-head loop (sub-128-lane slices; slower but always lowers)
            for h in range(nh):
                sl = slice(h * dh, (h + 1) * dh)
                s = jax.lax.dot_general(
                    q[:, sl], k[:, sl],
                    dimension_numbers=(((1,), (1,)), ((), ())),
                    preferred_element_type=jnp.float32) * scale
                s = s + m
                s = s - jnp.max(s, axis=-1, keepdims=True)
                e = jnp.exp(s)
                p = (e * pl.reciprocal(jnp.sum(e, axis=-1, keepdims=True),
                                       approx=True)).astype(jnp.bfloat16)
                ctx_scr[rows, sl] = jnp.dot(
                    p, v[:, sl], preferred_element_type=jnp.float32
                ).astype(jnp.bfloat16)

    # --- attention output projection + post-LN ---
    attn = jnp.dot(ctx_scr[...], wo_ref[0],
                   preferred_element_type=jnp.float32) + bo_ref[0]
    res1 = _layernorm(attn + x, g1_ref[0], be1_ref[0])

    # --- feed-forward ---
    inter = _gelu(jnp.dot(res1.astype(jnp.bfloat16), wi_ref[0],
                          preferred_element_type=jnp.float32) + bi_ref[0])
    ffn = jnp.dot(inter.astype(jnp.bfloat16), wo2_ref[0],
                  preferred_element_type=jnp.float32) + bo2_ref[0]
    h_new = _layernorm(ffn + res1, g2_ref[0], be2_ref[0])
    h_scr[...] = h_new

    @pl.when(l == pl.num_programs(1) - 1)
    def _():
        # fused MLM-head transform (dense + gelu + LN) on the final hidden state;
        # the tied decoder consumes this output in bf16.
        t = jnp.dot(h_new.astype(jnp.bfloat16), wt_ref[...],
                    preferred_element_type=jnp.float32) + bt_ref[...]
        t = _layernorm(_gelu(t), gt_ref[...], bet_ref[...]).astype(jnp.bfloat16)
        for b in range(bt_rows):
            o_ref[b] = t[b * S:(b + 1) * S, :]


def mlm_decoder_kernel(t_ref, w_ref, b_ref, o_ref, *, bt_rows):
    """Tied decoder: logits = t @ word_emb^T + bias, contracting the hidden dim of a
    (TV, H) vocab-row tile (no transpose of the embedding matrix needed).
    grid = (B // Bt, n_vocab_tiles), both axes "parallel"."""
    for b in range(bt_rows):
        o_ref[b] = jax.lax.dot_general(
            t_ref[b], w_ref[...],
            dimension_numbers=(((1,), (1,)), ((), ())),
            preferred_element_type=jnp.float32) + b_ref[...]


# ----------------------------- wrappers ---------------------------------------

def run_encoder(words, pos, types, emb_g, emb_b, mask, enc, head, num_heads,
                bt_rows, batched_heads):
    B, S, H = words.shape
    L = enc["wqkv"].shape[0]
    nb = B // bt_rows

    def wspec(arr):                      # stacked per-layer weight: streamed over l
        nd = arr.ndim
        return pl.BlockSpec((1,) + arr.shape[1:],
                            lambda bb, l, _n=nd: (l,) + (0,) * (_n - 1))

    def cspec(arr):                      # grid-invariant, stays VMEM-resident
        nd = arr.ndim
        return pl.BlockSpec(arr.shape, lambda bb, l, _n=nd: (0,) * _n)

    in_specs = [
        pl.BlockSpec((bt_rows, S, H), lambda bb, l: (bb, 0, 0)),   # word embeddings
        pl.BlockSpec((1, S, H), lambda bb, l: (0, 0, 0)),          # position embeddings
        pl.BlockSpec((bt_rows, S, H), lambda bb, l: (bb, 0, 0)),   # token-type embeddings
        cspec(emb_g), cspec(emb_b),                                # embedding LN
        pl.BlockSpec((bt_rows, 1, S), lambda bb, l: (bb, 0, 0)),   # additive attention mask
        wspec(enc["wqkv"]), wspec(enc["bqkv"]),
        wspec(enc["wo"]), wspec(enc["bo"]),
        wspec(enc["g1"]), wspec(enc["be1"]),
        wspec(enc["wi"]), wspec(enc["bi"]),
        wspec(enc["wo2"]), wspec(enc["bo2"]),
        wspec(enc["g2"]), wspec(enc["be2"]),
        cspec(head["wt"]), cspec(head["bt"]), cspec(head["g"]), cspec(head["be"]),
    ]

    return pl.pallas_call(
        functools.partial(encoder_kernel, num_heads=num_heads, bt_rows=bt_rows,
                          batched_heads=batched_heads),
        out_shape=jax.ShapeDtypeStruct((B, S, H), jnp.bfloat16),
        grid=(nb, L),
        in_specs=in_specs,
        out_specs=pl.BlockSpec((bt_rows, S, H), lambda bb, l: (bb, 0, 0)),
        scratch_shapes=[
            pltpu.VMEM((bt_rows * S, H), jnp.float32),   # residual stream (f32, carried over l)
            pltpu.VMEM((bt_rows * S, H), jnp.bfloat16),  # attention context (bf16)
        ],
        compiler_params=pltpu.CompilerParams(
            dimension_semantics=("parallel", "arbitrary"),
            vmem_limit_bytes=_vmem_limit_bytes()),
        # TODO(synk): for v7x (64 MiB VMEM) at full BERT-base, additionally split wi/wo2
        # into K-chunks (or quantize weights to fp8) to keep 2-deep weight pipelining.
    )(words, pos, types, emb_g, emb_b, mask,
      enc["wqkv"], enc["bqkv"], enc["wo"], enc["bo"], enc["g1"], enc["be1"],
      enc["wi"], enc["bi"], enc["wo2"], enc["bo2"], enc["g2"], enc["be2"],
      head["wt"], head["bt"], head["g"], head["be"])


def run_mlm_decoder(t, dec_w, dec_b, vocab, tv, bt_rows):
    B, S, H = t.shape
    Vp = dec_w.shape[0]
    nb = B // bt_rows
    nv = Vp // tv

    logits = pl.pallas_call(
        functools.partial(mlm_decoder_kernel, bt_rows=bt_rows),
        out_shape=jax.ShapeDtypeStruct((B, S, Vp), jnp.float32),
        grid=(nb, nv),
        in_specs=[
            pl.BlockSpec((bt_rows, S, H), lambda bb, v: (bb, 0, 0)),  # transformed hidden (bf16)
            pl.BlockSpec((tv, H), lambda bb, v: (v, 0)),              # vocab-row tile (tied emb)
            pl.BlockSpec((1, tv), lambda bb, v: (0, v)),              # decoder bias tile
        ],
        out_specs=pl.BlockSpec((bt_rows, S, tv), lambda bb, v: (bb, 0, v)),
        compiler_params=pltpu.CompilerParams(
            dimension_semantics=("parallel", "parallel"),
            vmem_limit_bytes=_vmem_limit_bytes()),
    )(t, dec_w, dec_b)
    return logits[:, :, :vocab]


def bert_for_masked_lm_forward(input_ids, token_type_ids, attention_mask, params,
                               num_heads, batched_heads=True):
    B, S = input_ids.shape
    # embedding gathers are XLA glue; the add + LayerNorm run inside the encoder kernel
    words = jnp.take(params["word_emb"], input_ids, axis=0)          # (B, S, H)
    types = jnp.take(params["type_emb"], token_type_ids, axis=0)     # (B, S, H)
    pos = params["pos_emb"][:S][None]                                # (1, S, H)
    # extended attention mask: (1 - mask) * -10000, broadcast over heads/queries
    ext_mask = ((1.0 - attention_mask.astype(jnp.float32)) * -10000.0)[:, None, :]

    bt_rows = 2 if B % 2 == 0 else 1     # batch block: amortize per-layer weight streaming
    t = run_encoder(words, pos, types, params["emb_g"], params["emb_b"], ext_mask,
                    params["enc"], params["head"], num_heads, bt_rows, batched_heads)
    return run_mlm_decoder(t, params["head"]["dec_w"], params["head"]["dec_b"],
                           params["word_emb"].shape[0], params["head"]["tv"], bt_rows)


# ----------------------------- parameter construction -------------------------

def init_params(key, vocab, max_pos, type_vocab, H, I, L, std=0.02):
    keys = iter(jax.random.split(key, 64))

    def nrm(shape, dtype=jnp.float32):
        return (std * jax.random.normal(next(keys), shape, jnp.float32)).astype(dtype)

    def zeros(shape, dtype=jnp.float32):
        return jnp.zeros(shape, dtype)

    word_emb = nrm((vocab, H))

    # tied MLM decoder weight: pre-pad to lane-dense vocab tiles and pre-cast ONCE
    tv = min(512, _round_up(vocab, 128))
    Vp = _round_up(vocab, tv)
    dec_w = jnp.pad(word_emb, ((0, Vp - vocab), (0, 0))).astype(jnp.bfloat16)

    params = {
        "word_emb": word_emb,
        "pos_emb": nrm((max_pos, H)),
        "type_emb": nrm((type_vocab, H)),
        # init_bert_weights draws LayerNorm weight/bias from the same normal
        "emb_g": nrm((1, H)),
        "emb_b": nrm((1, H)),
        "enc": {
            # matmul weights stored bf16 (MXU operands), stacked over layers
            "wqkv": nrm((L, H, 3 * H), jnp.bfloat16), "bqkv": zeros((L, 1, 3 * H)),
            "wo": nrm((L, H, H), jnp.bfloat16), "bo": zeros((L, 1, H)),
            "g1": nrm((L, 1, H)), "be1": nrm((L, 1, H)),
            "wi": nrm((L, H, I), jnp.bfloat16), "bi": zeros((L, 1, I)),
            "wo2": nrm((L, I, H), jnp.bfloat16), "bo2": zeros((L, 1, H)),
            "g2": nrm((L, 1, H)), "be2": nrm((L, 1, H)),
        },
        "head": {
            "wt": nrm((H, H), jnp.bfloat16), "bt": zeros((1, H)),
            "g": nrm((1, H)), "be": nrm((1, H)),
            "dec_w": dec_w,                  # tied word-embedding rows (bf16, padded to Vp)
            "dec_b": zeros((1, Vp)),         # BertLMPredictionHead.bias is zero-init
            "tv": tv,
        },
    }
    return params


# ----------------------------- main -------------------------------------------

if __name__ == "__main__":
    # small BertConfig-consistent shapes (lane-aligned: H, I, vocab multiples of 128)
    B, S = 2, 16
    VOCAB, MAX_POS, TYPE_VOCAB = 256, 64, 2
    H, NUM_HEADS, INTER = 128, 2, 256
    NUM_LAYERS = 2

    key = jax.random.PRNGKey(0)
    k_param, k_ids = jax.random.split(key)

    params = init_params(k_param, VOCAB, MAX_POS, TYPE_VOCAB, H, INTER, NUM_LAYERS)

    input_ids = jax.random.randint(k_ids, (B, S), 0, VOCAB, dtype=jnp.int32)
    token_type_ids = jnp.zeros((B, S), jnp.int32)
    attention_mask = jnp.ones((B, S), jnp.int32)

    def run(batched_heads):
        out = bert_for_masked_lm_forward(input_ids, token_type_ids, attention_mask,
                                         params, NUM_HEADS, batched_heads=batched_heads)
        return jax.block_until_ready(out)

    try:
        logits = run(True)
    except Exception:
        # Lowering fallback: identical math with a per-head loop instead of the
        # reshape/einshape batched-head attention path.
        logits = run(False)

    assert logits.shape == (B, S, VOCAB)
    assert bool(jnp.all(jnp.isfinite(logits)))
    print("KERNEL_OK")
</pallas_src>

<mosaic_0001>
module attributes {stable_mosaic.version = 11 : i64} {
  func.func @encoder_kernel(%arg0: i32, %arg1: i32, %arg2: memref<2x16x128xf32, #tpu.memory_space<vmem>>, %arg3: memref<1x16x128xf32, #tpu.memory_space<vmem>>, %arg4: memref<2x16x128xf32, #tpu.memory_space<vmem>>, %arg5: memref<1x128xf32, #tpu.memory_space<vmem>>, %arg6: memref<1x128xf32, #tpu.memory_space<vmem>>, %arg7: memref<2x1x16xf32, #tpu.memory_space<vmem>>, %arg8: memref<1x128x384xbf16, #tpu.memory_space<vmem>>, %arg9: memref<1x1x384xf32, #tpu.memory_space<vmem>>, %arg10: memref<1x128x128xbf16, #tpu.memory_space<vmem>>, %arg11: memref<1x1x128xf32, #tpu.memory_space<vmem>>, %arg12: memref<1x1x128xf32, #tpu.memory_space<vmem>>, %arg13: memref<1x1x128xf32, #tpu.memory_space<vmem>>, %arg14: memref<1x128x256xbf16, #tpu.memory_space<vmem>>, %arg15: memref<1x1x256xf32, #tpu.memory_space<vmem>>, %arg16: memref<1x256x128xbf16, #tpu.memory_space<vmem>>, %arg17: memref<1x1x128xf32, #tpu.memory_space<vmem>>, %arg18: memref<1x1x128xf32, #tpu.memory_space<vmem>>, %arg19: memref<1x1x128xf32, #tpu.memory_space<vmem>>, %arg20: memref<128x128xbf16, #tpu.memory_space<vmem>>, %arg21: memref<1x128xf32, #tpu.memory_space<vmem>>, %arg22: memref<1x128xf32, #tpu.memory_space<vmem>>, %arg23: memref<1x128xf32, #tpu.memory_space<vmem>>, %arg24: memref<2x16x128xbf16, #tpu.memory_space<vmem>>, %arg25: memref<32x128xf32, #tpu.memory_space<vmem>>, %arg26: memref<32x128xbf16, #tpu.memory_space<vmem>>) attributes {dimension_semantics = [#tpu.dimension_semantics<parallel>, #tpu.dimension_semantics<arbitrary>], iteration_bounds = array<i64: 1, 2>, scalar_prefetch = 0 : i64, scratch_operands = 2 : i64, tpu.core_type = #tpu.core_type<tc>, window_params = [{transform_indices = @transform_0, window_bounds = array<i64: 2, 16, 128>}, {pipeline_mode = #tpu.pipeline_mode<synchronous>, transform_indices = @transform_1, window_bounds = array<i64: 1, 16, 128>}, {transform_indices = @transform_2, window_bounds = array<i64: 2, 16, 128>}, {pipeline_mode = #tpu.pipeline_mode<synchronous>, transform_indices = @transform_3, window_bounds = array<i64: 1, 128>}, {pipeline_mode = #tpu.pipeline_mode<synchronous>, transform_indices = @transform_4, window_bounds = array<i64: 1, 128>}, {transform_indices = @transform_5, window_bounds = array<i64: 2, 1, 16>}, {transform_indices = @transform_6, window_bounds = array<i64: 1, 128, 384>}, {transform_indices = @transform_7, window_bounds = array<i64: 1, 1, 384>}, {transform_indices = @transform_8, window_bounds = array<i64: 1, 128, 128>}, {transform_indices = @transform_9, window_bounds = array<i64: 1, 1, 128>}, {transform_indices = @transform_10, window_bounds = array<i64: 1, 1, 128>}, {transform_indices = @transform_11, window_bounds = array<i64: 1, 1, 128>}, {transform_indices = @transform_12, window_bounds = array<i64: 1, 128, 256>}, {transform_indices = @transform_13, window_bounds = array<i64: 1, 1, 256>}, {transform_indices = @transform_14, window_bounds = array<i64: 1, 256, 128>}, {transform_indices = @transform_15, window_bounds = array<i64: 1, 1, 128>}, {transform_indices = @transform_16, window_bounds = array<i64: 1, 1, 128>}, {transform_indices = @transform_17, window_bounds = array<i64: 1, 1, 128>}, {pipeline_mode = #tpu.pipeline_mode<synchronous>, transform_indices = @transform_18, window_bounds = array<i64: 128, 128>}, {pipeline_mode = #tpu.pipeline_mode<synchronous>, transform_indices = @transform_19, window_bounds = array<i64: 1, 128>}, {pipeline_mode = #tpu.pipeline_mode<synchronous>, transform_indices = @transform_20, window_bounds = array<i64: 1, 128>}, {pipeline_mode = #tpu.pipeline_mode<synchronous>, transform_indices = @transform_21, window_bounds = array<i64: 1, 128>}, {transform_indices = @transform_22, window_bounds = array<i64: 2, 16, 128>}]} {
    %c0_i32 = arith.constant 0 : i32
    %0 = arith.cmpi eq, %arg1, %c0_i32 : i32
    %1 = arith.extui %0 : i1 to i32
    %c0_i32_0 = arith.constant 0 : i32
    %2 = arith.cmpi ne, %1, %c0_i32_0 : i32
    scf.if %2 {
      %c0_77 = arith.constant 0 : index
      %c0_78 = arith.constant 0 : index
      %c0_79 = arith.constant 0 : index
      %174 = vector.load %arg2[%c0_77, %c0_78, %c0_79] : memref<2x16x128xf32, #tpu.memory_space<vmem>>, vector<1x16x128xf32>
      %175 = vector.shape_cast %174 : vector<1x16x128xf32> to vector<16x128xf32>
      %c0_80 = arith.constant 0 : index
      %c0_81 = arith.constant 0 : index
      %c0_82 = arith.constant 0 : index
      %176 = vector.load %arg4[%c0_80, %c0_81, %c0_82] : memref<2x16x128xf32, #tpu.memory_space<vmem>>, vector<1x16x128xf32>
      %177 = vector.shape_cast %176 : vector<1x16x128xf32> to vector<16x128xf32>
      %178 = arith.addf %175, %177 : vector<16x128xf32>
      %c0_83 = arith.constant 0 : index
      %c0_84 = arith.constant 0 : index
      %c0_85 = arith.constant 0 : index
      %179 = vector.load %arg3[%c0_83, %c0_84, %c0_85] : memref<1x16x128xf32, #tpu.memory_space<vmem>>, vector<1x16x128xf32>
      %180 = vector.shape_cast %179 : vector<1x16x128xf32> to vector<16x128xf32>
      %181 = arith.addf %178, %180 : vector<16x128xf32>
      %c0_86 = arith.constant 0 : index
      %c0_87 = arith.constant 0 : index
      %182 = vector.load %arg5[%c0_86, %c0_87] : memref<1x128xf32, #tpu.memory_space<vmem>>, vector<1x128xf32>
      %c0_88 = arith.constant 0 : index
      %c0_89 = arith.constant 0 : index
      %183 = vector.load %arg6[%c0_88, %c0_89] : memref<1x128xf32, #tpu.memory_space<vmem>>, vector<1x128xf32>
      %cst_90 = arith.constant dense<0.000000e+00> : vector<16xf32>
      %184 = vector.multi_reduction <add>, %181, %cst_90 [1] : vector<16x128xf32> to vector<16xf32>
      %185 = vector.shape_cast %184 : vector<16xf32> to vector<16x1xf32>
      %cst_91 = arith.constant 1.280000e+02 : f32
      %186 = vector.broadcast %cst_91 : f32 to vector<16x1xf32>
      %187 = arith.divf %185, %186 : vector<16x1xf32>
      %188 = vector.broadcast %187 : vector<16x1xf32> to vector<16x128xf32>
      %189 = arith.subf %181, %188 : vector<16x128xf32>
      %190 = arith.mulf %189, %189 : vector<16x128xf32>
      %cst_92 = arith.constant dense<0.000000e+00> : vector<16xf32>
      %191 = vector.multi_reduction <add>, %190, %cst_92 [1] : vector<16x128xf32> to vector<16xf32>
      %192 = vector.shape_cast %191 : vector<16xf32> to vector<16x1xf32>
      %cst_93 = arith.constant 1.280000e+02 : f32
      %193 = vector.broadcast %cst_93 : f32 to vector<16x1xf32>
      %194 = arith.divf %192, %193 : vector<16x1xf32>
      %195 = vector.broadcast %187 : vector<16x1xf32> to vector<16x128xf32>
      %196 = arith.subf %181, %195 : vector<16x128xf32>
      %cst_94 = arith.constant 9.99999974E-6 : f32
      %197 = vector.broadcast %cst_94 : f32 to vector<16x1xf32>
      %198 = arith.addf %194, %197 : vector<16x1xf32>
      %199 = math.rsqrt %198 : vector<16x1xf32>
      %200 = vector.broadcast %199 : vector<16x1xf32> to vector<16x128xf32>
      %201 = arith.mulf %196, %200 : vector<16x128xf32>
      %202 = vector.broadcast %182 : vector<1x128xf32> to vector<16x128xf32>
      %203 = arith.mulf %201, %202 : vector<16x128xf32>
      %204 = vector.broadcast %183 : vector<1x128xf32> to vector<16x128xf32>
      %205 = arith.addf %203, %204 : vector<16x128xf32>
      %c0_95 = arith.constant 0 : index
      %c0_96 = arith.constant 0 : index
      %206 = vector.load %arg25[%c0_95, %c0_96] : memref<32x128xf32, #tpu.memory_space<vmem>>, vector<16x128xf32>
      tpu.vector_store %arg25[%c0_95, %c0_96], %205 {strides = array<i32>} : memref<32x128xf32, #tpu.memory_space<vmem>>, vector<16x128xf32>,
      %c1_97 = arith.constant 1 : index
      %c0_98 = arith.constant 0 : index
      %c0_99 = arith.constant 0 : index
      %207 = vector.load %arg2[%c1_97, %c0_98, %c0_99] : memref<2x16x128xf32, #tpu.memory_space<vmem>>, vector<1x16x128xf32>
      %208 = vector.shape_cast %207 : vector<1x16x128xf32> to vector<16x128xf32>
      %c1_100 = arith.constant 1 : index
      %c0_101 = arith.constant 0 : index
      %c0_102 = arith.constant 0 : index
      %209 = vector.load %arg4[%c1_100, %c0_101, %c0_102] : memref<2x16x128xf32, #tpu.memory_space<vmem>>, vector<1x16x128xf32>
      %210 = vector.shape_cast %209 : vector<1x16x128xf32> to vector<16x128xf32>
      %211 = arith.addf %208, %210 : vector<16x128xf32>
      %c0_103 = arith.constant 0 : index
      %c0_104 = arith.constant 0 : index
      %c0_105 = arith.constant 0 : index
      %212 = vector.load %arg3[%c0_103, %c0_104, %c0_105] : memref<1x16x128xf32, #tpu.memory_space<vmem>>, vector<1x16x128xf32>
      %213 = vector.shape_cast %212 : vector<1x16x128xf32> to vector<16x128xf32>
      %214 = arith.addf %211, %213 : vector<16x128xf32>
      %c0_106 = arith.constant 0 : index
      %c0_107 = arith.constant 0 : index
      %215 = vector.load %arg5[%c0_106, %c0_107] : memref<1x128xf32, #tpu.memory_space<vmem>>, vector<1x128xf32>
      %c0_108 = arith.constant 0 : index
      %c0_109 = arith.constant 0 : index
      %216 = vector.load %arg6[%c0_108, %c0_109] : memref<1x128xf32, #tpu.memory_space<vmem>>, vector<1x128xf32>
      %cst_110 = arith.constant dense<0.000000e+00> : vector<16xf32>
      %217 = vector.multi_reduction <add>, %214, %cst_110 [1] : vector<16x128xf32> to vector<16xf32>
      %218 = vector.shape_cast %217 : vector<16xf32> to vector<16x1xf32>
      %cst_111 = arith.constant 1.280000e+02 : f32
      %219 = vector.broadcast %cst_111 : f32 to vector<16x1xf32>
      %220 = arith.divf %218, %219 : vector<16x1xf32>
      %221 = vector.broadcast %220 : vector<16x1xf32> to vector<16x128xf32>
      %222 = arith.subf %214, %221 : vector<16x128xf32>
      %223 = arith.mulf %222, %222 : vector<16x128xf32>
      %cst_112 = arith.constant dense<0.000000e+00> : vector<16xf32>
      %224 = vector.multi_reduction <add>, %223, %cst_112 [1] : vector<16x128xf32> to vector<16xf32>
      %225 = vector.shape_cast %224 : vector<16xf32> to vector<16x1xf32>
      %cst_113 = arith.constant 1.280000e+02 : f32
      %226 = vector.broadcast %cst_113 : f32 to vector<16x1xf32>
      %227 = arith.divf %225, %226 : vector<16x1xf32>
      %228 = vector.broadcast %220 : vector<16x1xf32> to vector<16x128xf32>
      %229 = arith.subf %214, %228 : vector<16x128xf32>
      %cst_114 = arith.constant 9.99999974E-6 : f32
      %230 = vector.broadcast %cst_114 : f32 to vector<16x1xf32>
      %231 = arith.addf %227, %230 : vector<16x1xf32>
      %232 = math.rsqrt %231 : vector<16x1xf32>
      %233 = vector.broadcast %232 : vector<16x1xf32> to vector<16x128xf32>
      %234 = arith.mulf %229, %233 : vector<16x128xf32>
      %235 = vector.broadcast %215 : vector<1x128xf32> to vector<16x128xf32>
      %236 = arith.mulf %234, %235 : vector<16x128xf32>
      %237 = vector.broadcast %216 : vector<1x128xf32> to vector<16x128xf32>
      %238 = arith.addf %236, %237 : vector<16x128xf32>
      %c16_115 = arith.constant 16 : index
      %c0_116 = arith.constant 0 : index
      %239 = vector.load %arg25[%c16_115, %c0_116] : memref<32x128xf32, #tpu.memory_space<vmem>>, vector<16x128xf32>
      tpu.vector_store %arg25[%c16_115, %c0_116], %238 {strides = array<i32>} : memref<32x128xf32, #tpu.memory_space<vmem>>, vector<16x128xf32>,
    } else {
    }
    %c0 = arith.constant 0 : index
    %c0_1 = arith.constant 0 : index
    %3 = vector.load %arg25[%c0, %c0_1] : memref<32x128xf32, #tpu.memory_space<vmem>>, vector<32x128xf32>
    %4 = arith.truncf %3 : vector<32x128xf32> to vector<32x128xbf16>
    %c0_2 = arith.constant 0 : index
    %c0_3 = arith.constant 0 : index
    %c0_4 = arith.constant 0 : index
    %5 = vector.load %arg8[%c0_2, %c0_3, %c0_4] : memref<1x128x384xbf16, #tpu.memory_space<vmem>>, vector<1x128x384xbf16>
    %6 = vector.shape_cast %5 : vector<1x128x384xbf16> to vector<128x384xbf16>
    %cst = arith.constant dense<0.000000e+00> : vector<32x384xf32>
    %7 = tpu.matmul %4, %6, %cst {dimension_numbers = #tpu.dot_dimension_numbers<[1], [0], [0], [1], [0, 0, 1, 1], [], []>} : vector<32x128xbf16>, vector<128x384xbf16>, vector<32x384xf32> -> vector<32x384xf32>
    %c0_5 = arith.constant 0 : index
    %c0_6 = arith.constant 0 : index
    %c0_7 = arith.constant 0 : index
    %8 = vector.load %arg9[%c0_5, %c0_6, %c0_7] : memref<1x1x384xf32, #tpu.memory_space<vmem>>, vector<1x1x384xf32>
    %9 = vector.shape_cast %8 : vector<1x1x384xf32> to vector<1x384xf32>
    %10 = vector.broadcast %9 : vector<1x384xf32> to vector<32x384xf32>
    %11 = arith.addf %7, %10 : vector<32x384xf32>
    %12 = vector.extract_strided_slice %11 {offsets = [0, 0], sizes = [16, 128], strides = [1, 1]} : vector<32x384xf32> to vector<16x128xf32>
    %13 = arith.truncf %12 : vector<16x128xf32> to vector<16x128xbf16>
    %14 = vector.extract_strided_slice %11 {offsets = [0, 128], sizes = [16, 128], strides = [1, 1]} : vector<32x384xf32> to vector<16x128xf32>
    %15 = arith.truncf %14 : vector<16x128xf32> to vector<16x128xbf16>
    %16 = vector.extract_strided_slice %11 {offsets = [0, 256], sizes = [16, 128], strides = [1, 1]} : vector<32x384xf32> to vector<16x128xf32>
    %17 = arith.truncf %16 : vector<16x128xf32> to vector<16x128xbf16>
    %c0_8 = arith.constant 0 : index
    %c0_9 = arith.constant 0 : index
    %c0_10 = arith.constant 0 : index
    %18 = vector.load %arg7[%c0_8, %c0_9, %c0_10] : memref<2x1x16xf32, #tpu.memory_space<vmem>>, vector<1x1x16xf32>
    %19 = vector.shape_cast %18 : vector<1x1x16xf32> to vector<1x16xf32>
    %20 = vector.shape_cast %13 : vector<16x128xbf16> to vector<16x2x64xbf16>
    %21 = tpu.transpose %20, [1, 0, 2] : vector<16x2x64xbf16> -> vector<2x16x64xbf16>
    %22 = vector.shape_cast %15 : vector<16x128xbf16> to vector<16x2x64xbf16>
    %23 = tpu.transpose %22, [1, 0, 2] : vector<16x2x64xbf16> -> vector<2x16x64xbf16>
    %24 = vector.shape_cast %17 : vector<16x128xbf16> to vector<16x2x64xbf16>
    %25 = tpu.transpose %24, [1, 0, 2] : vector<16x2x64xbf16> -> vector<2x16x64xbf16>
    "tpu.trace_start"() <{level = 10 : i32, message = "hqd,hkd->hqk"}> : () -> ()
    %cst_11 = arith.constant dense<0.000000e+00> : vector<2x16x16xf32>
    %26 = tpu.matmul %21, %23, %cst_11 {dimension_numbers = #tpu.dot_dimension_numbers<[2], [2], [1], [1], [0, 0, 0, 1, 1, 1], [0], [0]>} : vector<2x16x64xbf16>, vector<2x16x64xbf16>, vector<2x16x16xf32> -> vector<2x16x16xf32>
    "tpu.trace_stop"() : () -> ()
    %cst_12 = arith.constant 1.250000e-01 : f32
    %27 = vector.broadcast %cst_12 : f32 to vector<2x16x16xf32>
    %28 = arith.mulf %26, %27 : vector<2x16x16xf32>
    %29 = vector.shape_cast %19 : vector<1x16xf32> to vector<1x1x16xf32>
    %30 = vector.broadcast %29 : vector<1x1x16xf32> to vector<2x16x16xf32>
    %31 = arith.addf %28, %30 : vector<2x16x16xf32>
    %cst_13 = arith.constant dense<0xFF800000> : vector<2x16xf32>
    %32 = vector.multi_reduction <maximumf>, %31, %cst_13 [2] : vector<2x16x16xf32> to vector<2x16xf32>
    %33 = vector.shape_cast %32 : vector<2x16xf32> to vector<2x16x1xf32>
    %34 = vector.broadcast %33 : vector<2x16x1xf32> to vector<2x16x16xf32>
    %35 = arith.subf %31, %34 : vector<2x16x16xf32>
    %36 = math.exp %35 : vector<2x16x16xf32>
    %cst_14 = arith.constant dense<0.000000e+00> : vector<2x16xf32>
    %37 = vector.multi_reduction <add>, %36, %cst_14 [2] : vector<2x16x16xf32> to vector<2x16xf32>
    %38 = vector.shape_cast %37 : vector<2x16xf32> to vector<2x16x1xf32>
    %39 = tpu.reciprocal %38 {approx = true} : vector<2x16x1xf32> -> vector<2x16x1xf32>
    %40 = vector.broadcast %39 : vector<2x16x1xf32> to vector<2x16x16xf32>
    %41 = arith.mulf %36, %40 : vector<2x16x16xf32>
    %42 = arith.truncf %41 : vector<2x16x16xf32> to vector<2x16x16xbf16>
    "tpu.trace_start"() <{level = 10 : i32, message = "hqk,hkd->hqd"}> : () -> ()
    %cst_15 = arith.constant dense<0.000000e+00> : vector<2x16x64xf32>
    %43 = tpu.matmul %42, %25, %cst_15 {dimension_numbers = #tpu.dot_dimension_numbers<[2], [1], [1], [2], [0, 0, 0, 1, 1, 2], [0], [0]>} : vector<2x16x16xbf16>, vector<2x16x64xbf16>, vector<2x16x64xf32> -> vector<2x16x64xf32>
    "tpu.trace_stop"() : () -> ()
    %44 = arith.truncf %43 : vector<2x16x64xf32> to vector<2x16x64xbf16>
    %45 = tpu.transpose %44, [1, 0, 2] : vector<2x16x64xbf16> -> vector<16x2x64xbf16>
    %46 = vector.shape_cast %45 : vector<16x2x64xbf16> to vector<16x128xbf16>
    %c0_16 = arith.constant 0 : index
    %c0_17 = arith.constant 0 : index
    %47 = vector.load %arg26[%c0_16, %c0_17] : memref<32x128xbf16, #tpu.memory_space<vmem>>, vector<16x128xbf16>
    tpu.vector_store %arg26[%c0_16, %c0_17], %46 {strides = array<i32>} : memref<32x128xbf16, #tpu.memory_space<vmem>>, vector<16x128xbf16>,
    %48 = vector.extract_strided_slice %11 {offsets = [16, 0], sizes = [16, 128], strides = [1, 1]} : vector<32x384xf32> to vector<16x128xf32>
    %49 = arith.truncf %48 : vector<16x128xf32> to vector<16x128xbf16>
    %50 = vector.extract_strided_slice %11 {offsets = [16, 128], sizes = [16, 128], strides = [1, 1]} : vector<32x384xf32> to vector<16x128xf32>
    %51 = arith.truncf %50 : vector<16x128xf32> to vector<16x128xbf16>
    %52 = vector.extract_strided_slice %11 {offsets = [16, 256], sizes = [16, 128], strides = [1, 1]} : vector<32x384xf32> to vector<16x128xf32>
    %53 = arith.truncf %52 : vector<16x128xf32> to vector<16x128xbf16>
    %c1 = arith.constant 1 : index
    %c0_18 = arith.constant 0 : index
    %c0_19 = arith.constant 0 : index
    %54 = vector.load %arg7[%c1, %c0_18, %c0_19] : memref<2x1x16xf32, #tpu.memory_space<vmem>>, vector<1x1x16xf32>
    %55 = vector.shape_cast %54 : vector<1x1x16xf32> to vector<1x16xf32>
    %56 = vector.shape_cast %49 : vector<16x128xbf16> to vector<16x2x64xbf16>
    %57 = tpu.transpose %56, [1, 0, 2] : vector<16x2x64xbf16> -> vector<2x16x64xbf16>
    %58 = vector.shape_cast %51 : vector<16x128xbf16> to vector<16x2x64xbf16>
    %59 = tpu.transpose %58, [1, 0, 2] : vector<16x2x64xbf16> -> vector<2x16x64xbf16>
    %60 = vector.shape_cast %53 : vector<16x128xbf16> to vector<16x2x64xbf16>
    %61 = tpu.transpose %60, [1, 0, 2] : vector<16x2x64xbf16> -> vector<2x16x64xbf16>
    "tpu.trace_start"() <{level = 10 : i32, message = "hqd,hkd->hqk"}> : () -> ()
    %cst_20 = arith.constant dense<0.000000e+00> : vector<2x16x16xf32>
    %62 = tpu.matmul %57, %59, %cst_20 {dimension_numbers = #tpu.dot_dimension_numbers<[2], [2], [1], [1], [0, 0, 0, 1, 1, 1], [0], [0]>} : vector<2x16x64xbf16>, vector<2x16x64xbf16>, vector<2x16x16xf32> -> vector<2x16x16xf32>
    "tpu.trace_stop"() : () -> ()
    %cst_21 = arith.constant 1.250000e-01 : f32
    %63 = vector.broadcast %cst_21 : f32 to vector<2x16x16xf32>
    %64 = arith.mulf %62, %63 : vector<2x16x16xf32>
    %65 = vector.shape_cast %55 : vector<1x16xf32> to vector<1x1x16xf32>
    %66 = vector.broadcast %65 : vector<1x1x16xf32> to vector<2x16x16xf32>
    %67 = arith.addf %64, %66 : vector<2x16x16xf32>
    %cst_22 = arith.constant dense<0xFF800000> : vector<2x16xf32>
    %68 = vector.multi_reduction <maximumf>, %67, %cst_22 [2] : vector<2x16x16xf32> to vector<2x16xf32>
    %69 = vector.shape_cast %68 : vector<2x16xf32> to vector<2x16x1xf32>
    %70 = vector.broadcast %69 : vector<2x16x1xf32> to vector<2x16x16xf32>
    %71 = arith.subf %67, %70 : vector<2x16x16xf32>
    %72 = math.exp %71 : vector<2x16x16xf32>
    %cst_23 = arith.constant dense<0.000000e+00> : vector<2x16xf32>
    %73 = vector.multi_reduction <add>, %72, %cst_23 [2] : vector<2x16x16xf32> to vector<2x16xf32>
    %74 = vector.shape_cast %73 : vector<2x16xf32> to vector<2x16x1xf32>
    %75 = tpu.reciprocal %74 {approx = true} : vector<2x16x1xf32> -> vector<2x16x1xf32>
    %76 = vector.broadcast %75 : vector<2x16x1xf32> to vector<2x16x16xf32>
    %77 = arith.mulf %72, %76 : vector<2x16x16xf32>
    %78 = arith.truncf %77 : vector<2x16x16xf32> to vector<2x16x16xbf16>
    "tpu.trace_start"() <{level = 10 : i32, message = "hqk,hkd->hqd"}> : () -> ()
    %cst_24 = arith.constant dense<0.000000e+00> : vector<2x16x64xf32>
    %79 = tpu.matmul %78, %61, %cst_24 {dimension_numbers = #tpu.dot_dimension_numbers<[2], [1], [1], [2], [0, 0, 0, 1, 1, 2], [0], [0]>} : vector<2x16x16xbf16>, vector<2x16x64xbf16>, vector<2x16x64xf32> -> vector<2x16x64xf32>
    "tpu.trace_stop"() : () -> ()
    %80 = arith.truncf %79 : vector<2x16x64xf32> to vector<2x16x64xbf16>
    %81 = tpu.transpose %80, [1, 0, 2] : vector<2x16x64xbf16> -> vector<16x2x64xbf16>
    %82 = vector.shape_cast %81 : vector<16x2x64xbf16> to vector<16x128xbf16>
    %c16 = arith.constant 16 : index
    %c0_25 = arith.constant 0 : index
    %83 = vector.load %arg26[%c16, %c0_25] : memref<32x128xbf16, #tpu.memory_space<vmem>>, vector<16x128xbf16>
    tpu.vector_store %arg26[%c16, %c0_25], %82 {strides = array<i32>} : memref<32x128xbf16, #tpu.memory_space<vmem>>, vector<16x128xbf16>,
    %c0_26 = arith.constant 0 : index
    %c0_27 = arith.constant 0 : index
    %84 = vector.load %arg26[%c0_26, %c0_27] : memref<32x128xbf16, #tpu.memory_space<vmem>>, vector<32x128xbf16>
    %c0_28 = arith.constant 0 : index
    %c0_29 = arith.constant 0 : index
    %c0_30 = arith.constant 0 : index
    %85 = vector.load %arg10[%c0_28, %c0_29, %c0_30] : memref<1x128x128xbf16, #tpu.memory_space<vmem>>, vector<1x128x128xbf16>
    %86 = vector.shape_cast %85 : vector<1x128x128xbf16> to vector<128x128xbf16>
    %cst_31 = arith.constant dense<0.000000e+00> : vector<32x128xf32>
    %87 = tpu.matmul %84, %86, %cst_31 {dimension_numbers = #tpu.dot_dimension_numbers<[1], [0], [0], [1], [0, 0, 1, 1], [], []>} : vector<32x128xbf16>, vector<128x128xbf16>, vector<32x128xf32> -> vector<32x128xf32>
    %c0_32 = arith.constant 0 : index
    %c0_33 = arith.constant 0 : index
    %c0_34 = arith.constant 0 : index
    %88 = vector.load %arg11[%c0_32, %c0_33, %c0_34] : memref<1x1x128xf32, #tpu.memory_space<vmem>>, vector<1x1x128xf32>
    %89 = vector.shape_cast %88 : vector<1x1x128xf32> to vector<1x128xf32>
    %90 = vector.broadcast %89 : vector<1x128xf32> to vector<32x128xf32>
    %91 = arith.addf %87, %90 : vector<32x128xf32>
    %92 = arith.addf %91, %3 : vector<32x128xf32>
    %c0_35 = arith.constant 0 : index
    %c0_36 = arith.constant 0 : index
    %c0_37 = arith.constant 0 : index
    %93 = vector.load %arg12[%c0_35, %c0_36, %c0_37] : memref<1x1x128xf32, #tpu.memory_space<vmem>>, vector<1x1x128xf32>
    %94 = vector.shape_cast %93 : vector<1x1x128xf32> to vector<1x128xf32>
    %c0_38 = arith.constant 0 : index
    %c0_39 = arith.constant 0 : index
    %c0_40 = arith.constant 0 : index
    %95 = vector.load %arg13[%c0_38, %c0_39, %c0_40] : memref<1x1x128xf32, #tpu.memory_space<vmem>>, vector<1x1x128xf32>
    %96 = vector.shape_cast %95 : vector<1x1x128xf32> to vector<1x128xf32>
    %cst_41 = arith.constant dense<0.000000e+00> : vector<32xf32>
    %97 = vector.multi_reduction <add>, %92, %cst_41 [1] : vector<32x128xf32> to vector<32xf32>
    %98 = vector.shape_cast %97 : vector<32xf32> to vector<32x1xf32>
    %cst_42 = arith.constant 1.280000e+02 : f32
    %99 = vector.broadcast %cst_42 : f32 to vector<32x1xf32>
    %100 = arith.divf %98, %99 : vector<32x1xf32>
    %101 = vector.broadcast %100 : vector<32x1xf32> to vector<32x128xf32>
    %102 = arith.subf %92, %101 : vector<32x128xf32>
    %103 = arith.mulf %102, %102 : vector<32x128xf32>
    %cst_43 = arith.constant dense<0.000000e+00> : vector<32xf32>
    %104 = vector.multi_reduction <add>, %103, %cst_43 [1] : vector<32x128xf32> to vector<32xf32>
    %105 = vector.shape_cast %104 : vector<32xf32> to vector<32x1xf32>
    %cst_44 = arith.constant 1.280000e+02 : f32
    %106 = vector.broadcast %cst_44 : f32 to vector<32x1xf32>
    %107 = arith.divf %105, %106 : vector<32x1xf32>
    %108 = vector.broadcast %100 : vector<32x1xf32> to vector<32x128xf32>
    %109 = arith.subf %92, %108 : vector<32x128xf32>
    %cst_45 = arith.constant 9.99999974E-6 : f32
    %110 = vector.broadcast %cst_45 : f32 to vector<32x1xf32>
    %111 = arith.addf %107, %110 : vector<32x1xf32>
    %112 = math.rsqrt %111 : vector<32x1xf32>
    %113 = vector.broadcast %112 : vector<32x1xf32> to vector<32x128xf32>
    %114 = arith.mulf %109, %113 : vector<32x128xf32>
    %115 = vector.broadcast %94 : vector<1x128xf32> to vector<32x128xf32>
    %116 = arith.mulf %114, %115 : vector<32x128xf32>
    %117 = vector.broadcast %96 : vector<1x128xf32> to vector<32x128xf32>
    %118 = arith.addf %116, %117 : vector<32x128xf32>
    %119 = arith.truncf %118 : vector<32x128xf32> to vector<32x128xbf16>
    %c0_46 = arith.constant 0 : index
    %c0_47 = arith.constant 0 : index
    %c0_48 = arith.constant 0 : index
    %120 = vector.load %arg14[%c0_46, %c0_47, %c0_48] : memref<1x128x256xbf16, #tpu.memory_space<vmem>>, vector<1x128x256xbf16>
    %121 = vector.shape_cast %120 : vector<1x128x256xbf16> to vector<128x256xbf16>
    %cst_49 = arith.constant dense<0.000000e+00> : vector<32x256xf32>
    %122 = tpu.matmul %119, %121, %cst_49 {dimension_numbers = #tpu.dot_dimension_numbers<[1], [0], [0], [1], [0, 0, 1, 1], [], []>} : vector<32x128xbf16>, vector<128x256xbf16>, vector<32x256xf32> -> vector<32x256xf32>
    %c0_50 = arith.constant 0 : index
    %c0_51 = arith.constant 0 : index
    %c0_52 = arith.constant 0 : index
    %123 = vector.load %arg15[%c0_50, %c0_51, %c0_52] : memref<1x1x256xf32, #tpu.memory_space<vmem>>, vector<1x1x256xf32>
    %124 = vector.shape_cast %123 : vector<1x1x256xf32> to vector<1x256xf32>
    %125 = vector.broadcast %124 : vector<1x256xf32> to vector<32x256xf32>
    %126 = arith.addf %122, %125 : vector<32x256xf32>
    %cst_53 = arith.constant 5.000000e-01 : f32
    %127 = vector.broadcast %cst_53 : f32 to vector<32x256xf32>
    %128 = arith.mulf %126, %127 : vector<32x256xf32>
    %cst_54 = arith.constant 1.41421354 : f32
    %129 = vector.broadcast %cst_54 : f32 to vector<32x256xf32>
    %130 = arith.divf %126, %129 : vector<32x256xf32>
    %131 = math.erf %130 : vector<32x256xf32>
    %cst_55 = arith.constant 1.000000e+00 : f32
    %132 = vector.broadcast %cst_55 : f32 to vector<32x256xf32>
    %133 = arith.addf %132, %131 : vector<32x256xf32>
    %134 = arith.mulf %128, %133 : vector<32x256xf32>
    %135 = arith.truncf %134 : vector<32x256xf32> to vector<32x256xbf16>
    %c0_56 = arith.constant 0 : index
    %c0_57 = arith.constant 0 : index
    %c0_58 = arith.constant 0 : index
    %136 = vector.load %arg16[%c0_56, %c0_57, %c0_58] : memref<1x256x128xbf16, #tpu.memory_space<vmem>>, vector<1x256x128xbf16>
    %137 = vector.shape_cast %136 : vector<1x256x128xbf16> to vector<256x128xbf16>
    %cst_59 = arith.constant dense<0.000000e+00> : vector<32x128xf32>
    %138 = tpu.matmul %135, %137, %cst_59 {dimension_numbers = #tpu.dot_dimension_numbers<[1], [0], [0], [1], [0, 0, 1, 1], [], []>} : vector<32x256xbf16>, vector<256x128xbf16>, vector<32x128xf32> -> vector<32x128xf32>
    %c0_60 = arith.constant 0 : index
    %c0_61 = arith.constant 0 : index
    %c0_62 = arith.constant 0 : index
    %139 = vector.load %arg17[%c0_60, %c0_61, %c0_62] : memref<1x1x128xf32, #tpu.memory_space<vmem>>, vector<1x1x128xf32>
    %140 = vector.shape_cast %139 : vector<1x1x128xf32> to vector<1x128xf32>
    %141 = vector.broadcast %140 : vector<1x128xf32> to vector<32x128xf32>
    %142 = arith.addf %138, %141 : vector<32x128xf32>
    %143 = arith.addf %142, %118 : vector<32x128xf32>
    %c0_63 = arith.constant 0 : index
    %c0_64 = arith.constant 0 : index
    %c0_65 = arith.constant 0 : index
    %144 = vector.load %arg18[%c0_63, %c0_64, %c0_65] : memref<1x1x128xf32, #tpu.memory_space<vmem>>, vector<1x1x128xf32>
    %145 = vector.shape_cast %144 : vector<1x1x128xf32> to vector<1x128xf32>
    %c0_66 = arith.constant 0 : index
    %c0_67 = arith.constant 0 : index
    %c0_68 = arith.constant 0 : index
    %146 = vector.load %arg19[%c0_66, %c0_67, %c0_68] : memref<1x1x128xf32, #tpu.memory_space<vmem>>, vector<1x1x128xf32>
    %147 = vector.shape_cast %146 : vector<1x1x128xf32> to vector<1x128xf32>
    %cst_69 = arith.constant dense<0.000000e+00> : vector<32xf32>
    %148 = vector.multi_reduction <add>, %143, %cst_69 [1] : vector<32x128xf32> to vector<32xf32>
    %149 = vector.shape_cast %148 : vector<32xf32> to vector<32x1xf32>
    %cst_70 = arith.constant 1.280000e+02 : f32
    %150 = vector.broadcast %cst_70 : f32 to vector<32x1xf32>
    %151 = arith.divf %149, %150 : vector<32x1xf32>
    %152 = vector.broadcast %151 : vector<32x1xf32> to vector<32x128xf32>
    %153 = arith.subf %143, %152 : vector<32x128xf32>
    %154 = arith.mulf %153, %153 : vector<32x128xf32>
    %cst_71 = arith.constant dense<0.000000e+00> : vector<32xf32>
    %155 = vector.multi_reduction <add>, %154, %cst_71 [1] : vector<32x128xf32> to vector<32xf32>
    %156 = vector.shape_cast %155 : vector<32xf32> to vector<32x1xf32>
    %cst_72 = arith.constant 1.280000e+02 : f32
    %157 = vector.broadcast %cst_72 : f32 to vector<32x1xf32>
    %158 = arith.divf %156, %157 : vector<32x1xf32>
    %159 = vector.broadcast %151 : vector<32x1xf32> to vector<32x128xf32>
    %160 = arith.subf %143, %159 : vector<32x128xf32>
    %cst_73 = arith.constant 9.99999974E-6 : f32
    %161 = vector.broadcast %cst_73 : f32 to vector<32x1xf32>
    %162 = arith.addf %158, %161 : vector<32x1xf32>
    %163 = math.rsqrt %162 : vector<32x1xf32>
    %164 = vector.broadcast %163 : vector<32x1xf32> to vector<32x128xf32>
    %165 = arith.mulf %160, %164 : vector<32x128xf32>
    %166 = vector.broadcast %145 : vector<1x128xf32> to vector<32x128xf32>
    %167 = arith.mulf %165, %166 : vector<32x128xf32>
    %168 = vector.broadcast %147 : vector<1x128xf32> to vector<32x128xf32>
    %169 = arith.addf %167, %168 : vector<32x128xf32>
    %c0_74 = arith.constant 0 : index
    %c0_75 = arith.constant 0 : index
    %170 = vector.load %arg25[%c0_74, %c0_75] : memref<32x128xf32, #tpu.memory_space<vmem>>, vector<32x128xf32>
    tpu.vector_store %arg25[%c0_74, %c0_75], %169 {strides = array<i32>} : memref<32x128xf32, #tpu.memory_space<vmem>>, vector<32x128xf32>,
    %c1_i32 = arith.constant 1 : i32
    %171 = arith.cmpi eq, %arg1, %c1_i32 : i32
    %172 = arith.extui %171 : i1 to i32
    %c0_i32_76 = arith.constant 0 : i32
    %173 = arith.cmpi ne, %172, %c0_i32_76 : i32
    scf.if %173 {
      %174 = arith.truncf %169 : vector<32x128xf32> to vector<32x128xbf16>
      %c0_77 = arith.constant 0 : index
      %c0_78 = arith.constant 0 : index
      %175 = vector.load %arg20[%c0_77, %c0_78] : memref<128x128xbf16, #tpu.memory_space<vmem>>, vector<128x128xbf16>
      %cst_79 = arith.constant dense<0.000000e+00> : vector<32x128xf32>
      %176 = tpu.matmul %174, %175, %cst_79 {dimension_numbers = #tpu.dot_dimension_numbers<[1], [0], [0], [1], [0, 0, 1, 1], [], []>} : vector<32x128xbf16>, vector<128x128xbf16>, vector<32x128xf32> -> vector<32x128xf32>
      %c0_80 = arith.constant 0 : index
      %c0_81 = arith.constant 0 : index
      %177 = vector.load %arg21[%c0_80, %c0_81] : memref<1x128xf32, #tpu.memory_space<vmem>>, vector<1x128xf32>
      %178 = vector.broadcast %177 : vector<1x128xf32> to vector<32x128xf32>
      %179 = arith.addf %176, %178 : vector<32x128xf32>
      %cst_82 = arith.constant 5.000000e-01 : f32
      %180 = vector.broadcast %cst_82 : f32 to vector<32x128xf32>
      %181 = arith.mulf %179, %180 : vector<32x128xf32>
      %cst_83 = arith.constant 1.41421354 : f32
      %182 = vector.broadcast %cst_83 : f32 to vector<32x128xf32>
      %183 = arith.divf %179, %182 : vector<32x128xf32>
      %184 = math.erf %183 : vector<32x128xf32>
      %cst_84 = arith.constant 1.000000e+00 : f32
      %185 = vector.broadcast %cst_84 : f32 to vector<32x128xf32>
      %186 = arith.addf %185, %184 : vector<32x128xf32>
      %187 = arith.mulf %181, %186 : vector<32x128xf32>
      %c0_85 = arith.constant 0 : index
      %c0_86 = arith.constant 0 : index
      %188 = vector.load %arg22[%c0_85, %c0_86] : memref<1x128xf32, #tpu.memory_space<vmem>>, vector<1x128xf32>
      %c0_87 = arith.constant 0 : index
      %c0_88 = arith.constant 0 : index
      %189 = vector.load %arg23[%c0_87, %c0_88] : memref<1x128xf32, #tpu.memory_space<vmem>>, vector<1x128xf32>
      %cst_89 = arith.constant dense<0.000000e+00> : vector<32xf32>
      %190 = vector.multi_reduction <add>, %187, %cst_89 [1] : vector<32x128xf32> to vector<32xf32>
      %191 = vector.shape_cast %190 : vector<32xf32> to vector<32x1xf32>
      %cst_90 = arith.constant 1.280000e+02 : f32
      %192 = vector.broadcast %cst_90 : f32 to vector<32x1xf32>
      %193 = arith.divf %191, %192 : vector<32x1xf32>
      %194 = vector.broadcast %193 : vector<32x1xf32> to vector<32x128xf32>
      %195 = arith.subf %187, %194 : vector<32x128xf32>
      %196 = arith.mulf %195, %195 : vector<32x128xf32>
      %cst_91 = arith.constant dense<0.000000e+00> : vector<32xf32>
      %197 = vector.multi_reduction <add>, %196, %cst_91 [1] : vector<32x128xf32> to vector<32xf32>
      %198 = vector.shape_cast %197 : vector<32xf32> to vector<32x1xf32>
      %cst_92 = arith.constant 1.280000e+02 : f32
      %199 = vector.broadcast %cst_92 : f32 to vector<32x1xf32>
      %200 = arith.divf %198, %199 : vector<32x1xf32>
      %201 = vector.broadcast %193 : vector<32x1xf32> to vector<32x128xf32>
      %202 = arith.subf %187, %201 : vector<32x128xf32>
      %cst_93 = arith.constant 9.99999974E-6 : f32
      %203 = vector.broadcast %cst_93 : f32 to vector<32x1xf32>
      %204 = arith.addf %200, %203 : vector<32x1xf32>
      %205 = math.rsqrt %204 : vector<32x1xf32>
      %206 = vector.broadcast %205 : vector<32x1xf32> to vector<32x128xf32>
      %207 = arith.mulf %202, %206 : vector<32x128xf32>
      %208 = vector.broadcast %188 : vector<1x128xf32> to vector<32x128xf32>
      %209 = arith.mulf %207, %208 : vector<32x128xf32>
      %210 = vector.broadcast %189 : vector<1x128xf32> to vector<32x128xf32>
      %211 = arith.addf %209, %210 : vector<32x128xf32>
      %212 = arith.truncf %211 : vector<32x128xf32> to vector<32x128xbf16>
      %213 = vector.extract_strided_slice %212 {offsets = [0, 0], sizes = [16, 128], strides = [1, 1]} : vector<32x128xbf16> to vector<16x128xbf16>
      %c0_94 = arith.constant 0 : index
      %c0_95 = arith.constant 0 : index
      %c0_96 = arith.constant 0 : index
      %214 = vector.load %arg24[%c0_94, %c0_95, %c0_96] : memref<2x16x128xbf16, #tpu.memory_space<vmem>>, vector<1x16x128xbf16>
      %215 = vector.shape_cast %214 : vector<1x16x128xbf16> to vector<16x128xbf16>
      %216 = vector.shape_cast %213 : vector<16x128xbf16> to vector<1x16x128xbf16>
      tpu.vector_store %arg24[%c0_94, %c0_95, %c0_96], %216 {strides = array<i32>} : memref<2x16x128xbf16, #tpu.memory_space<vmem>>, vector<1x16x128xbf16>,
      %217 = vector.extract_strided_slice %212 {offsets = [16, 0], sizes = [16, 128], strides = [1, 1]} : vector<32x128xbf16> to vector<16x128xbf16>
      %c1_97 = arith.constant 1 : index
      %c0_98 = arith.constant 0 : index
      %c0_99 = arith.constant 0 : index
      %218 = vector.load %arg24[%c1_97, %c0_98, %c0_99] : memref<2x16x128xbf16, #tpu.memory_space<vmem>>, vector<1x16x128xbf16>
      %219 = vector.shape_cast %218 : vector<1x16x128xbf16> to vector<16x128xbf16>
      %220 = vector.shape_cast %217 : vector<16x128xbf16> to vector<1x16x128xbf16>
      tpu.vector_store %arg24[%c1_97, %c0_98, %c0_99], %220 {strides = array<i32>} : memref<2x16x128xbf16, #tpu.memory_space<vmem>>, vector<1x16x128xbf16>,
    } else {
    }
    return
  }
  func.func @transform_0(%arg0: i32, %arg1: i32) -> (i32, i32, i32) {
    %c0_i32 = arith.constant 0 : i32
    %c0_i32_0 = arith.constant 0 : i32
    %c0_i32_1 = arith.constant 0 : i32
    return %arg0, %c0_i32, %c0_i32_0 : i32, i32, i32
  }
  func.func @transform_1(%arg0: i32, %arg1: i32) -> (i32, i32, i32) {
    %c0_i32 = arith.constant 0 : i32
    %c0_i32_0 = arith.constant 0 : i32
    %c0_i32_1 = arith.constant 0 : i32
    %c0_i32_2 = arith.constant 0 : i32
    return %c0_i32, %c0_i32_0, %c0_i32_1 : i32, i32, i32
  }
  func.func @transform_2(%arg0: i32, %arg1: i32) -> (i32, i32, i32) {
    %c0_i32 = arith.constant 0 : i32
    %c0_i32_0 = arith.constant 0 : i32
    %c0_i32_1 = arith.constant 0 : i32
    return %arg0, %c0_i32, %c0_i32_0 : i32, i32, i32
  }
  func.func @transform_3(%arg0: i32, %arg1: i32) -> (i32, i32) {
    %c0_i32 = arith.constant 0 : i32
    %c0_i32_0 = arith.constant 0 : i32
    %c0_i32_1 = arith.constant 0 : i32
    return %c0_i32, %c0_i32_0 : i32, i32
  }
  func.func @transform_4(%arg0: i32, %arg1: i32) -> (i32, i32) {
    %c0_i32 = arith.constant 0 : i32
    %c0_i32_0 = arith.constant 0 : i32
    %c0_i32_1 = arith.constant 0 : i32
    return %c0_i32, %c0_i32_0 : i32, i32
  }
  func.func @transform_5(%arg0: i32, %arg1: i32) -> (i32, i32, i32) {
    %c0_i32 = arith.constant 0 : i32
    %c0_i32_0 = arith.constant 0 : i32
    %c0_i32_1 = arith.constant 0 : i32
    return %arg0, %c0_i32, %c0_i32_0 : i32, i32, i32
  }
  func.func @transform_6(%arg0: i32, %arg1: i32) -> (i32, i32, i32) {
    %c0_i32 = arith.constant 0 : i32
    %c0_i32_0 = arith.constant 0 : i32
    %c0_i32_1 = arith.constant 0 : i32
    return %arg1, %c0_i32, %c0_i32_0 : i32, i32, i32
  }
  func.func @transform_7(%arg0: i32, %arg1: i32) -> (i32, i32, i32) {
    %c0_i32 = arith.constant 0 : i32
    %c0_i32_0 = arith.constant 0 : i32
    %c0_i32_1 = arith.constant 0 : i32
    return %arg1, %c0_i32, %c0_i32_0 : i32, i32, i32
  }
  func.func @transform_8(%arg0: i32, %arg1: i32) -> (i32, i32, i32) {
    %c0_i32 = arith.constant 0 : i32
    %c0_i32_0 = arith.constant 0 : i32
    %c0_i32_1 = arith.constant 0 : i32
    return %arg1, %c0_i32, %c0_i32_0 : i32, i32, i32
  }
  func.func @transform_9(%arg0: i32, %arg1: i32) -> (i32, i32, i32) {
    %c0_i32 = arith.constant 0 : i32
    %c0_i32_0 = arith.constant 0 : i32
    %c0_i32_1 = arith.constant 0 : i32
    return %arg1, %c0_i32, %c0_i32_0 : i32, i32, i32
  }
  func.func @transform_10(%arg0: i32, %arg1: i32) -> (i32, i32, i32) {
    %c0_i32 = arith.constant 0 : i32
    %c0_i32_0 = arith.constant 0 : i32
    %c0_i32_1 = arith.constant 0 : i32
    return %arg1, %c0_i32, %c0_i32_0 : i32, i32, i32
  }
  func.func @transform_11(%arg0: i32, %arg1: i32) -> (i32, i32, i32) {
    %c0_i32 = arith.constant 0 : i32
    %c0_i32_0 = arith.constant 0 : i32
    %c0_i32_1 = arith.constant 0 : i32
    return %arg1, %c0_i32, %c0_i32_0 : i32, i32, i32
  }
  func.func @transform_12(%arg0: i32, %arg1: i32) -> (i32, i32, i32) {
    %c0_i32 = arith.constant 0 : i32
    %c0_i32_0 = arith.constant 0 : i32
    %c0_i32_1 = arith.constant 0 : i32
    return %arg1, %c0_i32, %c0_i32_0 : i32, i32, i32
  }
  func.func @transform_13(%arg0: i32, %arg1: i32) -> (i32, i32, i32) {
    %c0_i32 = arith.constant 0 : i32
    %c0_i32_0 = arith.constant 0 : i32
    %c0_i32_1 = arith.constant 0 : i32
    return %arg1, %c0_i32, %c0_i32_0 : i32, i32, i32
  }
  func.func @transform_14(%arg0: i32, %arg1: i32) -> (i32, i32, i32) {
    %c0_i32 = arith.constant 0 : i32
    %c0_i32_0 = arith.constant 0 : i32
    %c0_i32_1 = arith.constant 0 : i32
    return %arg1, %c0_i32, %c0_i32_0 : i32, i32, i32
  }
  func.func @transform_15(%arg0: i32, %arg1: i32) -> (i32, i32, i32) {
    %c0_i32 = arith.constant 0 : i32
    %c0_i32_0 = arith.constant 0 : i32
    %c0_i32_1 = arith.constant 0 : i32
    return %arg1, %c0_i32, %c0_i32_0 : i32, i32, i32
  }
  func.func @transform_16(%arg0: i32, %arg1: i32) -> (i32, i32, i32) {
    %c0_i32 = arith.constant 0 : i32
    %c0_i32_0 = arith.constant 0 : i32
    %c0_i32_1 = arith.constant 0 : i32
    return %arg1, %c0_i32, %c0_i32_0 : i32, i32, i32
  }
  func.func @transform_17(%arg0: i32, %arg1: i32) -> (i32, i32, i32) {
    %c0_i32 = arith.constant 0 : i32
    %c0_i32_0 = arith.constant 0 : i32
    %c0_i32_1 = arith.constant 0 : i32
    return %arg1, %c0_i32, %c0_i32_0 : i32, i32, i32
  }
  func.func @transform_18(%arg0: i32, %arg1: i32) -> (i32, i32) {
    %c0_i32 = arith.constant 0 : i32
    %c0_i32_0 = arith.constant 0 : i32
    %c0_i32_1 = arith.constant 0 : i32
    return %c0_i32, %c0_i32_0 : i32, i32
  }
  func.func @transform_19(%arg0: i32, %arg1: i32) -> (i32, i32) {
    %c0_i32 = arith.constant 0 : i32
    %c0_i32_0 = arith.constant 0 : i32
    %c0_i32_1 = arith.constant 0 : i32
    return %c0_i32, %c0_i32_0 : i32, i32
  }
  func.func @transform_20(%arg0: i32, %arg1: i32) -> (i32, i32) {
    %c0_i32 = arith.constant 0 : i32
    %c0_i32_0 = arith.constant 0 : i32
    %c0_i32_1 = arith.constant 0 : i32
    return %c0_i32, %c0_i32_0 : i32, i32
  }
  func.func @transform_21(%arg0: i32, %arg1: i32) -> (i32, i32) {
    %c0_i32 = arith.constant 0 : i32
    %c0_i32_0 = arith.constant 0 : i32
    %c0_i32_1 = arith.constant 0 : i32
    return %c0_i32, %c0_i32_0 : i32, i32
  }
  func.func @transform_22(%arg0: i32, %arg1: i32) -> (i32, i32, i32) {
    %c0_i32 = arith.constant 0 : i32
    %c0_i32_0 = arith.constant 0 : i32
    %c0_i32_1 = arith.constant 0 : i32
    return %arg0, %c0_i32, %c0_i32_0 : i32, i32, i32
  }
}

module attributes {stable_mosaic.version = 11 : i64} {
  func.func @encoder_kernel(%arg0: i32, %arg1: i32, %arg2: memref<2x16x128xf32, #tpu.memory_space<vmem>>, %arg3: memref<1x16x128xf32, #tpu.memory_space<vmem>>, %arg4: memref<2x16x128xf32, #tpu.memory_space<vmem>>, %arg5: memref<1x128xf32, #tpu.memory_space<vmem>>, %arg6: memref<1x128xf32, #tpu.memory_space<vmem>>, %arg7: memref<2x1x16xf32, #tpu.memory_space<vmem>>, %arg8: memref<1x128x384xbf16, #tpu.memory_space<vmem>>, %arg9: memref<1x1x384xf32, #tpu.memory_space<vmem>>, %arg10: memref<1x128x128xbf16, #tpu.memory_space<vmem>>, %arg11: memref<1x1x128xf32, #tpu.memory_space<vmem>>, %arg12: memref<1x1x128xf32, #tpu.memory_space<vmem>>, %arg13: memref<1x1x128xf32, #tpu.memory_space<vmem>>, %arg14: memref<1x128x256xbf16, #tpu.memory_space<vmem>>, %arg15: memref<1x1x256xf32, #tpu.memory_space<vmem>>, %arg16: memref<1x256x128xbf16, #tpu.memory_space<vmem>>, %arg17: memref<1x1x128xf32, #tpu.memory_space<vmem>>, %arg18: memref<1x1x128xf32, #tpu.memory_space<vmem>>, %arg19: memref<1x1x128xf32, #tpu.memory_space<vmem>>, %arg20: memref<128x128xbf16, #tpu.memory_space<vmem>>, %arg21: memref<1x128xf32, #tpu.memory_space<vmem>>, %arg22: memref<1x128xf32, #tpu.memory_space<vmem>>, %arg23: memref<1x128xf32, #tpu.memory_space<vmem>>, %arg24: memref<2x16x128xbf16, #tpu.memory_space<vmem>>, %arg25: memref<32x128xf32, #tpu.memory_space<vmem>>, %arg26: memref<32x128xbf16, #tpu.memory_space<vmem>>) attributes {dimension_semantics = [#tpu.dimension_semantics<parallel>, #tpu.dimension_semantics<arbitrary>], iteration_bounds = array<i64: 1, 2>, scalar_prefetch = 0 : i64, scratch_operands = 2 : i64, tpu.core_type = #tpu.core_type<tc>, window_params = [{transform_indices = @transform_0, window_bounds = array<i64: 2, 16, 128>}, {pipeline_mode = #tpu.pipeline_mode<synchronous>, transform_indices = @transform_1, window_bounds = array<i64: 1, 16, 128>}, {transform_indices = @transform_2, window_bounds = array<i64: 2, 16, 128>}, {pipeline_mode = #tpu.pipeline_mode<synchronous>, transform_indices = @transform_3, window_bounds = array<i64: 1, 128>}, {pipeline_mode = #tpu.pipeline_mode<synchronous>, transform_indices = @transform_4, window_bounds = array<i64: 1, 128>}, {transform_indices = @transform_5, window_bounds = array<i64: 2, 1, 16>}, {transform_indices = @transform_6, window_bounds = array<i64: 1, 128, 384>}, {transform_indices = @transform_7, window_bounds = array<i64: 1, 1, 384>}, {transform_indices = @transform_8, window_bounds = array<i64: 1, 128, 128>}, {transform_indices = @transform_9, window_bounds = array<i64: 1, 1, 128>}, {transform_indices = @transform_10, window_bounds = array<i64: 1, 1, 128>}, {transform_indices = @transform_11, window_bounds = array<i64: 1, 1, 128>}, {transform_indices = @transform_12, window_bounds = array<i64: 1, 128, 256>}, {transform_indices = @transform_13, window_bounds = array<i64: 1, 1, 256>}, {transform_indices = @transform_14, window_bounds = array<i64: 1, 256, 128>}, {transform_indices = @transform_15, window_bounds = array<i64: 1, 1, 128>}, {transform_indices = @transform_16, window_bounds = array<i64: 1, 1, 128>}, {transform_indices = @transform_17, window_bounds = array<i64: 1, 1, 128>}, {pipeline_mode = #tpu.pipeline_mode<synchronous>, transform_indices = @transform_18, window_bounds = array<i64: 128, 128>}, {pipeline_mode = #tpu.pipeline_mode<synchronous>, transform_indices = @transform_19, window_bounds = array<i64: 1, 128>}, {pipeline_mode = #tpu.pipeline_mode<synchronous>, transform_indices = @transform_20, window_bounds = array<i64: 1, 128>}, {pipeline_mode = #tpu.pipeline_mode<synchronous>, transform_indices = @transform_21, window_bounds = array<i64: 1, 128>}, {transform_indices = @transform_22, window_bounds = array<i64: 2, 16, 128>}]} {
    %c0_i32 = arith.constant 0 : i32
    %0 = arith.cmpi eq, %arg1, %c0_i32 : i32
    %1 = arith.extui %0 : i1 to i32
    %c0_i32_0 = arith.constant 0 : i32
    %2 = arith.cmpi ne, %1, %c0_i32_0 : i32
    scf.if %2 {
      %c0_90 = arith.constant 0 : index
      %c0_91 = arith.constant 0 : index
      %c0_92 = arith.constant 0 : index
      %206 = vector.load %arg2[%c0_90, %c0_91, %c0_92] : memref<2x16x128xf32, #tpu.memory_space<vmem>>, vector<1x16x128xf32>
      %207 = vector.shape_cast %206 : vector<1x16x128xf32> to vector<16x128xf32>
      %c0_93 = arith.constant 0 : index
      %c0_94 = arith.constant 0 : index
      %c0_95 = arith.constant 0 : index
      %208 = vector.load %arg4[%c0_93, %c0_94, %c0_95] : memref<2x16x128xf32, #tpu.memory_space<vmem>>, vector<1x16x128xf32>
      %209 = vector.shape_cast %208 : vector<1x16x128xf32> to vector<16x128xf32>
      %210 = arith.addf %207, %209 : vector<16x128xf32>
      %c0_96 = arith.constant 0 : index
      %c0_97 = arith.constant 0 : index
      %c0_98 = arith.constant 0 : index
      %211 = vector.load %arg3[%c0_96, %c0_97, %c0_98] : memref<1x16x128xf32, #tpu.memory_space<vmem>>, vector<1x16x128xf32>
      %212 = vector.shape_cast %211 : vector<1x16x128xf32> to vector<16x128xf32>
      %213 = arith.addf %210, %212 : vector<16x128xf32>
      %c0_99 = arith.constant 0 : index
      %c0_100 = arith.constant 0 : index
      %214 = vector.load %arg5[%c0_99, %c0_100] : memref<1x128xf32, #tpu.memory_space<vmem>>, vector<1x128xf32>
      %c0_101 = arith.constant 0 : index
      %c0_102 = arith.constant 0 : index
      %215 = vector.load %arg6[%c0_101, %c0_102] : memref<1x128xf32, #tpu.memory_space<vmem>>, vector<1x128xf32>
      %cst_103 = arith.constant dense<0.000000e+00> : vector<16xf32>
      %216 = vector.multi_reduction <add>, %213, %cst_103 [1] : vector<16x128xf32> to vector<16xf32>
      %217 = vector.shape_cast %216 : vector<16xf32> to vector<16x1xf32>
      %cst_104 = arith.constant 1.280000e+02 : f32
      %218 = vector.broadcast %cst_104 : f32 to vector<16x1xf32>
      %219 = arith.divf %217, %218 : vector<16x1xf32>
      %220 = vector.broadcast %219 : vector<16x1xf32> to vector<16x128xf32>
      %221 = arith.subf %213, %220 : vector<16x128xf32>
      %222 = arith.mulf %221, %221 : vector<16x128xf32>
      %cst_105 = arith.constant dense<0.000000e+00> : vector<16xf32>
      %223 = vector.multi_reduction <add>, %222, %cst_105 [1] : vector<16x128xf32> to vector<16xf32>
      %224 = vector.shape_cast %223 : vector<16xf32> to vector<16x1xf32>
      %cst_106 = arith.constant 1.280000e+02 : f32
      %225 = vector.broadcast %cst_106 : f32 to vector<16x1xf32>
      %226 = arith.divf %224, %225 : vector<16x1xf32>
      %227 = vector.broadcast %219 : vector<16x1xf32> to vector<16x128xf32>
      %228 = arith.subf %213, %227 : vector<16x128xf32>
      %cst_107 = arith.constant 9.99999974E-6 : f32
      %229 = vector.broadcast %cst_107 : f32 to vector<16x1xf32>
      %230 = arith.addf %226, %229 : vector<16x1xf32>
      %231 = math.rsqrt %230 : vector<16x1xf32>
      %232 = vector.broadcast %231 : vector<16x1xf32> to vector<16x128xf32>
      %233 = arith.mulf %228, %232 : vector<16x128xf32>
      %234 = vector.broadcast %214 : vector<1x128xf32> to vector<16x128xf32>
      %235 = arith.mulf %233, %234 : vector<16x128xf32>
      %236 = vector.broadcast %215 : vector<1x128xf32> to vector<16x128xf32>
      %237 = arith.addf %235, %236 : vector<16x128xf32>
      %c0_108 = arith.constant 0 : index
      %c0_109 = arith.constant 0 : index
      %238 = vector.load %arg25[%c0_108, %c0_109] : memref<32x128xf32, #tpu.memory_space<vmem>>, vector<16x128xf32>
      tpu.vector_store %arg25[%c0_108, %c0_109], %237 {strides = array<i32>} : memref<32x128xf32, #tpu.memory_space<vmem>>, vector<16x128xf32>,
      %c1_110 = arith.constant 1 : index
      %c0_111 = arith.constant 0 : index
      %c0_112 = arith.constant 0 : index
      %239 = vector.load %arg2[%c1_110, %c0_111, %c0_112] : memref<2x16x128xf32, #tpu.memory_space<vmem>>, vector<1x16x128xf32>
      %240 = vector.shape_cast %239 : vector<1x16x128xf32> to vector<16x128xf32>
      %c1_113 = arith.constant 1 : index
      %c0_114 = arith.constant 0 : index
      %c0_115 = arith.constant 0 : index
      %241 = vector.load %arg4[%c1_113, %c0_114, %c0_115] : memref<2x16x128xf32, #tpu.memory_space<vmem>>, vector<1x16x128xf32>
      %242 = vector.shape_cast %241 : vector<1x16x128xf32> to vector<16x128xf32>
      %243 = arith.addf %240, %242 : vector<16x128xf32>
      %c0_116 = arith.constant 0 : index
      %c0_117 = arith.constant 0 : index
      %c0_118 = arith.constant 0 : index
      %244 = vector.load %arg3[%c0_116, %c0_117, %c0_118] : memref<1x16x128xf32, #tpu.memory_space<vmem>>, vector<1x16x128xf32>
      %245 = vector.shape_cast %244 : vector<1x16x128xf32> to vector<16x128xf32>
      %246 = arith.addf %243, %245 : vector<16x128xf32>
      %c0_119 = arith.constant 0 : index
      %c0_120 = arith.constant 0 : index
      %247 = vector.load %arg5[%c0_119, %c0_120] : memref<1x128xf32, #tpu.memory_space<vmem>>, vector<1x128xf32>
      %c0_121 = arith.constant 0 : index
      %c0_122 = arith.constant 0 : index
      %248 = vector.load %arg6[%c0_121, %c0_122] : memref<1x128xf32, #tpu.memory_space<vmem>>, vector<1x128xf32>
      %cst_123 = arith.constant dense<0.000000e+00> : vector<16xf32>
      %249 = vector.multi_reduction <add>, %246, %cst_123 [1] : vector<16x128xf32> to vector<16xf32>
      %250 = vector.shape_cast %249 : vector<16xf32> to vector<16x1xf32>
      %cst_124 = arith.constant 1.280000e+02 : f32
      %251 = vector.broadcast %cst_124 : f32 to vector<16x1xf32>
      %252 = arith.divf %250, %251 : vector<16x1xf32>
      %253 = vector.broadcast %252 : vector<16x1xf32> to vector<16x128xf32>
      %254 = arith.subf %246, %253 : vector<16x128xf32>
      %255 = arith.mulf %254, %254 : vector<16x128xf32>
      %cst_125 = arith.constant dense<0.000000e+00> : vector<16xf32>
      %256 = vector.multi_reduction <add>, %255, %cst_125 [1] : vector<16x128xf32> to vector<16xf32>
      %257 = vector.shape_cast %256 : vector<16xf32> to vector<16x1xf32>
      %cst_126 = arith.constant 1.280000e+02 : f32
      %258 = vector.broadcast %cst_126 : f32 to vector<16x1xf32>
      %259 = arith.divf %257, %258 : vector<16x1xf32>
      %260 = vector.broadcast %252 : vector<16x1xf32> to vector<16x128xf32>
      %261 = arith.subf %246, %260 : vector<16x128xf32>
      %cst_127 = arith.constant 9.99999974E-6 : f32
      %262 = vector.broadcast %cst_127 : f32 to vector<16x1xf32>
      %263 = arith.addf %259, %262 : vector<16x1xf32>
      %264 = math.rsqrt %263 : vector<16x1xf32>
      %265 = vector.broadcast %264 : vector<16x1xf32> to vector<16x128xf32>
      %266 = arith.mulf %261, %265 : vector<16x128xf32>
      %267 = vector.broadcast %247 : vector<1x128xf32> to vector<16x128xf32>
      %268 = arith.mulf %266, %267 : vector<16x128xf32>
      %269 = vector.broadcast %248 : vector<1x128xf32> to vector<16x128xf32>
      %270 = arith.addf %268, %269 : vector<16x128xf32>
      %c16_128 = arith.constant 16 : index
      %c0_129 = arith.constant 0 : index
      %271 = vector.load %arg25[%c16_128, %c0_129] : memref<32x128xf32, #tpu.memory_space<vmem>>, vector<16x128xf32>
      tpu.vector_store %arg25[%c16_128, %c0_129], %270 {strides = array<i32>} : memref<32x128xf32, #tpu.memory_space<vmem>>, vector<16x128xf32>,
    } else {
    }
    %c0 = arith.constant 0 : index
    %c0_1 = arith.constant 0 : index
    %3 = vector.load %arg25[%c0, %c0_1] : memref<32x128xf32, #tpu.memory_space<vmem>>, vector<32x128xf32>
    %4 = arith.truncf %3 : vector<32x128xf32> to vector<32x128xbf16>
    %c0_2 = arith.constant 0 : index
    %c0_3 = arith.constant 0 : index
    %c0_4 = arith.constant 0 : index
    %5 = vector.load %arg8[%c0_2, %c0_3, %c0_4] : memref<1x128x384xbf16, #tpu.memory_space<vmem>>, vector<1x128x384xbf16>
    %6 = vector.shape_cast %5 : vector<1x128x384xbf16> to vector<128x384xbf16>
    %cst = arith.constant dense<0.000000e+00> : vector<32x384xf32>
    %7 = tpu.matmul %4, %6, %cst {dimension_numbers = #tpu.dot_dimension_numbers<[1], [0], [0], [1], [0, 0, 1, 1], [], []>} : vector<32x128xbf16>, vector<128x384xbf16>, vector<32x384xf32> -> vector<32x384xf32>
    %c0_5 = arith.constant 0 : index
    %c0_6 = arith.constant 0 : index
    %c0_7 = arith.constant 0 : index
    %8 = vector.load %arg9[%c0_5, %c0_6, %c0_7] : memref<1x1x384xf32, #tpu.memory_space<vmem>>, vector<1x1x384xf32>
    %9 = vector.shape_cast %8 : vector<1x1x384xf32> to vector<1x384xf32>
    %10 = vector.broadcast %9 : vector<1x384xf32> to vector<32x384xf32>
    %11 = arith.addf %7, %10 : vector<32x384xf32>
    %12 = vector.extract_strided_slice %11 {offsets = [0, 0], sizes = [16, 128], strides = [1, 1]} : vector<32x384xf32> to vector<16x128xf32>
    %13 = arith.truncf %12 : vector<16x128xf32> to vector<16x128xbf16>
    %14 = vector.extract_strided_slice %11 {offsets = [0, 128], sizes = [16, 128], strides = [1, 1]} : vector<32x384xf32> to vector<16x128xf32>
    %15 = arith.truncf %14 : vector<16x128xf32> to vector<16x128xbf16>
    %16 = vector.extract_strided_slice %11 {offsets = [0, 256], sizes = [16, 128], strides = [1, 1]} : vector<32x384xf32> to vector<16x128xf32>
    %17 = arith.truncf %16 : vector<16x128xf32> to vector<16x128xbf16>
    %c0_8 = arith.constant 0 : index
    %c0_9 = arith.constant 0 : index
    %c0_10 = arith.constant 0 : index
    %18 = vector.load %arg7[%c0_8, %c0_9, %c0_10] : memref<2x1x16xf32, #tpu.memory_space<vmem>>, vector<1x1x16xf32>
    %19 = vector.shape_cast %18 : vector<1x1x16xf32> to vector<1x16xf32>
    %20 = vector.extract_strided_slice %13 {offsets = [0, 0], sizes = [16, 64], strides = [1, 1]} : vector<16x128xbf16> to vector<16x64xbf16>
    %21 = vector.extract_strided_slice %15 {offsets = [0, 0], sizes = [16, 64], strides = [1, 1]} : vector<16x128xbf16> to vector<16x64xbf16>
    %cst_11 = arith.constant dense<0.000000e+00> : vector<16x16xf32>
    %22 = tpu.matmul %20, %21, %cst_11 {dimension_numbers = #tpu.dot_dimension_numbers<[1], [1], [0], [0], [0, 0, 1, 0], [], []>} : vector<16x64xbf16>, vector<16x64xbf16>, vector<16x16xf32> -> vector<16x16xf32>
    %cst_12 = arith.constant 1.250000e-01 : f32
    %23 = vector.broadcast %cst_12 : f32 to vector<16x16xf32>
    %24 = arith.mulf %22, %23 : vector<16x16xf32>
    %25 = vector.broadcast %19 : vector<1x16xf32> to vector<16x16xf32>
    %26 = arith.addf %24, %25 : vector<16x16xf32>
    %cst_13 = arith.constant dense<0xFF800000> : vector<16xf32>
    %27 = vector.multi_reduction <maximumf>, %26, %cst_13 [1] : vector<16x16xf32> to vector<16xf32>
    %28 = vector.shape_cast %27 : vector<16xf32> to vector<16x1xf32>
    %29 = vector.broadcast %28 : vector<16x1xf32> to vector<16x16xf32>
    %30 = arith.subf %26, %29 : vector<16x16xf32>
    %31 = math.exp %30 : vector<16x16xf32>
    %cst_14 = arith.constant dense<0.000000e+00> : vector<16xf32>
    %32 = vector.multi_reduction <add>, %31, %cst_14 [1] : vector<16x16xf32> to vector<16xf32>
    %33 = vector.shape_cast %32 : vector<16xf32> to vector<16x1xf32>
    %34 = tpu.reciprocal %33 {approx = true} : vector<16x1xf32> -> vector<16x1xf32>
    %35 = vector.broadcast %34 : vector<16x1xf32> to vector<16x16xf32>
    %36 = arith.mulf %31, %35 : vector<16x16xf32>
    %37 = arith.truncf %36 : vector<16x16xf32> to vector<16x16xbf16>
    %38 = vector.extract_strided_slice %17 {offsets = [0, 0], sizes = [16, 64], strides = [1, 1]} : vector<16x128xbf16> to vector<16x64xbf16>
    %cst_15 = arith.constant dense<0.000000e+00> : vector<16x64xf32>
    %39 = tpu.matmul %37, %38, %cst_15 {dimension_numbers = #tpu.dot_dimension_numbers<[1], [0], [0], [1], [0, 0, 1, 1], [], []>} : vector<16x16xbf16>, vector<16x64xbf16>, vector<16x64xf32> -> vector<16x64xf32>
    %40 = arith.truncf %39 : vector<16x64xf32> to vector<16x64xbf16>
    %c0_16 = arith.constant 0 : index
    %c0_17 = arith.constant 0 : index
    %41 = vector.load %arg26[%c0_16, %c0_17] : memref<32x128xbf16, #tpu.memory_space<vmem>>, vector<16x64xbf16>
    tpu.vector_store %arg26[%c0_16, %c0_17], %40 {strides = array<i32>} : memref<32x128xbf16, #tpu.memory_space<vmem>>, vector<16x64xbf16>,
    %42 = vector.extract_strided_slice %13 {offsets = [0, 64], sizes = [16, 64], strides = [1, 1]} : vector<16x128xbf16> to vector<16x64xbf16>
    %43 = vector.extract_strided_slice %15 {offsets = [0, 64], sizes = [16, 64], strides = [1, 1]} : vector<16x128xbf16> to vector<16x64xbf16>
    %cst_18 = arith.constant dense<0.000000e+00> : vector<16x16xf32>
    %44 = tpu.matmul %42, %43, %cst_18 {dimension_numbers = #tpu.dot_dimension_numbers<[1], [1], [0], [0], [0, 0, 1, 0], [], []>} : vector<16x64xbf16>, vector<16x64xbf16>, vector<16x16xf32> -> vector<16x16xf32>
    %cst_19 = arith.constant 1.250000e-01 : f32
    %45 = vector.broadcast %cst_19 : f32 to vector<16x16xf32>
    %46 = arith.mulf %44, %45 : vector<16x16xf32>
    %47 = vector.broadcast %19 : vector<1x16xf32> to vector<16x16xf32>
    %48 = arith.addf %46, %47 : vector<16x16xf32>
    %cst_20 = arith.constant dense<0xFF800000> : vector<16xf32>
    %49 = vector.multi_reduction <maximumf>, %48, %cst_20 [1] : vector<16x16xf32> to vector<16xf32>
    %50 = vector.shape_cast %49 : vector<16xf32> to vector<16x1xf32>
    %51 = vector.broadcast %50 : vector<16x1xf32> to vector<16x16xf32>
    %52 = arith.subf %48, %51 : vector<16x16xf32>
    %53 = math.exp %52 : vector<16x16xf32>
    %cst_21 = arith.constant dense<0.000000e+00> : vector<16xf32>
    %54 = vector.multi_reduction <add>, %53, %cst_21 [1] : vector<16x16xf32> to vector<16xf32>
    %55 = vector.shape_cast %54 : vector<16xf32> to vector<16x1xf32>
    %56 = tpu.reciprocal %55 {approx = true} : vector<16x1xf32> -> vector<16x1xf32>
    %57 = vector.broadcast %56 : vector<16x1xf32> to vector<16x16xf32>
    %58 = arith.mulf %53, %57 : vector<16x16xf32>
    %59 = arith.truncf %58 : vector<16x16xf32> to vector<16x16xbf16>
    %60 = vector.extract_strided_slice %17 {offsets = [0, 64], sizes = [16, 64], strides = [1, 1]} : vector<16x128xbf16> to vector<16x64xbf16>
    %cst_22 = arith.constant dense<0.000000e+00> : vector<16x64xf32>
    %61 = tpu.matmul %59, %60, %cst_22 {dimension_numbers = #tpu.dot_dimension_numbers<[1], [0], [0], [1], [0, 0, 1, 1], [], []>} : vector<16x16xbf16>, vector<16x64xbf16>, vector<16x64xf32> -> vector<16x64xf32>
    %62 = arith.truncf %61 : vector<16x64xf32> to vector<16x64xbf16>
    %c0_23 = arith.constant 0 : index
    %c64 = arith.constant 64 : index
    %63 = vector.load %arg26[%c0_23, %c64] : memref<32x128xbf16, #tpu.memory_space<vmem>>, vector<16x64xbf16>
    tpu.vector_store %arg26[%c0_23, %c64], %62 {strides = array<i32>} : memref<32x128xbf16, #tpu.memory_space<vmem>>, vector<16x64xbf16>,
    %64 = vector.extract_strided_slice %11 {offsets = [16, 0], sizes = [16, 128], strides = [1, 1]} : vector<32x384xf32> to vector<16x128xf32>
    %65 = arith.truncf %64 : vector<16x128xf32> to vector<16x128xbf16>
    %66 = vector.extract_strided_slice %11 {offsets = [16, 128], sizes = [16, 128], strides = [1, 1]} : vector<32x384xf32> to vector<16x128xf32>
    %67 = arith.truncf %66 : vector<16x128xf32> to vector<16x128xbf16>
    %68 = vector.extract_strided_slice %11 {offsets = [16, 256], sizes = [16, 128], strides = [1, 1]} : vector<32x384xf32> to vector<16x128xf32>
    %69 = arith.truncf %68 : vector<16x128xf32> to vector<16x128xbf16>
    %c1 = arith.constant 1 : index
    %c0_24 = arith.constant 0 : index
    %c0_25 = arith.constant 0 : index
    %70 = vector.load %arg7[%c1, %c0_24, %c0_25] : memref<2x1x16xf32, #tpu.memory_space<vmem>>, vector<1x1x16xf32>
    %71 = vector.shape_cast %70 : vector<1x1x16xf32> to vector<1x16xf32>
    %72 = vector.extract_strided_slice %65 {offsets = [0, 0], sizes = [16, 64], strides = [1, 1]} : vector<16x128xbf16> to vector<16x64xbf16>
    %73 = vector.extract_strided_slice %67 {offsets = [0, 0], sizes = [16, 64], strides = [1, 1]} : vector<16x128xbf16> to vector<16x64xbf16>
    %cst_26 = arith.constant dense<0.000000e+00> : vector<16x16xf32>
    %74 = tpu.matmul %72, %73, %cst_26 {dimension_numbers = #tpu.dot_dimension_numbers<[1], [1], [0], [0], [0, 0, 1, 0], [], []>} : vector<16x64xbf16>, vector<16x64xbf16>, vector<16x16xf32> -> vector<16x16xf32>
    %cst_27 = arith.constant 1.250000e-01 : f32
    %75 = vector.broadcast %cst_27 : f32 to vector<16x16xf32>
    %76 = arith.mulf %74, %75 : vector<16x16xf32>
    %77 = vector.broadcast %71 : vector<1x16xf32> to vector<16x16xf32>
    %78 = arith.addf %76, %77 : vector<16x16xf32>
    %cst_28 = arith.constant dense<0xFF800000> : vector<16xf32>
    %79 = vector.multi_reduction <maximumf>, %78, %cst_28 [1] : vector<16x16xf32> to vector<16xf32>
    %80 = vector.shape_cast %79 : vector<16xf32> to vector<16x1xf32>
    %81 = vector.broadcast %80 : vector<16x1xf32> to vector<16x16xf32>
    %82 = arith.subf %78, %81 : vector<16x16xf32>
    %83 = math.exp %82 : vector<16x16xf32>
    %cst_29 = arith.constant dense<0.000000e+00> : vector<16xf32>
    %84 = vector.multi_reduction <add>, %83, %cst_29 [1] : vector<16x16xf32> to vector<16xf32>
    %85 = vector.shape_cast %84 : vector<16xf32> to vector<16x1xf32>
    %86 = tpu.reciprocal %85 {approx = true} : vector<16x1xf32> -> vector<16x1xf32>
    %87 = vector.broadcast %86 : vector<16x1xf32> to vector<16x16xf32>
    %88 = arith.mulf %83, %87 : vector<16x16xf32>
    %89 = arith.truncf %88 : vector<16x16xf32> to vector<16x16xbf16>
    %90 = vector.extract_strided_slice %69 {offsets = [0, 0], sizes = [16, 64], strides = [1, 1]} : vector<16x128xbf16> to vector<16x64xbf16>
    %cst_30 = arith.constant dense<0.000000e+00> : vector<16x64xf32>
    %91 = tpu.matmul %89, %90, %cst_30 {dimension_numbers = #tpu.dot_dimension_numbers<[1], [0], [0], [1], [0, 0, 1, 1], [], []>} : vector<16x16xbf16>, vector<16x64xbf16>, vector<16x64xf32> -> vector<16x64xf32>
    %92 = arith.truncf %91 : vector<16x64xf32> to vector<16x64xbf16>
    %c16 = arith.constant 16 : index
    %c0_31 = arith.constant 0 : index
    %93 = vector.load %arg26[%c16, %c0_31] : memref<32x128xbf16, #tpu.memory_space<vmem>>, vector<16x64xbf16>
    tpu.vector_store %arg26[%c16, %c0_31], %92 {strides = array<i32>} : memref<32x128xbf16, #tpu.memory_space<vmem>>, vector<16x64xbf16>,
    %94 = vector.extract_strided_slice %65 {offsets = [0, 64], sizes = [16, 64], strides = [1, 1]} : vector<16x128xbf16> to vector<16x64xbf16>
    %95 = vector.extract_strided_slice %67 {offsets = [0, 64], sizes = [16, 64], strides = [1, 1]} : vector<16x128xbf16> to vector<16x64xbf16>
    %cst_32 = arith.constant dense<0.000000e+00> : vector<16x16xf32>
    %96 = tpu.matmul %94, %95, %cst_32 {dimension_numbers = #tpu.dot_dimension_numbers<[1], [1], [0], [0], [0, 0, 1, 0], [], []>} : vector<16x64xbf16>, vector<16x64xbf16>, vector<16x16xf32> -> vector<16x16xf32>
    %cst_33 = arith.constant 1.250000e-01 : f32
    %97 = vector.broadcast %cst_33 : f32 to vector<16x16xf32>
    %98 = arith.mulf %96, %97 : vector<16x16xf32>
    %99 = vector.broadcast %71 : vector<1x16xf32> to vector<16x16xf32>
    %100 = arith.addf %98, %99 : vector<16x16xf32>
    %cst_34 = arith.constant dense<0xFF800000> : vector<16xf32>
    %101 = vector.multi_reduction <maximumf>, %100, %cst_34 [1] : vector<16x16xf32> to vector<16xf32>
    %102 = vector.shape_cast %101 : vector<16xf32> to vector<16x1xf32>
    %103 = vector.broadcast %102 : vector<16x1xf32> to vector<16x16xf32>
    %104 = arith.subf %100, %103 : vector<16x16xf32>
    %105 = math.exp %104 : vector<16x16xf32>
    %cst_35 = arith.constant dense<0.000000e+00> : vector<16xf32>
    %106 = vector.multi_reduction <add>, %105, %cst_35 [1] : vector<16x16xf32> to vector<16xf32>
    %107 = vector.shape_cast %106 : vector<16xf32> to vector<16x1xf32>
    %108 = tpu.reciprocal %107 {approx = true} : vector<16x1xf32> -> vector<16x1xf32>
    %109 = vector.broadcast %108 : vector<16x1xf32> to vector<16x16xf32>
    %110 = arith.mulf %105, %109 : vector<16x16xf32>
    %111 = arith.truncf %110 : vector<16x16xf32> to vector<16x16xbf16>
    %112 = vector.extract_strided_slice %69 {offsets = [0, 64], sizes = [16, 64], strides = [1, 1]} : vector<16x128xbf16> to vector<16x64xbf16>
    %cst_36 = arith.constant dense<0.000000e+00> : vector<16x64xf32>
    %113 = tpu.matmul %111, %112, %cst_36 {dimension_numbers = #tpu.dot_dimension_numbers<[1], [0], [0], [1], [0, 0, 1, 1], [], []>} : vector<16x16xbf16>, vector<16x64xbf16>, vector<16x64xf32> -> vector<16x64xf32>
    %114 = arith.truncf %113 : vector<16x64xf32> to vector<16x64xbf16>
    %c16_37 = arith.constant 16 : index
    %c64_38 = arith.constant 64 : index
    %115 = vector.load %arg26[%c16_37, %c64_38] : memref<32x128xbf16, #tpu.memory_space<vmem>>, vector<16x64xbf16>
    tpu.vector_store %arg26[%c16_37, %c64_38], %114 {strides = array<i32>} : memref<32x128xbf16, #tpu.memory_space<vmem>>, vector<16x64xbf16>,
    %c0_39 = arith.constant 0 : index
    %c0_40 = arith.constant 0 : index
    %116 = vector.load %arg26[%c0_39, %c0_40] : memref<32x128xbf16, #tpu.memory_space<vmem>>, vector<32x128xbf16>
    %c0_41 = arith.constant 0 : index
    %c0_42 = arith.constant 0 : index
    %c0_43 = arith.constant 0 : index
    %117 = vector.load %arg10[%c0_41, %c0_42, %c0_43] : memref<1x128x128xbf16, #tpu.memory_space<vmem>>, vector<1x128x128xbf16>
    %118 = vector.shape_cast %117 : vector<1x128x128xbf16> to vector<128x128xbf16>
    %cst_44 = arith.constant dense<0.000000e+00> : vector<32x128xf32>
    %119 = tpu.matmul %116, %118, %cst_44 {dimension_numbers = #tpu.dot_dimension_numbers<[1], [0], [0], [1], [0, 0, 1, 1], [], []>} : vector<32x128xbf16>, vector<128x128xbf16>, vector<32x128xf32> -> vector<32x128xf32>
    %c0_45 = arith.constant 0 : index
    %c0_46 = arith.constant 0 : index
    %c0_47 = arith.constant 0 : index
    %120 = vector.load %arg11[%c0_45, %c0_46, %c0_47] : memref<1x1x128xf32, #tpu.memory_space<vmem>>, vector<1x1x128xf32>
    %121 = vector.shape_cast %120 : vector<1x1x128xf32> to vector<1x128xf32>
    %122 = vector.broadcast %121 : vector<1x128xf32> to vector<32x128xf32>
    %123 = arith.addf %119, %122 : vector<32x128xf32>
    %124 = arith.addf %123, %3 : vector<32x128xf32>
    %c0_48 = arith.constant 0 : index
    %c0_49 = arith.constant 0 : index
    %c0_50 = arith.constant 0 : index
    %125 = vector.load %arg12[%c0_48, %c0_49, %c0_50] : memref<1x1x128xf32, #tpu.memory_space<vmem>>, vector<1x1x128xf32>
    %126 = vector.shape_cast %125 : vector<1x1x128xf32> to vector<1x128xf32>
    %c0_51 = arith.constant 0 : index
    %c0_52 = arith.constant 0 : index
    %c0_53 = arith.constant 0 : index
    %127 = vector.load %arg13[%c0_51, %c0_52, %c0_53] : memref<1x1x128xf32, #tpu.memory_space<vmem>>, vector<1x1x128xf32>
    %128 = vector.shape_cast %127 : vector<1x1x128xf32> to vector<1x128xf32>
    %cst_54 = arith.constant dense<0.000000e+00> : vector<32xf32>
    %129 = vector.multi_reduction <add>, %124, %cst_54 [1] : vector<32x128xf32> to vector<32xf32>
    %130 = vector.shape_cast %129 : vector<32xf32> to vector<32x1xf32>
    %cst_55 = arith.constant 1.280000e+02 : f32
    %131 = vector.broadcast %cst_55 : f32 to vector<32x1xf32>
    %132 = arith.divf %130, %131 : vector<32x1xf32>
    %133 = vector.broadcast %132 : vector<32x1xf32> to vector<32x128xf32>
    %134 = arith.subf %124, %133 : vector<32x128xf32>
    %135 = arith.mulf %134, %134 : vector<32x128xf32>
    %cst_56 = arith.constant dense<0.000000e+00> : vector<32xf32>
    %136 = vector.multi_reduction <add>, %135, %cst_56 [1] : vector<32x128xf32> to vector<32xf32>
    %137 = vector.shape_cast %136 : vector<32xf32> to vector<32x1xf32>
    %cst_57 = arith.constant 1.280000e+02 : f32
    %138 = vector.broadcast %cst_57 : f32 to vector<32x1xf32>
    %139 = arith.divf %137, %138 : vector<32x1xf32>
    %140 = vector.broadcast %132 : vector<32x1xf32> to vector<32x128xf32>
    %141 = arith.subf %124, %140 : vector<32x128xf32>
    %cst_58 = arith.constant 9.99999974E-6 : f32
    %142 = vector.broadcast %cst_58 : f32 to vector<32x1xf32>
    %143 = arith.addf %139, %142 : vector<32x1xf32>
    %144 = math.rsqrt %143 : vector<32x1xf32>
    %145 = vector.broadcast %144 : vector<32x1xf32> to vector<32x128xf32>
    %146 = arith.mulf %141, %145 : vector<32x128xf32>
    %147 = vector.broadcast %126 : vector<1x128xf32> to vector<32x128xf32>
    %148 = arith.mulf %146, %147 : vector<32x128xf32>
    %149 = vector.broadcast %128 : vector<1x128xf32> to vector<32x128xf32>
    %150 = arith.addf %148, %149 : vector<32x128xf32>
    %151 = arith.truncf %150 : vector<32x128xf32> to vector<32x128xbf16>
    %c0_59 = arith.constant 0 : index
    %c0_60 = arith.constant 0 : index
    %c0_61 = arith.constant 0 : index
    %152 = vector.load %arg14[%c0_59, %c0_60, %c0_61] : memref<1x128x256xbf16, #tpu.memory_space<vmem>>, vector<1x128x256xbf16>
    %153 = vector.shape_cast %152 : vector<1x128x256xbf16> to vector<128x256xbf16>
    %cst_62 = arith.constant dense<0.000000e+00> : vector<32x256xf32>
    %154 = tpu.matmul %151, %153, %cst_62 {dimension_numbers = #tpu.dot_dimension_numbers<[1], [0], [0], [1], [0, 0, 1, 1], [], []>} : vector<32x128xbf16>, vector<128x256xbf16>, vector<32x256xf32> -> vector<32x256xf32>
    %c0_63 = arith.constant 0 : index
    %c0_64 = arith.constant 0 : index
    %c0_65 = arith.constant 0 : index
    %155 = vector.load %arg15[%c0_63, %c0_64, %c0_65] : memref<1x1x256xf32, #tpu.memory_space<vmem>>, vector<1x1x256xf32>
    %156 = vector.shape_cast %155 : vector<1x1x256xf32> to vector<1x256xf32>
    %157 = vector.broadcast %156 : vector<1x256xf32> to vector<32x256xf32>
    %158 = arith.addf %154, %157 : vector<32x256xf32>
    %cst_66 = arith.constant 5.000000e-01 : f32
    %159 = vector.broadcast %cst_66 : f32 to vector<32x256xf32>
    %160 = arith.mulf %158, %159 : vector<32x256xf32>
    %cst_67 = arith.constant 1.41421354 : f32
    %161 = vector.broadcast %cst_67 : f32 to vector<32x256xf32>
    %162 = arith.divf %158, %161 : vector<32x256xf32>
    %163 = math.erf %162 : vector<32x256xf32>
    %cst_68 = arith.constant 1.000000e+00 : f32
    %164 = vector.broadcast %cst_68 : f32 to vector<32x256xf32>
    %165 = arith.addf %164, %163 : vector<32x256xf32>
    %166 = arith.mulf %160, %165 : vector<32x256xf32>
    %167 = arith.truncf %166 : vector<32x256xf32> to vector<32x256xbf16>
    %c0_69 = arith.constant 0 : index
    %c0_70 = arith.constant 0 : index
    %c0_71 = arith.constant 0 : index
    %168 = vector.load %arg16[%c0_69, %c0_70, %c0_71] : memref<1x256x128xbf16, #tpu.memory_space<vmem>>, vector<1x256x128xbf16>
    %169 = vector.shape_cast %168 : vector<1x256x128xbf16> to vector<256x128xbf16>
    %cst_72 = arith.constant dense<0.000000e+00> : vector<32x128xf32>
    %170 = tpu.matmul %167, %169, %cst_72 {dimension_numbers = #tpu.dot_dimension_numbers<[1], [0], [0], [1], [0, 0, 1, 1], [], []>} : vector<32x256xbf16>, vector<256x128xbf16>, vector<32x128xf32> -> vector<32x128xf32>
    %c0_73 = arith.constant 0 : index
    %c0_74 = arith.constant 0 : index
    %c0_75 = arith.constant 0 : index
    %171 = vector.load %arg17[%c0_73, %c0_74, %c0_75] : memref<1x1x128xf32, #tpu.memory_space<vmem>>, vector<1x1x128xf32>
    %172 = vector.shape_cast %171 : vector<1x1x128xf32> to vector<1x128xf32>
    %173 = vector.broadcast %172 : vector<1x128xf32> to vector<32x128xf32>
    %174 = arith.addf %170, %173 : vector<32x128xf32>
    %175 = arith.addf %174, %150 : vector<32x128xf32>
    %c0_76 = arith.constant 0 : index
    %c0_77 = arith.constant 0 : index
    %c0_78 = arith.constant 0 : index
    %176 = vector.load %arg18[%c0_76, %c0_77, %c0_78] : memref<1x1x128xf32, #tpu.memory_space<vmem>>, vector<1x1x128xf32>
    %177 = vector.shape_cast %176 : vector<1x1x128xf32> to vector<1x128xf32>
    %c0_79 = arith.constant 0 : index
    %c0_80 = arith.constant 0 : index
    %c0_81 = arith.constant 0 : index
    %178 = vector.load %arg19[%c0_79, %c0_80, %c0_81] : memref<1x1x128xf32, #tpu.memory_space<vmem>>, vector<1x1x128xf32>
    %179 = vector.shape_cast %178 : vector<1x1x128xf32> to vector<1x128xf32>
    %cst_82 = arith.constant dense<0.000000e+00> : vector<32xf32>
    %180 = vector.multi_reduction <add>, %175, %cst_82 [1] : vector<32x128xf32> to vector<32xf32>
    %181 = vector.shape_cast %180 : vector<32xf32> to vector<32x1xf32>
    %cst_83 = arith.constant 1.280000e+02 : f32
    %182 = vector.broadcast %cst_83 : f32 to vector<32x1xf32>
    %183 = arith.divf %181, %182 : vector<32x1xf32>
    %184 = vector.broadcast %183 : vector<32x1xf32> to vector<32x128xf32>
    %185 = arith.subf %175, %184 : vector<32x128xf32>
    %186 = arith.mulf %185, %185 : vector<32x128xf32>
    %cst_84 = arith.constant dense<0.000000e+00> : vector<32xf32>
    %187 = vector.multi_reduction <add>, %186, %cst_84 [1] : vector<32x128xf32> to vector<32xf32>
    %188 = vector.shape_cast %187 : vector<32xf32> to vector<32x1xf32>
    %cst_85 = arith.constant 1.280000e+02 : f32
    %189 = vector.broadcast %cst_85 : f32 to vector<32x1xf32>
    %190 = arith.divf %188, %189 : vector<32x1xf32>
    %191 = vector.broadcast %183 : vector<32x1xf32> to vector<32x128xf32>
    %192 = arith.subf %175, %191 : vector<32x128xf32>
    %cst_86 = arith.constant 9.99999974E-6 : f32
    %193 = vector.broadcast %cst_86 : f32 to vector<32x1xf32>
    %194 = arith.addf %190, %193 : vector<32x1xf32>
    %195 = math.rsqrt %194 : vector<32x1xf32>
    %196 = vector.broadcast %195 : vector<32x1xf32> to vector<32x128xf32>
    %197 = arith.mulf %192, %196 : vector<32x128xf32>
    %198 = vector.broadcast %177 : vector<1x128xf32> to vector<32x128xf32>
    %199 = arith.mulf %197, %198 : vector<32x128xf32>
    %200 = vector.broadcast %179 : vector<1x128xf32> to vector<32x128xf32>
    %201 = arith.addf %199, %200 : vector<32x128xf32>
    %c0_87 = arith.constant 0 : index
    %c0_88 = arith.constant 0 : index
    %202 = vector.load %arg25[%c0_87, %c0_88] : memref<32x128xf32, #tpu.memory_space<vmem>>, vector<32x128xf32>
    tpu.vector_store %arg25[%c0_87, %c0_88], %201 {strides = array<i32>} : memref<32x128xf32, #tpu.memory_space<vmem>>, vector<32x128xf32>,
    %c1_i32 = arith.constant 1 : i32
    %203 = arith.cmpi eq, %arg1, %c1_i32 : i32
    %204 = arith.extui %203 : i1 to i32
    %c0_i32_89 = arith.constant 0 : i32
    %205 = arith.cmpi ne, %204, %c0_i32_89 : i32
    scf.if %205 {
      %206 = arith.truncf %201 : vector<32x128xf32> to vector<32x128xbf16>
      %c0_90 = arith.constant 0 : index
      %c0_91 = arith.constant 0 : index
      %207 = vector.load %arg20[%c0_90, %c0_91] : memref<128x128xbf16, #tpu.memory_space<vmem>>, vector<128x128xbf16>
      %cst_92 = arith.constant dense<0.000000e+00> : vector<32x128xf32>
      %208 = tpu.matmul %206, %207, %cst_92 {dimension_numbers = #tpu.dot_dimension_numbers<[1], [0], [0], [1], [0, 0, 1, 1], [], []>} : vector<32x128xbf16>, vector<128x128xbf16>, vector<32x128xf32> -> vector<32x128xf32>
      %c0_93 = arith.constant 0 : index
      %c0_94 = arith.constant 0 : index
      %209 = vector.load %arg21[%c0_93, %c0_94] : memref<1x128xf32, #tpu.memory_space<vmem>>, vector<1x128xf32>
      %210 = vector.broadcast %209 : vector<1x128xf32> to vector<32x128xf32>
      %211 = arith.addf %208, %210 : vector<32x128xf32>
      %cst_95 = arith.constant 5.000000e-01 : f32
      %212 = vector.broadcast %cst_95 : f32 to vector<32x128xf32>
      %213 = arith.mulf %211, %212 : vector<32x128xf32>
      %cst_96 = arith.constant 1.41421354 : f32
      %214 = vector.broadcast %cst_96 : f32 to vector<32x128xf32>
      %215 = arith.divf %211, %214 : vector<32x128xf32>
      %216 = math.erf %215 : vector<32x128xf32>
      %cst_97 = arith.constant 1.000000e+00 : f32
      %217 = vector.broadcast %cst_97 : f32 to vector<32x128xf32>
      %218 = arith.addf %217, %216 : vector<32x128xf32>
      %219 = arith.mulf %213, %218 : vector<32x128xf32>
      %c0_98 = arith.constant 0 : index
      %c0_99 = arith.constant 0 : index
      %220 = vector.load %arg22[%c0_98, %c0_99] : memref<1x128xf32, #tpu.memory_space<vmem>>, vector<1x128xf32>
      %c0_100 = arith.constant 0 : index
      %c0_101 = arith.constant 0 : index
      %221 = vector.load %arg23[%c0_100, %c0_101] : memref<1x128xf32, #tpu.memory_space<vmem>>, vector<1x128xf32>
      %cst_102 = arith.constant dense<0.000000e+00> : vector<32xf32>
      %222 = vector.multi_reduction <add>, %219, %cst_102 [1] : vector<32x128xf32> to vector<32xf32>
      %223 = vector.shape_cast %222 : vector<32xf32> to vector<32x1xf32>
      %cst_103 = arith.constant 1.280000e+02 : f32
      %224 = vector.broadcast %cst_103 : f32 to vector<32x1xf32>
      %225 = arith.divf %223, %224 : vector<32x1xf32>
      %226 = vector.broadcast %225 : vector<32x1xf32> to vector<32x128xf32>
      %227 = arith.subf %219, %226 : vector<32x128xf32>
      %228 = arith.mulf %227, %227 : vector<32x128xf32>
      %cst_104 = arith.constant dense<0.000000e+00> : vector<32xf32>
      %229 = vector.multi_reduction <add>, %228, %cst_104 [1] : vector<32x128xf32> to vector<32xf32>
      %230 = vector.shape_cast %229 : vector<32xf32> to vector<32x1xf32>
      %cst_105 = arith.constant 1.280000e+02 : f32
      %231 = vector.broadcast %cst_105 : f32 to vector<32x1xf32>
      %232 = arith.divf %230, %231 : vector<32x1xf32>
      %233 = vector.broadcast %225 : vector<32x1xf32> to vector<32x128xf32>
      %234 = arith.subf %219, %233 : vector<32x128xf32>
      %cst_106 = arith.constant 9.99999974E-6 : f32
      %235 = vector.broadcast %cst_106 : f32 to vector<32x1xf32>
      %236 = arith.addf %232, %235 : vector<32x1xf32>
      %237 = math.rsqrt %236 : vector<32x1xf32>
      %238 = vector.broadcast %237 : vector<32x1xf32> to vector<32x128xf32>
      %239 = arith.mulf %234, %238 : vector<32x128xf32>
      %240 = vector.broadcast %220 : vector<1x128xf32> to vector<32x128xf32>
      %241 = arith.mulf %239, %240 : vector<32x128xf32>
      %242 = vector.broadcast %221 : vector<1x128xf32> to vector<32x128xf32>
      %243 = arith.addf %241, %242 : vector<32x128xf32>
      %244 = arith.truncf %243 : vector<32x128xf32> to vector<32x128xbf16>
      %245 = vector.extract_strided_slice %244 {offsets = [0, 0], sizes = [16, 128], strides = [1, 1]} : vector<32x128xbf16> to vector<16x128xbf16>
      %c0_107 = arith.constant 0 : index
      %c0_108 = arith.constant 0 : index
      %c0_109 = arith.constant 0 : index
      %246 = vector.load %arg24[%c0_107, %c0_108, %c0_109] : memref<2x16x128xbf16, #tpu.memory_space<vmem>>, vector<1x16x128xbf16>
      %247 = vector.shape_cast %246 : vector<1x16x128xbf16> to vector<16x128xbf16>
      %248 = vector.shape_cast %245 : vector<16x128xbf16> to vector<1x16x128xbf16>
      tpu.vector_store %arg24[%c0_107, %c0_108, %c0_109], %248 {strides = array<i32>} : memref<2x16x128xbf16, #tpu.memory_space<vmem>>, vector<1x16x128xbf16>,
      %249 = vector.extract_strided_slice %244 {offsets = [16, 0], sizes = [16, 128], strides = [1, 1]} : vector<32x128xbf16> to vector<16x128xbf16>
      %c1_110 = arith.constant 1 : index
      %c0_111 = arith.constant 0 : index
      %c0_112 = arith.constant 0 : index
      %250 = vector.load %arg24[%c1_110, %c0_111, %c0_112] : memref<2x16x128xbf16, #tpu.memory_space<vmem>>, vector<1x16x128xbf16>
      %251 = vector.shape_cast %250 : vector<1x16x128xbf16> to vector<16x128xbf16>
      %252 = vector.shape_cast %249 : vector<16x128xbf16> to vector<1x16x128xbf16>
      tpu.vector_store %arg24[%c1_110, %c0_111, %c0_112], %252 {strides = array<i32>} : memref<2x16x128xbf16, #tpu.memory_space<vmem>>, vector<1x16x128xbf16>,
    } else {
    }
    return
  }
  func.func @transform_0(%arg0: i32, %arg1: i32) -> (i32, i32, i32) {
    %c0_i32 = arith.constant 0 : i32
    %c0_i32_0 = arith.constant 0 : i32
    %c0_i32_1 = arith.constant 0 : i32
    return %arg0, %c0_i32, %c0_i32_0 : i32, i32, i32
  }
  func.func @transform_1(%arg0: i32, %arg1: i32) -> (i32, i32, i32) {
    %c0_i32 = arith.constant 0 : i32
    %c0_i32_0 = arith.constant 0 : i32
    %c0_i32_1 = arith.constant 0 : i32
    %c0_i32_2 = arith.constant 0 : i32
    return %c0_i32, %c0_i32_0, %c0_i32_1 : i32, i32, i32
  }
  func.func @transform_2(%arg0: i32, %arg1: i32) -> (i32, i32, i32) {
    %c0_i32 = arith.constant 0 : i32
    %c0_i32_0 = arith.constant 0 : i32
    %c0_i32_1 = arith.constant 0 : i32
    return %arg0, %c0_i32, %c0_i32_0 : i32, i32, i32
  }
  func.func @transform_3(%arg0: i32, %arg1: i32) -> (i32, i32) {
    %c0_i32 = arith.constant 0 : i32
    %c0_i32_0 = arith.constant 0 : i32
    %c0_i32_1 = arith.constant 0 : i32
    return %c0_i32, %c0_i32_0 : i32, i32
  }
  func.func @transform_4(%arg0: i32, %arg1: i32) -> (i32, i32) {
    %c0_i32 = arith.constant 0 : i32
    %c0_i32_0 = arith.constant 0 : i32
    %c0_i32_1 = arith.constant 0 : i32
    return %c0_i32, %c0_i32_0 : i32, i32
  }
  func.func @transform_5(%arg0: i32, %arg1: i32) -> (i32, i32, i32) {
    %c0_i32 = arith.constant 0 : i32
    %c0_i32_0 = arith.constant 0 : i32
    %c0_i32_1 = arith.constant 0 : i32
    return %arg0, %c0_i32, %c0_i32_0 : i32, i32, i32
  }
  func.func @transform_6(%arg0: i32, %arg1: i32) -> (i32, i32, i32) {
    %c0_i32 = arith.constant 0 : i32
    %c0_i32_0 = arith.constant 0 : i32
    %c0_i32_1 = arith.constant 0 : i32
    return %arg1, %c0_i32, %c0_i32_0 : i32, i32, i32
  }
  func.func @transform_7(%arg0: i32, %arg1: i32) -> (i32, i32, i32) {
    %c0_i32 = arith.constant 0 : i32
    %c0_i32_0 = arith.constant 0 : i32
    %c0_i32_1 = arith.constant 0 : i32
    return %arg1, %c0_i32, %c0_i32_0 : i32, i32, i32
  }
  func.func @transform_8(%arg0: i32, %arg1: i32) -> (i32, i32, i32) {
    %c0_i32 = arith.constant 0 : i32
    %c0_i32_0 = arith.constant 0 : i32
    %c0_i32_1 = arith.constant 0 : i32
    return %arg1, %c0_i32, %c0_i32_0 : i32, i32, i32
  }
  func.func @transform_9(%arg0: i32, %arg1: i32) -> (i32, i32, i32) {
    %c0_i32 = arith.constant 0 : i32
    %c0_i32_0 = arith.constant 0 : i32
    %c0_i32_1 = arith.constant 0 : i32
    return %arg1, %c0_i32, %c0_i32_0 : i32, i32, i32
  }
  func.func @transform_10(%arg0: i32, %arg1: i32) -> (i32, i32, i32) {
    %c0_i32 = arith.constant 0 : i32
    %c0_i32_0 = arith.constant 0 : i32
    %c0_i32_1 = arith.constant 0 : i32
    return %arg1, %c0_i32, %c0_i32_0 : i32, i32, i32
  }
  func.func @transform_11(%arg0: i32, %arg1: i32) -> (i32, i32, i32) {
    %c0_i32 = arith.constant 0 : i32
    %c0_i32_0 = arith.constant 0 : i32
    %c0_i32_1 = arith.constant 0 : i32
    return %arg1, %c0_i32, %c0_i32_0 : i32, i32, i32
  }
  func.func @transform_12(%arg0: i32, %arg1: i32) -> (i32, i32, i32) {
    %c0_i32 = arith.constant 0 : i32
    %c0_i32_0 = arith.constant 0 : i32
    %c0_i32_1 = arith.constant 0 : i32
    return %arg1, %c0_i32, %c0_i32_0 : i32, i32, i32
  }
  func.func @transform_13(%arg0: i32, %arg1: i32) -> (i32, i32, i32) {
    %c0_i32 = arith.constant 0 : i32
    %c0_i32_0 = arith.constant 0 : i32
    %c0_i32_1 = arith.constant 0 : i32
    return %arg1, %c0_i32, %c0_i32_0 : i32, i32, i32
  }
  func.func @transform_14(%arg0: i32, %arg1: i32) -> (i32, i32, i32) {
    %c0_i32 = arith.constant 0 : i32
    %c0_i32_0 = arith.constant 0 : i32
    %c0_i32_1 = arith.constant 0 : i32
    return %arg1, %c0_i32, %c0_i32_0 : i32, i32, i32
  }
  func.func @transform_15(%arg0: i32, %arg1: i32) -> (i32, i32, i32) {
    %c0_i32 = arith.constant 0 : i32
    %c0_i32_0 = arith.constant 0 : i32
    %c0_i32_1 = arith.constant 0 : i32
    return %arg1, %c0_i32, %c0_i32_0 : i32, i32, i32
  }
  func.func @transform_16(%arg0: i32, %arg1: i32) -> (i32, i32, i32) {
    %c0_i32 = arith.constant 0 : i32
    %c0_i32_0 = arith.constant 0 : i32
    %c0_i32_1 = arith.constant 0 : i32
    return %arg1, %c0_i32, %c0_i32_0 : i32, i32, i32
  }
  func.func @transform_17(%arg0: i32, %arg1: i32) -> (i32, i32, i32) {
    %c0_i32 = arith.constant 0 : i32
    %c0_i32_0 = arith.constant 0 : i32
    %c0_i32_1 = arith.constant 0 : i32
    return %arg1, %c0_i32, %c0_i32_0 : i32, i32, i32
  }
  func.func @transform_18(%arg0: i32, %arg1: i32) -> (i32, i32) {
    %c0_i32 = arith.constant 0 : i32
    %c0_i32_0 = arith.constant 0 : i32
    %c0_i32_1 = arith.constant 0 : i32
    return %c0_i32, %c0_i32_0 : i32, i32
  }
  func.func @transform_19(%arg0: i32, %arg1: i32) -> (i32, i32) {
    %c0_i32 = arith.constant 0 : i32
    %c0_i32_0 = arith.constant 0 : i32
    %c0_i32_1 = arith.constant 0 : i32
    return %c0_i32, %c0_i32_0 : i32, i32
  }
  func.func @transform_20(%arg0: i32, %arg1: i32) -> (i32, i32) {
    %c0_i32 = arith.constant 0 : i32
    %c0_i32_0 = arith.constant 0 : i32
    %c0_i32_1 = arith.constant 0 : i32
    return %c0_i32, %c0_i32_0 : i32, i32
  }
  func.func @transform_21(%arg0: i32, %arg1: i32) -> (i32, i32) {
    %c0_i32 = arith.constant 0 : i32
    %c0_i32_0 = arith.constant 0 : i32
    %c0_i32_1 = arith.constant 0 : i32
    return %c0_i32, %c0_i32_0 : i32, i32
  }
  func.func @transform_22(%arg0: i32, %arg1: i32) -> (i32, i32, i32) {
    %c0_i32 = arith.constant 0 : i32
    %c0_i32_0 = arith.constant 0 : i32
    %c0_i32_1 = arith.constant 0 : i32
    return %arg0, %c0_i32, %c0_i32_0 : i32, i32, i32
  }
}

</mosaic_0001>

<llo_original>
// kernel: tpu_custom_call.1
$region0: #{tpu_custom_call.1}
  #allocation0 [shape = 'u32[]', space=smem, size = 0x4, offset = 0x4, fixed_abs, tag = 'smem constant byte address 0x4 - core index']
  #allocation1 [shape = 'u32[72,128]{1,0:T(1,128)}', space=vmem, size = 0x9000, scoped, tag = 'internal scratch']
  #allocation2 [shape = 'f32[32,128]{1,0:T(8,128)}', space=vmem, size = 0x4000, scoped, tag = 'scratch operand']
  #allocation3 [shape = 'bf16[32,128]{1,0:T(8,128)(2,1)}', space=vmem, size = 0x2000, scoped, tag = 'scratch operand']
  %s0 = inlined_call_operand.hbm [shape: f32[2,16,128], index: 0, kind: input, shape index: {}]
  %s1 = inlined_call_operand.hbm [shape: f32[1,16,128], index: 1, kind: input, shape index: {}]
  %s2 = inlined_call_operand.hbm [shape: f32[2,16,128], index: 2, kind: input, shape index: {}]
  %s3 = inlined_call_operand.hbm [shape: f32[1,128], index: 3, kind: input, shape index: {}]
  %s4 = inlined_call_operand.hbm [shape: f32[1,128], index: 4, kind: input, shape index: {}]
  %s5 = inlined_call_operand.hbm [shape: f32[2,1,16], index: 5, kind: input, shape index: {}]
  %s6 = inlined_call_operand.hbm [shape: bf16[2,128,384], index: 6, kind: input, shape index: {}]
  %s7 = inlined_call_operand.vmem [shape: f32[2,1,384], index: 7, kind: input, shape index: {}]
  %s8 = inlined_call_operand.hbm [shape: bf16[2,128,128], index: 8, kind: input, shape index: {}]
  %s9 = inlined_call_operand.hbm [shape: f32[2,1,128], index: 9, kind: input, shape index: {}]
  %s10 = inlined_call_operand.hbm [shape: f32[2,1,128], index: 10, kind: input, shape index: {}]
  %s11 = inlined_call_operand.hbm [shape: f32[2,1,128], index: 11, kind: input, shape index: {}]
  %s12 = inlined_call_operand.hbm [shape: bf16[2,128,256], index: 12, kind: input, shape index: {}]
  %s13 = inlined_call_operand.vmem [shape: f32[2,1,256], index: 13, kind: input, shape index: {}]
  %s14 = inlined_call_operand.hbm [shape: bf16[2,256,128], index: 14, kind: input, shape index: {}]
  %s15 = inlined_call_operand.vmem [shape: f32[2,1,128], index: 15, kind: input, shape index: {}]
  %s16 = inlined_call_operand.vmem [shape: f32[2,1,128], index: 16, kind: input, shape index: {}]
  %s17 = inlined_call_operand.vmem [shape: f32[2,1,128], index: 17, kind: input, shape index: {}]
  %s18 = inlined_call_operand.hbm [shape: bf16[128,128], index: 18, kind: input, shape index: {}]
  %s19 = inlined_call_operand.vmem [shape: f32[1,128], index: 19, kind: input, shape index: {}]
  %s20 = inlined_call_operand.vmem [shape: f32[1,128], index: 20, kind: input, shape index: {}]
  %s21 = inlined_call_operand.vmem [shape: f32[1,128], index: 21, kind: input, shape index: {}]
  %s22 = inlined_call_operand.hbm [shape: bf16[2,16,128], index: 22, kind: output, shape index: {}]
  %s23 = sld [smem:[#allocation0]]
  $region185: #{tpu_custom_call.1} parent=0
    _
  %s25 = ssub.s32 1, %s23
  %s26 = scalar_select 0, %s25, %s23
  $region1: #{tpu_custom_call.1} parent=0
    #allocation4 [shape = 'u8[16384]{0}', space=vmem, size = 0x4000, scoped, tag = 'input window, operand 0, single buffered']
    #allocation5 [shape = 's32[2]{0}', space=sflag, size = 0x8, scoped, tag = 'scoped memory for tpu_custom_call.1']
    #allocation6 [shape = 's32[2]{0}', space=sflag, size = 0x8, scoped, tag = 'scoped memory for tpu_custom_call.1']
    #allocation7 [shape = 'u8[8192]{0}', space=vmem, size = 0x2000, scoped, tag = 'input window, operand 1, single buffered']
    #allocation8 [shape = 's32[1]{0}', space=sflag, size = 0x4, scoped, tag = 'scoped memory for tpu_custom_call.1']
    #allocation9 [shape = 'u8[16384]{0}', space=vmem, size = 0x4000, scoped, tag = 'input window, operand 2, single buffered']
    #allocation10 [shape = 'u8[512]{0}', space=vmem, size = 0x400, scoped, tag = 'input window, operand 3, single buffered']
    #allocation11 [shape = 's32[1]{0}', space=sflag, size = 0x4, scoped, tag = 'scoped memory for tpu_custom_call.1']
    #allocation12 [shape = 'u8[512]{0}', space=vmem, size = 0x400, scoped, tag = 'input window, operand 4, single buffered']
    #allocation13 [shape = 'u8[1024]{0}', space=vmem, size = 0x400, scoped, tag = 'input window, operand 5, single buffered']
    #allocation14 [shape = 's32[1]{0}', space=sflag, size = 0x4, scoped, tag = 'scoped memory for tpu_custom_call.1']
    #allocation15 [shape = 'u8[196608]{0}', space=vmem, size = 0x30000, scoped, tag = 'input window, operand 6']
    #allocation16 [shape = 'u8[65536]{0}', space=vmem, size = 0x10000, scoped, tag = 'input window, operand 8']
    #allocation17 [shape = 'u8[1024]{0}', space=vmem, size = 0x400, scoped, tag = 'input window, operand 9']
    #allocation18 [shape = 'u8[1024]{0}', space=vmem, size = 0x400, scoped, tag = 'input window, operand 10']
    #allocation19 [shape = 'u8[1024]{0}', space=vmem, size = 0x400, scoped, tag = 'input window, operand 11']
    #allocation20 [shape = 'u8[131072]{0}', space=vmem, size = 0x20000, scoped, tag = 'input window, operand 12']
    #allocation21 [shape = 'u8[131072]{0}', space=vmem, size = 0x20000, scoped, tag = 'input window, operand 14']
    #allocation22 [shape = 'u8[32768]{0}', space=vmem, size = 0x8000, scoped, tag = 'input window, operand 18, single buffered']
    #allocation23 [shape = 'u8[8192]{0}', space=vmem, size = 0x2000, scoped, tag = 'output window, operand 0, single buffered']
    %27 = vsyncpa [#allocation5], 0
    %28 = vsyncpa [#allocation8], 0
    %29 = vsyncpa [#allocation11], 0
    %30 = vsyncpa [#allocation14], 0
    %31 = vsyncpa [#allocation6], 0
    loop: start=0, step=1, limit=4
    $region2: #{tpu_custom_call.1} parent=1 // loop_pre_header
      _
    $region3: #{tpu_custom_call.1} parent=1 // loop_header
      %s33 = sphi 0, %s37
      %p34 = scmp.ge.s32.totalorder %s33, 4
      %s40 = sphi 0, %s52
      %s41 = sphi 0, %s48
      %s42 = sphi 0, %s40
      %s43 = sphi 0, %s41
      %s44 = sphi 0, %s42
      %s45 = sphi 0, %s43
      %s55 = sphi 0, %s57
      %s58 = sphi 0, %s55
      %s59 = sphi 0, %s58
      %s75 = sphi 0, %s59
      %s79 = sphi 0, %s79
      %s81 = sphi 0, %s79
      %s82 = sphi 0, %s81
      %s96 = sphi 0, %s82
      %s102 = sphi 0, %s104
      %s105 = sphi 0, %s102
      %s106 = sphi 0, %s105
      %s122 = sphi 0, %s106
      %s126 = sphi 0, %s126
      %s128 = sphi 0, %s126
      %s129 = sphi 0, %s128
      %s143 = sphi 0, %s129
      %s147 = sphi 0, %s147
      %s149 = sphi 0, %s147
      %s150 = sphi 0, %s149
      %s164 = sphi 0, %s150
      %s170 = sphi 0, %s172
      %s173 = sphi 0, %s170
      %s174 = sphi 0, %s173
      %s190 = sphi 0, %s174
      %s196 = sphi 0, %s198
      %s199 = sphi 0, %s196
      %s200 = sphi 0, %s199
      %s216 = sphi 0, %s200
      %s222 = sphi 0, %s224
      %s225 = sphi 0, %s222
      %s226 = sphi 0, %s225
      %s242 = sphi 0, %s226
      %s248 = sphi 0, %s250
      %s251 = sphi 0, %s248
      %s252 = sphi 0, %s251
      %s268 = sphi 0, %s252
      %s274 = sphi 0, %s276
      %s277 = sphi 0, %s274
      %s278 = sphi 0, %s277
      %s294 = sphi 0, %s278
      %s300 = sphi 0, %s302
      %s303 = sphi 0, %s300
      %s304 = sphi 0, %s303
      %s320 = sphi 0, %s304
      %s326 = sphi 0, %s328
      %s329 = sphi 0, %s326
      %s330 = sphi 0, %s329
      %s346 = sphi 0, %s330
      %s352 = sphi 0, %s354
      %s355 = sphi 0, %s352
      %s356 = sphi 0, %s355
      %s372 = sphi 0, %s356
      %s378 = sphi 0, %s380
      %s381 = sphi 0, %s378
      %s382 = sphi 0, %s381
      %s398 = sphi 0, %s382
      %s404 = sphi 0, %s406
      %s407 = sphi 0, %s404
      %s408 = sphi 0, %s407
      %s424 = sphi 0, %s408
      %s430 = sphi 0, %s432
      %s433 = sphi 0, %s430
      %s434 = sphi 0, %s433
      %s450 = sphi 0, %s434
      %s456 = sphi 0, %s458
      %s459 = sphi 0, %s456
      %s460 = sphi 0, %s459
      %s476 = sphi 0, %s460
      %s482 = sphi 0, %s484
      %s485 = sphi 0, %s482
      %s486 = sphi 0, %s485
      %s502 = sphi 0, %s486
      %s506 = sphi 0, %s506
      %s508 = sphi 0, %s506
      %s509 = sphi 0, %s508
      %s523 = sphi 0, %s509
      %s527 = sphi 0, %s527
      %s529 = sphi 0, %s527
      %s530 = sphi 0, %s529
      %s544 = sphi 0, %s530
      %s548 = sphi 0, %s548
      %s550 = sphi 0, %s548
      %s551 = sphi 0, %s550
      %s565 = sphi 0, %s551
      %s569 = sphi 0, %s569
      %s571 = sphi 0, %s569
      %s572 = sphi 0, %s571
      %s586 = sphi 0, %s572
      %s592 = sphi 0, %s594
      %s595 = sphi 0, %s592
      %s596 = sphi 0, %s595
      %s612 = sphi 0, %s596
    $region4: #{tpu_custom_call.1} parent=1 // loop_header_branch
      %36 = sbr.rel (%p34) target = $region8
    $region5: #{tpu_custom_call.1} parent=1 // loop_body
      %s38 = ssub.s32 %s33, 1
      %s39 = ssub.s32 %s33, 2
      %s46 = sadd.s32 1, %s41
      %p47 = scmp.ge.s32.totalorder %s46, 2
      %s48 = scalar_select %p47, 0, %s46
      %s49 = sadd.s32 1, %s40
      %s50 = scalar_select %p47, %s49, %s40
      %p51 = scmp.ge.s32.totalorder %s50, 1
      %s52 = scalar_select %p51, 0, %s50
      %s53 = ssub.s32 %s40, %s52
      %p54 = scmp.eq.s32.totalorder %s53, 0
      %s56 = sadd.s32 %s55, 1
      %s57 = scalar_select %p54, %s55, %s56
      %p60 = pneg %p54
      %p61 = scmp.eq.s32.totalorder %s33, 1
      %p62 = por %p60, %p61
      %p63 = scmp.ne.s32.totalorder %s55, %s58
      %p64 = scmp.eq.s32.totalorder %s33, 0
      %p65 = por %p63, %p64
      %p66 = scmp.ne.s32.totalorder %s55, %s58
      %p67 = scmp.eq.s32.totalorder %s38, 1
      %p68 = por %p66, %p67
      %p69 = scmp.ne.s32.totalorder %s58, %s59
      %p70 = scmp.eq.s32.totalorder %s38, 0
      %p71 = por %p69, %p70
      %p72 = scmp.ne.s32.totalorder %s58, %s59
      %p73 = scmp.eq.s32.totalorder %s39, 1
      %p74 = por %p72, %p73
      %p76 = scmp.ne.s32.totalorder %s59, %s75
      %p77 = scmp.eq.s32.totalorder %s39, 0
      %p78 = por %p76, %p77
      %s80 = sadd.s32 %s79, 1
      %p83 = scmp.eq.s32.totalorder %s33, 1
      %p84 = scmp.ne.s32.totalorder %s79, %s81
      %p85 = scmp.eq.s32.totalorder %s33, 0
      %p86 = por %p84, %p85
      %p87 = scmp.ne.s32.totalorder %s79, %s81
      %p88 = scmp.eq.s32.totalorder %s38, 1
      %p89 = por %p87, %p88
      %p90 = scmp.ne.s32.totalorder %s81, %s82
      %p91 = scmp.eq.s32.totalorder %s38, 0
      %p92 = por %p90, %p91
      %p93 = scmp.ne.s32.totalorder %s81, %s82
      %p94 = scmp.eq.s32.totalorder %s39, 1
      %p95 = por %p93, %p94
      %p97 = scmp.ne.s32.totalorder %s82, %s96
      %p98 = scmp.eq.s32.totalorder %s39, 0
      %p99 = por %p97, %p98
      %s100 = ssub.s32 %s40, %s52
      %p101 = scmp.eq.s32.totalorder %s100, 0
      %s103 = sadd.s32 %s102, 1
      %s104 = scalar_select %p101, %s102, %s103
      %p107 = pneg %p101
      %p108 = scmp.eq.s32.totalorder %s33, 1
      %p109 = por %p107, %p108
      %p110 = scmp.ne.s32.totalorder %s102, %s105
      %p111 = scmp.eq.s32.totalorder %s33, 0
      %p112 = por %p110, %p111
      %p113 = scmp.ne.s32.totalorder %s102, %s105
      %p114 = scmp.eq.s32.totalorder %s38, 1
      %p115 = por %p113, %p114
      %p116 = scmp.ne.s32.totalorder %s105, %s106
      %p117 = scmp.eq.s32.totalorder %s38, 0
      %p118 = por %p116, %p117
      %p119 = scmp.ne.s32.totalorder %s105, %s106
      %p120 = scmp.eq.s32.totalorder %s39, 1
      %p121 = por %p119, %p120
      %p123 = scmp.ne.s32.totalorder %s106, %s122
      %p124 = scmp.eq.s32.totalorder %s39, 0
      %p125 = por %p123, %p124
      %s127 = sadd.s32 %s126, 1
      %p130 = scmp.eq.s32.totalorder %s33, 1
      %p131 = scmp.ne.s32.totalorder %s126, %s128
      %p132 = scmp.eq.s32.totalorder %s33, 0
      %p133 = por %p131, %p132
      %p134 = scmp.ne.s32.totalorder %s126, %s128
      %p135 = scmp.eq.s32.totalorder %s38, 1
      %p136 = por %p134, %p135
      %p137 = scmp.ne.s32.totalorder %s128, %s129
      %p138 = scmp.eq.s32.totalorder %s38, 0
      %p139 = por %p137, %p138
      %p140 = scmp.ne.s32.totalorder %s128, %s129
      %p141 = scmp.eq.s32.totalorder %s39, 1
      %p142 = por %p140, %p141
      %p144 = scmp.ne.s32.totalorder %s129, %s143
      %p145 = scmp.eq.s32.totalorder %s39, 0
      %p146 = por %p144, %p145
      %s148 = sadd.s32 %s147, 1
      %p151 = scmp.eq.s32.totalorder %s33, 1
      %p152 = scmp.ne.s32.totalorder %s147, %s149
      %p153 = scmp.eq.s32.totalorder %s33, 0
      %p154 = por %p152, %p153
      %p155 = scmp.ne.s32.totalorder %s147, %s149
      %p156 = scmp.eq.s32.totalorder %s38, 1
      %p157 = por %p155, %p156
      %p158 = scmp.ne.s32.totalorder %s149, %s150
      %p159 = scmp.eq.s32.totalorder %s38, 0
      %p160 = por %p158, %p159
      %p161 = scmp.ne.s32.totalorder %s149, %s150
      %p162 = scmp.eq.s32.totalorder %s39, 1
      %p163 = por %p161, %p162
      %p165 = scmp.ne.s32.totalorder %s150, %s164
      %p166 = scmp.eq.s32.totalorder %s39, 0
      %p167 = por %p165, %p166
      %s168 = ssub.s32 %s40, %s52
      %p169 = scmp.eq.s32.totalorder %s168, 0
      %s171 = sadd.s32 %s170, 1
      %s172 = scalar_select %p169, %s170, %s171
      %p175 = pneg %p169
      %p176 = scmp.eq.s32.totalorder %s33, 1
      %p177 = por %p175, %p176
      %p178 = scmp.ne.s32.totalorder %s170, %s173
      %p179 = scmp.eq.s32.totalorder %s33, 0
      %p180 = por %p178, %p179
      %p181 = scmp.ne.s32.totalorder %s170, %s173
      %p182 = scmp.eq.s32.totalorder %s38, 1
      %p183 = por %p181, %p182
      %p184 = scmp.ne.s32.totalorder %s173, %s174
      %p185 = scmp.eq.s32.totalorder %s38, 0
      %p186 = por %p184, %p185
      %p187 = scmp.ne.s32.totalorder %s173, %s174
      %p188 = scmp.eq.s32.totalorder %s39, 1
      %p189 = por %p187, %p188
      %p191 = scmp.ne.s32.totalorder %s174, %s190
      %p192 = scmp.eq.s32.totalorder %s39, 0
      %p193 = por %p191, %p192
      %s194 = ssub.s32 %s41, %s48
      %p195 = scmp.eq.s32.totalorder %s194, 0
      %s197 = sadd.s32 %s196, 1
      %s198 = scalar_select %p195, %s196, %s197
      %p201 = pneg %p195
      %p202 = scmp.eq.s32.totalorder %s33, 1
      %p203 = por %p201, %p202
      %p204 = scmp.ne.s32.totalorder %s196, %s199
      %p205 = scmp.eq.s32.totalorder %s33, 0
      %p206 = por %p204, %p205
      %p207 = scmp.ne.s32.totalorder %s196, %s199
      %p208 = scmp.eq.s32.totalorder %s38, 1
      %p209 = por %p207, %p208
      %p210 = scmp.ne.s32.totalorder %s199, %s200
      %p211 = scmp.eq.s32.totalorder %s38, 0
      %p212 = por %p210, %p211
      %p213 = scmp.ne.s32.totalorder %s199, %s200
      %p214 = scmp.eq.s32.totalorder %s39, 1
      %p215 = por %p213, %p214
      %p217 = scmp.ne.s32.totalorder %s200, %s216
      %p218 = scmp.eq.s32.totalorder %s39, 0
      %p219 = por %p217, %p218
      %s220 = ssub.s32 %s41, %s48
      %p221 = scmp.eq.s32.totalorder %s220, 0
      %s223 = sadd.s32 %s222, 1
      %s224 = scalar_select %p221, %s222, %s223
      %p227 = pneg %p221
      %p228 = scmp.eq.s32.totalorder %s33, 1
      %p229 = por %p227, %p228
      %p230 = scmp.ne.s32.totalorder %s222, %s225
      %p231 = scmp.eq.s32.totalorder %s33, 0
      %p232 = por %p230, %p231
      %p233 = scmp.ne.s32.totalorder %s222, %s225
      %p234 = scmp.eq.s32.totalorder %s38, 1
      %p235 = por %p233, %p234
      %p236 = scmp.ne.s32.totalorder %s225, %s226
      %p237 = scmp.eq.s32.totalorder %s38, 0
      %p238 = por %p236, %p237
      %p239 = scmp.ne.s32.totalorder %s225, %s226
      %p240 = scmp.eq.s32.totalorder %s39, 1
      %p241 = por %p239, %p240
      %p243 = scmp.ne.s32.totalorder %s226, %s242
      %p244 = scmp.eq.s32.totalorder %s39, 0
      %p245 = por %p243, %p244
      %s246 = ssub.s32 %s41, %s48
      %p247 = scmp.eq.s32.totalorder %s246, 0
      %s249 = sadd.s32 %s248, 1
      %s250 = scalar_select %p247, %s248, %s249
      %p253 = pneg %p247
      %p254 = scmp.eq.s32.totalorder %s33, 1
      %p255 = por %p253, %p254
      %p256 = scmp.ne.s32.totalorder %s248, %s251
      %p257 = scmp.eq.s32.totalorder %s33, 0
      %p258 = por %p256, %p257
      %p259 = scmp.ne.s32.totalorder %s248, %s251
      %p260 = scmp.eq.s32.totalorder %s38, 1
      %p261 = por %p259, %p260
      %p262 = scmp.ne.s32.totalorder %s251, %s252
      %p263 = scmp.eq.s32.totalorder %s38, 0
      %p264 = por %p262, %p263
      %p265 = scmp.ne.s32.totalorder %s251, %s252
      %p266 = scmp.eq.s32.totalorder %s39, 1
      %p267 = por %p265, %p266
      %p269 = scmp.ne.s32.totalorder %s252, %s268
      %p270 = scmp.eq.s32.totalorder %s39, 0
      %p271 = por %p269, %p270
      %s272 = ssub.s32 %s41, %s48
      %p273 = scmp.eq.s32.totalorder %s272, 0
      %s275 = sadd.s32 %s274, 1
      %s276 = scalar_select %p273, %s274, %s275
      %p279 = pneg %p273
      %p280 = scmp.eq.s32.totalorder %s33, 1
      %p281 = por %p279, %p280
      %p282 = scmp.ne.s32.totalorder %s274, %s277
      %p283 = scmp.eq.s32.totalorder %s33, 0
      %p284 = por %p282, %p283
      %p285 = scmp.ne.s32.totalorder %s274, %s277
      %p286 = scmp.eq.s32.totalorder %s38, 1
      %p287 = por %p285, %p286
      %p288 = scmp.ne.s32.totalorder %s277, %s278
      %p289 = scmp.eq.s32.totalorder %s38, 0
      %p290 = por %p288, %p289
      %p291 = scmp.ne.s32.totalorder %s277, %s278
      %p292 = scmp.eq.s32.totalorder %s39, 1
      %p293 = por %p291, %p292
      %p295 = scmp.ne.s32.totalorder %s278, %s294
      %p296 = scmp.eq.s32.totalorder %s39, 0
      %p297 = por %p295, %p296
      %s298 = ssub.s32 %s41, %s48
      %p299 = scmp.eq.s32.totalorder %s298, 0
      %s301 = sadd.s32 %s300, 1
      %s302 = scalar_select %p299, %s300, %s301
      %p305 = pneg %p299
      %p306 = scmp.eq.s32.totalorder %s33, 1
      %p307 = por %p305, %p306
      %p308 = scmp.ne.s32.totalorder %s300, %s303
      %p309 = scmp.eq.s32.totalorder %s33, 0
      %p310 = por %p308, %p309
      %p311 = scmp.ne.s32.totalorder %s300, %s303
      %p312 = scmp.eq.s32.totalorder %s38, 1
      %p313 = por %p311, %p312
      %p314 = scmp.ne.s32.totalorder %s303, %s304
      %p315 = scmp.eq.s32.totalorder %s38, 0
      %p316 = por %p314, %p315
      %p317 = scmp.ne.s32.totalorder %s303, %s304
      %p318 = scmp.eq.s32.totalorder %s39, 1
      %p319 = por %p317, %p318
      %p321 = scmp.ne.s32.totalorder %s304, %s320
      %p322 = scmp.eq.s32.totalorder %s39, 0
      %p323 = por %p321, %p322
      %s324 = ssub.s32 %s41, %s48
      %p325 = scmp.eq.s32.totalorder %s324, 0
      %s327 = sadd.s32 %s326, 1
      %s328 = scalar_select %p325, %s326, %s327
      %p331 = pneg %p325
      %p332 = scmp.eq.s32.totalorder %s33, 1
      %p333 = por %p331, %p332
      %p334 = scmp.ne.s32.totalorder %s326, %s329
      %p335 = scmp.eq.s32.totalorder %s33, 0
      %p336 = por %p334, %p335
      %p337 = scmp.ne.s32.totalorder %s326, %s329
      %p338 = scmp.eq.s32.totalorder %s38, 1
      %p339 = por %p337, %p338
      %p340 = scmp.ne.s32.totalorder %s329, %s330
      %p341 = scmp.eq.s32.totalorder %s38, 0
      %p342 = por %p340, %p341
      %p343 = scmp.ne.s32.totalorder %s329, %s330
      %p344 = scmp.eq.s32.totalorder %s39, 1
      %p345 = por %p343, %p344
      %p347 = scmp.ne.s32.totalorder %s330, %s346
      %p348 = scmp.eq.s32.totalorder %s39, 0
      %p349 = por %p347, %p348
      %s350 = ssub.s32 %s41, %s48
      %p351 = scmp.eq.s32.totalorder %s350, 0
      %s353 = sadd.s32 %s352, 1
      %s354 = scalar_select %p351, %s352, %s353
      %p357 = pneg %p351
      %p358 = scmp.eq.s32.totalorder %s33, 1
      %p359 = por %p357, %p358
      %p360 = scmp.ne.s32.totalorder %s352, %s355
      %p361 = scmp.eq.s32.totalorder %s33, 0
      %p362 = por %p360, %p361
      %p363 = scmp.ne.s32.totalorder %s352, %s355
      %p364 = scmp.eq.s32.totalorder %s38, 1
      %p365 = por %p363, %p364
      %p366 = scmp.ne.s32.totalorder %s355, %s356
      %p367 = scmp.eq.s32.totalorder %s38, 0
      %p368 = por %p366, %p367
      %p369 = scmp.ne.s32.totalorder %s355, %s356
      %p370 = scmp.eq.s32.totalorder %s39, 1
      %p371 = por %p369, %p370
      %p373 = scmp.ne.s32.totalorder %s356, %s372
      %p374 = scmp.eq.s32.totalorder %s39, 0
      %p375 = por %p373, %p374
      %s376 = ssub.s32 %s41, %s48
      %p377 = scmp.eq.s32.totalorder %s376, 0
      %s379 = sadd.s32 %s378, 1
      %s380 = scalar_select %p377, %s378, %s379
      %p383 = pneg %p377
      %p384 = scmp.eq.s32.totalorder %s33, 1
      %p385 = por %p383, %p384
      %p386 = scmp.ne.s32.totalorder %s378, %s381
      %p387 = scmp.eq.s32.totalorder %s33, 0
      %p388 = por %p386, %p387
      %p389 = scmp.ne.s32.totalorder %s378, %s381
      %p390 = scmp.eq.s32.totalorder %s38, 1
      %p391 = por %p389, %p390
      %p392 = scmp.ne.s32.totalorder %s381, %s382
      %p393 = scmp.eq.s32.totalorder %s38, 0
      %p394 = por %p392, %p393
      %p395 = scmp.ne.s32.totalorder %s381, %s382
      %p396 = scmp.eq.s32.totalorder %s39, 1
      %p397 = por %p395, %p396
      %p399 = scmp.ne.s32.totalorder %s382, %s398
      %p400 = scmp.eq.s32.totalorder %s39, 0
      %p401 = por %p399, %p400
      %s402 = ssub.s32 %s41, %s48
      %p403 = scmp.eq.s32.totalorder %s402, 0
      %s405 = sadd.s32 %s404, 1
      %s406 = scalar_select %p403, %s404, %s405
      %p409 = pneg %p403
      %p410 = scmp.eq.s32.totalorder %s33, 1
      %p411 = por %p409, %p410
      %p412 = scmp.ne.s32.totalorder %s404, %s407
      %p413 = scmp.eq.s32.totalorder %s33, 0
      %p414 = por %p412, %p413
      %p415 = scmp.ne.s32.totalorder %s404, %s407
      %p416 = scmp.eq.s32.totalorder %s38, 1
      %p417 = por %p415, %p416
      %p418 = scmp.ne.s32.totalorder %s407, %s408
      %p419 = scmp.eq.s32.totalorder %s38, 0
      %p420 = por %p418, %p419
      %p421 = scmp.ne.s32.totalorder %s407, %s408
      %p422 = scmp.eq.s32.totalorder %s39, 1
      %p423 = por %p421, %p422
      %p425 = scmp.ne.s32.totalorder %s408, %s424
      %p426 = scmp.eq.s32.totalorder %s39, 0
      %p427 = por %p425, %p426
      %s428 = ssub.s32 %s41, %s48
      %p429 = scmp.eq.s32.totalorder %s428, 0
      %s431 = sadd.s32 %s430, 1
      %s432 = scalar_select %p429, %s430, %s431
      %p435 = pneg %p429
      %p436 = scmp.eq.s32.totalorder %s33, 1
      %p437 = por %p435, %p436
      %p438 = scmp.ne.s32.totalorder %s430, %s433
      %p439 = scmp.eq.s32.totalorder %s33, 0
      %p440 = por %p438, %p439
      %p441 = scmp.ne.s32.totalorder %s430, %s433
      %p442 = scmp.eq.s32.totalorder %s38, 1
      %p443 = por %p441, %p442
      %p444 = scmp.ne.s32.totalorder %s433, %s434
      %p445 = scmp.eq.s32.totalorder %s38, 0
      %p446 = por %p444, %p445
      %p447 = scmp.ne.s32.totalorder %s433, %s434
      %p448 = scmp.eq.s32.totalorder %s39, 1
      %p449 = por %p447, %p448
      %p451 = scmp.ne.s32.totalorder %s434, %s450
      %p452 = scmp.eq.s32.totalorder %s39, 0
      %p453 = por %p451, %p452
      %s454 = ssub.s32 %s41, %s48
      %p455 = scmp.eq.s32.totalorder %s454, 0
      %s457 = sadd.s32 %s456, 1
      %s458 = scalar_select %p455, %s456, %s457
      %p461 = pneg %p455
      %p462 = scmp.eq.s32.totalorder %s33, 1
      %p463 = por %p461, %p462
      %p464 = scmp.ne.s32.totalorder %s456, %s459
      %p465 = scmp.eq.s32.totalorder %s33, 0
      %p466 = por %p464, %p465
      %p467 = scmp.ne.s32.totalorder %s456, %s459
      %p468 = scmp.eq.s32.totalorder %s38, 1
      %p469 = por %p467, %p468
      %p470 = scmp.ne.s32.totalorder %s459, %s460
      %p471 = scmp.eq.s32.totalorder %s38, 0
      %p472 = por %p470, %p471
      %p473 = scmp.ne.s32.totalorder %s459, %s460
      %p474 = scmp.eq.s32.totalorder %s39, 1
      %p475 = por %p473, %p474
      %p477 = scmp.ne.s32.totalorder %s460, %s476
      %p478 = scmp.eq.s32.totalorder %s39, 0
      %p479 = por %p477, %p478
      %s480 = ssub.s32 %s41, %s48
      %p481 = scmp.eq.s32.totalorder %s480, 0
      %s483 = sadd.s32 %s482, 1
      %s484 = scalar_select %p481, %s482, %s483
      %p487 = pneg %p481
      %p488 = scmp.eq.s32.totalorder %s33, 1
      %p489 = por %p487, %p488
      %p490 = scmp.ne.s32.totalorder %s482, %s485
      %p491 = scmp.eq.s32.totalorder %s33, 0
      %p492 = por %p490, %p491
      %p493 = scmp.ne.s32.totalorder %s482, %s485
      %p494 = scmp.eq.s32.totalorder %s38, 1
      %p495 = por %p493, %p494
      %p496 = scmp.ne.s32.totalorder %s485, %s486
      %p497 = scmp.eq.s32.totalorder %s38, 0
      %p498 = por %p496, %p497
      %p499 = scmp.ne.s32.totalorder %s485, %s486
      %p500 = scmp.eq.s32.totalorder %s39, 1
      %p501 = por %p499, %p500
      %p503 = scmp.ne.s32.totalorder %s486, %s502
      %p504 = scmp.eq.s32.totalorder %s39, 0
      %p505 = por %p503, %p504
      %s507 = sadd.s32 %s506, 1
      %p510 = scmp.eq.s32.totalorder %s33, 1
      %p511 = scmp.ne.s32.totalorder %s506, %s508
      %p512 = scmp.eq.s32.totalorder %s33, 0
      %p513 = por %p511, %p512
      %p514 = scmp.ne.s32.totalorder %s506, %s508
      %p515 = scmp.eq.s32.totalorder %s38, 1
      %p516 = por %p514, %p515
      %p517 = scmp.ne.s32.totalorder %s508, %s509
      %p518 = scmp.eq.s32.totalorder %s38, 0
      %p519 = por %p517, %p518
      %p520 = scmp.ne.s32.totalorder %s508, %s509
      %p521 = scmp.eq.s32.totalorder %s39, 1
      %p522 = por %p520, %p521
      %p524 = scmp.ne.s32.totalorder %s509, %s523
      %p525 = scmp.eq.s32.totalorder %s39, 0
      %p526 = por %p524, %p525
      %s528 = sadd.s32 %s527, 1
      %p531 = scmp.eq.s32.totalorder %s33, 1
      %p532 = scmp.ne.s32.totalorder %s527, %s529
      %p533 = scmp.eq.s32.totalorder %s33, 0
      %p534 = por %p532, %p533
      %p535 = scmp.ne.s32.totalorder %s527, %s529
      %p536 = scmp.eq.s32.totalorder %s38, 1
      %p537 = por %p535, %p536
      %p538 = scmp.ne.s32.totalorder %s529, %s530
      %p539 = scmp.eq.s32.totalorder %s38, 0
      %p540 = por %p538, %p539
      %p541 = scmp.ne.s32.totalorder %s529, %s530
      %p542 = scmp.eq.s32.totalorder %s39, 1
      %p543 = por %p541, %p542
      %p545 = scmp.ne.s32.totalorder %s530, %s544
      %p546 = scmp.eq.s32.totalorder %s39, 0
      %p547 = por %p545, %p546
      %s549 = sadd.s32 %s548, 1
      %p552 = scmp.eq.s32.totalorder %s33, 1
      %p553 = scmp.ne.s32.totalorder %s548, %s550
      %p554 = scmp.eq.s32.totalorder %s33, 0
      %p555 = por %p553, %p554
      %p556 = scmp.ne.s32.totalorder %s548, %s550
      %p557 = scmp.eq.s32.totalorder %s38, 1
      %p558 = por %p556, %p557
      %p559 = scmp.ne.s32.totalorder %s550, %s551
      %p560 = scmp.eq.s32.totalorder %s38, 0
      %p561 = por %p559, %p560
      %p562 = scmp.ne.s32.totalorder %s550, %s551
      %p563 = scmp.eq.s32.totalorder %s39, 1
      %p564 = por %p562, %p563
      %p566 = scmp.ne.s32.totalorder %s551, %s565
      %p567 = scmp.eq.s32.totalorder %s39, 0
      %p568 = por %p566, %p567
      %s570 = sadd.s32 %s569, 1
      %p573 = scmp.eq.s32.totalorder %s33, 1
      %p574 = scmp.ne.s32.totalorder %s569, %s571
      %p575 = scmp.eq.s32.totalorder %s33, 0
      %p576 = por %p574, %p575
      %p577 = scmp.ne.s32.totalorder %s569, %s571
      %p578 = scmp.eq.s32.totalorder %s38, 1
      %p579 = por %p577, %p578
      %p580 = scmp.ne.s32.totalorder %s571, %s572
      %p581 = scmp.eq.s32.totalorder %s38, 0
      %p582 = por %p580, %p581
      %p583 = scmp.ne.s32.totalorder %s571, %s572
      %p584 = scmp.eq.s32.totalorder %s39, 1
      %p585 = por %p583, %p584
      %p587 = scmp.ne.s32.totalorder %s572, %s586
      %p588 = scmp.eq.s32.totalorder %s39, 0
      %p589 = por %p587, %p588
      %s590 = ssub.s32 %s40, %s52
      %p591 = scmp.eq.s32.totalorder %s590, 0
      %s593 = sadd.s32 %s592, 1
      %s594 = scalar_select %p591, %s592, %s593
      %p597 = pneg %p591
      %p598 = scmp.eq.s32.totalorder %s33, 1
      %p599 = por %p597, %p598
      %p600 = scmp.ne.s32.totalorder %s592, %s595
      %p601 = scmp.eq.s32.totalorder %s33, 0
      %p602 = por %p600, %p601
      %p603 = scmp.ne.s32.totalorder %s592, %s595
      %p604 = scmp.eq.s32.totalorder %s38, 1
      %p605 = por %p603, %p604
      %p606 = scmp.ne.s32.totalorder %s595, %s596
      %p607 = scmp.eq.s32.totalorder %s38, 0
      %p608 = por %p606, %p607
      %p609 = scmp.ne.s32.totalorder %s595, %s596
      %p610 = scmp.eq.s32.totalorder %s39, 1
      %p611 = por %p609, %p610
      %p613 = scmp.ne.s32.totalorder %s596, %s612
      %p614 = scmp.eq.s32.totalorder %s39, 0
      %p615 = por %p613, %p614
      %p616 = scmp.le.s32.totalorder 1, %s33
      %p617 = scmp.lt.s32.totalorder %s33, 3
      %p618 = pnand %p616, %p617
      %p619 = pneg %p618
      // Predicated region
      $region9: #{tpu_custom_call.1} parent=5 // pred_check
        _
      $region10: #{tpu_custom_call.1} parent=5 // pred_check_branch
        %621 = sbr.rel (%p618) target = $region12
      $region11: #{tpu_custom_call.1} parent=5 // pred_region
        %s622 = ssub.s32 %s33, 1
        // Predicated region
        $region13: #{tpu_custom_call.1} parent=11 // pred_check
          %p623 = pneg %p71
        $region14: #{tpu_custom_call.1} parent=11 // pred_check_branch
          %625 = sbr.rel (%p623) target = $region16
        $region15: #{tpu_custom_call.1} parent=11 // pred_region
          %s626 = smul.u32 2, %s42
          %628 = vsyncadd [#allocation5], 0
          %s629 = smul.addr %s626, 2
          %s630 = smul.addr %s629, 8
          %s631 = scalar_lea.hbm %s0, %s630
          %s632 = sshll.u32 %s631, 4
          %s633 = int_to_ptr.hbm [resolvable:$true] %s632
          %s634 = sshll.u32 [#allocation4], 4
          %s635 = int_to_ptr.vmem [resolvable:$true] %s634
          %640 = dma.hbm_to_vmem [thread:$0]  %s633, 512, %s635, [#allocation5], 128, 128, 8
        $region16: #{tpu_custom_call.1} parent=11 // pred_fallthru
          _
        // Predicated region
        $region17: #{tpu_custom_call.1} parent=11 // pred_check
          %p641 = pneg %p92
        $region18: #{tpu_custom_call.1} parent=11 // pred_check_branch
          %643 = sbr.rel (%p641) target = $region20
        $region19: #{tpu_custom_call.1} parent=11 // pred_region
          %645 = vsyncadd [#allocation8], 0
          %s646 = sshll.u32 %s1, 4
          %s647 = int_to_ptr.hbm [resolvable:$true] %s646
          %s648 = sshll.u32 [#allocation7], 4
          %s649 = int_to_ptr.vmem [resolvable:$true] %s648
          %654 = dma.hbm_to_vmem [thread:$0]  %s647, 256, %s649, [#allocation8], 128, 128, 8
        $region20: #{tpu_custom_call.1} parent=11 // pred_fallthru
          _
        // Predicated region
        $region21: #{tpu_custom_call.1} parent=11 // pred_check
          %p655 = pneg %p118
        $region22: #{tpu_custom_call.1} parent=11 // pred_check_branch
          %657 = sbr.rel (%p655) target = $region24
        $region23: #{tpu_custom_call.1} parent=11 // pred_region
          %s658 = smul.u32 2, %s42
          %660 = vsyncadd [#allocation8], 0
          %s661 = smul.addr %s658, 2
          %s662 = smul.addr %s661, 8
          %s663 = scalar_lea.hbm %s2, %s662
          %s664 = sshll.u32 %s663, 4
          %s665 = int_to_ptr.hbm [resolvable:$true] %s664
          %s666 = sshll.u32 [#allocation9], 4
          %s667 = int_to_ptr.vmem [resolvable:$true] %s666
          %672 = dma.hbm_to_vmem [thread:$0]  %s665, 512, %s667, [#allocation8], 128, 128, 8
        $region24: #{tpu_custom_call.1} parent=11 // pred_fallthru
          _
        // Predicated region
        $region25: #{tpu_custom_call.1} parent=11 // pred_check
          %p673 = pneg %p139
        $region26: #{tpu_custom_call.1} parent=11 // pred_check_branch
          %675 = sbr.rel (%p673) target = $region28
        $region27: #{tpu_custom_call.1} parent=11 // pred_region
          %677 = vsyncadd [#allocation11], 0
          %s679 = sshll.u32 %s3, 4
          %s680 = int_to_ptr.hbm [resolvable:$true] %s679
          %s681 = sshll.u32 [#allocation10], 4
          %s682 = int_to_ptr.vmem [resolvable:$true] %s681
          %684 = dma.hbm_to_vmem [thread:$0]  %s680, 16, %s682, [#allocation11]
        $region28: #{tpu_custom_call.1} parent=11 // pred_fallthru
          _
        // Predicated region
        $region29: #{tpu_custom_call.1} parent=11 // pred_check
          %p685 = pneg %p160
        $region30: #{tpu_custom_call.1} parent=11 // pred_check_branch
          %687 = sbr.rel (%p685) target = $region32
        $region31: #{tpu_custom_call.1} parent=11 // pred_region
          %689 = vsyncadd [#allocation11], 0
          %s691 = sshll.u32 %s4, 4
          %s692 = int_to_ptr.hbm [resolvable:$true] %s691
          %s693 = sshll.u32 [#allocation12], 4
          %s694 = int_to_ptr.vmem [resolvable:$true] %s693
          %696 = dma.hbm_to_vmem [thread:$0]  %s692, 16, %s694, [#allocation11]
        $region32: #{tpu_custom_call.1} parent=11 // pred_fallthru
          _
        // Predicated region
        $region33: #{tpu_custom_call.1} parent=11 // pred_check
          %p697 = pneg %p186
        $region34: #{tpu_custom_call.1} parent=11 // pred_check_branch
          %699 = sbr.rel (%p697) target = $region36
        $region35: #{tpu_custom_call.1} parent=11 // pred_region
          %s700 = smul.u32 2, %s42
          %702 = vsyncadd [#allocation14], 0
          %s703 = scalar_lea.hbm %s5, %s700
          %s704 = sshll.u32 %s703, 4
          %s705 = int_to_ptr.hbm [resolvable:$true] %s704
          %s706 = sshll.u32 [#allocation13], 4
          %s707 = int_to_ptr.vmem [resolvable:$true] %s706
          %712 = dma.hbm_to_vmem [thread:$0]  %s705, 32, %s707, [#allocation14], 16, 16, 1
        $region36: #{tpu_custom_call.1} parent=11 // pred_fallthru
          _
        // Predicated region
        $region37: #{tpu_custom_call.1} parent=11 // pred_check
          %p713 = pneg %p519
        $region38: #{tpu_custom_call.1} parent=11 // pred_check_branch
          %715 = sbr.rel (%p713) target = $region40
        $region39: #{tpu_custom_call.1} parent=11 // pred_region
          %717 = vsyncadd [#allocation8], 0
          %s718 = sshll.u32 %s18, 4
          %s719 = int_to_ptr.hbm [resolvable:$true] %s718
          %s720 = sshll.u32 [#allocation22], 4
          %s721 = int_to_ptr.vmem [resolvable:$true] %s720
          %726 = dma.hbm_to_vmem [thread:$0]  %s719, 1024, %s721, [#allocation8], 64, 64, 4
        $region40: #{tpu_custom_call.1} parent=11 // pred_fallthru
          _
        // Predicated region
        $region41: #{tpu_custom_call.1} parent=11 // pred_check
          %p727 = pneg %p540
        $region42: #{tpu_custom_call.1} parent=11 // pred_check_branch
          %729 = sbr.rel (%p727) target = $region44
        $region43: #{tpu_custom_call.1} parent=11 // pred_region
          _
        $region44: #{tpu_custom_call.1} parent=11 // pred_fallthru
          _
        // Predicated region
        $region45: #{tpu_custom_call.1} parent=11 // pred_check
          %p730 = pneg %p561
        $region46: #{tpu_custom_call.1} parent=11 // pred_check_branch
          %732 = sbr.rel (%p730) target = $region48
        $region47: #{tpu_custom_call.1} parent=11 // pred_region
          _
        $region48: #{tpu_custom_call.1} parent=11 // pred_fallthru
          _
        // Predicated region
        $region49: #{tpu_custom_call.1} parent=11 // pred_check
          %p733 = pneg %p582
        $region50: #{tpu_custom_call.1} parent=11 // pred_check_branch
          %735 = sbr.rel (%p733) target = $region52
        $region51: #{tpu_custom_call.1} parent=11 // pred_region
          _
        $region52: #{tpu_custom_call.1} parent=11 // pred_fallthru
          _
      $region12: #{tpu_custom_call.1} parent=5 // pred_fallthru
        _
      %p736 = scmp.lt.s32.totalorder %s33, 2
      // Predicated region
      $region53: #{tpu_custom_call.1} parent=5 // pred_check
        %p737 = pneg %p736
      $region54: #{tpu_custom_call.1} parent=5 // pred_check_branch
        %739 = sbr.rel (%p737) target = $region56
      $region55: #{tpu_custom_call.1} parent=5 // pred_region
        // Predicated region
        $region57: #{tpu_custom_call.1} parent=55 // pred_check
          %p740 = pneg %p206
        $region58: #{tpu_custom_call.1} parent=55 // pred_check_branch
          %742 = sbr.rel (%p740) target = $region60
        $region59: #{tpu_custom_call.1} parent=55 // pred_region
          %s743 = sand.u32 %s33, 1
          %s744 = scalar_lea.sflag [#allocation5], %s743
          %s745 = sand.u32 %s196, 1
          %s746 = smul.addr %s745, 192
          %s747 = scalar_lea.vmem [#allocation15], %s746
          %749 = vsyncadd %s744, 0
          %s750 = smul.addr %s41, 48
          %s751 = smul.addr %s750, 4
          %s752 = scalar_lea.hbm %s6, %s751
          %s753 = sshll.u32 %s752, 4
          %s754 = int_to_ptr.hbm [resolvable:$true] %s753
          %s755 = sshll.u32 %s747, 4
          %s756 = int_to_ptr.vmem [resolvable:$true] %s755
          %761 = dma.hbm_to_vmem [thread:$0]  %s754, 3072, %s756, %s744, 192, 192, 12
        $region60: #{tpu_custom_call.1} parent=55 // pred_fallthru
          _
        // Predicated region
        $region61: #{tpu_custom_call.1} parent=55 // pred_check
          %p762 = pneg %p232
        $region62: #{tpu_custom_call.1} parent=55 // pred_check_branch
          %764 = sbr.rel (%p762) target = $region64
        $region63: #{tpu_custom_call.1} parent=55 // pred_region
          %p765 = scmp.lt.s32.totalorder %s41, 1
          %s766 = scalar_select %p765, %s41, 1
          %s767 = smul.addr %s766, 3
          %s768 = scalar_lea.vmem %s7, %s767
        $region64: #{tpu_custom_call.1} parent=55 // pred_fallthru
          _
        // Predicated region
        $region65: #{tpu_custom_call.1} parent=55 // pred_check
          %p769 = pneg %p258
        $region66: #{tpu_custom_call.1} parent=55 // pred_check_branch
          %771 = sbr.rel (%p769) target = $region68
        $region67: #{tpu_custom_call.1} parent=55 // pred_region
          %s772 = sand.u32 %s33, 1
          %s773 = scalar_lea.sflag [#allocation5], %s772
          %s774 = sand.u32 %s248, 1
          %s775 = smul.addr %s774, 64
          %s776 = scalar_lea.vmem [#allocation16], %s775
          %778 = vsyncadd %s773, 0
          %s779 = smul.addr %s41, 16
          %s780 = smul.addr %s779, 4
          %s781 = scalar_lea.hbm %s8, %s780
          %s782 = sshll.u32 %s781, 4
          %s783 = int_to_ptr.hbm [resolvable:$true] %s782
          %s784 = sshll.u32 %s776, 4
          %s785 = int_to_ptr.vmem [resolvable:$true] %s784
          %790 = dma.hbm_to_vmem [thread:$0]  %s783, 1024, %s785, %s773, 64, 64, 4
        $region68: #{tpu_custom_call.1} parent=55 // pred_fallthru
          _
        // Predicated region
        $region69: #{tpu_custom_call.1} parent=55 // pred_check
          %p791 = pneg %p284
        $region70: #{tpu_custom_call.1} parent=55 // pred_check_branch
          %793 = sbr.rel (%p791) target = $region72
        $region71: #{tpu_custom_call.1} parent=55 // pred_region
          %s794 = sand.u32 %s33, 1
          %s795 = scalar_lea.sflag [#allocation5], %s794
          %s796 = sand.u32 %s274, 1
          %s797 = scalar_lea.vmem [#allocation17], %s796
          %799 = vsyncadd %s795, 0
          %s800 = scalar_lea.hbm %s9, %s41
          %s802 = sshll.u32 %s800, 4
          %s803 = int_to_ptr.hbm [resolvable:$true] %s802
          %s804 = sshll.u32 %s797, 4
          %s805 = int_to_ptr.vmem [resolvable:$true] %s804
          %807 = dma.hbm_to_vmem [thread:$0]  %s803, 16, %s805, %s795
        $region72: #{tpu_custom_call.1} parent=55 // pred_fallthru
          _
        // Predicated region
        $region73: #{tpu_custom_call.1} parent=55 // pred_check
          %p808 = pneg %p310
        $region74: #{tpu_custom_call.1} parent=55 // pred_check_branch
          %810 = sbr.rel (%p808) target = $region76
        $region75: #{tpu_custom_call.1} parent=55 // pred_region
          %s811 = sand.u32 %s33, 1
          %s812 = scalar_lea.sflag [#allocation5], %s811
          %s813 = sand.u32 %s300, 1
          %s814 = scalar_lea.vmem [#allocation18], %s813
          %816 = vsyncadd %s812, 0
          %s817 = scalar_lea.hbm %s10, %s41
          %s819 = sshll.u32 %s817, 4
          %s820 = int_to_ptr.hbm [resolvable:$true] %s819
          %s821 = sshll.u32 %s814, 4
          %s822 = int_to_ptr.vmem [resolvable:$true] %s821
          %824 = dma.hbm_to_vmem [thread:$0]  %s820, 16, %s822, %s812
        $region76: #{tpu_custom_call.1} parent=55 // pred_fallthru
          _
        // Predicated region
        $region77: #{tpu_custom_call.1} parent=55 // pred_check
          %p825 = pneg %p336
        $region78: #{tpu_custom_call.1} parent=55 // pred_check_branch
          %827 = sbr.rel (%p825) target = $region80
        $region79: #{tpu_custom_call.1} parent=55 // pred_region
          %s828 = sand.u32 %s33, 1
          %s829 = scalar_lea.sflag [#allocation5], %s828
          %s830 = sand.u32 %s326, 1
          %s831 = scalar_lea.vmem [#allocation19], %s830
          %833 = vsyncadd %s829, 0
          %s834 = scalar_lea.hbm %s11, %s41
          %s836 = sshll.u32 %s834, 4
          %s837 = int_to_ptr.hbm [resolvable:$true] %s836
          %s838 = sshll.u32 %s831, 4
          %s839 = int_to_ptr.vmem [resolvable:$true] %s838
          %841 = dma.hbm_to_vmem [thread:$0]  %s837, 16, %s839, %s829
        $region80: #{tpu_custom_call.1} parent=55 // pred_fallthru
          _
        // Predicated region
        $region81: #{tpu_custom_call.1} parent=55 // pred_check
          %p842 = pneg %p362
        $region82: #{tpu_custom_call.1} parent=55 // pred_check_branch
          %844 = sbr.rel (%p842) target = $region84
        $region83: #{tpu_custom_call.1} parent=55 // pred_region
          %s845 = sand.u32 %s33, 1
          %s846 = scalar_lea.sflag [#allocation5], %s845
          %s847 = sand.u32 %s352, 1
          %s848 = smul.addr %s847, 128
          %s849 = scalar_lea.vmem [#allocation20], %s848
          %851 = vsyncadd %s846, 0
          %s852 = smul.addr %s41, 32
          %s853 = smul.addr %s852, 4
          %s854 = scalar_lea.hbm %s12, %s853
          %s855 = sshll.u32 %s854, 4
          %s856 = int_to_ptr.hbm [resolvable:$true] %s855
          %s857 = sshll.u32 %s849, 4
          %s858 = int_to_ptr.vmem [resolvable:$true] %s857
          %863 = dma.hbm_to_vmem [thread:$0]  %s856, 2048, %s858, %s846, 128, 128, 8
        $region84: #{tpu_custom_call.1} parent=55 // pred_fallthru
          _
        // Predicated region
        $region85: #{tpu_custom_call.1} parent=55 // pred_check
          %p864 = pneg %p388
        $region86: #{tpu_custom_call.1} parent=55 // pred_check_branch
          %866 = sbr.rel (%p864) target = $region88
        $region87: #{tpu_custom_call.1} parent=55 // pred_region
          %p867 = scmp.lt.s32.totalorder %s41, 1
          %s868 = scalar_select %p867, %s41, 1
          %s869 = smul.addr %s868, 2
          %s870 = scalar_lea.vmem %s13, %s869
        $region88: #{tpu_custom_call.1} parent=55 // pred_fallthru
          _
        // Predicated region
        $region89: #{tpu_custom_call.1} parent=55 // pred_check
          %p871 = pneg %p414
        $region90: #{tpu_custom_call.1} parent=55 // pred_check_branch
          %873 = sbr.rel (%p871) target = $region92
        $region91: #{tpu_custom_call.1} parent=55 // pred_region
          %s874 = sand.u32 %s33, 1
          %s875 = scalar_lea.sflag [#allocation5], %s874
          %s876 = sand.u32 %s404, 1
          %s877 = smul.addr %s876, 128
          %s878 = scalar_lea.vmem [#allocation21], %s877
          %880 = vsyncadd %s875, 0
          %s881 = smul.addr %s41, 32
          %s882 = smul.addr %s881, 4
          %s883 = scalar_lea.hbm %s14, %s882
          %s884 = sshll.u32 %s883, 4
          %s885 = int_to_ptr.hbm [resolvable:$true] %s884
          %s886 = sshll.u32 %s878, 4
          %s887 = int_to_ptr.vmem [resolvable:$true] %s886
          %892 = dma.hbm_to_vmem [thread:$0]  %s885, 2048, %s887, %s875, 64, 64, 4
        $region92: #{tpu_custom_call.1} parent=55 // pred_fallthru
          _
        // Predicated region
        $region93: #{tpu_custom_call.1} parent=55 // pred_check
          %p893 = pneg %p440
        $region94: #{tpu_custom_call.1} parent=55 // pred_check_branch
          %895 = sbr.rel (%p893) target = $region96
        $region95: #{tpu_custom_call.1} parent=55 // pred_region
          %p896 = scmp.lt.s32.totalorder %s41, 1
          %s897 = scalar_select %p896, %s41, 1
          %s898 = scalar_lea.vmem %s15, %s897
        $region96: #{tpu_custom_call.1} parent=55 // pred_fallthru
          _
        // Predicated region
        $region97: #{tpu_custom_call.1} parent=55 // pred_check
          %p899 = pneg %p466
        $region98: #{tpu_custom_call.1} parent=55 // pred_check_branch
          %901 = sbr.rel (%p899) target = $region100
        $region99: #{tpu_custom_call.1} parent=55 // pred_region
          %p902 = scmp.lt.s32.totalorder %s41, 1
          %s903 = scalar_select %p902, %s41, 1
          %s904 = scalar_lea.vmem %s16, %s903
        $region100: #{tpu_custom_call.1} parent=55 // pred_fallthru
          _
        // Predicated region
        $region101: #{tpu_custom_call.1} parent=55 // pred_check
          %p905 = pneg %p492
        $region102: #{tpu_custom_call.1} parent=55 // pred_check_branch
          %907 = sbr.rel (%p905) target = $region104
        $region103: #{tpu_custom_call.1} parent=55 // pred_region
          %p908 = scmp.lt.s32.totalorder %s41, 1
          %s909 = scalar_select %p908, %s41, 1
          %s910 = scalar_lea.vmem %s17, %s909
        $region104: #{tpu_custom_call.1} parent=55 // pred_fallthru
          _
      $region56: #{tpu_custom_call.1} parent=5 // pred_fallthru
        _
      %p911 = scmp.le.s32.totalorder 1, %s33
      %p912 = scmp.lt.s32.totalorder %s33, 3
      %p913 = pnand %p911, %p912
      %p914 = pneg %p913
      // Predicated region
      $region105: #{tpu_custom_call.1} parent=5 // pred_check
        _
      $region106: #{tpu_custom_call.1} parent=5 // pred_check_branch
        %916 = sbr.rel (%p913) target = $region108
      $region107: #{tpu_custom_call.1} parent=5 // pred_region
        %s917 = ssub.s32 %s33, 1
        // Predicated region
        $region109: #{tpu_custom_call.1} parent=107 // pred_check
          %p918 = pneg %p71
        $region110: #{tpu_custom_call.1} parent=107 // pred_check_branch
          %920 = sbr.rel (%p918) target = $region112
        $region111: #{tpu_custom_call.1} parent=107 // pred_region
          %922 = dma.done [#allocation5], 512
        $region112: #{tpu_custom_call.1} parent=107 // pred_fallthru
          _
        // Predicated region
        $region113: #{tpu_custom_call.1} parent=107 // pred_check
          %p923 = pneg %p92
        $region114: #{tpu_custom_call.1} parent=107 // pred_check_branch
          %925 = sbr.rel (%p923) target = $region116
        $region115: #{tpu_custom_call.1} parent=107 // pred_region
          %927 = dma.done [#allocation8], 256
        $region116: #{tpu_custom_call.1} parent=107 // pred_fallthru
          _
        // Predicated region
        $region117: #{tpu_custom_call.1} parent=107 // pred_check
          %p928 = pneg %p118
        $region118: #{tpu_custom_call.1} parent=107 // pred_check_branch
          %930 = sbr.rel (%p928) target = $region120
        $region119: #{tpu_custom_call.1} parent=107 // pred_region
          %932 = dma.done [#allocation8], 512
        $region120: #{tpu_custom_call.1} parent=107 // pred_fallthru
          _
        // Predicated region
        $region121: #{tpu_custom_call.1} parent=107 // pred_check
          %p933 = pneg %p139
        $region122: #{tpu_custom_call.1} parent=107 // pred_check_branch
          %935 = sbr.rel (%p933) target = $region124
        $region123: #{tpu_custom_call.1} parent=107 // pred_region
          %937 = dma.done [#allocation11], 16
        $region124: #{tpu_custom_call.1} parent=107 // pred_fallthru
          _
        // Predicated region
        $region125: #{tpu_custom_call.1} parent=107 // pred_check
          %p938 = pneg %p160
        $region126: #{tpu_custom_call.1} parent=107 // pred_check_branch
          %940 = sbr.rel (%p938) target = $region128
        $region127: #{tpu_custom_call.1} parent=107 // pred_region
          %942 = dma.done [#allocation11], 16
        $region128: #{tpu_custom_call.1} parent=107 // pred_fallthru
          _
        // Predicated region
        $region129: #{tpu_custom_call.1} parent=107 // pred_check
          %p943 = pneg %p186
        $region130: #{tpu_custom_call.1} parent=107 // pred_check_branch
          %945 = sbr.rel (%p943) target = $region132
        $region131: #{tpu_custom_call.1} parent=107 // pred_region
          %947 = dma.done [#allocation14], 32
        $region132: #{tpu_custom_call.1} parent=107 // pred_fallthru
          _
        %s948 = sand.u32 %s38, 1
        %s949 = scalar_lea.sflag [#allocation5], %s948
        %s950 = sand.u32 %s199, 1
        %s951 = smul.addr %s950, 192
        %s952 = scalar_lea.vmem [#allocation15], %s951
        // Predicated region
        $region133: #{tpu_custom_call.1} parent=107 // pred_check
          %p953 = pneg %p212
        $region134: #{tpu_custom_call.1} parent=107 // pred_check_branch
          %955 = sbr.rel (%p953) target = $region136
        $region135: #{tpu_custom_call.1} parent=107 // pred_region
          %957 = dma.done %s949, 3072
        $region136: #{tpu_custom_call.1} parent=107 // pred_fallthru
          _
        %s958 = sand.u32 %s38, 1
        %s959 = scalar_lea.sflag [#allocation5], %s958
        %s960 = sand.u32 %s251, 1
        %s961 = smul.addr %s960, 64
        %s962 = scalar_lea.vmem [#allocation16], %s961
        // Predicated region
        $region137: #{tpu_custom_call.1} parent=107 // pred_check
          %p963 = pneg %p264
        $region138: #{tpu_custom_call.1} parent=107 // pred_check_branch
          %965 = sbr.rel (%p963) target = $region140
        $region139: #{tpu_custom_call.1} parent=107 // pred_region
          %967 = dma.done %s959, 1024
        $region140: #{tpu_custom_call.1} parent=107 // pred_fallthru
          _
        %s968 = sand.u32 %s38, 1
        %s969 = scalar_lea.sflag [#allocation5], %s968
        %s970 = sand.u32 %s277, 1
        %s971 = scalar_lea.vmem [#allocation17], %s970
        // Predicated region
        $region141: #{tpu_custom_call.1} parent=107 // pred_check
          %p972 = pneg %p290
        $region142: #{tpu_custom_call.1} parent=107 // pred_check_branch
          %974 = sbr.rel (%p972) target = $region144
        $region143: #{tpu_custom_call.1} parent=107 // pred_region
          %976 = dma.done %s969, 16
        $region144: #{tpu_custom_call.1} parent=107 // pred_fallthru
          _
        %s977 = sand.u32 %s38, 1
        %s978 = scalar_lea.sflag [#allocation5], %s977
        %s979 = sand.u32 %s303, 1
        %s980 = scalar_lea.vmem [#allocation18], %s979
        // Predicated region
        $region145: #{tpu_custom_call.1} parent=107 // pred_check
          %p981 = pneg %p316
        $region146: #{tpu_custom_call.1} parent=107 // pred_check_branch
          %983 = sbr.rel (%p981) target = $region148
        $region147: #{tpu_custom_call.1} parent=107 // pred_region
          %985 = dma.done %s978, 16
        $region148: #{tpu_custom_call.1} parent=107 // pred_fallthru
          _
        %s986 = sand.u32 %s38, 1
        %s987 = scalar_lea.sflag [#allocation5], %s986
        %s988 = sand.u32 %s329, 1
        %s989 = scalar_lea.vmem [#allocation19], %s988
        // Predicated region
        $region149: #{tpu_custom_call.1} parent=107 // pred_check
          %p990 = pneg %p342
        $region150: #{tpu_custom_call.1} parent=107 // pred_check_branch
          %992 = sbr.rel (%p990) target = $region152
        $region151: #{tpu_custom_call.1} parent=107 // pred_region
          %994 = dma.done %s987, 16
        $region152: #{tpu_custom_call.1} parent=107 // pred_fallthru
          _
        %s995 = sand.u32 %s38, 1
        %s996 = scalar_lea.sflag [#allocation5], %s995
        %s997 = sand.u32 %s355, 1
        %s998 = smul.addr %s997, 128
        %s999 = scalar_lea.vmem [#allocation20], %s998
        // Predicated region
        $region153: #{tpu_custom_call.1} parent=107 // pred_check
          %p1000 = pneg %p368
        $region154: #{tpu_custom_call.1} parent=107 // pred_check_branch
          %1002 = sbr.rel (%p1000) target = $region156
        $region155: #{tpu_custom_call.1} parent=107 // pred_region
          %1004 = dma.done %s996, 2048
        $region156: #{tpu_custom_call.1} parent=107 // pred_fallthru
          _
        %s1005 = sand.u32 %s38, 1
        %s1006 = scalar_lea.sflag [#allocation5], %s1005
        %s1007 = sand.u32 %s407, 1
        %s1008 = smul.addr %s1007, 128
        %s1009 = scalar_lea.vmem [#allocation21], %s1008
        // Predicated region
        $region157: #{tpu_custom_call.1} parent=107 // pred_check
          %p1010 = pneg %p420
        $region158: #{tpu_custom_call.1} parent=107 // pred_check_branch
          %1012 = sbr.rel (%p1010) target = $region160
        $region159: #{tpu_custom_call.1} parent=107 // pred_region
          %1014 = dma.done %s1006, 2048
        $region160: #{tpu_custom_call.1} parent=107 // pred_fallthru
          _
        // Predicated region
        $region161: #{tpu_custom_call.1} parent=107 // pred_check
          %p1015 = pneg %p519
        $region162: #{tpu_custom_call.1} parent=107 // pred_check_branch
          %1017 = sbr.rel (%p1015) target = $region164
        $region163: #{tpu_custom_call.1} parent=107 // pred_region
          %1019 = dma.done [#allocation8], 1024
        $region164: #{tpu_custom_call.1} parent=107 // pred_fallthru
          _
        %p1020 = pneg %p71
        %p1021 = pneg %p68
        %p1022 = pneg %p92
        %p1023 = pneg %p89
        %p1024 = pneg %p118
        %p1025 = pneg %p115
        %p1026 = pneg %p139
        %p1027 = pneg %p136
        %p1028 = pneg %p160
        %p1029 = pneg %p157
        %p1030 = pneg %p186
        %p1031 = pneg %p183
        %s1032 = sand.u32 %s38, 1
        %s1033 = scalar_lea.sflag [#allocation5], %s1032
        %s1034 = sand.u32 %s199, 1
        %s1035 = smul.addr %s1034, 192
        %s1036 = scalar_lea.vmem [#allocation15], %s1035
        %p1037 = pneg %p212
        %p1038 = pneg %p209
        %p1039 = scmp.lt.s32.totalorder %s43, 1
        %s1040 = scalar_select %p1039, %s43, 1
        %s1041 = smul.addr %s1040, 3
        %s1042 = scalar_lea.vmem %s7, %s1041
        %p1043 = pneg %p238
        %p1044 = pneg %p235
        %s1045 = sand.u32 %s38, 1
        %s1046 = scalar_lea.sflag [#allocation5], %s1045
        %s1047 = sand.u32 %s251, 1
        %s1048 = smul.addr %s1047, 64
        %s1049 = scalar_lea.vmem [#allocation16], %s1048
        %p1050 = pneg %p264
        %p1051 = pneg %p261
        %s1052 = sand.u32 %s38, 1
        %s1053 = scalar_lea.sflag [#allocation5], %s1052
        %s1054 = sand.u32 %s277, 1
        %s1055 = scalar_lea.vmem [#allocation17], %s1054
        %p1056 = pneg %p290
        %p1057 = pneg %p287
        %s1058 = sand.u32 %s38, 1
        %s1059 = scalar_lea.sflag [#allocation5], %s1058
        %s1060 = sand.u32 %s303, 1
        %s1061 = scalar_lea.vmem [#allocation18], %s1060
        %p1062 = pneg %p316
        %p1063 = pneg %p313
        %s1064 = sand.u32 %s38, 1
        %s1065 = scalar_lea.sflag [#allocation5], %s1064
        %s1066 = sand.u32 %s329, 1
        %s1067 = scalar_lea.vmem [#allocation19], %s1066
        %p1068 = pneg %p342
        %p1069 = pneg %p339
        %s1070 = sand.u32 %s38, 1
        %s1071 = scalar_lea.sflag [#allocation5], %s1070
        %s1072 = sand.u32 %s355, 1
        %s1073 = smul.addr %s1072, 128
        %s1074 = scalar_lea.vmem [#allocation20], %s1073
        %p1075 = pneg %p368
        %p1076 = pneg %p365
        %p1077 = scmp.lt.s32.totalorder %s43, 1
        %s1078 = scalar_select %p1077, %s43, 1
        %s1079 = smul.addr %s1078, 2
        %s1080 = scalar_lea.vmem %s13, %s1079
        %p1081 = pneg %p394
        %p1082 = pneg %p391
        %s1083 = sand.u32 %s38, 1
        %s1084 = scalar_lea.sflag [#allocation5], %s1083
        %s1085 = sand.u32 %s407, 1
        %s1086 = smul.addr %s1085, 128
        %s1087 = scalar_lea.vmem [#allocation21], %s1086
        %p1088 = pneg %p420
        %p1089 = pneg %p417
        %p1090 = scmp.lt.s32.totalorder %s43, 1
        %s1091 = scalar_select %p1090, %s43, 1
        %s1092 = scalar_lea.vmem %s15, %s1091
        %p1093 = pneg %p446
        %p1094 = pneg %p443
        %p1095 = scmp.lt.s32.totalorder %s43, 1
        %s1096 = scalar_select %p1095, %s43, 1
        %s1097 = scalar_lea.vmem %s16, %s1096
        %p1098 = pneg %p472
        %p1099 = pneg %p469
        %p1100 = scmp.lt.s32.totalorder %s43, 1
        %s1101 = scalar_select %p1100, %s43, 1
        %s1102 = scalar_lea.vmem %s17, %s1101
        %p1103 = pneg %p498
        %p1104 = pneg %p495
        %p1105 = pneg %p519
        %p1106 = pneg %p516
        %p1107 = pneg %p540
        %p1108 = pneg %p537
        %p1109 = pneg %p561
        %p1110 = pneg %p558
        %p1111 = pneg %p582
        %p1112 = pneg %p579
        %p1113 = pneg %p608
        %p1114 = pneg %p605
        %s1115 = smul.u32 2, %s42
        %s1116 = smul.u32 2, %s42
        %s1117 = smul.u32 2, %s42
        %p1118 = scmp.lt.s32.totalorder %s43, 1
        %s1119 = scalar_select %p1118, %s43, 1
        %s1120 = smul.addr %s1119, 3
        %s1121 = scalar_lea.vmem %s7, %s1120
        %p1122 = scmp.lt.s32.totalorder %s43, 1
        %s1123 = scalar_select %p1122, %s43, 1
        %s1124 = smul.addr %s1123, 2
        %s1125 = scalar_lea.vmem %s13, %s1124
        %p1126 = scmp.lt.s32.totalorder %s43, 1
        %s1127 = scalar_select %p1126, %s43, 1
        %s1128 = scalar_lea.vmem %s15, %s1127
        %p1129 = scmp.lt.s32.totalorder %s43, 1
        %s1130 = scalar_select %p1129, %s43, 1
        %s1131 = scalar_lea.vmem %s16, %s1130
        %p1132 = scmp.lt.s32.totalorder %s43, 1
        %s1133 = scalar_select %p1132, %s43, 1
        %s1134 = scalar_lea.vmem %s17, %s1133
        %s1135 = smul.u32 2, %s42
        %p1137 = scmp.eq.s32.totalorder %s43, 0
        // Predicated region
        $region165: #{tpu_custom_call.1} parent=107 // pred_check
          %p1138 = pneg %p1137
        $region166: #{tpu_custom_call.1} parent=107 // pred_check_branch
          %1140 = sbr.rel (%p1138) target = $region168
        $region167: #{tpu_custom_call.1} parent=107 // pred_region
          %v1141 = vld [vmem:[#allocation4] sm:$0xff]
          %v1142 = vld [vmem:[#allocation4 + $0x8] sm:$0xff]
          %v1143 = vld [vmem:[#allocation9] sm:$0xff]
          %v1144 = vld [vmem:[#allocation9 + $0x8] sm:$0xff]
          %v1145 = vadd.f32 %v1141, %v1143
          %v1146 = vadd.f32 %v1142, %v1144
          %v1147 = vld [vmem:[#allocation7] sm:$0xff]
          %v1148 = vld [vmem:[#allocation7 + $0x8] sm:$0xff]
          %v1149 = vadd.f32 %v1145, %v1147
          %v1150 = vadd.f32 %v1146, %v1148
          %v1151 = vld [vmem:[#allocation10] sm:$0x1]
          %v1152 = vld [vmem:[#allocation12] sm:$0x1]
          %1153 = vadd.xlane.f32.xlu0 %v1149
          %v1154 = vpop.xlane.xlu0 %1153
          %1155 = vadd.xlane.f32.xlu0 %v1150
          %v1156 = vpop.xlane.xlu0 %1155
          %v1157 = vrcp.pop 128.0
          %v1158 = vmul.f32 128.0, %v1157
          %v1159 = vsub.f32 1.0, %v1158
          %v1160 = vmul.f32 %v1157, %v1159
          %v1161 = vadd.f32 %v1157, %v1160
          %vm1162 = vweird.f32 %v1157
          %v1163 = vsel %vm1162, %v1157, %v1161
          %v1164 = vmul.f32 %v1154, %v1163
          %v1165 = vmul.f32 %v1156, %v1163
          %v1166 = vsub.f32 %v1149, %v1164
          %v1167 = vsub.f32 %v1150, %v1165
          %v1168 = vmul.f32 %v1166, %v1166
          %v1169 = vmul.f32 %v1167, %v1167
          %1170 = vadd.xlane.f32.xlu0 %v1168
          %v1171 = vpop.xlane.xlu0 %1170
          %1172 = vadd.xlane.f32.xlu0 %v1169
          %v1173 = vpop.xlane.xlu0 %1172
          %v1174 = vmul.f32 %v1171, %v1163
          %v1175 = vmul.f32 %v1173, %v1163
          %v1176 = vadd.f32 %v1174, 1e-05
          %v1177 = vadd.f32 %v1175, 1e-05
          %v1178 = vrsqrt.pop %v1176
          %v1179 = vmul.f32 %v1178, %v1176
          %v1180 = vmul.f32 %v1179, %v1178
          %v1181 = vmul.f32 0.5, %v1180
          %v1182 = vsub.f32 1.5, %v1181
          %v1183 = vmul.f32 %v1178, %v1182
          %vm1184 = vweird.f32 %v1176
          %vm1185 = vweird.f32 %v1178
          %vm1186 = vmor %vm1184, %vm1185
          %v1187 = vsel %vm1186, %v1178, %v1183
          %v1188 = vrsqrt.pop %v1177
          %v1189 = vmul.f32 %v1188, %v1177
          %v1190 = vmul.f32 %v1189, %v1188
          %v1191 = vmul.f32 0.5, %v1190
          %v1192 = vsub.f32 1.5, %v1191
          %v1193 = vmul.f32 %v1188, %v1192
          %vm1194 = vweird.f32 %v1177
          %vm1195 = vweird.f32 %v1188
          %vm1196 = vmor %vm1194, %vm1195
          %v1197 = vsel %vm1196, %v1188, %v1193
          %v1198 = vmul.f32 %v1166, %v1187
          %v1199 = vmul.f32 %v1167, %v1197
          %v1201 = vperm.slane %v1151, 0
          %v1203 = vmul.f32 %v1198, %v1201
          %v1204 = vmul.f32 %v1199, %v1201
          %v1206 = vperm.slane %v1152, 0
          %v1208 = vadd.f32 %v1203, %v1206
          %v1209 = vadd.f32 %v1204, %v1206
          %1210 = vst [vmem:[#allocation2] sm:$0xff] %v1208
          %1211 = vst [vmem:[#allocation2 + $0x8] sm:$0xff] %v1209
          %s1212 = scalar_lea.vmem [#allocation4], 16
          %v1213 = vld [vmem:[%s1212] sm:$0xff]
          %v1214 = vld [vmem:[%s1212 + $0x8] sm:$0xff]
          %s1215 = scalar_lea.vmem [#allocation9], 16
          %v1216 = vld [vmem:[%s1215] sm:$0xff]
          %v1217 = vld [vmem:[%s1215 + $0x8] sm:$0xff]
          %v1218 = vadd.f32 %v1213, %v1216
          %v1219 = vadd.f32 %v1214, %v1217
          %v1220 = vld [vmem:[#allocation7] sm:$0xff]
          %v1221 = vld [vmem:[#allocation7 + $0x8] sm:$0xff]
          %v1222 = vadd.f32 %v1218, %v1220
          %v1223 = vadd.f32 %v1219, %v1221
          %v1224 = vld [vmem:[#allocation10] sm:$0x1]
          %v1225 = vld [vmem:[#allocation12] sm:$0x1]
          %1226 = vadd.xlane.f32.xlu0 %v1222
          %v1227 = vpop.xlane.xlu0 %1226
          %1228 = vadd.xlane.f32.xlu0 %v1223
          %v1229 = vpop.xlane.xlu0 %1228
          %v1230 = vmul.f32 %v1227, %v1163
          %v1231 = vmul.f32 %v1229, %v1163
          %v1232 = vsub.f32 %v1222, %v1230
          %v1233 = vsub.f32 %v1223, %v1231
          %v1234 = vmul.f32 %v1232, %v1232
          %v1235 = vmul.f32 %v1233, %v1233
          %1236 = vadd.xlane.f32.xlu0 %v1234
          %v1237 = vpop.xlane.xlu0 %1236
          %1238 = vadd.xlane.f32.xlu0 %v1235
          %v1239 = vpop.xlane.xlu0 %1238
          %v1240 = vmul.f32 %v1237, %v1163
          %v1241 = vmul.f32 %v1239, %v1163
          %v1242 = vadd.f32 %v1240, 1e-05
          %v1243 = vadd.f32 %v1241, 1e-05
          %v1244 = vrsqrt.pop %v1242
          %v1245 = vmul.f32 %v1244, %v1242
          %v1246 = vmul.f32 %v1245, %v1244
          %v1247 = vmul.f32 0.5, %v1246
          %v1248 = vsub.f32 1.5, %v1247
          %v1249 = vmul.f32 %v1244, %v1248
          %vm1250 = vweird.f32 %v1242
          %vm1251 = vweird.f32 %v1244
          %vm1252 = vmor %vm1250, %vm1251
          %v1253 = vsel %vm1252, %v1244, %v1249
          %v1254 = vrsqrt.pop %v1243
          %v1255 = vmul.f32 %v1254, %v1243
          %v1256 = vmul.f32 %v1255, %v1254
          %v1257 = vmul.f32 0.5, %v1256
          %v1258 = vsub.f32 1.5, %v1257
          %v1259 = vmul.f32 %v1254, %v1258
          %vm1260 = vweird.f32 %v1243
          %vm1261 = vweird.f32 %v1254
          %vm1262 = vmor %vm1260, %vm1261
          %v1263 = vsel %vm1262, %v1254, %v1259
          %v1264 = vmul.f32 %v1232, %v1253
          %v1265 = vmul.f32 %v1233, %v1263
          %v1267 = vperm.slane %v1224, 0
          %v1269 = vmul.f32 %v1264, %v1267
          %v1270 = vmul.f32 %v1265, %v1267
          %v1272 = vperm.slane %v1225, 0
          %v1274 = vadd.f32 %v1269, %v1272
          %v1275 = vadd.f32 %v1270, %v1272
          %1276 = vst [vmem:[#allocation2 + $0x10] sm:$0xff] %v1274
          %1277 = vst [vmem:[#allocation2 + $0x18] sm:$0xff] %v1275
        $region168: #{tpu_custom_call.1} parent=107 // pred_fallthru
          _
        %v1278 = vld [vmem:[#allocation2] sm:$0xff]
        %v1279 = vld [vmem:[#allocation2 + $0x8] sm:$0xff]
        %v1280 = vld [vmem:[#allocation2 + $0x10] sm:$0xff]
        %v1281 = vld [vmem:[#allocation2 + $0x18] sm:$0xff]
        %v1282 = vpack.c.bf16 %v1279, %v1278
        %v1283 = vpack.c.bf16 %v1281, %v1280
        %v1284 = vld [vmem:[%s952] sm:$0xff]
        %v1285 = vld [vmem:[%s952 + $0x8] sm:$0xf]
        %v1286 = vld [vmem:[%s952 + $0xc] sm:$0xff]
        %v1287 = vld [vmem:[%s952 + $0x14] sm:$0xf]
        %v1288 = vld [vmem:[%s952 + $0x18] sm:$0xff]
        %v1289 = vld [vmem:[%s952 + $0x20] sm:$0xf]
        %v1290 = vld [vmem:[%s952 + $0x24] sm:$0xff]
        %v1291 = vld [vmem:[%s952 + $0x2c] sm:$0xf]
        %v1292 = vld [vmem:[%s952 + $0x30] sm:$0xff]
        %v1293 = vld [vmem:[%s952 + $0x38] sm:$0xf]
        %v1294 = vld [vmem:[%s952 + $0x3c] sm:$0xff]
        %v1295 = vld [vmem:[%s952 + $0x44] sm:$0xf]
        %v1296 = vld [vmem:[%s952 + $0x48] sm:$0xff]
        %v1297 = vld [vmem:[%s952 + $0x50] sm:$0xf]
        %v1298 = vld [vmem:[%s952 + $0x54] sm:$0xff]
        %v1299 = vld [vmem:[%s952 + $0x5c] sm:$0xf]
        %v1300 = vld [vmem:[%s952 + $0x60] sm:$0xff]
        %v1301 = vld [vmem:[%s952 + $0x68] sm:$0xf]
        %v1302 = vld [vmem:[%s952 + $0x6c] sm:$0xff]
        %v1303 = vld [vmem:[%s952 + $0x74] sm:$0xf]
        %v1304 = vld [vmem:[%s952 + $0x78] sm:$0xff]
        %v1305 = vld [vmem:[%s952 + $0x80] sm:$0xf]
        %v1306 = vld [vmem:[%s952 + $0x84] sm:$0xff]
        %v1307 = vld [vmem:[%s952 + $0x8c] sm:$0xf]
        %v1308 = vld [vmem:[%s952 + $0x90] sm:$0xff]
        %v1309 = vld [vmem:[%s952 + $0x98] sm:$0xf]
        %v1310 = vld [vmem:[%s952 + $0x9c] sm:$0xff]
        %v1311 = vld [vmem:[%s952 + $0xa4] sm:$0xf]
        %v1312 = vld [vmem:[%s952 + $0xa8] sm:$0xff]
        %v1313 = vld [vmem:[%s952 + $0xb0] sm:$0xf]
        %v1314 = vld [vmem:[%s952 + $0xb4] sm:$0xff]
        %v1315 = vld [vmem:[%s952 + $0xbc] sm:$0xf]
        %v1316 = vld [vmem:[%s1121] sm:$0x7]
        %v1318 = vperm.slane %v1316, 0
        %v1319 = vperm.slane %v1316, 1
        %v1320 = vperm.slane %v1316, 2
        %v1356 = vunpack.c.l.b16 %v1284
        %v1357 = vunpack.c.h.b16 %v1284
        %v1358 = vunpack.c.l.b16 %v1285
        %v1359 = vunpack.c.l.b16 %v1286
        %v1360 = vunpack.c.h.b16 %v1286
        %v1361 = vunpack.c.l.b16 %v1287
        %v1362 = vunpack.c.l.b16 %v1288
        %v1363 = vunpack.c.h.b16 %v1288
        %v1364 = vunpack.c.l.b16 %v1289
        %v1365 = vunpack.c.l.b16 %v1290
        %v1366 = vunpack.c.h.b16 %v1290
        %v1367 = vunpack.c.l.b16 %v1291
        %v1368 = vunpack.c.l.b16 %v1292
        %v1369 = vunpack.c.h.b16 %v1292
        %v1370 = vunpack.c.l.b16 %v1293
        %v1371 = vunpack.c.l.b16 %v1294
        %v1372 = vunpack.c.h.b16 %v1294
        %v1373 = vunpack.c.l.b16 %v1295
        %v1374 = vunpack.c.l.b16 %v1296
        %v1375 = vunpack.c.h.b16 %v1296
        %v1376 = vunpack.c.l.b16 %v1297
        %v1377 = vunpack.c.l.b16 %v1298
        %v1378 = vunpack.c.h.b16 %v1298
        %v1379 = vunpack.c.l.b16 %v1299
        %v1380 = vunpack.c.l.b16 %v1300
        %v1381 = vunpack.c.h.b16 %v1300
        %v1382 = vunpack.c.l.b16 %v1301
        %v1383 = vunpack.c.l.b16 %v1302
        %v1384 = vunpack.c.h.b16 %v1302
        %v1385 = vunpack.c.l.b16 %v1303
        %v1386 = vunpack.c.l.b16 %v1304
        %v1387 = vunpack.c.h.b16 %v1304
        %v1388 = vunpack.c.l.b16 %v1305
        %v1389 = vunpack.c.l.b16 %v1306
        %v1390 = vunpack.c.h.b16 %v1306
        %v1391 = vunpack.c.l.b16 %v1307
        %v1392 = vunpack.c.l.b16 %v1308
        %v1393 = vunpack.c.h.b16 %v1308
        %v1394 = vunpack.c.l.b16 %v1309
        %v1395 = vunpack.c.l.b16 %v1310
        %v1396 = vunpack.c.h.b16 %v1310
        %v1397 = vunpack.c.l.b16 %v1311
        %v1398 = vunpack.c.l.b16 %v1312
        %v1399 = vunpack.c.h.b16 %v1312
        %v1400 = vunpack.c.l.b16 %v1313
        %v1401 = vunpack.c.l.b16 %v1314
        %v1402 = vunpack.c.h.b16 %v1314
        %v1403 = vunpack.c.l.b16 %v1315
        %v1404 = vpack.c.b16 %v1359, %v1356
        %v1405 = vpack.c.b16 %v1360, %v1357
        %v1406 = vpack.c.b16 %v1361, %v1358
        %v1407 = vpack.c.b16 %v1365, %v1362
        %v1408 = vpack.c.b16 %v1366, %v1363
        %v1409 = vpack.c.b16 %v1367, %v1364
        %v1410 = vpack.c.b16 %v1371, %v1368
        %v1411 = vpack.c.b16 %v1372, %v1369
        %v1412 = vpack.c.b16 %v1373, %v1370
        %v1413 = vpack.c.b16 %v1377, %v1374
        %v1414 = vpack.c.b16 %v1378, %v1375
        %v1415 = vpack.c.b16 %v1379, %v1376
        %v1416 = vpack.c.b16 %v1383, %v1380
        %v1417 = vpack.c.b16 %v1384, %v1381
        %v1418 = vpack.c.b16 %v1385, %v1382
        %v1419 = vpack.c.b16 %v1389, %v1386
        %v1420 = vpack.c.b16 %v1390, %v1387
        %v1421 = vpack.c.b16 %v1391, %v1388
        %v1422 = vpack.c.b16 %v1395, %v1392
        %v1423 = vpack.c.b16 %v1396, %v1393
        %v1424 = vpack.c.b16 %v1397, %v1394
        %v1425 = vpack.c.b16 %v1401, %v1398
        %v1426 = vpack.c.b16 %v1402, %v1399
        %v1427 = vpack.c.b16 %v1403, %v1400
        %1452 = vmatpush.bf16.msra.mxu0 %v1425
        %1453 = vmatpush.bf16.msra.mxu0 %v1422
        %1454 = vmatpush.bf16.msra.mxu0 %v1419
        %1455 = vmatpush.bf16.msra.mxu0 %v1416
        %1456 = vmatpush.bf16.msra.mxu0 %v1413
        %1457 = vmatpush.bf16.msra.mxu0 %v1410
        %1458 = vmatpush.bf16.msra.mxu0 %v1407
        %1459 = vmatpush.bf16.msra.mxu0 %v1404
        %1460 = vmatmul.bf16.gmra.mxu0 %v1282
        %v1461 = vpop.f32.mrf.mxu0
        %v1462 = vadd.f32 %v1318, %v1461
        %v1463 = vpop.f32.mrf.mxu0
        %v1464 = vadd.f32 %v1318, %v1463
        %1465 = vmatmul.bf16.gmra.mxu0 %v1283
        %v1466 = vpop.f32.mrf.mxu0
        %v1467 = vadd.f32 %v1318, %v1466
        %v1468 = vpop.f32.mrf.mxu0
        %v1469 = vadd.f32 %v1318, %v1468
        %1470 = vdwg.mxu0
        %1471 = vmatpush.bf16.msra.mxu0 %v1426
        %1472 = vmatpush.bf16.msra.mxu0 %v1423
        %1473 = vmatpush.bf16.msra.mxu0 %v1420
        %1474 = vmatpush.bf16.msra.mxu0 %v1417
        %1475 = vmatpush.bf16.msra.mxu0 %v1414
        %1476 = vmatpush.bf16.msra.mxu0 %v1411
        %1477 = vmatpush.bf16.msra.mxu0 %v1408
        %1478 = vmatpush.bf16.msra.mxu0 %v1405
        %1479 = vmatmul.bf16.gmra.mxu0 %v1282
        %v1480 = vpop.f32.mrf.mxu0
        %v1481 = vadd.f32 %v1319, %v1480
        %v1482 = vpop.f32.mrf.mxu0
        %v1483 = vadd.f32 %v1319, %v1482
        %1484 = vmatmul.bf16.gmra.mxu0 %v1283
        %v1485 = vpop.f32.mrf.mxu0
        %v1486 = vadd.f32 %v1319, %v1485
        %v1487 = vpop.f32.mrf.mxu0
        %v1488 = vadd.f32 %v1319, %v1487
        %1489 = vdwg.mxu0
        %1490 = vmatpush.bf16.msra.mxu0 %v1427
        %1491 = vmatpush.bf16.msra.mxu0 %v1424
        %1492 = vmatpush.bf16.msra.mxu0 %v1421
        %1493 = vmatpush.bf16.msra.mxu0 %v1418
        %1494 = vmatpush.bf16.msra.mxu0 %v1415
        %1495 = vmatpush.bf16.msra.mxu0 %v1412
        %1496 = vmatpush.bf16.msra.mxu0 %v1409
        %1497 = vmatpush.bf16.msra.mxu0 %v1406
        %1498 = vmatmul.bf16.gmra.mxu0 %v1282
        %v1499 = vpop.f32.mrf.mxu0
        %v1500 = vadd.f32 %v1320, %v1499
        %v1501 = vpop.f32.mrf.mxu0
        %v1502 = vadd.f32 %v1320, %v1501
        %1503 = vmatmul.bf16.gmra.mxu0 %v1283
        %v1504 = vpop.f32.mrf.mxu0
        %v1505 = vadd.f32 %v1320, %v1504
        %v1506 = vpop.f32.mrf.mxu0
        %v1507 = vadd.f32 %v1320, %v1506
        %1508 = vdwg.mxu0
        %v1509 = vpack.c.bf16 %v1462, %v1462
        %v1510 = vpack.c.bf16 %v1464, %v1464
        %v1511 = vpack.c.bf16 %v1481, %v1481
        %v1512 = vpack.c.bf16 %v1483, %v1483
        %v1513 = vpack.c.bf16 %v1500, %v1500
        %v1514 = vpack.c.bf16 %v1502, %v1502
        %v1515 = vld [vmem:[#allocation13] sm:$0x1]
        %1518 = vrot.lane.b32.xlu0 %v1509, 64
        %v1519 = vpop.permute.xlu0 %1518
        %1520 = vrot.lane.b32.xlu0 %v1510, 64
        %v1521 = vpop.permute.xlu0 %1520
        %v1524 = vpack.i.b16 %v1519, %v1509
        %v1525 = vshrl.u32 %v1509, 16
        %v1526 = vshrl.u32 %v1519, 16
        %v1527 = vpack.i.b16 %v1526, %v1525
        %v1530 = vpack.i.b16 %v1521, %v1510
        %v1531 = vshrl.u32 %v1510, 16
        %v1532 = vshrl.u32 %v1521, 16
        %v1533 = vpack.i.b16 %v1532, %v1531
        %v1536 = vunpack.c.l.s4 1983009808
        %v1537 = vunpack.c.0.s8 %v1536
        %v1538 = vperm.slane %v1524, %v1537
        %v1539 = vrot.slane %v1538, 4
        %vm1540 = vcmask 1047556
        %v1541 = vsel %vm1540, 0, %v1539
        %v1543 = vunpack.c.l.s4 1934713408
        %v1544 = vunpack.c.0.s8 %v1543
        %v1545 = vperm.slane %v1538, %v1544
        %v1547 = vunpack.c.l.s4 1934713408
        %v1548 = vunpack.c.0.s8 %v1547
        %v1549 = vperm.slane %v1541, %v1548
        %v1550 = vrot.slane %v1545, 4
        %v1551 = vsel %vm1540, 0, %v1550
        %v1552 = vrot.slane %v1549, 4
        %v1553 = vsel %vm1540, 0, %v1552
        %v1556 = vunpack.c.l.s4 1983009808
        %v1557 = vunpack.c.0.s8 %v1556
        %v1558 = vperm.slane %v1527, %v1557
        %v1559 = vrot.slane %v1558, 4
        %v1560 = vsel %vm1540, 0, %v1559
        %v1562 = vunpack.c.l.s4 1934713408
        %v1563 = vunpack.c.0.s8 %v1562
        %v1564 = vperm.slane %v1558, %v1563
        %v1566 = vunpack.c.l.s4 1934713408
        %v1567 = vunpack.c.0.s8 %v1566
        %v1568 = vperm.slane %v1560, %v1567
        %v1569 = vrot.slane %v1564, 4
        %v1570 = vsel %vm1540, 0, %v1569
        %v1571 = vrot.slane %v1568, 4
        %v1572 = vsel %vm1540, 0, %v1571
        %v1575 = vunpack.c.l.s4 1983009808
        %v1576 = vunpack.c.0.s8 %v1575
        %v1577 = vperm.slane %v1530, %v1576
        %v1578 = vrot.slane %v1577, 4
        %v1579 = vsel %vm1540, 0, %v1578
        %v1581 = vunpack.c.l.s4 1934713408
        %v1582 = vunpack.c.0.s8 %v1581
        %v1583 = vperm.slane %v1577, %v1582
        %v1585 = vunpack.c.l.s4 1934713408
        %v1586 = vunpack.c.0.s8 %v1585
        %v1587 = vperm.slane %v1579, %v1586
        %v1588 = vrot.slane %v1583, 4
        %v1589 = vsel %vm1540, 0, %v1588
        %v1590 = vrot.slane %v1587, 4
        %v1591 = vsel %vm1540, 0, %v1590
        %v1594 = vunpack.c.l.s4 1983009808
        %v1595 = vunpack.c.0.s8 %v1594
        %v1596 = vperm.slane %v1533, %v1595
        %v1597 = vrot.slane %v1596, 4
        %v1598 = vsel %vm1540, 0, %v1597
        %v1600 = vunpack.c.l.s4 1934713408
        %v1601 = vunpack.c.0.s8 %v1600
        %v1602 = vperm.slane %v1596, %v1601
        %v1604 = vunpack.c.l.s4 1934713408
        %v1605 = vunpack.c.0.s8 %v1604
        %v1606 = vperm.slane %v1598, %v1605
        %v1607 = vrot.slane %v1602, 4
        %v1608 = vsel %vm1540, 0, %v1607
        %v1609 = vrot.slane %v1606, 4
        %v1610 = vsel %vm1540, 0, %v1609
        %v1611 = vsel %vm1540, %v1552, %v1545
        %v1613 = vunpack.c.l.s4 1983009808
        %v1614 = vunpack.c.0.s8 %v1613
        %v1615 = vperm.slane %v1611, %v1614
        %v1616 = vrot.slane %v1553, 4
        %v1617 = vsel %vm1540, %v1616, %v1551
        %v1619 = vunpack.c.l.s4 1983009808
        %v1620 = vunpack.c.0.s8 %v1619
        %v1621 = vperm.slane %v1617, %v1620
        %v1622 = vrot.slane %v1621, 4
        %v1623 = vsel %vm1540, %v1622, %v1615
        %v1625 = vunpack.c.l.s4 1934713408
        %v1626 = vunpack.c.0.s8 %v1625
        %v1627 = vperm.slane %v1623, %v1626
        %v1628 = vsel %vm1540, %v1571, %v1564
        %v1630 = vunpack.c.l.s4 1983009808
        %v1631 = vunpack.c.0.s8 %v1630
        %v1632 = vperm.slane %v1628, %v1631
        %v1633 = vrot.slane %v1572, 4
        %v1634 = vsel %vm1540, %v1633, %v1570
        %v1636 = vunpack.c.l.s4 1983009808
        %v1637 = vunpack.c.0.s8 %v1636
        %v1638 = vperm.slane %v1634, %v1637
        %v1639 = vrot.slane %v1638, 4
        %v1640 = vsel %vm1540, %v1639, %v1632
        %v1642 = vunpack.c.l.s4 1934713408
        %v1643 = vunpack.c.0.s8 %v1642
        %v1644 = vperm.slane %v1640, %v1643
        %v1645 = vsel %vm1540, %v1590, %v1583
        %v1647 = vunpack.c.l.s4 1983009808
        %v1648 = vunpack.c.0.s8 %v1647
        %v1649 = vperm.slane %v1645, %v1648
        %v1650 = vrot.slane %v1591, 4
        %v1651 = vsel %vm1540, %v1650, %v1589
        %v1653 = vunpack.c.l.s4 1983009808
        %v1654 = vunpack.c.0.s8 %v1653
        %v1655 = vperm.slane %v1651, %v1654
        %v1656 = vrot.slane %v1655, 4
        %v1657 = vsel %vm1540, %v1656, %v1649
        %v1659 = vunpack.c.l.s4 1934713408
        %v1660 = vunpack.c.0.s8 %v1659
        %v1661 = vperm.slane %v1657, %v1660
        %v1662 = vsel %vm1540, %v1609, %v1602
        %v1664 = vunpack.c.l.s4 1983009808
        %v1665 = vunpack.c.0.s8 %v1664
        %v1666 = vperm.slane %v1662, %v1665
        %v1667 = vrot.slane %v1610, 4
        %v1668 = vsel %vm1540, %v1667, %v1608
        %v1670 = vunpack.c.l.s4 1983009808
        %v1671 = vunpack.c.0.s8 %v1670
        %v1672 = vperm.slane %v1668, %v1671
        %v1673 = vrot.slane %v1672, 4
        %v1674 = vsel %vm1540, %v1673, %v1666
        %v1676 = vunpack.c.l.s4 1934713408
        %v1677 = vunpack.c.0.s8 %v1676
        %v1678 = vperm.slane %v1674, %v1677
        %v1681 = vpack.i.b16 %v1644, %v1627
        %v1682 = vshrl.u32 %v1627, 16
        %v1683 = vshrl.u32 %v1644, 16
        %v1684 = vpack.i.b16 %v1683, %v1682
        %v1687 = vpack.i.b16 %v1678, %v1661
        %v1688 = vshrl.u32 %v1661, 16
        %v1689 = vshrl.u32 %v1678, 16
        %v1690 = vpack.i.b16 %v1689, %v1688
        %1693 = vrot.lane.b32.xlu0 %v1511, 64
        %v1694 = vpop.permute.xlu0 %1693
        %1695 = vrot.lane.b32.xlu0 %v1512, 64
        %v1696 = vpop.permute.xlu0 %1695
        %v1699 = vpack.i.b16 %v1694, %v1511
        %v1700 = vshrl.u32 %v1511, 16
        %v1701 = vshrl.u32 %v1694, 16
        %v1702 = vpack.i.b16 %v1701, %v1700
        %v1705 = vpack.i.b16 %v1696, %v1512
        %v1706 = vshrl.u32 %v1512, 16
        %v1707 = vshrl.u32 %v1696, 16
        %v1708 = vpack.i.b16 %v1707, %v1706
        %v1711 = vunpack.c.l.s4 1983009808
        %v1712 = vunpack.c.0.s8 %v1711
        %v1713 = vperm.slane %v1699, %v1712
        %v1714 = vrot.slane %v1713, 4
        %v1715 = vsel %vm1540, 0, %v1714
        %v1717 = vunpack.c.l.s4 1934713408
        %v1718 = vunpack.c.0.s8 %v1717
        %v1719 = vperm.slane %v1713, %v1718
        %v1721 = vunpack.c.l.s4 1934713408
        %v1722 = vunpack.c.0.s8 %v1721
        %v1723 = vperm.slane %v1715, %v1722
        %v1724 = vrot.slane %v1719, 4
        %v1725 = vsel %vm1540, 0, %v1724
        %v1726 = vrot.slane %v1723, 4
        %v1727 = vsel %vm1540, 0, %v1726
        %v1730 = vunpack.c.l.s4 1983009808
        %v1731 = vunpack.c.0.s8 %v1730
        %v1732 = vperm.slane %v1702, %v1731
        %v1733 = vrot.slane %v1732, 4
        %v1734 = vsel %vm1540, 0, %v1733
        %v1736 = vunpack.c.l.s4 1934713408
        %v1737 = vunpack.c.0.s8 %v1736
        %v1738 = vperm.slane %v1732, %v1737
        %v1740 = vunpack.c.l.s4 1934713408
        %v1741 = vunpack.c.0.s8 %v1740
        %v1742 = vperm.slane %v1734, %v1741
        %v1743 = vrot.slane %v1738, 4
        %v1744 = vsel %vm1540, 0, %v1743
        %v1745 = vrot.slane %v1742, 4
        %v1746 = vsel %vm1540, 0, %v1745
        %v1749 = vunpack.c.l.s4 1983009808
        %v1750 = vunpack.c.0.s8 %v1749
        %v1751 = vperm.slane %v1705, %v1750
        %v1752 = vrot.slane %v1751, 4
        %v1753 = vsel %vm1540, 0, %v1752
        %v1755 = vunpack.c.l.s4 1934713408
        %v1756 = vunpack.c.0.s8 %v1755
        %v1757 = vperm.slane %v1751, %v1756
        %v1759 = vunpack.c.l.s4 1934713408
        %v1760 = vunpack.c.0.s8 %v1759
        %v1761 = vperm.slane %v1753, %v1760
        %v1762 = vrot.slane %v1757, 4
        %v1763 = vsel %vm1540, 0, %v1762
        %v1764 = vrot.slane %v1761, 4
        %v1765 = vsel %vm1540, 0, %v1764
        %v1768 = vunpack.c.l.s4 1983009808
        %v1769 = vunpack.c.0.s8 %v1768
        %v1770 = vperm.slane %v1708, %v1769
        %v1771 = vrot.slane %v1770, 4
        %v1772 = vsel %vm1540, 0, %v1771
        %v1774 = vunpack.c.l.s4 1934713408
        %v1775 = vunpack.c.0.s8 %v1774
        %v1776 = vperm.slane %v1770, %v1775
        %v1778 = vunpack.c.l.s4 1934713408
        %v1779 = vunpack.c.0.s8 %v1778
        %v1780 = vperm.slane %v1772, %v1779
        %v1781 = vrot.slane %v1776, 4
        %v1782 = vsel %vm1540, 0, %v1781
        %v1783 = vrot.slane %v1780, 4
        %v1784 = vsel %vm1540, 0, %v1783
        %v1785 = vsel %vm1540, %v1726, %v1719
        %v1787 = vunpack.c.l.s4 1983009808
        %v1788 = vunpack.c.0.s8 %v1787
        %v1789 = vperm.slane %v1785, %v1788
        %v1790 = vrot.slane %v1727, 4
        %v1791 = vsel %vm1540, %v1790, %v1725
        %v1793 = vunpack.c.l.s4 1983009808
        %v1794 = vunpack.c.0.s8 %v1793
        %v1795 = vperm.slane %v1791, %v1794
        %v1796 = vrot.slane %v1795, 4
        %v1797 = vsel %vm1540, %v1796, %v1789
        %v1799 = vunpack.c.l.s4 1934713408
        %v1800 = vunpack.c.0.s8 %v1799
        %v1801 = vperm.slane %v1797, %v1800
        %v1802 = vsel %vm1540, %v1745, %v1738
        %v1804 = vunpack.c.l.s4 1983009808
        %v1805 = vunpack.c.0.s8 %v1804
        %v1806 = vperm.slane %v1802, %v1805
        %v1807 = vrot.slane %v1746, 4
        %v1808 = vsel %vm1540, %v1807, %v1744
        %v1810 = vunpack.c.l.s4 1983009808
        %v1811 = vunpack.c.0.s8 %v1810
        %v1812 = vperm.slane %v1808, %v1811
        %v1813 = vrot.slane %v1812, 4
        %v1814 = vsel %vm1540, %v1813, %v1806
        %v1816 = vunpack.c.l.s4 1934713408
        %v1817 = vunpack.c.0.s8 %v1816
        %v1818 = vperm.slane %v1814, %v1817
        %v1819 = vsel %vm1540, %v1764, %v1757
        %v1821 = vunpack.c.l.s4 1983009808
        %v1822 = vunpack.c.0.s8 %v1821
        %v1823 = vperm.slane %v1819, %v1822
        %v1824 = vrot.slane %v1765, 4
        %v1825 = vsel %vm1540, %v1824, %v1763
        %v1827 = vunpack.c.l.s4 1983009808
        %v1828 = vunpack.c.0.s8 %v1827
        %v1829 = vperm.slane %v1825, %v1828
        %v1830 = vrot.slane %v1829, 4
        %v1831 = vsel %vm1540, %v1830, %v1823
        %v1833 = vunpack.c.l.s4 1934713408
        %v1834 = vunpack.c.0.s8 %v1833
        %v1835 = vperm.slane %v1831, %v1834
        %v1836 = vsel %vm1540, %v1783, %v1776
        %v1838 = vunpack.c.l.s4 1983009808
        %v1839 = vunpack.c.0.s8 %v1838
        %v1840 = vperm.slane %v1836, %v1839
        %v1841 = vrot.slane %v1784, 4
        %v1842 = vsel %vm1540, %v1841, %v1782
        %v1844 = vunpack.c.l.s4 1983009808
        %v1845 = vunpack.c.0.s8 %v1844
        %v1846 = vperm.slane %v1842, %v1845
        %v1847 = vrot.slane %v1846, 4
        %v1848 = vsel %vm1540, %v1847, %v1840
        %v1850 = vunpack.c.l.s4 1934713408
        %v1851 = vunpack.c.0.s8 %v1850
        %v1852 = vperm.slane %v1848, %v1851
        %v1855 = vpack.i.b16 %v1818, %v1801
        %v1856 = vshrl.u32 %v1801, 16
        %v1857 = vshrl.u32 %v1818, 16
        %v1858 = vpack.i.b16 %v1857, %v1856
        %v1861 = vpack.i.b16 %v1852, %v1835
        %v1862 = vshrl.u32 %v1835, 16
        %v1863 = vshrl.u32 %v1852, 16
        %v1864 = vpack.i.b16 %v1863, %v1862
        %1867 = vrot.lane.b32.xlu0 %v1513, 64
        %v1868 = vpop.permute.xlu0 %1867
        %1869 = vrot.lane.b32.xlu0 %v1514, 64
        %v1870 = vpop.permute.xlu0 %1869
        %v1873 = vpack.i.b16 %v1868, %v1513
        %v1874 = vshrl.u32 %v1513, 16
        %v1875 = vshrl.u32 %v1868, 16
        %v1876 = vpack.i.b16 %v1875, %v1874
        %v1879 = vpack.i.b16 %v1870, %v1514
        %v1880 = vshrl.u32 %v1514, 16
        %v1881 = vshrl.u32 %v1870, 16
        %v1882 = vpack.i.b16 %v1881, %v1880
        %v1885 = vunpack.c.l.s4 1983009808
        %v1886 = vunpack.c.0.s8 %v1885
        %v1887 = vperm.slane %v1873, %v1886
        %v1888 = vrot.slane %v1887, 4
        %v1889 = vsel %vm1540, 0, %v1888
        %v1891 = vunpack.c.l.s4 1934713408
        %v1892 = vunpack.c.0.s8 %v1891
        %v1893 = vperm.slane %v1887, %v1892
        %v1895 = vunpack.c.l.s4 1934713408
        %v1896 = vunpack.c.0.s8 %v1895
        %v1897 = vperm.slane %v1889, %v1896
        %v1898 = vrot.slane %v1893, 4
        %v1899 = vsel %vm1540, 0, %v1898
        %v1900 = vrot.slane %v1897, 4
        %v1901 = vsel %vm1540, 0, %v1900
        %v1904 = vunpack.c.l.s4 1983009808
        %v1905 = vunpack.c.0.s8 %v1904
        %v1906 = vperm.slane %v1876, %v1905
        %v1907 = vrot.slane %v1906, 4
        %v1908 = vsel %vm1540, 0, %v1907
        %v1910 = vunpack.c.l.s4 1934713408
        %v1911 = vunpack.c.0.s8 %v1910
        %v1912 = vperm.slane %v1906, %v1911
        %v1914 = vunpack.c.l.s4 1934713408
        %v1915 = vunpack.c.0.s8 %v1914
        %v1916 = vperm.slane %v1908, %v1915
        %v1917 = vrot.slane %v1912, 4
        %v1918 = vsel %vm1540, 0, %v1917
        %v1919 = vrot.slane %v1916, 4
        %v1920 = vsel %vm1540, 0, %v1919
        %v1923 = vunpack.c.l.s4 1983009808
        %v1924 = vunpack.c.0.s8 %v1923
        %v1925 = vperm.slane %v1879, %v1924
        %v1926 = vrot.slane %v1925, 4
        %v1927 = vsel %vm1540, 0, %v1926
        %v1929 = vunpack.c.l.s4 1934713408
        %v1930 = vunpack.c.0.s8 %v1929
        %v1931 = vperm.slane %v1925, %v1930
        %v1933 = vunpack.c.l.s4 1934713408
        %v1934 = vunpack.c.0.s8 %v1933
        %v1935 = vperm.slane %v1927, %v1934
        %v1936 = vrot.slane %v1931, 4
        %v1937 = vsel %vm1540, 0, %v1936
        %v1938 = vrot.slane %v1935, 4
        %v1939 = vsel %vm1540, 0, %v1938
        %v1942 = vunpack.c.l.s4 1983009808
        %v1943 = vunpack.c.0.s8 %v1942
        %v1944 = vperm.slane %v1882, %v1943
        %v1945 = vrot.slane %v1944, 4
        %v1946 = vsel %vm1540, 0, %v1945
        %v1948 = vunpack.c.l.s4 1934713408
        %v1949 = vunpack.c.0.s8 %v1948
        %v1950 = vperm.slane %v1944, %v1949
        %v1952 = vunpack.c.l.s4 1934713408
        %v1953 = vunpack.c.0.s8 %v1952
        %v1954 = vperm.slane %v1946, %v1953
        %v1955 = vrot.slane %v1950, 4
        %v1956 = vsel %vm1540, 0, %v1955
        %v1957 = vrot.slane %v1954, 4
        %v1958 = vsel %vm1540, 0, %v1957
        %v1959 = vsel %vm1540, %v1900, %v1893
        %v1961 = vunpack.c.l.s4 1983009808
        %v1962 = vunpack.c.0.s8 %v1961
        %v1963 = vperm.slane %v1959, %v1962
        %v1964 = vrot.slane %v1901, 4
        %v1965 = vsel %vm1540, %v1964, %v1899
        %v1967 = vunpack.c.l.s4 1983009808
        %v1968 = vunpack.c.0.s8 %v1967
        %v1969 = vperm.slane %v1965, %v1968
        %v1970 = vrot.slane %v1969, 4
        %v1971 = vsel %vm1540, %v1970, %v1963
        %v1973 = vunpack.c.l.s4 1934713408
        %v1974 = vunpack.c.0.s8 %v1973
        %v1975 = vperm.slane %v1971, %v1974
        %v1976 = vsel %vm1540, %v1919, %v1912
        %v1978 = vunpack.c.l.s4 1983009808
        %v1979 = vunpack.c.0.s8 %v1978
        %v1980 = vperm.slane %v1976, %v1979
        %v1981 = vrot.slane %v1920, 4
        %v1982 = vsel %vm1540, %v1981, %v1918
        %v1984 = vunpack.c.l.s4 1983009808
        %v1985 = vunpack.c.0.s8 %v1984
        %v1986 = vperm.slane %v1982, %v1985
        %v1987 = vrot.slane %v1986, 4
        %v1988 = vsel %vm1540, %v1987, %v1980
        %v1990 = vunpack.c.l.s4 1934713408
        %v1991 = vunpack.c.0.s8 %v1990
        %v1992 = vperm.slane %v1988, %v1991
        %v1993 = vsel %vm1540, %v1938, %v1931
        %v1995 = vunpack.c.l.s4 1983009808
        %v1996 = vunpack.c.0.s8 %v1995
        %v1997 = vperm.slane %v1993, %v1996
        %v1998 = vrot.slane %v1939, 4
        %v1999 = vsel %vm1540, %v1998, %v1937
        %v2001 = vunpack.c.l.s4 1983009808
        %v2002 = vunpack.c.0.s8 %v2001
        %v2003 = vperm.slane %v1999, %v2002
        %v2004 = vrot.slane %v2003, 4
        %v2005 = vsel %vm1540, %v2004, %v1997
        %v2007 = vunpack.c.l.s4 1934713408
        %v2008 = vunpack.c.0.s8 %v2007
        %v2009 = vperm.slane %v2005, %v2008
        %v2010 = vsel %vm1540, %v1957, %v1950
        %v2012 = vunpack.c.l.s4 1983009808
        %v2013 = vunpack.c.0.s8 %v2012
        %v2014 = vperm.slane %v2010, %v2013
        %v2015 = vrot.slane %v1958, 4
        %v2016 = vsel %vm1540, %v2015, %v1956
        %v2018 = vunpack.c.l.s4 1983009808
        %v2019 = vunpack.c.0.s8 %v2018
        %v2020 = vperm.slane %v2016, %v2019
        %v2021 = vrot.slane %v2020, 4
        %v2022 = vsel %vm1540, %v2021, %v2014
        %v2024 = vunpack.c.l.s4 1934713408
        %v2025 = vunpack.c.0.s8 %v2024
        %v2026 = vperm.slane %v2022, %v2025
        %v2029 = vpack.i.b16 %v1992, %v1975
        %v2030 = vshrl.u32 %v1975, 16
        %v2031 = vshrl.u32 %v1992, 16
        %v2032 = vpack.i.b16 %v2031, %v2030
        %v2035 = vpack.i.b16 %v2026, %v2009
        %v2036 = vshrl.u32 %v2009, 16
        %v2037 = vshrl.u32 %v2026, 16
        %v2038 = vpack.i.b16 %v2037, %v2036
        %v2039 = vunpack.c.l.b16 %v1681
        %v2040 = vunpack.c.l.b16 %v1687
        %v2041 = vpack.c.b16 %v2040, %v2039
        %v2042 = vunpack.c.l.b16 %v1855
        %v2043 = vunpack.c.l.b16 %v1861
        %v2044 = vpack.c.b16 %v2043, %v2042
        %vm2045 = vcmask 523264
        %v2047 = vsel %vm2045, %v2041, 0
        %v2050 = vsel %vm2045, %v2044, 0
        %2052 = vmatpush.bf16.xpose.msra.mxu0 0
        %2053 = vmatpush.bf16.xpose.msra.mxu0 0
        %2054 = vmatpush.bf16.xpose.msra.mxu0 0
        %2055 = vmatpush.bf16.xpose.msra.mxu0 0
        %2056 = vmatpush.bf16.xpose.msra.mxu0 0
        %2057 = vmatpush.bf16.xpose.msra.mxu0 0
        %2058 = vmatpush.bf16.xpose.msra.mxu0 0
        %2059 = vmatpush.bf16.xpose.msra.mxu0 %v2050
        %2060 = vmatmul.bf16.gmra.mxu0 %v2047
        %v2061 = vpop.f32.mrf.mxu0
        %v2062 = vadd.f32 0.0, %v2061
        %v2063 = vpop.f32.mrf.mxu0
        %v2064 = vadd.f32 0.0, %v2063
        %2065 = vdwg.mxu0
        %v2066 = vunpack.c.l.b16 %v1684
        %v2067 = vunpack.c.l.b16 %v1690
        %v2068 = vpack.c.b16 %v2067, %v2066
        %v2069 = vunpack.c.l.b16 %v1858
        %v2070 = vunpack.c.l.b16 %v1864
        %v2071 = vpack.c.b16 %v2070, %v2069
        %v2073 = vsel %vm2045, %v2068, 0
        %v2076 = vsel %vm2045, %v2071, 0
        %2078 = vmatpush.bf16.xpose.msra.mxu0 0
        %2079 = vmatpush.bf16.xpose.msra.mxu0 0
        %2080 = vmatpush.bf16.xpose.msra.mxu0 0
        %2081 = vmatpush.bf16.xpose.msra.mxu0 0
        %2082 = vmatpush.bf16.xpose.msra.mxu0 0
        %2083 = vmatpush.bf16.xpose.msra.mxu0 0
        %2084 = vmatpush.bf16.xpose.msra.mxu0 0
        %2085 = vmatpush.bf16.xpose.msra.mxu0 %v2076
        %2086 = vmatmul.bf16.gmra.mxu0 %v2073
        %v2087 = vpop.f32.mrf.mxu0
        %v2088 = vadd.f32 0.0, %v2087
        %v2089 = vpop.f32.mrf.mxu0
        %v2090 = vadd.f32 0.0, %v2089
        %2091 = vdwg.mxu0
        %v2092 = vmul.f32 %v2062, 0.125
        %v2093 = vmul.f32 %v2064, 0.125
        %v2094 = vmul.f32 %v2088, 0.125
        %v2095 = vmul.f32 %v2090, 0.125
        %v2097 = vperm.slane %v1515, 0
        %v2099 = vadd.f32 %v2092, %v2097
        %v2100 = vadd.f32 %v2093, %v2097
        %v2101 = vadd.f32 %v2094, %v2097
        %v2102 = vadd.f32 %v2095, %v2097
        %vm2103 = vcmask 130048
        %v2104 = vsel %vm2103, %v2099, -inf
        %2105 = vmax.xlane.f32.xlu0 %v2104
        %v2106 = vpop.xlane.xlu0 %2105
        %v2107 = vsel %vm2103, %v2100, -inf
        %2108 = vmax.xlane.f32.xlu0 %v2107
        %v2109 = vpop.xlane.xlu0 %2108
        %v2110 = vsel %vm2103, %v2101, -inf
        %2111 = vmax.xlane.f32.xlu0 %v2110
        %v2112 = vpop.xlane.xlu0 %2111
        %v2113 = vsel %vm2103, %v2102, -inf
        %2114 = vmax.xlane.f32.xlu0 %v2113
        %v2115 = vpop.xlane.xlu0 %2114
        %v2116 = vsub.f32 %v2099, %v2106
        %v2117 = vsub.f32 %v2100, %v2109
        %v2118 = vsub.f32 %v2101, %v2112
        %v2119 = vsub.f32 %v2102, %v2115
        %v2120 = vmul.f32 %v2116, 1.442695
        %v2121 = vpow.pop %v2120
        %v2122 = vmul.f32 %v2117, 1.442695
        %v2123 = vpow.pop %v2122
        %v2124 = vmul.f32 %v2118, 1.442695
        %v2125 = vpow.pop %v2124
        %v2126 = vmul.f32 %v2119, 1.442695
        %v2127 = vpow.pop %v2126
        %v2128 = vsel %vm2103, %v2121, 0.0
        %2129 = vadd.xlane.f32.xlu0 %v2128
        %v2130 = vpop.xlane.xlu0 %2129
        %v2131 = vsel %vm2103, %v2123, 0.0
        %2132 = vadd.xlane.f32.xlu0 %v2131
        %v2133 = vpop.xlane.xlu0 %2132
        %v2134 = vsel %vm2103, %v2125, 0.0
        %2135 = vadd.xlane.f32.xlu0 %v2134
        %v2136 = vpop.xlane.xlu0 %2135
        %v2137 = vsel %vm2103, %v2127, 0.0
        %2138 = vadd.xlane.f32.xlu0 %v2137
        %v2139 = vpop.xlane.xlu0 %2138
        %v2140 = vrcp.pop %v2130
        %v2141 = vrcp.pop %v2133
        %v2142 = vrcp.pop %v2136
        %v2143 = vrcp.pop %v2139
        %v2144 = vmul.f32 %v2121, %v2140
        %v2145 = vmul.f32 %v2123, %v2141
        %v2146 = vmul.f32 %v2125, %v2142
        %v2147 = vmul.f32 %v2127, %v2143
        %v2148 = vpack.c.bf16 %v2144, %v2144
        %v2149 = vpack.c.bf16 %v2145, %v2145
        %v2150 = vpack.c.bf16 %v2146, %v2146
        %v2151 = vpack.c.bf16 %v2147, %v2147
        %v2154 = vunpack.c.l.b16 %v2148
        %v2155 = vunpack.c.l.b16 %v2149
        %v2156 = vpack.c.b16 %v2155, %v2154
        %v2157 = vunpack.c.l.b16 %v2029
        %v2158 = vunpack.c.l.b16 %v2035
        %v2159 = vpack.c.b16 %v2158, %v2157
        %v2162 = vsel %vm2103, %v2156, 0
        %2164 = vmatpush.bf16.msra.mxu0 0
        %2165 = vmatpush.bf16.msra.mxu0 0
        %2166 = vmatpush.bf16.msra.mxu0 0
        %2167 = vmatpush.bf16.msra.mxu0 0
        %2168 = vmatpush.bf16.msra.mxu0 0
        %2169 = vmatpush.bf16.msra.mxu0 0
        %2170 = vmatpush.bf16.msra.mxu0 0
        %2171 = vmatpush.bf16.msra.mxu0 %v2159
        %2172 = vmatmul.bf16.gmra.mxu0 %v2162
        %v2173 = vpop.f32.mrf.mxu0
        %v2174 = vadd.f32 0.0, %v2173
        %v2175 = vpop.f32.mrf.mxu0
        %v2176 = vadd.f32 0.0, %v2175
        %2177 = vdwg.mxu0
        %v2180 = vunpack.c.l.b16 %v2150
        %v2181 = vunpack.c.l.b16 %v2151
        %v2182 = vpack.c.b16 %v2181, %v2180
        %v2183 = vunpack.c.l.b16 %v2032
        %v2184 = vunpack.c.l.b16 %v2038
        %v2185 = vpack.c.b16 %v2184, %v2183
        %v2188 = vsel %vm2103, %v2182, 0
        %2190 = vmatpush.bf16.msra.mxu0 0
        %2191 = vmatpush.bf16.msra.mxu0 0
        %2192 = vmatpush.bf16.msra.mxu0 0
        %2193 = vmatpush.bf16.msra.mxu0 0
        %2194 = vmatpush.bf16.msra.mxu0 0
        %2195 = vmatpush.bf16.msra.mxu0 0
        %2196 = vmatpush.bf16.msra.mxu0 0
        %2197 = vmatpush.bf16.msra.mxu0 %v2185
        %2198 = vmatmul.bf16.gmra.mxu0 %v2188
        %v2199 = vpop.f32.mrf.mxu0
        %v2200 = vadd.f32 0.0, %v2199
        %v2201 = vpop.f32.mrf.mxu0
        %v2202 = vadd.f32 0.0, %v2201
        %2203 = vdwg.mxu0
        %v2204 = vpack.c.bf16 %v2174, %v2174
        %v2205 = vpack.c.bf16 %v2176, %v2176
        %v2206 = vpack.c.bf16 %v2200, %v2200
        %v2207 = vpack.c.bf16 %v2202, %v2202
        %v2210 = vpack.i.b16 %v2206, %v2204
        %v2211 = vshrl.u32 %v2204, 16
        %v2212 = vshrl.u32 %v2206, 16
        %v2213 = vpack.i.b16 %v2212, %v2211
        %v2216 = vpack.i.b16 %v2207, %v2205
        %v2217 = vshrl.u32 %v2205, 16
        %v2218 = vshrl.u32 %v2207, 16
        %v2219 = vpack.i.b16 %v2218, %v2217
        %v2222 = vunpack.c.l.s4 1983009808
        %v2223 = vunpack.c.0.s8 %v2222
        %v2224 = vperm.slane %v2210, %v2223
        %v2225 = vrot.slane %v2224, 4
        %v2226 = vsel %vm1540, 0, %v2225
        %v2228 = vunpack.c.l.s4 1934713408
        %v2229 = vunpack.c.0.s8 %v2228
        %v2230 = vperm.slane %v2224, %v2229
        %v2232 = vunpack.c.l.s4 1934713408
        %v2233 = vunpack.c.0.s8 %v2232
        %v2234 = vperm.slane %v2226, %v2233
        %v2235 = vrot.slane %v2230, 4
        %v2236 = vsel %vm1540, 0, %v2235
        %v2237 = vrot.slane %v2234, 4
        %v2238 = vsel %vm1540, 0, %v2237
        %v2241 = vunpack.c.l.s4 1983009808
        %v2242 = vunpack.c.0.s8 %v2241
        %v2243 = vperm.slane %v2213, %v2242
        %v2244 = vrot.slane %v2243, 4
        %v2245 = vsel %vm1540, 0, %v2244
        %v2247 = vunpack.c.l.s4 1934713408
        %v2248 = vunpack.c.0.s8 %v2247
        %v2249 = vperm.slane %v2243, %v2248
        %v2251 = vunpack.c.l.s4 1934713408
        %v2252 = vunpack.c.0.s8 %v2251
        %v2253 = vperm.slane %v2245, %v2252
        %v2254 = vrot.slane %v2249, 4
        %v2255 = vsel %vm1540, 0, %v2254
        %v2256 = vrot.slane %v2253, 4
        %v2257 = vsel %vm1540, 0, %v2256
        %v2260 = vunpack.c.l.s4 1983009808
        %v2261 = vunpack.c.0.s8 %v2260
        %v2262 = vperm.slane %v2216, %v2261
        %v2263 = vrot.slane %v2262, 4
        %v2264 = vsel %vm1540, 0, %v2263
        %v2266 = vunpack.c.l.s4 1934713408
        %v2267 = vunpack.c.0.s8 %v2266
        %v2268 = vperm.slane %v2262, %v2267
        %v2270 = vunpack.c.l.s4 1934713408
        %v2271 = vunpack.c.0.s8 %v2270
        %v2272 = vperm.slane %v2264, %v2271
        %v2273 = vrot.slane %v2268, 4
        %v2274 = vsel %vm1540, 0, %v2273
        %v2275 = vrot.slane %v2272, 4
        %v2276 = vsel %vm1540, 0, %v2275
        %v2279 = vunpack.c.l.s4 1983009808
        %v2280 = vunpack.c.0.s8 %v2279
        %v2281 = vperm.slane %v2219, %v2280
        %v2282 = vrot.slane %v2281, 4
        %v2283 = vsel %vm1540, 0, %v2282
        %v2285 = vunpack.c.l.s4 1934713408
        %v2286 = vunpack.c.0.s8 %v2285
        %v2287 = vperm.slane %v2281, %v2286
        %v2289 = vunpack.c.l.s4 1934713408
        %v2290 = vunpack.c.0.s8 %v2289
        %v2291 = vperm.slane %v2283, %v2290
        %v2292 = vrot.slane %v2287, 4
        %v2293 = vsel %vm1540, 0, %v2292
        %v2294 = vrot.slane %v2291, 4
        %v2295 = vsel %vm1540, 0, %v2294
        %v2296 = vsel %vm1540, %v2237, %v2230
        %v2298 = vunpack.c.l.s4 1983009808
        %v2299 = vunpack.c.0.s8 %v2298
        %v2300 = vperm.slane %v2296, %v2299
        %v2301 = vrot.slane %v2238, 4
        %v2302 = vsel %vm1540, %v2301, %v2236
        %v2304 = vunpack.c.l.s4 1983009808
        %v2305 = vunpack.c.0.s8 %v2304
        %v2306 = vperm.slane %v2302, %v2305
        %v2307 = vrot.slane %v2306, 4
        %v2308 = vsel %vm1540, %v2307, %v2300
        %v2310 = vunpack.c.l.s4 1934713408
        %v2311 = vunpack.c.0.s8 %v2310
        %v2312 = vperm.slane %v2308, %v2311
        %v2313 = vsel %vm1540, %v2256, %v2249
        %v2315 = vunpack.c.l.s4 1983009808
        %v2316 = vunpack.c.0.s8 %v2315
        %v2317 = vperm.slane %v2313, %v2316
        %v2318 = vrot.slane %v2257, 4
        %v2319 = vsel %vm1540, %v2318, %v2255
        %v2321 = vunpack.c.l.s4 1983009808
        %v2322 = vunpack.c.0.s8 %v2321
        %v2323 = vperm.slane %v2319, %v2322
        %v2324 = vrot.slane %v2323, 4
        %v2325 = vsel %vm1540, %v2324, %v2317
        %v2327 = vunpack.c.l.s4 1934713408
        %v2328 = vunpack.c.0.s8 %v2327
        %v2329 = vperm.slane %v2325, %v2328
        %v2330 = vsel %vm1540, %v2275, %v2268
        %v2332 = vunpack.c.l.s4 1983009808
        %v2333 = vunpack.c.0.s8 %v2332
        %v2334 = vperm.slane %v2330, %v2333
        %v2335 = vrot.slane %v2276, 4
        %v2336 = vsel %vm1540, %v2335, %v2274
        %v2338 = vunpack.c.l.s4 1983009808
        %v2339 = vunpack.c.0.s8 %v2338
        %v2340 = vperm.slane %v2336, %v2339
        %v2341 = vrot.slane %v2340, 4
        %v2342 = vsel %vm1540, %v2341, %v2334
        %v2344 = vunpack.c.l.s4 1934713408
        %v2345 = vunpack.c.0.s8 %v2344
        %v2346 = vperm.slane %v2342, %v2345
        %v2347 = vsel %vm1540, %v2294, %v2287
        %v2349 = vunpack.c.l.s4 1983009808
        %v2350 = vunpack.c.0.s8 %v2349
        %v2351 = vperm.slane %v2347, %v2350
        %v2352 = vrot.slane %v2295, 4
        %v2353 = vsel %vm1540, %v2352, %v2293
        %v2355 = vunpack.c.l.s4 1983009808
        %v2356 = vunpack.c.0.s8 %v2355
        %v2357 = vperm.slane %v2353, %v2356
        %v2358 = vrot.slane %v2357, 4
        %v2359 = vsel %vm1540, %v2358, %v2351
        %v2361 = vunpack.c.l.s4 1934713408
        %v2362 = vunpack.c.0.s8 %v2361
        %v2363 = vperm.slane %v2359, %v2362
        %v2366 = vpack.i.b16 %v2329, %v2312
        %v2367 = vshrl.u32 %v2312, 16
        %v2368 = vshrl.u32 %v2329, 16
        %v2369 = vpack.i.b16 %v2368, %v2367
        %v2372 = vpack.i.b16 %v2363, %v2346
        %v2373 = vshrl.u32 %v2346, 16
        %v2374 = vshrl.u32 %v2363, 16
        %v2375 = vpack.i.b16 %v2374, %v2373
        %v2376 = vunpack.c.l.b16 %v2366
        %v2377 = vunpack.c.l.b16 %v2372
        %v2378 = vpack.c.b16 %v2377, %v2376
        %v2379 = vunpack.c.l.b16 %v2369
        %v2380 = vunpack.c.l.b16 %v2375
        %v2381 = vpack.c.b16 %v2380, %v2379
        %2382 = vrot.lane.b32.xlu0 %v2381, 64
        %v2383 = vpop.permute.xlu0 %2382
        %v2386 = vsel %vm2045, %v2378, %v2383
        %v2388 = vunpack.c.l.b16 %v2386
        %v2389 = vunpack.c.h.b16 %v2386
        %v2390 = vpack.c.b16 %v2388, %v2388
        %v2391 = vpack.c.b16 %v2389, %v2389
        %2394 = vst [vmem:[#allocation3] sm:$0xf] %v2390
        %2395 = vst [vmem:[#allocation3 + $0x4] sm:$0xf] %v2391
        %v2396 = vpack.c.bf16 %v1467, %v1467
        %v2397 = vpack.c.bf16 %v1469, %v1469
        %v2398 = vpack.c.bf16 %v1486, %v1486
        %v2399 = vpack.c.bf16 %v1488, %v1488
        %v2400 = vpack.c.bf16 %v1505, %v1505
        %v2401 = vpack.c.bf16 %v1507, %v1507
        %s2402 = scalar_lea.vmem [#allocation13], 1
        %v2403 = vld [vmem:[%s2402] sm:$0x1]
        %2406 = vrot.lane.b32.xlu0 %v2396, 64
        %v2407 = vpop.permute.xlu0 %2406
        %2408 = vrot.lane.b32.xlu0 %v2397, 64
        %v2409 = vpop.permute.xlu0 %2408
        %v2412 = vpack.i.b16 %v2407, %v2396
        %v2413 = vshrl.u32 %v2396, 16
        %v2414 = vshrl.u32 %v2407, 16
        %v2415 = vpack.i.b16 %v2414, %v2413
        %v2418 = vpack.i.b16 %v2409, %v2397
        %v2419 = vshrl.u32 %v2397, 16
        %v2420 = vshrl.u32 %v2409, 16
        %v2421 = vpack.i.b16 %v2420, %v2419
        %v2424 = vunpack.c.l.s4 1983009808
        %v2425 = vunpack.c.0.s8 %v2424
        %v2426 = vperm.slane %v2412, %v2425
        %v2427 = vrot.slane %v2426, 4
        %v2428 = vsel %vm1540, 0, %v2427
        %v2430 = vunpack.c.l.s4 1934713408
        %v2431 = vunpack.c.0.s8 %v2430
        %v2432 = vperm.slane %v2426, %v2431
        %v2434 = vunpack.c.l.s4 1934713408
        %v2435 = vunpack.c.0.s8 %v2434
        %v2436 = vperm.slane %v2428, %v2435
        %v2437 = vrot.slane %v2432, 4
        %v2438 = vsel %vm1540, 0, %v2437
        %v2439 = vrot.slane %v2436, 4
        %v2440 = vsel %vm1540, 0, %v2439
        %v2443 = vunpack.c.l.s4 1983009808
        %v2444 = vunpack.c.0.s8 %v2443
        %v2445 = vperm.slane %v2415, %v2444
        %v2446 = vrot.slane %v2445, 4
        %v2447 = vsel %vm1540, 0, %v2446
        %v2449 = vunpack.c.l.s4 1934713408
        %v2450 = vunpack.c.0.s8 %v2449
        %v2451 = vperm.slane %v2445, %v2450
        %v2453 = vunpack.c.l.s4 1934713408
        %v2454 = vunpack.c.0.s8 %v2453
        %v2455 = vperm.slane %v2447, %v2454
        %v2456 = vrot.slane %v2451, 4
        %v2457 = vsel %vm1540, 0, %v2456
        %v2458 = vrot.slane %v2455, 4
        %v2459 = vsel %vm1540, 0, %v2458
        %v2462 = vunpack.c.l.s4 1983009808
        %v2463 = vunpack.c.0.s8 %v2462
        %v2464 = vperm.slane %v2418, %v2463
        %v2465 = vrot.slane %v2464, 4
        %v2466 = vsel %vm1540, 0, %v2465
        %v2468 = vunpack.c.l.s4 1934713408
        %v2469 = vunpack.c.0.s8 %v2468
        %v2470 = vperm.slane %v2464, %v2469
        %v2472 = vunpack.c.l.s4 1934713408
        %v2473 = vunpack.c.0.s8 %v2472
        %v2474 = vperm.slane %v2466, %v2473
        %v2475 = vrot.slane %v2470, 4
        %v2476 = vsel %vm1540, 0, %v2475
        %v2477 = vrot.slane %v2474, 4
        %v2478 = vsel %vm1540, 0, %v2477
        %v2481 = vunpack.c.l.s4 1983009808
        %v2482 = vunpack.c.0.s8 %v2481
        %v2483 = vperm.slane %v2421, %v2482
        %v2484 = vrot.slane %v2483, 4
        %v2485 = vsel %vm1540, 0, %v2484
        %v2487 = vunpack.c.l.s4 1934713408
        %v2488 = vunpack.c.0.s8 %v2487
        %v2489 = vperm.slane %v2483, %v2488
        %v2491 = vunpack.c.l.s4 1934713408
        %v2492 = vunpack.c.0.s8 %v2491
        %v2493 = vperm.slane %v2485, %v2492
        %v2494 = vrot.slane %v2489, 4
        %v2495 = vsel %vm1540, 0, %v2494
        %v2496 = vrot.slane %v2493, 4
        %v2497 = vsel %vm1540, 0, %v2496
        %v2498 = vsel %vm1540, %v2439, %v2432
        %v2500 = vunpack.c.l.s4 1983009808
        %v2501 = vunpack.c.0.s8 %v2500
        %v2502 = vperm.slane %v2498, %v2501
        %v2503 = vrot.slane %v2440, 4
        %v2504 = vsel %vm1540, %v2503, %v2438
        %v2506 = vunpack.c.l.s4 1983009808
        %v2507 = vunpack.c.0.s8 %v2506
        %v2508 = vperm.slane %v2504, %v2507
        %v2509 = vrot.slane %v2508, 4
        %v2510 = vsel %vm1540, %v2509, %v2502
        %v2512 = vunpack.c.l.s4 1934713408
        %v2513 = vunpack.c.0.s8 %v2512
        %v2514 = vperm.slane %v2510, %v2513
        %v2515 = vsel %vm1540, %v2458, %v2451
        %v2517 = vunpack.c.l.s4 1983009808
        %v2518 = vunpack.c.0.s8 %v2517
        %v2519 = vperm.slane %v2515, %v2518
        %v2520 = vrot.slane %v2459, 4
        %v2521 = vsel %vm1540, %v2520, %v2457
        %v2523 = vunpack.c.l.s4 1983009808
        %v2524 = vunpack.c.0.s8 %v2523
        %v2525 = vperm.slane %v2521, %v2524
        %v2526 = vrot.slane %v2525, 4
        %v2527 = vsel %vm1540, %v2526, %v2519
        %v2529 = vunpack.c.l.s4 1934713408
        %v2530 = vunpack.c.0.s8 %v2529
        %v2531 = vperm.slane %v2527, %v2530
        %v2532 = vsel %vm1540, %v2477, %v2470
        %v2534 = vunpack.c.l.s4 1983009808
        %v2535 = vunpack.c.0.s8 %v2534
        %v2536 = vperm.slane %v2532, %v2535
        %v2537 = vrot.slane %v2478, 4
        %v2538 = vsel %vm1540, %v2537, %v2476
        %v2540 = vunpack.c.l.s4 1983009808
        %v2541 = vunpack.c.0.s8 %v2540
        %v2542 = vperm.slane %v2538, %v2541
        %v2543 = vrot.slane %v2542, 4
        %v2544 = vsel %vm1540, %v2543, %v2536
        %v2546 = vunpack.c.l.s4 1934713408
        %v2547 = vunpack.c.0.s8 %v2546
        %v2548 = vperm.slane %v2544, %v2547
        %v2549 = vsel %vm1540, %v2496, %v2489
        %v2551 = vunpack.c.l.s4 1983009808
        %v2552 = vunpack.c.0.s8 %v2551
        %v2553 = vperm.slane %v2549, %v2552
        %v2554 = vrot.slane %v2497, 4
        %v2555 = vsel %vm1540, %v2554, %v2495
        %v2557 = vunpack.c.l.s4 1983009808
        %v2558 = vunpack.c.0.s8 %v2557
        %v2559 = vperm.slane %v2555, %v2558
        %v2560 = vrot.slane %v2559, 4
        %v2561 = vsel %vm1540, %v2560, %v2553
        %v2563 = vunpack.c.l.s4 1934713408
        %v2564 = vunpack.c.0.s8 %v2563
        %v2565 = vperm.slane %v2561, %v2564
        %v2568 = vpack.i.b16 %v2531, %v2514
        %v2569 = vshrl.u32 %v2514, 16
        %v2570 = vshrl.u32 %v2531, 16
        %v2571 = vpack.i.b16 %v2570, %v2569
        %v2574 = vpack.i.b16 %v2565, %v2548
        %v2575 = vshrl.u32 %v2548, 16
        %v2576 = vshrl.u32 %v2565, 16
        %v2577 = vpack.i.b16 %v2576, %v2575
        %2580 = vrot.lane.b32.xlu0 %v2398, 64
        %v2581 = vpop.permute.xlu0 %2580
        %2582 = vrot.lane.b32.xlu0 %v2399, 64
        %v2583 = vpop.permute.xlu0 %2582
        %v2586 = vpack.i.b16 %v2581, %v2398
        %v2587 = vshrl.u32 %v2398, 16
        %v2588 = vshrl.u32 %v2581, 16
        %v2589 = vpack.i.b16 %v2588, %v2587
        %v2592 = vpack.i.b16 %v2583, %v2399
        %v2593 = vshrl.u32 %v2399, 16
        %v2594 = vshrl.u32 %v2583, 16
        %v2595 = vpack.i.b16 %v2594, %v2593
        %v2598 = vunpack.c.l.s4 1983009808
        %v2599 = vunpack.c.0.s8 %v2598
        %v2600 = vperm.slane %v2586, %v2599
        %v2601 = vrot.slane %v2600, 4
        %v2602 = vsel %vm1540, 0, %v2601
        %v2604 = vunpack.c.l.s4 1934713408
        %v2605 = vunpack.c.0.s8 %v2604
        %v2606 = vperm.slane %v2600, %v2605
        %v2608 = vunpack.c.l.s4 1934713408
        %v2609 = vunpack.c.0.s8 %v2608
        %v2610 = vperm.slane %v2602, %v2609
        %v2611 = vrot.slane %v2606, 4
        %v2612 = vsel %vm1540, 0, %v2611
        %v2613 = vrot.slane %v2610, 4
        %v2614 = vsel %vm1540, 0, %v2613
        %v2617 = vunpack.c.l.s4 1983009808
        %v2618 = vunpack.c.0.s8 %v2617
        %v2619 = vperm.slane %v2589, %v2618
        %v2620 = vrot.slane %v2619, 4
        %v2621 = vsel %vm1540, 0, %v2620
        %v2623 = vunpack.c.l.s4 1934713408
        %v2624 = vunpack.c.0.s8 %v2623
        %v2625 = vperm.slane %v2619, %v2624
        %v2627 = vunpack.c.l.s4 1934713408
        %v2628 = vunpack.c.0.s8 %v2627
        %v2629 = vperm.slane %v2621, %v2628
        %v2630 = vrot.slane %v2625, 4
        %v2631 = vsel %vm1540, 0, %v2630
        %v2632 = vrot.slane %v2629, 4
        %v2633 = vsel %vm1540, 0, %v2632
        %v2636 = vunpack.c.l.s4 1983009808
        %v2637 = vunpack.c.0.s8 %v2636
        %v2638 = vperm.slane %v2592, %v2637
        %v2639 = vrot.slane %v2638, 4
        %v2640 = vsel %vm1540, 0, %v2639
        %v2642 = vunpack.c.l.s4 1934713408
        %v2643 = vunpack.c.0.s8 %v2642
        %v2644 = vperm.slane %v2638, %v2643
        %v2646 = vunpack.c.l.s4 1934713408
        %v2647 = vunpack.c.0.s8 %v2646
        %v2648 = vperm.slane %v2640, %v2647
        %v2649 = vrot.slane %v2644, 4
        %v2650 = vsel %vm1540, 0, %v2649
        %v2651 = vrot.slane %v2648, 4
        %v2652 = vsel %vm1540, 0, %v2651
        %v2655 = vunpack.c.l.s4 1983009808
        %v2656 = vunpack.c.0.s8 %v2655
        %v2657 = vperm.slane %v2595, %v2656
        %v2658 = vrot.slane %v2657, 4
        %v2659 = vsel %vm1540, 0, %v2658
        %v2661 = vunpack.c.l.s4 1934713408
        %v2662 = vunpack.c.0.s8 %v2661
        %v2663 = vperm.slane %v2657, %v2662
        %v2665 = vunpack.c.l.s4 1934713408
        %v2666 = vunpack.c.0.s8 %v2665
        %v2667 = vperm.slane %v2659, %v2666
        %v2668 = vrot.slane %v2663, 4
        %v2669 = vsel %vm1540, 0, %v2668
        %v2670 = vrot.slane %v2667, 4
        %v2671 = vsel %vm1540, 0, %v2670
        %v2672 = vsel %vm1540, %v2613, %v2606
        %v2674 = vunpack.c.l.s4 1983009808
        %v2675 = vunpack.c.0.s8 %v2674
        %v2676 = vperm.slane %v2672, %v2675
        %v2677 = vrot.slane %v2614, 4
        %v2678 = vsel %vm1540, %v2677, %v2612
        %v2680 = vunpack.c.l.s4 1983009808
        %v2681 = vunpack.c.0.s8 %v2680
        %v2682 = vperm.slane %v2678, %v2681
        %v2683 = vrot.slane %v2682, 4
        %v2684 = vsel %vm1540, %v2683, %v2676
        %v2686 = vunpack.c.l.s4 1934713408
        %v2687 = vunpack.c.0.s8 %v2686
        %v2688 = vperm.slane %v2684, %v2687
        %v2689 = vsel %vm1540, %v2632, %v2625
        %v2691 = vunpack.c.l.s4 1983009808
        %v2692 = vunpack.c.0.s8 %v2691
        %v2693 = vperm.slane %v2689, %v2692
        %v2694 = vrot.slane %v2633, 4
        %v2695 = vsel %vm1540, %v2694, %v2631
        %v2697 = vunpack.c.l.s4 1983009808
        %v2698 = vunpack.c.0.s8 %v2697
        %v2699 = vperm.slane %v2695, %v2698
        %v2700 = vrot.slane %v2699, 4
        %v2701 = vsel %vm1540, %v2700, %v2693
        %v2703 = vunpack.c.l.s4 1934713408
        %v2704 = vunpack.c.0.s8 %v2703
        %v2705 = vperm.slane %v2701, %v2704
        %v2706 = vsel %vm1540, %v2651, %v2644
        %v2708 = vunpack.c.l.s4 1983009808
        %v2709 = vunpack.c.0.s8 %v2708
        %v2710 = vperm.slane %v2706, %v2709
        %v2711 = vrot.slane %v2652, 4
        %v2712 = vsel %vm1540, %v2711, %v2650
        %v2714 = vunpack.c.l.s4 1983009808
        %v2715 = vunpack.c.0.s8 %v2714
        %v2716 = vperm.slane %v2712, %v2715
        %v2717 = vrot.slane %v2716, 4
        %v2718 = vsel %vm1540, %v2717, %v2710
        %v2720 = vunpack.c.l.s4 1934713408
        %v2721 = vunpack.c.0.s8 %v2720
        %v2722 = vperm.slane %v2718, %v2721
        %v2723 = vsel %vm1540, %v2670, %v2663
        %v2725 = vunpack.c.l.s4 1983009808
        %v2726 = vunpack.c.0.s8 %v2725
        %v2727 = vperm.slane %v2723, %v2726
        %v2728 = vrot.slane %v2671, 4
        %v2729 = vsel %vm1540, %v2728, %v2669
        %v2731 = vunpack.c.l.s4 1983009808
        %v2732 = vunpack.c.0.s8 %v2731
        %v2733 = vperm.slane %v2729, %v2732
        %v2734 = vrot.slane %v2733, 4
        %v2735 = vsel %vm1540, %v2734, %v2727
        %v2737 = vunpack.c.l.s4 1934713408
        %v2738 = vunpack.c.0.s8 %v2737
        %v2739 = vperm.slane %v2735, %v2738
        %v2742 = vpack.i.b16 %v2705, %v2688
        %v2743 = vshrl.u32 %v2688, 16
        %v2744 = vshrl.u32 %v2705, 16
        %v2745 = vpack.i.b16 %v2744, %v2743
        %v2748 = vpack.i.b16 %v2739, %v2722
        %v2749 = vshrl.u32 %v2722, 16
        %v2750 = vshrl.u32 %v2739, 16
        %v2751 = vpack.i.b16 %v2750, %v2749
        %2754 = vrot.lane.b32.xlu0 %v2400, 64
        %v2755 = vpop.permute.xlu0 %2754
        %2756 = vrot.lane.b32.xlu0 %v2401, 64
        %v2757 = vpop.permute.xlu0 %2756
        %v2760 = vpack.i.b16 %v2755, %v2400
        %v2761 = vshrl.u32 %v2400, 16
        %v2762 = vshrl.u32 %v2755, 16
        %v2763 = vpack.i.b16 %v2762, %v2761
        %v2766 = vpack.i.b16 %v2757, %v2401
        %v2767 = vshrl.u32 %v2401, 16
        %v2768 = vshrl.u32 %v2757, 16
        %v2769 = vpack.i.b16 %v2768, %v2767
        %v2772 = vunpack.c.l.s4 1983009808
        %v2773 = vunpack.c.0.s8 %v2772
        %v2774 = vperm.slane %v2760, %v2773
        %v2775 = vrot.slane %v2774, 4
        %v2776 = vsel %vm1540, 0, %v2775
        %v2778 = vunpack.c.l.s4 1934713408
        %v2779 = vunpack.c.0.s8 %v2778
        %v2780 = vperm.slane %v2774, %v2779
        %v2782 = vunpack.c.l.s4 1934713408
        %v2783 = vunpack.c.0.s8 %v2782
        %v2784 = vperm.slane %v2776, %v2783
        %v2785 = vrot.slane %v2780, 4
        %v2786 = vsel %vm1540, 0, %v2785
        %v2787 = vrot.slane %v2784, 4
        %v2788 = vsel %vm1540, 0, %v2787
        %v2791 = vunpack.c.l.s4 1983009808
        %v2792 = vunpack.c.0.s8 %v2791
        %v2793 = vperm.slane %v2763, %v2792
        %v2794 = vrot.slane %v2793, 4
        %v2795 = vsel %vm1540, 0, %v2794
        %v2797 = vunpack.c.l.s4 1934713408
        %v2798 = vunpack.c.0.s8 %v2797
        %v2799 = vperm.slane %v2793, %v2798
        %v2801 = vunpack.c.l.s4 1934713408
        %v2802 = vunpack.c.0.s8 %v2801
        %v2803 = vperm.slane %v2795, %v2802
        %v2804 = vrot.slane %v2799, 4
        %v2805 = vsel %vm1540, 0, %v2804
        %v2806 = vrot.slane %v2803, 4
        %v2807 = vsel %vm1540, 0, %v2806
        %v2810 = vunpack.c.l.s4 1983009808
        %v2811 = vunpack.c.0.s8 %v2810
        %v2812 = vperm.slane %v2766, %v2811
        %v2813 = vrot.slane %v2812, 4
        %v2814 = vsel %vm1540, 0, %v2813
        %v2816 = vunpack.c.l.s4 1934713408
        %v2817 = vunpack.c.0.s8 %v2816
        %v2818 = vperm.slane %v2812, %v2817
        %v2820 = vunpack.c.l.s4 1934713408
        %v2821 = vunpack.c.0.s8 %v2820
        %v2822 = vperm.slane %v2814, %v2821
        %v2823 = vrot.slane %v2818, 4
        %v2824 = vsel %vm1540, 0, %v2823
        %v2825 = vrot.slane %v2822, 4
        %v2826 = vsel %vm1540, 0, %v2825
        %v2829 = vunpack.c.l.s4 1983009808
        %v2830 = vunpack.c.0.s8 %v2829
        %v2831 = vperm.slane %v2769, %v2830
        %v2832 = vrot.slane %v2831, 4
        %v2833 = vsel %vm1540, 0, %v2832
        %v2835 = vunpack.c.l.s4 1934713408
        %v2836 = vunpack.c.0.s8 %v2835
        %v2837 = vperm.slane %v2831, %v2836
        %v2839 = vunpack.c.l.s4 1934713408
        %v2840 = vunpack.c.0.s8 %v2839
        %v2841 = vperm.slane %v2833, %v2840
        %v2842 = vrot.slane %v2837, 4
        %v2843 = vsel %vm1540, 0, %v2842
        %v2844 = vrot.slane %v2841, 4
        %v2845 = vsel %vm1540, 0, %v2844
        %v2846 = vsel %vm1540, %v2787, %v2780
        %v2848 = vunpack.c.l.s4 1983009808
        %v2849 = vunpack.c.0.s8 %v2848
        %v2850 = vperm.slane %v2846, %v2849
        %v2851 = vrot.slane %v2788, 4
        %v2852 = vsel %vm1540, %v2851, %v2786
        %v2854 = vunpack.c.l.s4 1983009808
        %v2855 = vunpack.c.0.s8 %v2854
        %v2856 = vperm.slane %v2852, %v2855
        %v2857 = vrot.slane %v2856, 4
        %v2858 = vsel %vm1540, %v2857, %v2850
        %v2860 = vunpack.c.l.s4 1934713408
        %v2861 = vunpack.c.0.s8 %v2860
        %v2862 = vperm.slane %v2858, %v2861
        %v2863 = vsel %vm1540, %v2806, %v2799
        %v2865 = vunpack.c.l.s4 1983009808
        %v2866 = vunpack.c.0.s8 %v2865
        %v2867 = vperm.slane %v2863, %v2866
        %v2868 = vrot.slane %v2807, 4
        %v2869 = vsel %vm1540, %v2868, %v2805
        %v2871 = vunpack.c.l.s4 1983009808
        %v2872 = vunpack.c.0.s8 %v2871
        %v2873 = vperm.slane %v2869, %v2872
        %v2874 = vrot.slane %v2873, 4
        %v2875 = vsel %vm1540, %v2874, %v2867
        %v2877 = vunpack.c.l.s4 1934713408
        %v2878 = vunpack.c.0.s8 %v2877
        %v2879 = vperm.slane %v2875, %v2878
        %v2880 = vsel %vm1540, %v2825, %v2818
        %v2882 = vunpack.c.l.s4 1983009808
        %v2883 = vunpack.c.0.s8 %v2882
        %v2884 = vperm.slane %v2880, %v2883
        %v2885 = vrot.slane %v2826, 4
        %v2886 = vsel %vm1540, %v2885, %v2824
        %v2888 = vunpack.c.l.s4 1983009808
        %v2889 = vunpack.c.0.s8 %v2888
        %v2890 = vperm.slane %v2886, %v2889
        %v2891 = vrot.slane %v2890, 4
        %v2892 = vsel %vm1540, %v2891, %v2884
        %v2894 = vunpack.c.l.s4 1934713408
        %v2895 = vunpack.c.0.s8 %v2894
        %v2896 = vperm.slane %v2892, %v2895
        %v2897 = vsel %vm1540, %v2844, %v2837
        %v2899 = vunpack.c.l.s4 1983009808
        %v2900 = vunpack.c.0.s8 %v2899
        %v2901 = vperm.slane %v2897, %v2900
        %v2902 = vrot.slane %v2845, 4
        %v2903 = vsel %vm1540, %v2902, %v2843
        %v2905 = vunpack.c.l.s4 1983009808
        %v2906 = vunpack.c.0.s8 %v2905
        %v2907 = vperm.slane %v2903, %v2906
        %v2908 = vrot.slane %v2907, 4
        %v2909 = vsel %vm1540, %v2908, %v2901
        %v2911 = vunpack.c.l.s4 1934713408
        %v2912 = vunpack.c.0.s8 %v2911
        %v2913 = vperm.slane %v2909, %v2912
        %v2916 = vpack.i.b16 %v2879, %v2862
        %v2917 = vshrl.u32 %v2862, 16
        %v2918 = vshrl.u32 %v2879, 16
        %v2919 = vpack.i.b16 %v2918, %v2917
        %v2922 = vpack.i.b16 %v2913, %v2896
        %v2923 = vshrl.u32 %v2896, 16
        %v2924 = vshrl.u32 %v2913, 16
        %v2925 = vpack.i.b16 %v2924, %v2923
        %v2926 = vunpack.c.l.b16 %v2568
        %v2927 = vunpack.c.l.b16 %v2574
        %v2928 = vpack.c.b16 %v2927, %v2926
        %v2929 = vunpack.c.l.b16 %v2742
        %v2930 = vunpack.c.l.b16 %v2748
        %v2931 = vpack.c.b16 %v2930, %v2929
        %v2933 = vsel %vm2045, %v2928, 0
        %v2936 = vsel %vm2045, %v2931, 0
        %2938 = vmatpush.bf16.xpose.msra.mxu0 0
        %2939 = vmatpush.bf16.xpose.msra.mxu0 0
        %2940 = vmatpush.bf16.xpose.msra.mxu0 0
        %2941 = vmatpush.bf16.xpose.msra.mxu0 0
        %2942 = vmatpush.bf16.xpose.msra.mxu0 0
        %2943 = vmatpush.bf16.xpose.msra.mxu0 0
        %2944 = vmatpush.bf16.xpose.msra.mxu0 0
        %2945 = vmatpush.bf16.xpose.msra.mxu0 %v2936
        %2946 = vmatmul.bf16.gmra.mxu0 %v2933
        %v2947 = vpop.f32.mrf.mxu0
        %v2948 = vadd.f32 0.0, %v2947
        %v2949 = vpop.f32.mrf.mxu0
        %v2950 = vadd.f32 0.0, %v2949
        %2951 = vdwg.mxu0
        %v2952 = vunpack.c.l.b16 %v2571
        %v2953 = vunpack.c.l.b16 %v2577
        %v2954 = vpack.c.b16 %v2953, %v2952
        %v2955 = vunpack.c.l.b16 %v2745
        %v2956 = vunpack.c.l.b16 %v2751
        %v2957 = vpack.c.b16 %v2956, %v2955
        %v2959 = vsel %vm2045, %v2954, 0
        %v2962 = vsel %vm2045, %v2957, 0
        %2964 = vmatpush.bf16.xpose.msra.mxu0 0
        %2965 = vmatpush.bf16.xpose.msra.mxu0 0
        %2966 = vmatpush.bf16.xpose.msra.mxu0 0
        %2967 = vmatpush.bf16.xpose.msra.mxu0 0
        %2968 = vmatpush.bf16.xpose.msra.mxu0 0
        %2969 = vmatpush.bf16.xpose.msra.mxu0 0
        %2970 = vmatpush.bf16.xpose.msra.mxu0 0
        %2971 = vmatpush.bf16.xpose.msra.mxu0 %v2962
        %2972 = vmatmul.bf16.gmra.mxu0 %v2959
        %v2973 = vpop.f32.mrf.mxu0
        %v2974 = vadd.f32 0.0, %v2973
        %v2975 = vpop.f32.mrf.mxu0
        %v2976 = vadd.f32 0.0, %v2975
        %2977 = vdwg.mxu0
        %v2978 = vmul.f32 %v2948, 0.125
        %v2979 = vmul.f32 %v2950, 0.125
        %v2980 = vmul.f32 %v2974, 0.125
        %v2981 = vmul.f32 %v2976, 0.125
        %v2983 = vperm.slane %v2403, 0
        %v2985 = vadd.f32 %v2978, %v2983
        %v2986 = vadd.f32 %v2979, %v2983
        %v2987 = vadd.f32 %v2980, %v2983
        %v2988 = vadd.f32 %v2981, %v2983
        %v2989 = vsel %vm2103, %v2985, -inf
        %2990 = vmax.xlane.f32.xlu0 %v2989
        %v2991 = vpop.xlane.xlu0 %2990
        %v2992 = vsel %vm2103, %v2986, -inf
        %2993 = vmax.xlane.f32.xlu0 %v2992
        %v2994 = vpop.xlane.xlu0 %2993
        %v2995 = vsel %vm2103, %v2987, -inf
        %2996 = vmax.xlane.f32.xlu0 %v2995
        %v2997 = vpop.xlane.xlu0 %2996
        %v2998 = vsel %vm2103, %v2988, -inf
        %2999 = vmax.xlane.f32.xlu0 %v2998
        %v3000 = vpop.xlane.xlu0 %2999
        %v3001 = vsub.f32 %v2985, %v2991
        %v3002 = vsub.f32 %v2986, %v2994
        %v3003 = vsub.f32 %v2987, %v2997
        %v3004 = vsub.f32 %v2988, %v3000
        %v3005 = vmul.f32 %v3001, 1.442695
        %v3006 = vpow.pop %v3005
        %v3007 = vmul.f32 %v3002, 1.442695
        %v3008 = vpow.pop %v3007
        %v3009 = vmul.f32 %v3003, 1.442695
        %v3010 = vpow.pop %v3009
        %v3011 = vmul.f32 %v3004, 1.442695
        %v3012 = vpow.pop %v3011
        %v3013 = vsel %vm2103, %v3006, 0.0
        %3014 = vadd.xlane.f32.xlu0 %v3013
        %v3015 = vpop.xlane.xlu0 %3014
        %v3016 = vsel %vm2103, %v3008, 0.0
        %3017 = vadd.xlane.f32.xlu0 %v3016
        %v3018 = vpop.xlane.xlu0 %3017
        %v3019 = vsel %vm2103, %v3010, 0.0
        %3020 = vadd.xlane.f32.xlu0 %v3019
        %v3021 = vpop.xlane.xlu0 %3020
        %v3022 = vsel %vm2103, %v3012, 0.0
        %3023 = vadd.xlane.f32.xlu0 %v3022
        %v3024 = vpop.xlane.xlu0 %3023
        %v3025 = vrcp.pop %v3015
        %v3026 = vrcp.pop %v3018
        %v3027 = vrcp.pop %v3021
        %v3028 = vrcp.pop %v3024
        %v3029 = vmul.f32 %v3006, %v3025
        %v3030 = vmul.f32 %v3008, %v3026
        %v3031 = vmul.f32 %v3010, %v3027
        %v3032 = vmul.f32 %v3012, %v3028
        %v3033 = vpack.c.bf16 %v3029, %v3029
        %v3034 = vpack.c.bf16 %v3030, %v3030
        %v3035 = vpack.c.bf16 %v3031, %v3031
        %v3036 = vpack.c.bf16 %v3032, %v3032
        %v3039 = vunpack.c.l.b16 %v3033
        %v3040 = vunpack.c.l.b16 %v3034
        %v3041 = vpack.c.b16 %v3040, %v3039
        %v3042 = vunpack.c.l.b16 %v2916
        %v3043 = vunpack.c.l.b16 %v2922
        %v3044 = vpack.c.b16 %v3043, %v3042
        %v3047 = vsel %vm2103, %v3041, 0
        %3049 = vmatpush.bf16.msra.mxu0 0
        %3050 = vmatpush.bf16.msra.mxu0 0
        %3051 = vmatpush.bf16.msra.mxu0 0
        %3052 = vmatpush.bf16.msra.mxu0 0
        %3053 = vmatpush.bf16.msra.mxu0 0
        %3054 = vmatpush.bf16.msra.mxu0 0
        %3055 = vmatpush.bf16.msra.mxu0 0
        %3056 = vmatpush.bf16.msra.mxu0 %v3044
        %3057 = vmatmul.bf16.gmra.mxu0 %v3047
        %v3058 = vpop.f32.mrf.mxu0
        %v3059 = vadd.f32 0.0, %v3058
        %v3060 = vpop.f32.mrf.mxu0
        %v3061 = vadd.f32 0.0, %v3060
        %3062 = vdwg.mxu0
        %v3065 = vunpack.c.l.b16 %v3035
        %v3066 = vunpack.c.l.b16 %v3036
        %v3067 = vpack.c.b16 %v3066, %v3065
        %v3068 = vunpack.c.l.b16 %v2919
        %v3069 = vunpack.c.l.b16 %v2925
        %v3070 = vpack.c.b16 %v3069, %v3068
        %v3073 = vsel %vm2103, %v3067, 0
        %3075 = vmatpush.bf16.msra.mxu0 0
        %3076 = vmatpush.bf16.msra.mxu0 0
        %3077 = vmatpush.bf16.msra.mxu0 0
        %3078 = vmatpush.bf16.msra.mxu0 0
        %3079 = vmatpush.bf16.msra.mxu0 0
        %3080 = vmatpush.bf16.msra.mxu0 0
        %3081 = vmatpush.bf16.msra.mxu0 0
        %3082 = vmatpush.bf16.msra.mxu0 %v3070
        %3083 = vmatmul.bf16.gmra.mxu0 %v3073
        %v3084 = vpop.f32.mrf.mxu0
        %v3085 = vadd.f32 0.0, %v3084
        %v3086 = vpop.f32.mrf.mxu0
        %v3087 = vadd.f32 0.0, %v3086
        %3088 = vdwg.mxu0
        %v3089 = vpack.c.bf16 %v3059, %v3059
        %v3090 = vpack.c.bf16 %v3061, %v3061
        %v3091 = vpack.c.bf16 %v3085, %v3085
        %v3092 = vpack.c.bf16 %v3087, %v3087
        %v3095 = vpack.i.b16 %v3091, %v3089
        %v3096 = vshrl.u32 %v3089, 16
        %v3097 = vshrl.u32 %v3091, 16
        %v3098 = vpack.i.b16 %v3097, %v3096
        %v3101 = vpack.i.b16 %v3092, %v3090
        %v3102 = vshrl.u32 %v3090, 16
        %v3103 = vshrl.u32 %v3092, 16
        %v3104 = vpack.i.b16 %v3103, %v3102
        %v3107 = vunpack.c.l.s4 1983009808
        %v3108 = vunpack.c.0.s8 %v3107
        %v3109 = vperm.slane %v3095, %v3108
        %v3110 = vrot.slane %v3109, 4
        %v3111 = vsel %vm1540, 0, %v3110
        %v3113 = vunpack.c.l.s4 1934713408
        %v3114 = vunpack.c.0.s8 %v3113
        %v3115 = vperm.slane %v3109, %v3114
        %v3117 = vunpack.c.l.s4 1934713408
        %v3118 = vunpack.c.0.s8 %v3117
        %v3119 = vperm.slane %v3111, %v3118
        %v3120 = vrot.slane %v3115, 4
        %v3121 = vsel %vm1540, 0, %v3120
        %v3122 = vrot.slane %v3119, 4
        %v3123 = vsel %vm1540, 0, %v3122
        %v3126 = vunpack.c.l.s4 1983009808
        %v3127 = vunpack.c.0.s8 %v3126
        %v3128 = vperm.slane %v3098, %v3127
        %v3129 = vrot.slane %v3128, 4
        %v3130 = vsel %vm1540, 0, %v3129
        %v3132 = vunpack.c.l.s4 1934713408
        %v3133 = vunpack.c.0.s8 %v3132
        %v3134 = vperm.slane %v3128, %v3133
        %v3136 = vunpack.c.l.s4 1934713408
        %v3137 = vunpack.c.0.s8 %v3136
        %v3138 = vperm.slane %v3130, %v3137
        %v3139 = vrot.slane %v3134, 4
        %v3140 = vsel %vm1540, 0, %v3139
        %v3141 = vrot.slane %v3138, 4
        %v3142 = vsel %vm1540, 0, %v3141
        %v3145 = vunpack.c.l.s4 1983009808
        %v3146 = vunpack.c.0.s8 %v3145
        %v3147 = vperm.slane %v3101, %v3146
        %v3148 = vrot.slane %v3147, 4
        %v3149 = vsel %vm1540, 0, %v3148
        %v3151 = vunpack.c.l.s4 1934713408
        %v3152 = vunpack.c.0.s8 %v3151
        %v3153 = vperm.slane %v3147, %v3152
        %v3155 = vunpack.c.l.s4 1934713408
        %v3156 = vunpack.c.0.s8 %v3155
        %v3157 = vperm.slane %v3149, %v3156
        %v3158 = vrot.slane %v3153, 4
        %v3159 = vsel %vm1540, 0, %v3158
        %v3160 = vrot.slane %v3157, 4
        %v3161 = vsel %vm1540, 0, %v3160
        %v3164 = vunpack.c.l.s4 1983009808
        %v3165 = vunpack.c.0.s8 %v3164
        %v3166 = vperm.slane %v3104, %v3165
        %v3167 = vrot.slane %v3166, 4
        %v3168 = vsel %vm1540, 0, %v3167
        %v3170 = vunpack.c.l.s4 1934713408
        %v3171 = vunpack.c.0.s8 %v3170
        %v3172 = vperm.slane %v3166, %v3171
        %v3174 = vunpack.c.l.s4 1934713408
        %v3175 = vunpack.c.0.s8 %v3174
        %v3176 = vperm.slane %v3168, %v3175
        %v3177 = vrot.slane %v3172, 4
        %v3178 = vsel %vm1540, 0, %v3177
        %v3179 = vrot.slane %v3176, 4
        %v3180 = vsel %vm1540, 0, %v3179
        %v3181 = vsel %vm1540, %v3122, %v3115
        %v3183 = vunpack.c.l.s4 1983009808
        %v3184 = vunpack.c.0.s8 %v3183
        %v3185 = vperm.slane %v3181, %v3184
        %v3186 = vrot.slane %v3123, 4
        %v3187 = vsel %vm1540, %v3186, %v3121
        %v3189 = vunpack.c.l.s4 1983009808
        %v3190 = vunpack.c.0.s8 %v3189
        %v3191 = vperm.slane %v3187, %v3190
        %v3192 = vrot.slane %v3191, 4
        %v3193 = vsel %vm1540, %v3192, %v3185
        %v3195 = vunpack.c.l.s4 1934713408
        %v3196 = vunpack.c.0.s8 %v3195
        %v3197 = vperm.slane %v3193, %v3196
        %v3198 = vsel %vm1540, %v3141, %v3134
        %v3200 = vunpack.c.l.s4 1983009808
        %v3201 = vunpack.c.0.s8 %v3200
        %v3202 = vperm.slane %v3198, %v3201
        %v3203 = vrot.slane %v3142, 4
        %v3204 = vsel %vm1540, %v3203, %v3140
        %v3206 = vunpack.c.l.s4 1983009808
        %v3207 = vunpack.c.0.s8 %v3206
        %v3208 = vperm.slane %v3204, %v3207
        %v3209 = vrot.slane %v3208, 4
        %v3210 = vsel %vm1540, %v3209, %v3202
        %v3212 = vunpack.c.l.s4 1934713408
        %v3213 = vunpack.c.0.s8 %v3212
        %v3214 = vperm.slane %v3210, %v3213
        %v3215 = vsel %vm1540, %v3160, %v3153
        %v3217 = vunpack.c.l.s4 1983009808
        %v3218 = vunpack.c.0.s8 %v3217
        %v3219 = vperm.slane %v3215, %v3218
        %v3220 = vrot.slane %v3161, 4
        %v3221 = vsel %vm1540, %v3220, %v3159
        %v3223 = vunpack.c.l.s4 1983009808
        %v3224 = vunpack.c.0.s8 %v3223
        %v3225 = vperm.slane %v3221, %v3224
        %v3226 = vrot.slane %v3225, 4
        %v3227 = vsel %vm1540, %v3226, %v3219
        %v3229 = vunpack.c.l.s4 1934713408
        %v3230 = vunpack.c.0.s8 %v3229
        %v3231 = vperm.slane %v3227, %v3230
        %v3232 = vsel %vm1540, %v3179, %v3172
        %v3234 = vunpack.c.l.s4 1983009808
        %v3235 = vunpack.c.0.s8 %v3234
        %v3236 = vperm.slane %v3232, %v3235
        %v3237 = vrot.slane %v3180, 4
        %v3238 = vsel %vm1540, %v3237, %v3178
        %v3240 = vunpack.c.l.s4 1983009808
        %v3241 = vunpack.c.0.s8 %v3240
        %v3242 = vperm.slane %v3238, %v3241
        %v3243 = vrot.slane %v3242, 4
        %v3244 = vsel %vm1540, %v3243, %v3236
        %v3246 = vunpack.c.l.s4 1934713408
        %v3247 = vunpack.c.0.s8 %v3246
        %v3248 = vperm.slane %v3244, %v3247
        %v3251 = vpack.i.b16 %v3214, %v3197
        %v3252 = vshrl.u32 %v3197, 16
        %v3253 = vshrl.u32 %v3214, 16
        %v3254 = vpack.i.b16 %v3253, %v3252
        %v3257 = vpack.i.b16 %v3248, %v3231
        %v3258 = vshrl.u32 %v3231, 16
        %v3259 = vshrl.u32 %v3248, 16
        %v3260 = vpack.i.b16 %v3259, %v3258
        %v3261 = vunpack.c.l.b16 %v3251
        %v3262 = vunpack.c.l.b16 %v3257
        %v3263 = vpack.c.b16 %v3262, %v3261
        %v3264 = vunpack.c.l.b16 %v3254
        %v3265 = vunpack.c.l.b16 %v3260
        %v3266 = vpack.c.b16 %v3265, %v3264
        %3267 = vrot.lane.b32.xlu0 %v3266, 64
        %v3268 = vpop.permute.xlu0 %3267
        %v3271 = vsel %vm2045, %v3263, %v3268
        %v3273 = vunpack.c.l.b16 %v3271
        %v3274 = vunpack.c.h.b16 %v3271
        %v3275 = vpack.c.b16 %v3273, %v3273
        %v3276 = vpack.c.b16 %v3274, %v3274
        %3279 = vst [vmem:[#allocation3 + $0x8] sm:$0xf] %v3275
        %3280 = vst [vmem:[#allocation3 + $0xc] sm:$0xf] %v3276
        %v3281 = vld [vmem:[#allocation3] sm:$0xf]
        %v3282 = vld [vmem:[#allocation3 + $0x4] sm:$0xf]
        %v3283 = vld [vmem:[#allocation3 + $0x8] sm:$0xf]
        %v3284 = vld [vmem:[#allocation3 + $0xc] sm:$0xf]
        %v3285 = vld [vmem:[%s962] sm:$0xf]
        %v3286 = vld [vmem:[%s962 + $0x4] sm:$0xf]
        %v3287 = vld [vmem:[%s962 + $0x8] sm:$0xf]
        %v3288 = vld [vmem:[%s962 + $0xc] sm:$0xf]
        %v3289 = vld [vmem:[%s962 + $0x10] sm:$0xf]
        %v3290 = vld [vmem:[%s962 + $0x14] sm:$0xf]
        %v3291 = vld [vmem:[%s962 + $0x18] sm:$0xf]
        %v3292 = vld [vmem:[%s962 + $0x1c] sm:$0xf]
        %v3293 = vld [vmem:[%s962 + $0x20] sm:$0xf]
        %v3294 = vld [vmem:[%s962 + $0x24] sm:$0xf]
        %v3295 = vld [vmem:[%s962 + $0x28] sm:$0xf]
        %v3296 = vld [vmem:[%s962 + $0x2c] sm:$0xf]
        %v3297 = vld [vmem:[%s962 + $0x30] sm:$0xf]
        %v3298 = vld [vmem:[%s962 + $0x34] sm:$0xf]
        %v3299 = vld [vmem:[%s962 + $0x38] sm:$0xf]
        %v3300 = vld [vmem:[%s962 + $0x3c] sm:$0xf]
        %v3301 = vld [vmem:[%s971] sm:$0x1]
        %v3303 = vperm.slane %v3301, 0
        %v3309 = vunpack.c.l.b16 %v3281
        %v3310 = vunpack.c.l.b16 %v3282
        %v3311 = vunpack.c.l.b16 %v3283
        %v3312 = vunpack.c.l.b16 %v3284
        %v3313 = vpack.c.b16 %v3310, %v3309
        %v3314 = vpack.c.b16 %v3312, %v3311
        %v3333 = vunpack.c.l.b16 %v3285
        %v3334 = vunpack.c.l.b16 %v3286
        %v3335 = vunpack.c.l.b16 %v3287
        %v3336 = vunpack.c.l.b16 %v3288
        %v3337 = vunpack.c.l.b16 %v3289
        %v3338 = vunpack.c.l.b16 %v3290
        %v3339 = vunpack.c.l.b16 %v3291
        %v3340 = vunpack.c.l.b16 %v3292
        %v3341 = vunpack.c.l.b16 %v3293
        %v3342 = vunpack.c.l.b16 %v3294
        %v3343 = vunpack.c.l.b16 %v3295
        %v3344 = vunpack.c.l.b16 %v3296
        %v3345 = vunpack.c.l.b16 %v3297
        %v3346 = vunpack.c.l.b16 %v3298
        %v3347 = vunpack.c.l.b16 %v3299
        %v3348 = vunpack.c.l.b16 %v3300
        %v3349 = vpack.c.b16 %v3334, %v3333
        %v3350 = vpack.c.b16 %v3336, %v3335
        %v3351 = vpack.c.b16 %v3338, %v3337
        %v3352 = vpack.c.b16 %v3340, %v3339
        %v3353 = vpack.c.b16 %v3342, %v3341
        %v3354 = vpack.c.b16 %v3344, %v3343
        %v3355 = vpack.c.b16 %v3346, %v3345
        %v3356 = vpack.c.b16 %v3348, %v3347
        %3365 = vmatpush.bf16.msra.mxu0 %v3356
        %3366 = vmatpush.bf16.msra.mxu0 %v3355
        %3367 = vmatpush.bf16.msra.mxu0 %v3354
        %3368 = vmatpush.bf16.msra.mxu0 %v3353
        %3369 = vmatpush.bf16.msra.mxu0 %v3352
        %3370 = vmatpush.bf16.msra.mxu0 %v3351
        %3371 = vmatpush.bf16.msra.mxu0 %v3350
        %3372 = vmatpush.bf16.msra.mxu0 %v3349
        %3373 = vmatmul.bf16.gmra.mxu0 %v3313
        %v3374 = vpop.f32.mrf.mxu0
        %v3375 = vadd.f32 %v3303, %v3374
        %v3376 = vpop.f32.mrf.mxu0
        %v3377 = vadd.f32 %v3303, %v3376
        %3378 = vmatmul.bf16.gmra.mxu0 %v3314
        %v3379 = vpop.f32.mrf.mxu0
        %v3380 = vadd.f32 %v3303, %v3379
        %v3381 = vpop.f32.mrf.mxu0
        %v3382 = vadd.f32 %v3303, %v3381
        %3383 = vdwg.mxu0
        %v3384 = vadd.f32 %v3375, %v1278
        %v3385 = vadd.f32 %v3377, %v1279
        %v3386 = vadd.f32 %v3380, %v1280
        %v3387 = vadd.f32 %v3382, %v1281
        %v3388 = vld [vmem:[%s980] sm:$0x1]
        %v3389 = vld [vmem:[%s989] sm:$0x1]
        %3390 = vadd.xlane.f32.xlu0 %v3384
        %v3391 = vpop.xlane.xlu0 %3390
        %3392 = vadd.xlane.f32.xlu0 %v3385
        %v3393 = vpop.xlane.xlu0 %3392
        %3394 = vadd.xlane.f32.xlu0 %v3386
        %v3395 = vpop.xlane.xlu0 %3394
        %3396 = vadd.xlane.f32.xlu0 %v3387
        %v3397 = vpop.xlane.xlu0 %3396
        %v3398 = vrcp.pop 128.0
        %v3399 = vmul.f32 128.0, %v3398
        %v3400 = vsub.f32 1.0, %v3399
        %v3401 = vmul.f32 %v3398, %v3400
        %v3402 = vadd.f32 %v3398, %v3401
        %vm3403 = vweird.f32 %v3398
        %v3404 = vsel %vm3403, %v3398, %v3402
        %v3405 = vmul.f32 %v3391, %v3404
        %v3406 = vmul.f32 %v3393, %v3404
        %v3407 = vmul.f32 %v3395, %v3404
        %v3408 = vmul.f32 %v3397, %v3404
        %v3409 = vsub.f32 %v3384, %v3405
        %v3410 = vsub.f32 %v3385, %v3406
        %v3411 = vsub.f32 %v3386, %v3407
        %v3412 = vsub.f32 %v3387, %v3408
        %v3413 = vmul.f32 %v3409, %v3409
        %v3414 = vmul.f32 %v3410, %v3410
        %v3415 = vmul.f32 %v3411, %v3411
        %v3416 = vmul.f32 %v3412, %v3412
        %3417 = vadd.xlane.f32.xlu0 %v3413
        %v3418 = vpop.xlane.xlu0 %3417
        %3419 = vadd.xlane.f32.xlu0 %v3414
        %v3420 = vpop.xlane.xlu0 %3419
        %3421 = vadd.xlane.f32.xlu0 %v3415
        %v3422 = vpop.xlane.xlu0 %3421
        %3423 = vadd.xlane.f32.xlu0 %v3416
        %v3424 = vpop.xlane.xlu0 %3423
        %v3425 = vmul.f32 %v3418, %v3404
        %v3426 = vmul.f32 %v3420, %v3404
        %v3427 = vmul.f32 %v3422, %v3404
        %v3428 = vmul.f32 %v3424, %v3404
        %v3429 = vadd.f32 %v3425, 1e-05
        %v3430 = vadd.f32 %v3426, 1e-05
        %v3431 = vadd.f32 %v3427, 1e-05
        %v3432 = vadd.f32 %v3428, 1e-05
        %v3433 = vrsqrt.pop %v3429
        %v3434 = vmul.f32 %v3433, %v3429
        %v3435 = vmul.f32 %v3434, %v3433
        %v3436 = vmul.f32 0.5, %v3435
        %v3437 = vsub.f32 1.5, %v3436
        %v3438 = vmul.f32 %v3433, %v3437
        %vm3439 = vweird.f32 %v3429
        %vm3440 = vweird.f32 %v3433
        %vm3441 = vmor %vm3439, %vm3440
        %v3442 = vsel %vm3441, %v3433, %v3438
        %v3443 = vrsqrt.pop %v3430
        %v3444 = vmul.f32 %v3443, %v3430
        %v3445 = vmul.f32 %v3444, %v3443
        %v3446 = vmul.f32 0.5, %v3445
        %v3447 = vsub.f32 1.5, %v3446
        %v3448 = vmul.f32 %v3443, %v3447
        %vm3449 = vweird.f32 %v3430
        %vm3450 = vweird.f32 %v3443
        %vm3451 = vmor %vm3449, %vm3450
        %v3452 = vsel %vm3451, %v3443, %v3448
        %v3453 = vrsqrt.pop %v3431
        %v3454 = vmul.f32 %v3453, %v3431
        %v3455 = vmul.f32 %v3454, %v3453
        %v3456 = vmul.f32 0.5, %v3455
        %v3457 = vsub.f32 1.5, %v3456
        %v3458 = vmul.f32 %v3453, %v3457
        %vm3459 = vweird.f32 %v3431
        %vm3460 = vweird.f32 %v3453
        %vm3461 = vmor %vm3459, %vm3460
        %v3462 = vsel %vm3461, %v3453, %v3458
        %v3463 = vrsqrt.pop %v3432
        %v3464 = vmul.f32 %v3463, %v3432
        %v3465 = vmul.f32 %v3464, %v3463
        %v3466 = vmul.f32 0.5, %v3465
        %v3467 = vsub.f32 1.5, %v3466
        %v3468 = vmul.f32 %v3463, %v3467
        %vm3469 = vweird.f32 %v3432
        %vm3470 = vweird.f32 %v3463
        %vm3471 = vmor %vm3469, %vm3470
        %v3472 = vsel %vm3471, %v3463, %v3468
        %v3473 = vmul.f32 %v3409, %v3442
        %v3474 = vmul.f32 %v3410, %v3452
        %v3475 = vmul.f32 %v3411, %v3462
        %v3476 = vmul.f32 %v3412, %v3472
        %v3478 = vperm.slane %v3388, 0
        %v3480 = vmul.f32 %v3473, %v3478
        %v3481 = vmul.f32 %v3474, %v3478
        %v3482 = vmul.f32 %v3475, %v3478
        %v3483 = vmul.f32 %v3476, %v3478
        %v3485 = vperm.slane %v3389, 0
        %v3487 = vadd.f32 %v3480, %v3485
        %v3488 = vadd.f32 %v3481, %v3485
        %v3489 = vadd.f32 %v3482, %v3485
        %v3490 = vadd.f32 %v3483, %v3485
        %v3491 = vpack.c.bf16 %v3488, %v3487
        %v3492 = vpack.c.bf16 %v3490, %v3489
        %v3493 = vld [vmem:[%s999] sm:$0xff]
        %v3494 = vld [vmem:[%s999 + $0x8] sm:$0xff]
        %v3495 = vld [vmem:[%s999 + $0x10] sm:$0xff]
        %v3496 = vld [vmem:[%s999 + $0x18] sm:$0xff]
        %v3497 = vld [vmem:[%s999 + $0x20] sm:$0xff]
        %v3498 = vld [vmem:[%s999 + $0x28] sm:$0xff]
        %v3499 = vld [vmem:[%s999 + $0x30] sm:$0xff]
        %v3500 = vld [vmem:[%s999 + $0x38] sm:$0xff]
        %v3501 = vld [vmem:[%s999 + $0x40] sm:$0xff]
        %v3502 = vld [vmem:[%s999 + $0x48] sm:$0xff]
        %v3503 = vld [vmem:[%s999 + $0x50] sm:$0xff]
        %v3504 = vld [vmem:[%s999 + $0x58] sm:$0xff]
        %v3505 = vld [vmem:[%s999 + $0x60] sm:$0xff]
        %v3506 = vld [vmem:[%s999 + $0x68] sm:$0xff]
        %v3507 = vld [vmem:[%s999 + $0x70] sm:$0xff]
        %v3508 = vld [vmem:[%s999 + $0x78] sm:$0xff]
        %v3509 = vld [vmem:[%s1125] sm:$0x3]
        %v3511 = vperm.slane %v3509, 0
        %v3512 = vperm.slane %v3509, 1
        %v3531 = vunpack.c.l.b16 %v3493
        %v3532 = vunpack.c.h.b16 %v3493
        %v3533 = vunpack.c.l.b16 %v3494
        %v3534 = vunpack.c.h.b16 %v3494
        %v3535 = vunpack.c.l.b16 %v3495
        %v3536 = vunpack.c.h.b16 %v3495
        %v3537 = vunpack.c.l.b16 %v3496
        %v3538 = vunpack.c.h.b16 %v3496
        %v3539 = vunpack.c.l.b16 %v3497
        %v3540 = vunpack.c.h.b16 %v3497
        %v3541 = vunpack.c.l.b16 %v3498
        %v3542 = vunpack.c.h.b16 %v3498
        %v3543 = vunpack.c.l.b16 %v3499
        %v3544 = vunpack.c.h.b16 %v3499
        %v3545 = vunpack.c.l.b16 %v3500
        %v3546 = vunpack.c.h.b16 %v3500
        %v3547 = vunpack.c.l.b16 %v3501
        %v3548 = vunpack.c.h.b16 %v3501
        %v3549 = vunpack.c.l.b16 %v3502
        %v3550 = vunpack.c.h.b16 %v3502
        %v3551 = vunpack.c.l.b16 %v3503
        %v3552 = vunpack.c.h.b16 %v3503
        %v3553 = vunpack.c.l.b16 %v3504
        %v3554 = vunpack.c.h.b16 %v3504
        %v3555 = vunpack.c.l.b16 %v3505
        %v3556 = vunpack.c.h.b16 %v3505
        %v3557 = vunpack.c.l.b16 %v3506
        %v3558 = vunpack.c.h.b16 %v3506
        %v3559 = vunpack.c.l.b16 %v3507
        %v3560 = vunpack.c.h.b16 %v3507
        %v3561 = vunpack.c.l.b16 %v3508
        %v3562 = vunpack.c.h.b16 %v3508
        %v3563 = vpack.c.b16 %v3533, %v3531
        %v3564 = vpack.c.b16 %v3534, %v3532
        %v3565 = vpack.c.b16 %v3537, %v3535
        %v3566 = vpack.c.b16 %v3538, %v3536
        %v3567 = vpack.c.b16 %v3541, %v3539
        %v3568 = vpack.c.b16 %v3542, %v3540
        %v3569 = vpack.c.b16 %v3545, %v3543
        %v3570 = vpack.c.b16 %v3546, %v3544
        %v3571 = vpack.c.b16 %v3549, %v3547
        %v3572 = vpack.c.b16 %v3550, %v3548
        %v3573 = vpack.c.b16 %v3553, %v3551
        %v3574 = vpack.c.b16 %v3554, %v3552
        %v3575 = vpack.c.b16 %v3557, %v3555
        %v3576 = vpack.c.b16 %v3558, %v3556
        %v3577 = vpack.c.b16 %v3561, %v3559
        %v3578 = vpack.c.b16 %v3562, %v3560
        %3595 = vmatpush.bf16.msra.mxu0 %v3577
        %3596 = vmatpush.bf16.msra.mxu0 %v3575
        %3597 = vmatpush.bf16.msra.mxu0 %v3573
        %3598 = vmatpush.bf16.msra.mxu0 %v3571
        %3599 = vmatpush.bf16.msra.mxu0 %v3569
        %3600 = vmatpush.bf16.msra.mxu0 %v3567
        %3601 = vmatpush.bf16.msra.mxu0 %v3565
        %3602 = vmatpush.bf16.msra.mxu0 %v3563
        %3603 = vmatmul.bf16.gmra.mxu0 %v3491
        %v3604 = vpop.f32.mrf.mxu0
        %v3605 = vadd.f32 %v3511, %v3604
        %v3606 = vpop.f32.mrf.mxu0
        %v3607 = vadd.f32 %v3511, %v3606
        %3608 = vmatmul.bf16.gmra.mxu0 %v3492
        %v3609 = vpop.f32.mrf.mxu0
        %v3610 = vadd.f32 %v3511, %v3609
        %v3611 = vpop.f32.mrf.mxu0
        %v3612 = vadd.f32 %v3511, %v3611
        %3613 = vdwg.mxu0
        %3614 = vmatpush.bf16.msra.mxu0 %v3578
        %3615 = vmatpush.bf16.msra.mxu0 %v3576
        %3616 = vmatpush.bf16.msra.mxu0 %v3574
        %3617 = vmatpush.bf16.msra.mxu0 %v3572
        %3618 = vmatpush.bf16.msra.mxu0 %v3570
        %3619 = vmatpush.bf16.msra.mxu0 %v3568
        %3620 = vmatpush.bf16.msra.mxu0 %v3566
        %3621 = vmatpush.bf16.msra.mxu0 %v3564
        %3622 = vmatmul.bf16.gmra.mxu0 %v3491
        %v3623 = vpop.f32.mrf.mxu0
        %v3624 = vadd.f32 %v3512, %v3623
        %v3625 = vpop.f32.mrf.mxu0
        %v3626 = vadd.f32 %v3512, %v3625
        %3627 = vmatmul.bf16.gmra.mxu0 %v3492
        %v3628 = vpop.f32.mrf.mxu0
        %v3629 = vadd.f32 %v3512, %v3628
        %v3630 = vpop.f32.mrf.mxu0
        %v3631 = vadd.f32 %v3512, %v3630
        %3632 = vdwg.mxu0
        %v3633 = vmul.f32 %v3605, 0.5
        %v3634 = vmul.f32 %v3624, 0.5
        %v3635 = vmul.f32 %v3607, 0.5
        %v3636 = vmul.f32 %v3626, 0.5
        %v3637 = vmul.f32 %v3610, 0.5
        %v3638 = vmul.f32 %v3629, 0.5
        %v3639 = vmul.f32 %v3612, 0.5
        %v3640 = vmul.f32 %v3631, 0.5
        %v3641 = vrcp.pop 1.4142135
        %v3642 = vmul.f32 1.4142135, %v3641
        %v3643 = vsub.f32 1.0, %v3642
        %v3644 = vmul.f32 %v3641, %v3643
        %v3645 = vadd.f32 %v3641, %v3644
        %vm3646 = vweird.f32 %v3641
        %v3647 = vsel %vm3646, %v3641, %v3645
        %v3648 = vmul.f32 %v3605, %v3647
        %v3649 = vmul.f32 %v3624, %v3647
        %v3650 = vmul.f32 %v3607, %v3647
        %v3651 = vmul.f32 %v3626, %v3647
        %v3652 = vmul.f32 %v3610, %v3647
        %v3653 = vmul.f32 %v3629, %v3647
        %v3654 = vmul.f32 %v3612, %v3647
        %v3655 = vmul.f32 %v3631, %v3647
        %v3656 = vmul.f32 %v3648, %v3648
        %v3657 = vmin.f32 16.0, %v3656
        %v3658 = vmul.f32 %v3657, 2.1237322e-06
        %v3659 = vadd.f32 %v3658, 0.00028619796
        %v3660 = vmul.f32 %v3657, %v3659
        %v3661 = vadd.f32 %v3660, 0.0036580483
        %v3662 = vmul.f32 %v3657, %v3661
        %v3663 = vadd.f32 %v3662, 0.05243302
        %v3664 = vmul.f32 %v3657, %v3663
        %v3665 = vadd.f32 %v3664, 0.18741608
        %v3666 = vmul.f32 %v3657, %v3665
        %v3667 = vadd.f32 %v3666, 1.1283791
        %v3668 = vmul.f32 %v3648, %v3667
        %v3669 = vmul.f32 %v3657, 3.8918573e-05
        %v3670 = vadd.f32 %v3669, 0.001143296
        %v3671 = vmul.f32 %v3657, %v3670
        %v3672 = vadd.f32 %v3671, 0.014752088
        %v3673 = vmul.f32 %v3657, %v3672
        %v3674 = vadd.f32 %v3673, 0.112945676
        %v3675 = vmul.f32 %v3657, %v3674
        %v3676 = vadd.f32 %v3675, 0.4994258
        %v3677 = vmul.f32 %v3657, %v3676
        %v3678 = vadd.f32 %v3677, 1.0
        %v3679 = vrcp.pop %v3678
        %v3680 = vmul.f32 %v3678, %v3679
        %v3681 = vsub.f32 1.0, %v3680
        %v3682 = vmul.f32 %v3679, %v3681
        %v3683 = vadd.f32 %v3679, %v3682
        %vm3684 = vweird.f32 %v3678
        %vm3685 = vweird.f32 %v3679
        %vm3686 = vmor %vm3684, %vm3685
        %v3687 = vsel %vm3686, %v3679, %v3683
        %v3688 = vand.u32 2147483647, %v3678
        %vm3689 = vcmp.eq.f32.partialorder %v3688, 8.507059e+37
        %v3690 = vand.u32 %v3678, 2147483648
        %v3691 = vor.u32 1.1754944e-38, %v3690
        %v3692 = vsel %vm3689, %v3691, %v3687
        %v3693 = vmul.f32 %v3668, %v3692
        %v3694 = vmin.f32 %v3693, 1.0
        %v3695 = vmax.f32 %v3694, -1.0
        %v3696 = vmul.f32 %v3649, %v3649
        %v3697 = vmin.f32 16.0, %v3696
        %v3698 = vmul.f32 %v3697, 2.1237322e-06
        %v3699 = vadd.f32 %v3698, 0.00028619796
        %v3700 = vmul.f32 %v3697, %v3699
        %v3701 = vadd.f32 %v3700, 0.0036580483
        %v3702 = vmul.f32 %v3697, %v3701
        %v3703 = vadd.f32 %v3702, 0.05243302
        %v3704 = vmul.f32 %v3697, %v3703
        %v3705 = vadd.f32 %v3704, 0.18741608
        %v3706 = vmul.f32 %v3697, %v3705
        %v3707 = vadd.f32 %v3706, 1.1283791
        %v3708 = vmul.f32 %v3649, %v3707
        %v3709 = vmul.f32 %v3697, 3.8918573e-05
        %v3710 = vadd.f32 %v3709, 0.001143296
        %v3711 = vmul.f32 %v3697, %v3710
        %v3712 = vadd.f32 %v3711, 0.014752088
        %v3713 = vmul.f32 %v3697, %v3712
        %v3714 = vadd.f32 %v3713, 0.112945676
        %v3715 = vmul.f32 %v3697, %v3714
        %v3716 = vadd.f32 %v3715, 0.4994258
        %v3717 = vmul.f32 %v3697, %v3716
        %v3718 = vadd.f32 %v3717, 1.0
        %v3719 = vrcp.pop %v3718
        %v3720 = vmul.f32 %v3718, %v3719
        %v3721 = vsub.f32 1.0, %v3720
        %v3722 = vmul.f32 %v3719, %v3721
        %v3723 = vadd.f32 %v3719, %v3722
        %vm3724 = vweird.f32 %v3718
        %vm3725 = vweird.f32 %v3719
        %vm3726 = vmor %vm3724, %vm3725
        %v3727 = vsel %vm3726, %v3719, %v3723
        %v3728 = vand.u32 2147483647, %v3718
        %vm3729 = vcmp.eq.f32.partialorder %v3728, 8.507059e+37
        %v3730 = vand.u32 %v3718, 2147483648
        %v3731 = vor.u32 1.1754944e-38, %v3730
        %v3732 = vsel %vm3729, %v3731, %v3727
        %v3733 = vmul.f32 %v3708, %v3732
        %v3734 = vmin.f32 %v3733, 1.0
        %v3735 = vmax.f32 %v3734, -1.0
        %v3736 = vmul.f32 %v3650, %v3650
        %v3737 = vmin.f32 16.0, %v3736
        %v3738 = vmul.f32 %v3737, 2.1237322e-06
        %v3739 = vadd.f32 %v3738, 0.00028619796
        %v3740 = vmul.f32 %v3737, %v3739
        %v3741 = vadd.f32 %v3740, 0.0036580483
        %v3742 = vmul.f32 %v3737, %v3741
        %v3743 = vadd.f32 %v3742, 0.05243302
        %v3744 = vmul.f32 %v3737, %v3743
        %v3745 = vadd.f32 %v3744, 0.18741608
        %v3746 = vmul.f32 %v3737, %v3745
        %v3747 = vadd.f32 %v3746, 1.1283791
        %v3748 = vmul.f32 %v3650, %v3747
        %v3749 = vmul.f32 %v3737, 3.8918573e-05
        %v3750 = vadd.f32 %v3749, 0.001143296
        %v3751 = vmul.f32 %v3737, %v3750
        %v3752 = vadd.f32 %v3751, 0.014752088
        %v3753 = vmul.f32 %v3737, %v3752
        %v3754 = vadd.f32 %v3753, 0.112945676
        %v3755 = vmul.f32 %v3737, %v3754
        %v3756 = vadd.f32 %v3755, 0.4994258
        %v3757 = vmul.f32 %v3737, %v3756
        %v3758 = vadd.f32 %v3757, 1.0
        %v3759 = vrcp.pop %v3758
        %v3760 = vmul.f32 %v3758, %v3759
        %v3761 = vsub.f32 1.0, %v3760
        %v3762 = vmul.f32 %v3759, %v3761
        %v3763 = vadd.f32 %v3759, %v3762
        %vm3764 = vweird.f32 %v3758
        %vm3765 = vweird.f32 %v3759
        %vm3766 = vmor %vm3764, %vm3765
        %v3767 = vsel %vm3766, %v3759, %v3763
        %v3768 = vand.u32 2147483647, %v3758
        %vm3769 = vcmp.eq.f32.partialorder %v3768, 8.507059e+37
        %v3770 = vand.u32 %v3758, 2147483648
        %v3771 = vor.u32 1.1754944e-38, %v3770
        %v3772 = vsel %vm3769, %v3771, %v3767
        %v3773 = vmul.f32 %v3748, %v3772
        %v3774 = vmin.f32 %v3773, 1.0
        %v3775 = vmax.f32 %v3774, -1.0
        %v3776 = vmul.f32 %v3651, %v3651
        %v3777 = vmin.f32 16.0, %v3776
        %v3778 = vmul.f32 %v3777, 2.1237322e-06
        %v3779 = vadd.f32 %v3778, 0.00028619796
        %v3780 = vmul.f32 %v3777, %v3779
        %v3781 = vadd.f32 %v3780, 0.0036580483
        %v3782 = vmul.f32 %v3777, %v3781
        %v3783 = vadd.f32 %v3782, 0.05243302
        %v3784 = vmul.f32 %v3777, %v3783
        %v3785 = vadd.f32 %v3784, 0.18741608
        %v3786 = vmul.f32 %v3777, %v3785
        %v3787 = vadd.f32 %v3786, 1.1283791
        %v3788 = vmul.f32 %v3651, %v3787
        %v3789 = vmul.f32 %v3777, 3.8918573e-05
        %v3790 = vadd.f32 %v3789, 0.001143296
        %v3791 = vmul.f32 %v3777, %v3790
        %v3792 = vadd.f32 %v3791, 0.014752088
        %v3793 = vmul.f32 %v3777, %v3792
        %v3794 = vadd.f32 %v3793, 0.112945676
        %v3795 = vmul.f32 %v3777, %v3794
        %v3796 = vadd.f32 %v3795, 0.4994258
        %v3797 = vmul.f32 %v3777, %v3796
        %v3798 = vadd.f32 %v3797, 1.0
        %v3799 = vrcp.pop %v3798
        %v3800 = vmul.f32 %v3798, %v3799
        %v3801 = vsub.f32 1.0, %v3800
        %v3802 = vmul.f32 %v3799, %v3801
        %v3803 = vadd.f32 %v3799, %v3802
        %vm3804 = vweird.f32 %v3798
        %vm3805 = vweird.f32 %v3799
        %vm3806 = vmor %vm3804, %vm3805
        %v3807 = vsel %vm3806, %v3799, %v3803
        %v3808 = vand.u32 2147483647, %v3798
        %vm3809 = vcmp.eq.f32.partialorder %v3808, 8.507059e+37
        %v3810 = vand.u32 %v3798, 2147483648
        %v3811 = vor.u32 1.1754944e-38, %v3810
        %v3812 = vsel %vm3809, %v3811, %v3807
        %v3813 = vmul.f32 %v3788, %v3812
        %v3814 = vmin.f32 %v3813, 1.0
        %v3815 = vmax.f32 %v3814, -1.0
        %v3816 = vmul.f32 %v3652, %v3652
        %v3817 = vmin.f32 16.0, %v3816
        %v3818 = vmul.f32 %v3817, 2.1237322e-06
        %v3819 = vadd.f32 %v3818, 0.00028619796
        %v3820 = vmul.f32 %v3817, %v3819
        %v3821 = vadd.f32 %v3820, 0.0036580483
        %v3822 = vmul.f32 %v3817, %v3821
        %v3823 = vadd.f32 %v3822, 0.05243302
        %v3824 = vmul.f32 %v3817, %v3823
        %v3825 = vadd.f32 %v3824, 0.18741608
        %v3826 = vmul.f32 %v3817, %v3825
        %v3827 = vadd.f32 %v3826, 1.1283791
        %v3828 = vmul.f32 %v3652, %v3827
        %v3829 = vmul.f32 %v3817, 3.8918573e-05
        %v3830 = vadd.f32 %v3829, 0.001143296
        %v3831 = vmul.f32 %v3817, %v3830
        %v3832 = vadd.f32 %v3831, 0.014752088
        %v3833 = vmul.f32 %v3817, %v3832
        %v3834 = vadd.f32 %v3833, 0.112945676
        %v3835 = vmul.f32 %v3817, %v3834
        %v3836 = vadd.f32 %v3835, 0.4994258
        %v3837 = vmul.f32 %v3817, %v3836
        %v3838 = vadd.f32 %v3837, 1.0
        %v3839 = vrcp.pop %v3838
        %v3840 = vmul.f32 %v3838, %v3839
        %v3841 = vsub.f32 1.0, %v3840
        %v3842 = vmul.f32 %v3839, %v3841
        %v3843 = vadd.f32 %v3839, %v3842
        %vm3844 = vweird.f32 %v3838
        %vm3845 = vweird.f32 %v3839
        %vm3846 = vmor %vm3844, %vm3845
        %v3847 = vsel %vm3846, %v3839, %v3843
        %v3848 = vand.u32 2147483647, %v3838
        %vm3849 = vcmp.eq.f32.partialorder %v3848, 8.507059e+37
        %v3850 = vand.u32 %v3838, 2147483648
        %v3851 = vor.u32 1.1754944e-38, %v3850
        %v3852 = vsel %vm3849, %v3851, %v3847
        %v3853 = vmul.f32 %v3828, %v3852
        %v3854 = vmin.f32 %v3853, 1.0
        %v3855 = vmax.f32 %v3854, -1.0
        %v3856 = vmul.f32 %v3653, %v3653
        %v3857 = vmin.f32 16.0, %v3856
        %v3858 = vmul.f32 %v3857, 2.1237322e-06
        %v3859 = vadd.f32 %v3858, 0.00028619796
        %v3860 = vmul.f32 %v3857, %v3859
        %v3861 = vadd.f32 %v3860, 0.0036580483
        %v3862 = vmul.f32 %v3857, %v3861
        %v3863 = vadd.f32 %v3862, 0.05243302
        %v3864 = vmul.f32 %v3857, %v3863
        %v3865 = vadd.f32 %v3864, 0.18741608
        %v3866 = vmul.f32 %v3857, %v3865
        %v3867 = vadd.f32 %v3866, 1.1283791
        %v3868 = vmul.f32 %v3653, %v3867
        %v3869 = vmul.f32 %v3857, 3.8918573e-05
        %v3870 = vadd.f32 %v3869, 0.001143296
        %v3871 = vmul.f32 %v3857, %v3870
        %v3872 = vadd.f32 %v3871, 0.014752088
        %v3873 = vmul.f32 %v3857, %v3872
        %v3874 = vadd.f32 %v3873, 0.112945676
        %v3875 = vmul.f32 %v3857, %v3874
        %v3876 = vadd.f32 %v3875, 0.4994258
        %v3877 = vmul.f32 %v3857, %v3876
        %v3878 = vadd.f32 %v3877, 1.0
        %v3879 = vrcp.pop %v3878
        %v3880 = vmul.f32 %v3878, %v3879
        %v3881 = vsub.f32 1.0, %v3880
        %v3882 = vmul.f32 %v3879, %v3881
        %v3883 = vadd.f32 %v3879, %v3882
        %vm3884 = vweird.f32 %v3878
        %vm3885 = vweird.f32 %v3879
        %vm3886 = vmor %vm3884, %vm3885
        %v3887 = vsel %vm3886, %v3879, %v3883
        %v3888 = vand.u32 2147483647, %v3878
        %vm3889 = vcmp.eq.f32.partialorder %v3888, 8.507059e+37
        %v3890 = vand.u32 %v3878, 2147483648
        %v3891 = vor.u32 1.1754944e-38, %v3890
        %v3892 = vsel %vm3889, %v3891, %v3887
        %v3893 = vmul.f32 %v3868, %v3892
        %v3894 = vmin.f32 %v3893, 1.0
        %v3895 = vmax.f32 %v3894, -1.0
        %v3896 = vmul.f32 %v3654, %v3654
        %v3897 = vmin.f32 16.0, %v3896
        %v3898 = vmul.f32 %v3897, 2.1237322e-06
        %v3899 = vadd.f32 %v3898, 0.00028619796
        %v3900 = vmul.f32 %v3897, %v3899
        %v3901 = vadd.f32 %v3900, 0.0036580483
        %v3902 = vmul.f32 %v3897, %v3901
        %v3903 = vadd.f32 %v3902, 0.05243302
        %v3904 = vmul.f32 %v3897, %v3903
        %v3905 = vadd.f32 %v3904, 0.18741608
        %v3906 = vmul.f32 %v3897, %v3905
        %v3907 = vadd.f32 %v3906, 1.1283791
        %v3908 = vmul.f32 %v3654, %v3907
        %v3909 = vmul.f32 %v3897, 3.8918573e-05
        %v3910 = vadd.f32 %v3909, 0.001143296
        %v3911 = vmul.f32 %v3897, %v3910
        %v3912 = vadd.f32 %v3911, 0.014752088
        %v3913 = vmul.f32 %v3897, %v3912
        %v3914 = vadd.f32 %v3913, 0.112945676
        %v3915 = vmul.f32 %v3897, %v3914
        %v3916 = vadd.f32 %v3915, 0.4994258
        %v3917 = vmul.f32 %v3897, %v3916
        %v3918 = vadd.f32 %v3917, 1.0
        %v3919 = vrcp.pop %v3918
        %v3920 = vmul.f32 %v3918, %v3919
        %v3921 = vsub.f32 1.0, %v3920
        %v3922 = vmul.f32 %v3919, %v3921
        %v3923 = vadd.f32 %v3919, %v3922
        %vm3924 = vweird.f32 %v3918
        %vm3925 = vweird.f32 %v3919
        %vm3926 = vmor %vm3924, %vm3925
        %v3927 = vsel %vm3926, %v3919, %v3923
        %v3928 = vand.u32 2147483647, %v3918
        %vm3929 = vcmp.eq.f32.partialorder %v3928, 8.507059e+37
        %v3930 = vand.u32 %v3918, 2147483648
        %v3931 = vor.u32 1.1754944e-38, %v3930
        %v3932 = vsel %vm3929, %v3931, %v3927
        %v3933 = vmul.f32 %v3908, %v3932
        %v3934 = vmin.f32 %v3933, 1.0
        %v3935 = vmax.f32 %v3934, -1.0
        %v3936 = vmul.f32 %v3655, %v3655
        %v3937 = vmin.f32 16.0, %v3936
        %v3938 = vmul.f32 %v3937, 2.1237322e-06
        %v3939 = vadd.f32 %v3938, 0.00028619796
        %v3940 = vmul.f32 %v3937, %v3939
        %v3941 = vadd.f32 %v3940, 0.0036580483
        %v3942 = vmul.f32 %v3937, %v3941
        %v3943 = vadd.f32 %v3942, 0.05243302
        %v3944 = vmul.f32 %v3937, %v3943
        %v3945 = vadd.f32 %v3944, 0.18741608
        %v3946 = vmul.f32 %v3937, %v3945
        %v3947 = vadd.f32 %v3946, 1.1283791
        %v3948 = vmul.f32 %v3655, %v3947
        %v3949 = vmul.f32 %v3937, 3.8918573e-05
        %v3950 = vadd.f32 %v3949, 0.001143296
        %v3951 = vmul.f32 %v3937, %v3950
        %v3952 = vadd.f32 %v3951, 0.014752088
        %v3953 = vmul.f32 %v3937, %v3952
        %v3954 = vadd.f32 %v3953, 0.112945676
        %v3955 = vmul.f32 %v3937, %v3954
        %v3956 = vadd.f32 %v3955, 0.4994258
        %v3957 = vmul.f32 %v3937, %v3956
        %v3958 = vadd.f32 %v3957, 1.0
        %v3959 = vrcp.pop %v3958
        %v3960 = vmul.f32 %v3958, %v3959
        %v3961 = vsub.f32 1.0, %v3960
        %v3962 = vmul.f32 %v3959, %v3961
        %v3963 = vadd.f32 %v3959, %v3962
        %vm3964 = vweird.f32 %v3958
        %vm3965 = vweird.f32 %v3959
        %vm3966 = vmor %vm3964, %vm3965
        %v3967 = vsel %vm3966, %v3959, %v3963
        %v3968 = vand.u32 2147483647, %v3958
        %vm3969 = vcmp.eq.f32.partialorder %v3968, 8.507059e+37
        %v3970 = vand.u32 %v3958, 2147483648
        %v3971 = vor.u32 1.1754944e-38, %v3970
        %v3972 = vsel %vm3969, %v3971, %v3967
        %v3973 = vmul.f32 %v3948, %v3972
        %v3974 = vmin.f32 %v3973, 1.0
        %v3975 = vmax.f32 %v3974, -1.0
        %v3976 = vadd.f32 %v3695, 1.0
        %v3977 = vadd.f32 %v3735, 1.0
        %v3978 = vadd.f32 %v3775, 1.0
        %v3979 = vadd.f32 %v3815, 1.0
        %v3980 = vadd.f32 %v3855, 1.0
        %v3981 = vadd.f32 %v3895, 1.0
        %v3982 = vadd.f32 %v3935, 1.0
        %v3983 = vadd.f32 %v3975, 1.0
        %v3984 = vmul.f32 %v3633, %v3976
        %v3985 = vmul.f32 %v3634, %v3977
        %v3986 = vmul.f32 %v3635, %v3978
        %v3987 = vmul.f32 %v3636, %v3979
        %v3988 = vmul.f32 %v3637, %v3980
        %v3989 = vmul.f32 %v3638, %v3981
        %v3990 = vmul.f32 %v3639, %v3982
        %v3991 = vmul.f32 %v3640, %v3983
        %v3992 = vpack.c.bf16 %v3986, %v3984
        %v3993 = vpack.c.bf16 %v3987, %v3985
        %v3994 = vpack.c.bf16 %v3990, %v3988
        %v3995 = vpack.c.bf16 %v3991, %v3989
        %v3996 = vld [vmem:[%s1009] sm:$0xf]
        %v3997 = vld [vmem:[%s1009 + $0x4] sm:$0xf]
        %v3998 = vld [vmem:[%s1009 + $0x8] sm:$0xf]
        %v3999 = vld [vmem:[%s1009 + $0xc] sm:$0xf]
        %v4000 = vld [vmem:[%s1009 + $0x10] sm:$0xf]
        %v4001 = vld [vmem:[%s1009 + $0x14] sm:$0xf]
        %v4002 = vld [vmem:[%s1009 + $0x18] sm:$0xf]
        %v4003 = vld [vmem:[%s1009 + $0x1c] sm:$0xf]
        %v4004 = vld [vmem:[%s1009 + $0x20] sm:$0xf]
        %v4005 = vld [vmem:[%s1009 + $0x24] sm:$0xf]
        %v4006 = vld [vmem:[%s1009 + $0x28] sm:$0xf]
        %v4007 = vld [vmem:[%s1009 + $0x2c] sm:$0xf]
        %v4008 = vld [vmem:[%s1009 + $0x30] sm:$0xf]
        %v4009 = vld [vmem:[%s1009 + $0x34] sm:$0xf]
        %v4010 = vld [vmem:[%s1009 + $0x38] sm:$0xf]
        %v4011 = vld [vmem:[%s1009 + $0x3c] sm:$0xf]
        %v4012 = vld [vmem:[%s1009 + $0x40] sm:$0xf]
        %v4013 = vld [vmem:[%s1009 + $0x44] sm:$0xf]
        %v4014 = vld [vmem:[%s1009 + $0x48] sm:$0xf]
        %v4015 = vld [vmem:[%s1009 + $0x4c] sm:$0xf]
        %v4016 = vld [vmem:[%s1009 + $0x50] sm:$0xf]
        %v4017 = vld [vmem:[%s1009 + $0x54] sm:$0xf]
        %v4018 = vld [vmem:[%s1009 + $0x58] sm:$0xf]
        %v4019 = vld [vmem:[%s1009 + $0x5c] sm:$0xf]
        %v4020 = vld [vmem:[%s1009 + $0x60] sm:$0xf]
        %v4021 = vld [vmem:[%s1009 + $0x64] sm:$0xf]
        %v4022 = vld [vmem:[%s1009 + $0x68] sm:$0xf]
        %v4023 = vld [vmem:[%s1009 + $0x6c] sm:$0xf]
        %v4024 = vld [vmem:[%s1009 + $0x70] sm:$0xf]
        %v4025 = vld [vmem:[%s1009 + $0x74] sm:$0xf]
        %v4026 = vld [vmem:[%s1009 + $0x78] sm:$0xf]
        %v4027 = vld [vmem:[%s1009 + $0x7c] sm:$0xf]
        %v4028 = vld [vmem:[%s1128] sm:$0x1]
        %v4030 = vperm.slane %v4028, 0
        %v4064 = vunpack.c.l.b16 %v3996
        %v4065 = vunpack.c.l.b16 %v3997
        %v4066 = vunpack.c.l.b16 %v3998
        %v4067 = vunpack.c.l.b16 %v3999
        %v4068 = vunpack.c.l.b16 %v4000
        %v4069 = vunpack.c.l.b16 %v4001
        %v4070 = vunpack.c.l.b16 %v4002
        %v4071 = vunpack.c.l.b16 %v4003
        %v4072 = vunpack.c.l.b16 %v4004
        %v4073 = vunpack.c.l.b16 %v4005
        %v4074 = vunpack.c.l.b16 %v4006
        %v4075 = vunpack.c.l.b16 %v4007
        %v4076 = vunpack.c.l.b16 %v4008
        %v4077 = vunpack.c.l.b16 %v4009
        %v4078 = vunpack.c.l.b16 %v4010
        %v4079 = vunpack.c.l.b16 %v4011
        %v4080 = vunpack.c.l.b16 %v4012
        %v4081 = vunpack.c.l.b16 %v4013
        %v4082 = vunpack.c.l.b16 %v4014
        %v4083 = vunpack.c.l.b16 %v4015
        %v4084 = vunpack.c.l.b16 %v4016
        %v4085 = vunpack.c.l.b16 %v4017
        %v4086 = vunpack.c.l.b16 %v4018
        %v4087 = vunpack.c.l.b16 %v4019
        %v4088 = vunpack.c.l.b16 %v4020
        %v4089 = vunpack.c.l.b16 %v4021
        %v4090 = vunpack.c.l.b16 %v4022
        %v4091 = vunpack.c.l.b16 %v4023
        %v4092 = vunpack.c.l.b16 %v4024
        %v4093 = vunpack.c.l.b16 %v4025
        %v4094 = vunpack.c.l.b16 %v4026
        %v4095 = vunpack.c.l.b16 %v4027
        %v4096 = vpack.c.b16 %v4065, %v4064
        %v4097 = vpack.c.b16 %v4067, %v4066
        %v4098 = vpack.c.b16 %v4069, %v4068
        %v4099 = vpack.c.b16 %v4071, %v4070
        %v4100 = vpack.c.b16 %v4073, %v4072
        %v4101 = vpack.c.b16 %v4075, %v4074
        %v4102 = vpack.c.b16 %v4077, %v4076
        %v4103 = vpack.c.b16 %v4079, %v4078
        %v4104 = vpack.c.b16 %v4081, %v4080
        %v4105 = vpack.c.b16 %v4083, %v4082
        %v4106 = vpack.c.b16 %v4085, %v4084
        %v4107 = vpack.c.b16 %v4087, %v4086
        %v4108 = vpack.c.b16 %v4089, %v4088
        %v4109 = vpack.c.b16 %v4091, %v4090
        %v4110 = vpack.c.b16 %v4093, %v4092
        %v4111 = vpack.c.b16 %v4095, %v4094
        %4128 = vmatpush.bf16.msra.mxu0 %v4103
        %4129 = vmatpush.bf16.msra.mxu0 %v4102
        %4130 = vmatpush.bf16.msra.mxu0 %v4101
        %4131 = vmatpush.bf16.msra.mxu0 %v4100
        %4132 = vmatpush.bf16.msra.mxu0 %v4099
        %4133 = vmatpush.bf16.msra.mxu0 %v4098
        %4134 = vmatpush.bf16.msra.mxu0 %v4097
        %4135 = vmatpush.bf16.msra.mxu0 %v4096
        %4136 = vmatmul.bf16.gmra.mxu0 %v3992
        %v4137 = vpop.f32.mrf.mxu0
        %v4138 = vadd.f32 %v4030, %v4137
        %v4139 = vpop.f32.mrf.mxu0
        %v4140 = vadd.f32 %v4030, %v4139
        %4141 = vmatmul.bf16.gmra.mxu0 %v3994
        %v4142 = vpop.f32.mrf.mxu0
        %v4143 = vadd.f32 %v4030, %v4142
        %v4144 = vpop.f32.mrf.mxu0
        %v4145 = vadd.f32 %v4030, %v4144
        %4146 = vdwg.mxu0
        %4147 = vmatpush.bf16.msra.mxu0 %v4111
        %4148 = vmatpush.bf16.msra.mxu0 %v4110
        %4149 = vmatpush.bf16.msra.mxu0 %v4109
        %4150 = vmatpush.bf16.msra.mxu0 %v4108
        %4151 = vmatpush.bf16.msra.mxu0 %v4107
        %4152 = vmatpush.bf16.msra.mxu0 %v4106
        %4153 = vmatpush.bf16.msra.mxu0 %v4105
        %4154 = vmatpush.bf16.msra.mxu0 %v4104
        %4155 = vmatmul.bf16.gmra.mxu0 %v3993
        %v4156 = vpop.f32.mrf.mxu0
        %v4157 = vadd.f32 %v4138, %v4156
        %v4158 = vpop.f32.mrf.mxu0
        %v4159 = vadd.f32 %v4140, %v4158
        %4160 = vmatmul.bf16.gmra.mxu0 %v3995
        %v4161 = vpop.f32.mrf.mxu0
        %v4162 = vadd.f32 %v4143, %v4161
        %v4163 = vpop.f32.mrf.mxu0
        %v4164 = vadd.f32 %v4145, %v4163
        %4165 = vdwg.mxu0
        %v4166 = vadd.f32 %v4157, %v3487
        %v4167 = vadd.f32 %v4159, %v3488
        %v4168 = vadd.f32 %v4162, %v3489
        %v4169 = vadd.f32 %v4164, %v3490
        %v4170 = vld [vmem:[%s1131] sm:$0x1]
        %v4171 = vld [vmem:[%s1134] sm:$0x1]
        %4172 = vadd.xlane.f32.xlu0 %v4166
        %v4173 = vpop.xlane.xlu0 %4172
        %4174 = vadd.xlane.f32.xlu0 %v4167
        %v4175 = vpop.xlane.xlu0 %4174
        %4176 = vadd.xlane.f32.xlu0 %v4168
        %v4177 = vpop.xlane.xlu0 %4176
        %4178 = vadd.xlane.f32.xlu0 %v4169
        %v4179 = vpop.xlane.xlu0 %4178
        %v4180 = vmul.f32 %v4173, %v3404
        %v4181 = vmul.f32 %v4175, %v3404
        %v4182 = vmul.f32 %v4177, %v3404
        %v4183 = vmul.f32 %v4179, %v3404
        %v4184 = vsub.f32 %v4166, %v4180
        %v4185 = vsub.f32 %v4167, %v4181
        %v4186 = vsub.f32 %v4168, %v4182
        %v4187 = vsub.f32 %v4169, %v4183
        %v4188 = vmul.f32 %v4184, %v4184
        %v4189 = vmul.f32 %v4185, %v4185
        %v4190 = vmul.f32 %v4186, %v4186
        %v4191 = vmul.f32 %v4187, %v4187
        %4192 = vadd.xlane.f32.xlu0 %v4188
        %v4193 = vpop.xlane.xlu0 %4192
        %4194 = vadd.xlane.f32.xlu0 %v4189
        %v4195 = vpop.xlane.xlu0 %4194
        %4196 = vadd.xlane.f32.xlu0 %v4190
        %v4197 = vpop.xlane.xlu0 %4196
        %4198 = vadd.xlane.f32.xlu0 %v4191
        %v4199 = vpop.xlane.xlu0 %4198
        %v4200 = vmul.f32 %v4193, %v3404
        %v4201 = vmul.f32 %v4195, %v3404
        %v4202 = vmul.f32 %v4197, %v3404
        %v4203 = vmul.f32 %v4199, %v3404
        %v4204 = vadd.f32 %v4200, 1e-05
        %v4205 = vadd.f32 %v4201, 1e-05
        %v4206 = vadd.f32 %v4202, 1e-05
        %v4207 = vadd.f32 %v4203, 1e-05
        %v4208 = vrsqrt.pop %v4204
        %v4209 = vmul.f32 %v4208, %v4204
        %v4210 = vmul.f32 %v4209, %v4208
        %v4211 = vmul.f32 0.5, %v4210
        %v4212 = vsub.f32 1.5, %v4211
        %v4213 = vmul.f32 %v4208, %v4212
        %vm4214 = vweird.f32 %v4204
        %vm4215 = vweird.f32 %v4208
        %vm4216 = vmor %vm4214, %vm4215
        %v4217 = vsel %vm4216, %v4208, %v4213
        %v4218 = vrsqrt.pop %v4205
        %v4219 = vmul.f32 %v4218, %v4205
        %v4220 = vmul.f32 %v4219, %v4218
        %v4221 = vmul.f32 0.5, %v4220
        %v4222 = vsub.f32 1.5, %v4221
        %v4223 = vmul.f32 %v4218, %v4222
        %vm4224 = vweird.f32 %v4205
        %vm4225 = vweird.f32 %v4218
        %vm4226 = vmor %vm4224, %vm4225
        %v4227 = vsel %vm4226, %v4218, %v4223
        %v4228 = vrsqrt.pop %v4206
        %v4229 = vmul.f32 %v4228, %v4206
        %v4230 = vmul.f32 %v4229, %v4228
        %v4231 = vmul.f32 0.5, %v4230
        %v4232 = vsub.f32 1.5, %v4231
        %v4233 = vmul.f32 %v4228, %v4232
        %vm4234 = vweird.f32 %v4206
        %vm4235 = vweird.f32 %v4228
        %vm4236 = vmor %vm4234, %vm4235
        %v4237 = vsel %vm4236, %v4228, %v4233
        %v4238 = vrsqrt.pop %v4207
        %v4239 = vmul.f32 %v4238, %v4207
        %v4240 = vmul.f32 %v4239, %v4238
        %v4241 = vmul.f32 0.5, %v4240
        %v4242 = vsub.f32 1.5, %v4241
        %v4243 = vmul.f32 %v4238, %v4242
        %vm4244 = vweird.f32 %v4207
        %vm4245 = vweird.f32 %v4238
        %vm4246 = vmor %vm4244, %vm4245
        %v4247 = vsel %vm4246, %v4238, %v4243
        %v4248 = vmul.f32 %v4184, %v4217
        %v4249 = vmul.f32 %v4185, %v4227
        %v4250 = vmul.f32 %v4186, %v4237
        %v4251 = vmul.f32 %v4187, %v4247
        %v4253 = vperm.slane %v4170, 0
        %v4255 = vmul.f32 %v4248, %v4253
        %v4256 = vmul.f32 %v4249, %v4253
        %v4257 = vmul.f32 %v4250, %v4253
        %v4258 = vmul.f32 %v4251, %v4253
        %v4260 = vperm.slane %v4171, 0
        %v4262 = vadd.f32 %v4255, %v4260
        %v4263 = vadd.f32 %v4256, %v4260
        %v4264 = vadd.f32 %v4257, %v4260
        %v4265 = vadd.f32 %v4258, %v4260
        %4266 = vst [vmem:[#allocation2] sm:$0xff] %v4262
        %4267 = vst [vmem:[#allocation2 + $0x8] sm:$0xff] %v4263
        %4268 = vst [vmem:[#allocation2 + $0x10] sm:$0xff] %v4264
        %4269 = vst [vmem:[#allocation2 + $0x18] sm:$0xff] %v4265
        %p4270 = scmp.eq.s32.totalorder %s43, 1
        // Predicated region
        $region169: #{tpu_custom_call.1} parent=107 // pred_check
          %p4271 = pneg %p4270
        $region170: #{tpu_custom_call.1} parent=107 // pred_check_branch
          %4273 = sbr.rel (%p4271) target = $region172
        $region171: #{tpu_custom_call.1} parent=107 // pred_region
          %v4274 = vpack.c.bf16 %v4263, %v4262
          %v4275 = vpack.c.bf16 %v4265, %v4264
          %v4276 = vld [vmem:[#allocation22] sm:$0xf]
          %v4277 = vld [vmem:[#allocation22 + $0x4] sm:$0xf]
          %v4278 = vld [vmem:[#allocation22 + $0x8] sm:$0xf]
          %v4279 = vld [vmem:[#allocation22 + $0xc] sm:$0xf]
          %v4280 = vld [vmem:[#allocation22 + $0x10] sm:$0xf]
          %v4281 = vld [vmem:[#allocation22 + $0x14] sm:$0xf]
          %v4282 = vld [vmem:[#allocation22 + $0x18] sm:$0xf]
          %v4283 = vld [vmem:[#allocation22 + $0x1c] sm:$0xf]
          %v4284 = vld [vmem:[#allocation22 + $0x20] sm:$0xf]
          %v4285 = vld [vmem:[#allocation22 + $0x24] sm:$0xf]
          %v4286 = vld [vmem:[#allocation22 + $0x28] sm:$0xf]
          %v4287 = vld [vmem:[#allocation22 + $0x2c] sm:$0xf]
          %v4288 = vld [vmem:[#allocation22 + $0x30] sm:$0xf]
          %v4289 = vld [vmem:[#allocation22 + $0x34] sm:$0xf]
          %v4290 = vld [vmem:[#allocation22 + $0x38] sm:$0xf]
          %v4291 = vld [vmem:[#allocation22 + $0x3c] sm:$0xf]
          %v4292 = vld [vmem:[%s19] sm:$0x1]
          %v4294 = vperm.slane %v4292, 0
          %v4312 = vunpack.c.l.b16 %v4276
          %v4313 = vunpack.c.l.b16 %v4277
          %v4314 = vunpack.c.l.b16 %v4278
          %v4315 = vunpack.c.l.b16 %v4279
          %v4316 = vunpack.c.l.b16 %v4280
          %v4317 = vunpack.c.l.b16 %v4281
          %v4318 = vunpack.c.l.b16 %v4282
          %v4319 = vunpack.c.l.b16 %v4283
          %v4320 = vunpack.c.l.b16 %v4284
          %v4321 = vunpack.c.l.b16 %v4285
          %v4322 = vunpack.c.l.b16 %v4286
          %v4323 = vunpack.c.l.b16 %v4287
          %v4324 = vunpack.c.l.b16 %v4288
          %v4325 = vunpack.c.l.b16 %v4289
          %v4326 = vunpack.c.l.b16 %v4290
          %v4327 = vunpack.c.l.b16 %v4291
          %v4328 = vpack.c.b16 %v4313, %v4312
          %v4329 = vpack.c.b16 %v4315, %v4314
          %v4330 = vpack.c.b16 %v4317, %v4316
          %v4331 = vpack.c.b16 %v4319, %v4318
          %v4332 = vpack.c.b16 %v4321, %v4320
          %v4333 = vpack.c.b16 %v4323, %v4322
          %v4334 = vpack.c.b16 %v4325, %v4324
          %v4335 = vpack.c.b16 %v4327, %v4326
          %4344 = vmatpush.bf16.msra.mxu0 %v4335
          %4345 = vmatpush.bf16.msra.mxu0 %v4334
          %4346 = vmatpush.bf16.msra.mxu0 %v4333
          %4347 = vmatpush.bf16.msra.mxu0 %v4332
          %4348 = vmatpush.bf16.msra.mxu0 %v4331
          %4349 = vmatpush.bf16.msra.mxu0 %v4330
          %4350 = vmatpush.bf16.msra.mxu0 %v4329
          %4351 = vmatpush.bf16.msra.mxu0 %v4328
          %4352 = vmatmul.bf16.gmra.mxu0 %v4274
          %v4353 = vpop.f32.mrf.mxu0
          %v4354 = vadd.f32 %v4294, %v4353
          %v4355 = vpop.f32.mrf.mxu0
          %v4356 = vadd.f32 %v4294, %v4355
          %4357 = vmatmul.bf16.gmra.mxu0 %v4275
          %v4358 = vpop.f32.mrf.mxu0
          %v4359 = vadd.f32 %v4294, %v4358
          %v4360 = vpop.f32.mrf.mxu0
          %v4361 = vadd.f32 %v4294, %v4360
          %4362 = vdwg.mxu0
          %v4363 = vmul.f32 %v4354, 0.5
          %v4364 = vmul.f32 %v4356, 0.5
          %v4365 = vmul.f32 %v4359, 0.5
          %v4366 = vmul.f32 %v4361, 0.5
          %v4367 = vmul.f32 %v4354, %v3647
          %v4368 = vmul.f32 %v4356, %v3647
          %v4369 = vmul.f32 %v4359, %v3647
          %v4370 = vmul.f32 %v4361, %v3647
          %v4371 = vmul.f32 %v4367, %v4367
          %v4372 = vmin.f32 16.0, %v4371
          %v4373 = vmul.f32 %v4372, 2.1237322e-06
          %v4374 = vadd.f32 %v4373, 0.00028619796
          %v4375 = vmul.f32 %v4372, %v4374
          %v4376 = vadd.f32 %v4375, 0.0036580483
          %v4377 = vmul.f32 %v4372, %v4376
          %v4378 = vadd.f32 %v4377, 0.05243302
          %v4379 = vmul.f32 %v4372, %v4378
          %v4380 = vadd.f32 %v4379, 0.18741608
          %v4381 = vmul.f32 %v4372, %v4380
          %v4382 = vadd.f32 %v4381, 1.1283791
          %v4383 = vmul.f32 %v4367, %v4382
          %v4384 = vmul.f32 %v4372, 3.8918573e-05
          %v4385 = vadd.f32 %v4384, 0.001143296
          %v4386 = vmul.f32 %v4372, %v4385
          %v4387 = vadd.f32 %v4386, 0.014752088
          %v4388 = vmul.f32 %v4372, %v4387
          %v4389 = vadd.f32 %v4388, 0.112945676
          %v4390 = vmul.f32 %v4372, %v4389
          %v4391 = vadd.f32 %v4390, 0.4994258
          %v4392 = vmul.f32 %v4372, %v4391
          %v4393 = vadd.f32 %v4392, 1.0
          %v4394 = vrcp.pop %v4393
          %v4395 = vmul.f32 %v4393, %v4394
          %v4396 = vsub.f32 1.0, %v4395
          %v4397 = vmul.f32 %v4394, %v4396
          %v4398 = vadd.f32 %v4394, %v4397
          %vm4399 = vweird.f32 %v4393
          %vm4400 = vweird.f32 %v4394
          %vm4401 = vmor %vm4399, %vm4400
          %v4402 = vsel %vm4401, %v4394, %v4398
          %v4403 = vand.u32 2147483647, %v4393
          %vm4404 = vcmp.eq.f32.partialorder %v4403, 8.507059e+37
          %v4405 = vand.u32 %v4393, 2147483648
          %v4406 = vor.u32 1.1754944e-38, %v4405
          %v4407 = vsel %vm4404, %v4406, %v4402
          %v4408 = vmul.f32 %v4383, %v4407
          %v4409 = vmin.f32 %v4408, 1.0
          %v4410 = vmax.f32 %v4409, -1.0
          %v4411 = vmul.f32 %v4368, %v4368
          %v4412 = vmin.f32 16.0, %v4411
          %v4413 = vmul.f32 %v4412, 2.1237322e-06
          %v4414 = vadd.f32 %v4413, 0.00028619796
          %v4415 = vmul.f32 %v4412, %v4414
          %v4416 = vadd.f32 %v4415, 0.0036580483
          %v4417 = vmul.f32 %v4412, %v4416
          %v4418 = vadd.f32 %v4417, 0.05243302
          %v4419 = vmul.f32 %v4412, %v4418
          %v4420 = vadd.f32 %v4419, 0.18741608
          %v4421 = vmul.f32 %v4412, %v4420
          %v4422 = vadd.f32 %v4421, 1.1283791
          %v4423 = vmul.f32 %v4368, %v4422
          %v4424 = vmul.f32 %v4412, 3.8918573e-05
          %v4425 = vadd.f32 %v4424, 0.001143296
          %v4426 = vmul.f32 %v4412, %v4425
          %v4427 = vadd.f32 %v4426, 0.014752088
          %v4428 = vmul.f32 %v4412, %v4427
          %v4429 = vadd.f32 %v4428, 0.112945676
          %v4430 = vmul.f32 %v4412, %v4429
          %v4431 = vadd.f32 %v4430, 0.4994258
          %v4432 = vmul.f32 %v4412, %v4431
          %v4433 = vadd.f32 %v4432, 1.0
          %v4434 = vrcp.pop %v4433
          %v4435 = vmul.f32 %v4433, %v4434
          %v4436 = vsub.f32 1.0, %v4435
          %v4437 = vmul.f32 %v4434, %v4436
          %v4438 = vadd.f32 %v4434, %v4437
          %vm4439 = vweird.f32 %v4433
          %vm4440 = vweird.f32 %v4434
          %vm4441 = vmor %vm4439, %vm4440
          %v4442 = vsel %vm4441, %v4434, %v4438
          %v4443 = vand.u32 2147483647, %v4433
          %vm4444 = vcmp.eq.f32.partialorder %v4443, 8.507059e+37
          %v4445 = vand.u32 %v4433, 2147483648
          %v4446 = vor.u32 1.1754944e-38, %v4445
          %v4447 = vsel %vm4444, %v4446, %v4442
          %v4448 = vmul.f32 %v4423, %v4447
          %v4449 = vmin.f32 %v4448, 1.0
          %v4450 = vmax.f32 %v4449, -1.0
          %v4451 = vmul.f32 %v4369, %v4369
          %v4452 = vmin.f32 16.0, %v4451
          %v4453 = vmul.f32 %v4452, 2.1237322e-06
          %v4454 = vadd.f32 %v4453, 0.00028619796
          %v4455 = vmul.f32 %v4452, %v4454
          %v4456 = vadd.f32 %v4455, 0.0036580483
          %v4457 = vmul.f32 %v4452, %v4456
          %v4458 = vadd.f32 %v4457, 0.05243302
          %v4459 = vmul.f32 %v4452, %v4458
          %v4460 = vadd.f32 %v4459, 0.18741608
          %v4461 = vmul.f32 %v4452, %v4460
          %v4462 = vadd.f32 %v4461, 1.1283791
          %v4463 = vmul.f32 %v4369, %v4462
          %v4464 = vmul.f32 %v4452, 3.8918573e-05
          %v4465 = vadd.f32 %v4464, 0.001143296
          %v4466 = vmul.f32 %v4452, %v4465
          %v4467 = vadd.f32 %v4466, 0.014752088
          %v4468 = vmul.f32 %v4452, %v4467
          %v4469 = vadd.f32 %v4468, 0.112945676
          %v4470 = vmul.f32 %v4452, %v4469
          %v4471 = vadd.f32 %v4470, 0.4994258
          %v4472 = vmul.f32 %v4452, %v4471
          %v4473 = vadd.f32 %v4472, 1.0
          %v4474 = vrcp.pop %v4473
          %v4475 = vmul.f32 %v4473, %v4474
          %v4476 = vsub.f32 1.0, %v4475
          %v4477 = vmul.f32 %v4474, %v4476
          %v4478 = vadd.f32 %v4474, %v4477
          %vm4479 = vweird.f32 %v4473
          %vm4480 = vweird.f32 %v4474
          %vm4481 = vmor %vm4479, %vm4480
          %v4482 = vsel %vm4481, %v4474, %v4478
          %v4483 = vand.u32 2147483647, %v4473
          %vm4484 = vcmp.eq.f32.partialorder %v4483, 8.507059e+37
          %v4485 = vand.u32 %v4473, 2147483648
          %v4486 = vor.u32 1.1754944e-38, %v4485
          %v4487 = vsel %vm4484, %v4486, %v4482
          %v4488 = vmul.f32 %v4463, %v4487
          %v4489 = vmin.f32 %v4488, 1.0
          %v4490 = vmax.f32 %v4489, -1.0
          %v4491 = vmul.f32 %v4370, %v4370
          %v4492 = vmin.f32 16.0, %v4491
          %v4493 = vmul.f32 %v4492, 2.1237322e-06
          %v4494 = vadd.f32 %v4493, 0.00028619796
          %v4495 = vmul.f32 %v4492, %v4494
          %v4496 = vadd.f32 %v4495, 0.0036580483
          %v4497 = vmul.f32 %v4492, %v4496
          %v4498 = vadd.f32 %v4497, 0.05243302
          %v4499 = vmul.f32 %v4492, %v4498
          %v4500 = vadd.f32 %v4499, 0.18741608
          %v4501 = vmul.f32 %v4492, %v4500
          %v4502 = vadd.f32 %v4501, 1.1283791
          %v4503 = vmul.f32 %v4370, %v4502
          %v4504 = vmul.f32 %v4492, 3.8918573e-05
          %v4505 = vadd.f32 %v4504, 0.001143296
          %v4506 = vmul.f32 %v4492, %v4505
          %v4507 = vadd.f32 %v4506, 0.014752088
          %v4508 = vmul.f32 %v4492, %v4507
          %v4509 = vadd.f32 %v4508, 0.112945676
          %v4510 = vmul.f32 %v4492, %v4509
          %v4511 = vadd.f32 %v4510, 0.4994258
          %v4512 = vmul.f32 %v4492, %v4511
          %v4513 = vadd.f32 %v4512, 1.0
          %v4514 = vrcp.pop %v4513
          %v4515 = vmul.f32 %v4513, %v4514
          %v4516 = vsub.f32 1.0, %v4515
          %v4517 = vmul.f32 %v4514, %v4516
          %v4518 = vadd.f32 %v4514, %v4517
          %vm4519 = vweird.f32 %v4513
          %vm4520 = vweird.f32 %v4514
          %vm4521 = vmor %vm4519, %vm4520
          %v4522 = vsel %vm4521, %v4514, %v4518
          %v4523 = vand.u32 2147483647, %v4513
          %vm4524 = vcmp.eq.f32.partialorder %v4523, 8.507059e+37
          %v4525 = vand.u32 %v4513, 2147483648
          %v4526 = vor.u32 1.1754944e-38, %v4525
          %v4527 = vsel %vm4524, %v4526, %v4522
          %v4528 = vmul.f32 %v4503, %v4527
          %v4529 = vmin.f32 %v4528, 1.0
          %v4530 = vmax.f32 %v4529, -1.0
          %v4531 = vadd.f32 %v4410, 1.0
          %v4532 = vadd.f32 %v4450, 1.0
          %v4533 = vadd.f32 %v4490, 1.0
          %v4534 = vadd.f32 %v4530, 1.0
          %v4535 = vmul.f32 %v4363, %v4531
          %v4536 = vmul.f32 %v4364, %v4532
          %v4537 = vmul.f32 %v4365, %v4533
          %v4538 = vmul.f32 %v4366, %v4534
          %v4539 = vld [vmem:[%s20] sm:$0x1]
          %v4540 = vld [vmem:[%s21] sm:$0x1]
          %4541 = vadd.xlane.f32.xlu0 %v4535
          %v4542 = vpop.xlane.xlu0 %4541
          %4543 = vadd.xlane.f32.xlu0 %v4536
          %v4544 = vpop.xlane.xlu0 %4543
          %4545 = vadd.xlane.f32.xlu0 %v4537
          %v4546 = vpop.xlane.xlu0 %4545
          %4547 = vadd.xlane.f32.xlu0 %v4538
          %v4548 = vpop.xlane.xlu0 %4547
          %v4549 = vmul.f32 %v4542, %v3404
          %v4550 = vmul.f32 %v4544, %v3404
          %v4551 = vmul.f32 %v4546, %v3404
          %v4552 = vmul.f32 %v4548, %v3404
          %v4553 = vsub.f32 %v4535, %v4549
          %v4554 = vsub.f32 %v4536, %v4550
          %v4555 = vsub.f32 %v4537, %v4551
          %v4556 = vsub.f32 %v4538, %v4552
          %v4557 = vmul.f32 %v4553, %v4553
          %v4558 = vmul.f32 %v4554, %v4554
          %v4559 = vmul.f32 %v4555, %v4555
          %v4560 = vmul.f32 %v4556, %v4556
          %4561 = vadd.xlane.f32.xlu0 %v4557
          %v4562 = vpop.xlane.xlu0 %4561
          %4563 = vadd.xlane.f32.xlu0 %v4558
          %v4564 = vpop.xlane.xlu0 %4563
          %4565 = vadd.xlane.f32.xlu0 %v4559
          %v4566 = vpop.xlane.xlu0 %4565
          %4567 = vadd.xlane.f32.xlu0 %v4560
          %v4568 = vpop.xlane.xlu0 %4567
          %v4569 = vmul.f32 %v4562, %v3404
          %v4570 = vmul.f32 %v4564, %v3404
          %v4571 = vmul.f32 %v4566, %v3404
          %v4572 = vmul.f32 %v4568, %v3404
          %v4573 = vadd.f32 %v4569, 1e-05
          %v4574 = vadd.f32 %v4570, 1e-05
          %v4575 = vadd.f32 %v4571, 1e-05
          %v4576 = vadd.f32 %v4572, 1e-05
          %v4577 = vrsqrt.pop %v4573
          %v4578 = vmul.f32 %v4577, %v4573
          %v4579 = vmul.f32 %v4578, %v4577
          %v4580 = vmul.f32 0.5, %v4579
          %v4581 = vsub.f32 1.5, %v4580
          %v4582 = vmul.f32 %v4577, %v4581
          %vm4583 = vweird.f32 %v4573
          %vm4584 = vweird.f32 %v4577
          %vm4585 = vmor %vm4583, %vm4584
          %v4586 = vsel %vm4585, %v4577, %v4582
          %v4587 = vrsqrt.pop %v4574
          %v4588 = vmul.f32 %v4587, %v4574
          %v4589 = vmul.f32 %v4588, %v4587
          %v4590 = vmul.f32 0.5, %v4589
          %v4591 = vsub.f32 1.5, %v4590
          %v4592 = vmul.f32 %v4587, %v4591
          %vm4593 = vweird.f32 %v4574
          %vm4594 = vweird.f32 %v4587
          %vm4595 = vmor %vm4593, %vm4594
          %v4596 = vsel %vm4595, %v4587, %v4592
          %v4597 = vrsqrt.pop %v4575
          %v4598 = vmul.f32 %v4597, %v4575
          %v4599 = vmul.f32 %v4598, %v4597
          %v4600 = vmul.f32 0.5, %v4599
          %v4601 = vsub.f32 1.5, %v4600
          %v4602 = vmul.f32 %v4597, %v4601
          %vm4603 = vweird.f32 %v4575
          %vm4604 = vweird.f32 %v4597
          %vm4605 = vmor %vm4603, %vm4604
          %v4606 = vsel %vm4605, %v4597, %v4602
          %v4607 = vrsqrt.pop %v4576
          %v4608 = vmul.f32 %v4607, %v4576
          %v4609 = vmul.f32 %v4608, %v4607
          %v4610 = vmul.f32 0.5, %v4609
          %v4611 = vsub.f32 1.5, %v4610
          %v4612 = vmul.f32 %v4607, %v4611
          %vm4613 = vweird.f32 %v4576
          %vm4614 = vweird.f32 %v4607
          %vm4615 = vmor %vm4613, %vm4614
          %v4616 = vsel %vm4615, %v4607, %v4612
          %v4617 = vmul.f32 %v4553, %v4586
          %v4618 = vmul.f32 %v4554, %v4596
          %v4619 = vmul.f32 %v4555, %v4606
          %v4620 = vmul.f32 %v4556, %v4616
          %v4622 = vperm.slane %v4539, 0
          %v4624 = vmul.f32 %v4617, %v4622
          %v4625 = vmul.f32 %v4618, %v4622
          %v4626 = vmul.f32 %v4619, %v4622
          %v4627 = vmul.f32 %v4620, %v4622
          %v4629 = vperm.slane %v4540, 0
          %v4631 = vadd.f32 %v4624, %v4629
          %v4632 = vadd.f32 %v4625, %v4629
          %v4633 = vadd.f32 %v4626, %v4629
          %v4634 = vadd.f32 %v4627, %v4629
          %v4635 = vpack.c.bf16 %v4631, %v4631
          %v4636 = vpack.c.bf16 %v4632, %v4632
          %v4637 = vpack.c.bf16 %v4633, %v4633
          %v4638 = vpack.c.bf16 %v4634, %v4634
          %4639 = vst [vmem:[#allocation23] sm:$0xf] %v4635
          %4640 = vst [vmem:[#allocation23 + $0x4] sm:$0xf] %v4636
          %s4641 = scalar_lea.vmem [#allocation23], 8
          %4642 = vst [vmem:[%s4641] sm:$0xf] %v4637
          %4643 = vst [vmem:[%s4641 + $0x4] sm:$0xf] %v4638
        $region172: #{tpu_custom_call.1} parent=107 // pred_fallthru
          _
        // Predicated region
        $region173: #{tpu_custom_call.1} parent=107 // pred_check
          %p4644 = pneg %p605
        $region174: #{tpu_custom_call.1} parent=107 // pred_check_branch
          %4646 = sbr.rel (%p4644) target = $region176
        $region175: #{tpu_custom_call.1} parent=107 // pred_region
          %s4647 = smul.u32 2, %s42
          %4649 = vsyncadd [#allocation6], 0
          %s4650 = smul.addr %s4647, 2
          %s4651 = smul.addr %s4650, 4
          %s4652 = scalar_lea.hbm %s22, %s4651
          %s4653 = sshll.u32 [#allocation23], 4
          %s4654 = int_to_ptr.vmem [resolvable:$true] %s4653
          %s4655 = sshll.u32 %s4652, 4
          %s4656 = int_to_ptr.hbm [resolvable:$true] %s4655
          %4661 = dma.vmem_to_hbm [thread:$0]  %s4654, 256, %s4656, [#allocation6], 64, 64, 4
        $region176: #{tpu_custom_call.1} parent=107 // pred_fallthru
          _
        // Predicated region
        $region177: #{tpu_custom_call.1} parent=107 // pred_check
          %p4662 = pneg %p605
        $region178: #{tpu_custom_call.1} parent=107 // pred_check_branch
          %4664 = sbr.rel (%p4662) target = $region180
        $region179: #{tpu_custom_call.1} parent=107 // pred_region
          %4666 = dma.done [#allocation6], 256
        $region180: #{tpu_custom_call.1} parent=107 // pred_fallthru
          _
      $region108: #{tpu_custom_call.1} parent=5 // pred_fallthru
        _
      %p4667 = scmp.le.s32.totalorder 2, %s33
      // Predicated region
      $region181: #{tpu_custom_call.1} parent=5 // pred_check
        %p4668 = pneg %p4667
      $region182: #{tpu_custom_call.1} parent=5 // pred_check_branch
        %4670 = sbr.rel (%p4668) target = $region184
      $region183: #{tpu_custom_call.1} parent=5 // pred_region
        %s4671 = ssub.s32 %s33, 2
      $region184: #{tpu_custom_call.1} parent=5 // pred_fallthru
        _
    $region6: #{tpu_custom_call.1} parent=1 // loop_footer
      %s37 = sadd.s32 1, %s33
    $region7: #{tpu_custom_call.1} parent=1 // loop_footer_branch
      %32 = sbr.rel target = $region3
    $region8: #{tpu_custom_call.1} parent=1 // loop_exit
      _
    %4672 = vsyncpa [#allocation5], 1
    %s4673 = scalar_lea.sflag [#allocation5], 1
    %4674 = vsyncpa %s4673, 1
    %4675 = vsyncpa [#allocation8], 1
    %4676 = vsyncpa [#allocation11], 1
    %4677 = vsyncpa [#allocation14], 1
    %4678 = vsyncpa [#allocation6], 1
    %s4679 = scalar_lea.sflag [#allocation6], 1
    %4680 = vsyncpa %s4679, 1

// kernel: tpu_custom_call.1
$region0: #{tpu_custom_call.1}
  #allocation0 [shape = 'u32[]', space=smem, size = 0x4, offset = 0x4, fixed_abs, tag = 'smem constant byte address 0x4 - core index']
  #allocation1 [shape = 'u32[72,128]{1,0:T(1,128)}', space=vmem, size = 0x9000, scoped, tag = 'internal scratch']
  #allocation2 [shape = 'f32[32,128]{1,0:T(8,128)}', space=vmem, size = 0x4000, scoped, tag = 'scratch operand']
  #allocation3 [shape = 'bf16[32,128]{1,0:T(8,128)(2,1)}', space=vmem, size = 0x2000, scoped, tag = 'scratch operand']
  %s0 = inlined_call_operand.hbm [shape: f32[2,16,128], index: 0, kind: input, shape index: {}]
  %s1 = inlined_call_operand.hbm [shape: f32[1,16,128], index: 1, kind: input, shape index: {}]
  %s2 = inlined_call_operand.hbm [shape: f32[2,16,128], index: 2, kind: input, shape index: {}]
  %s3 = inlined_call_operand.hbm [shape: f32[1,128], index: 3, kind: input, shape index: {}]
  %s4 = inlined_call_operand.hbm [shape: f32[1,128], index: 4, kind: input, shape index: {}]
  %s5 = inlined_call_operand.hbm [shape: f32[2,1,16], index: 5, kind: input, shape index: {}]
  %s6 = inlined_call_operand.hbm [shape: bf16[2,128,384], index: 6, kind: input, shape index: {}]
  %s7 = inlined_call_operand.vmem [shape: f32[2,1,384], index: 7, kind: input, shape index: {}]
  %s8 = inlined_call_operand.hbm [shape: bf16[2,128,128], index: 8, kind: input, shape index: {}]
  %s9 = inlined_call_operand.hbm [shape: f32[2,1,128], index: 9, kind: input, shape index: {}]
  %s10 = inlined_call_operand.hbm [shape: f32[2,1,128], index: 10, kind: input, shape index: {}]
  %s11 = inlined_call_operand.hbm [shape: f32[2,1,128], index: 11, kind: input, shape index: {}]
  %s12 = inlined_call_operand.hbm [shape: bf16[2,128,256], index: 12, kind: input, shape index: {}]
  %s13 = inlined_call_operand.vmem [shape: f32[2,1,256], index: 13, kind: input, shape index: {}]
  %s14 = inlined_call_operand.hbm [shape: bf16[2,256,128], index: 14, kind: input, shape index: {}]
  %s15 = inlined_call_operand.vmem [shape: f32[2,1,128], index: 15, kind: input, shape index: {}]
  %s16 = inlined_call_operand.vmem [shape: f32[2,1,128], index: 16, kind: input, shape index: {}]
  %s17 = inlined_call_operand.vmem [shape: f32[2,1,128], index: 17, kind: input, shape index: {}]
  %s18 = inlined_call_operand.hbm [shape: bf16[128,128], index: 18, kind: input, shape index: {}]
  %s19 = inlined_call_operand.vmem [shape: f32[1,128], index: 19, kind: input, shape index: {}]
  %s20 = inlined_call_operand.vmem [shape: f32[1,128], index: 20, kind: input, shape index: {}]
  %s21 = inlined_call_operand.vmem [shape: f32[1,128], index: 21, kind: input, shape index: {}]
  %s22 = inlined_call_operand.hbm [shape: bf16[2,16,128], index: 22, kind: output, shape index: {}]
  %s23 = sld [smem:[#allocation0]]
  $region185: #{tpu_custom_call.1} parent=0
    _
  %s25 = ssub.s32 1, %s23
  %s26 = scalar_select 0, %s25, %s23
  $region1: #{tpu_custom_call.1} parent=0
    #allocation4 [shape = 'u8[16384]{0}', space=vmem, size = 0x4000, scoped, tag = 'input window, operand 0, single buffered']
    #allocation5 [shape = 's32[2]{0}', space=sflag, size = 0x8, scoped, tag = 'scoped memory for tpu_custom_call.1']
    #allocation6 [shape = 's32[2]{0}', space=sflag, size = 0x8, scoped, tag = 'scoped memory for tpu_custom_call.1']
    #allocation7 [shape = 'u8[8192]{0}', space=vmem, size = 0x2000, scoped, tag = 'input window, operand 1, single buffered']
    #allocation8 [shape = 's32[1]{0}', space=sflag, size = 0x4, scoped, tag = 'scoped memory for tpu_custom_call.1']
    #allocation9 [shape = 'u8[16384]{0}', space=vmem, size = 0x4000, scoped, tag = 'input window, operand 2, single buffered']
    #allocation10 [shape = 'u8[512]{0}', space=vmem, size = 0x400, scoped, tag = 'input window, operand 3, single buffered']
    #allocation11 [shape = 's32[1]{0}', space=sflag, size = 0x4, scoped, tag = 'scoped memory for tpu_custom_call.1']
    #allocation12 [shape = 'u8[512]{0}', space=vmem, size = 0x400, scoped, tag = 'input window, operand 4, single buffered']
    #allocation13 [shape = 'u8[1024]{0}', space=vmem, size = 0x400, scoped, tag = 'input window, operand 5, single buffered']
    #allocation14 [shape = 's32[1]{0}', space=sflag, size = 0x4, scoped, tag = 'scoped memory for tpu_custom_call.1']
    #allocation15 [shape = 'u8[196608]{0}', space=vmem, size = 0x30000, scoped, tag = 'input window, operand 6']
    #allocation16 [shape = 'u8[65536]{0}', space=vmem, size = 0x10000, scoped, tag = 'input window, operand 8']
    #allocation17 [shape = 'u8[1024]{0}', space=vmem, size = 0x400, scoped, tag = 'input window, operand 9']
    #allocation18 [shape = 'u8[1024]{0}', space=vmem, size = 0x400, scoped, tag = 'input window, operand 10']
    #allocation19 [shape = 'u8[1024]{0}', space=vmem, size = 0x400, scoped, tag = 'input window, operand 11']
    #allocation20 [shape = 'u8[131072]{0}', space=vmem, size = 0x20000, scoped, tag = 'input window, operand 12']
    #allocation21 [shape = 'u8[131072]{0}', space=vmem, size = 0x20000, scoped, tag = 'input window, operand 14']
    #allocation22 [shape = 'u8[32768]{0}', space=vmem, size = 0x8000, scoped, tag = 'input window, operand 18, single buffered']
    #allocation23 [shape = 'u8[8192]{0}', space=vmem, size = 0x2000, scoped, tag = 'output window, operand 0, single buffered']
    %27 = vsyncpa [#allocation5], 0
    %28 = vsyncpa [#allocation8], 0
    %29 = vsyncpa [#allocation11], 0
    %30 = vsyncpa [#allocation14], 0
    %31 = vsyncpa [#allocation6], 0
    loop: start=0, step=1, limit=4
    $region2: #{tpu_custom_call.1} parent=1 // loop_pre_header
      _
    $region3: #{tpu_custom_call.1} parent=1 // loop_header
      %s33 = sphi 0, %s37
      %p34 = scmp.ge.s32.totalorder %s33, 4
      %s40 = sphi 0, %s52
      %s41 = sphi 0, %s48
      %s42 = sphi 0, %s40
      %s43 = sphi 0, %s41
      %s44 = sphi 0, %s42
      %s45 = sphi 0, %s43
      %s55 = sphi 0, %s57
      %s58 = sphi 0, %s55
      %s59 = sphi 0, %s58
      %s75 = sphi 0, %s59
      %s79 = sphi 0, %s79
      %s81 = sphi 0, %s79
      %s82 = sphi 0, %s81
      %s96 = sphi 0, %s82
      %s102 = sphi 0, %s104
      %s105 = sphi 0, %s102
      %s106 = sphi 0, %s105
      %s122 = sphi 0, %s106
      %s126 = sphi 0, %s126
      %s128 = sphi 0, %s126
      %s129 = sphi 0, %s128
      %s143 = sphi 0, %s129
      %s147 = sphi 0, %s147
      %s149 = sphi 0, %s147
      %s150 = sphi 0, %s149
      %s164 = sphi 0, %s150
      %s170 = sphi 0, %s172
      %s173 = sphi 0, %s170
      %s174 = sphi 0, %s173
      %s190 = sphi 0, %s174
      %s196 = sphi 0, %s198
      %s199 = sphi 0, %s196
      %s200 = sphi 0, %s199
      %s216 = sphi 0, %s200
      %s222 = sphi 0, %s224
      %s225 = sphi 0, %s222
      %s226 = sphi 0, %s225
      %s242 = sphi 0, %s226
      %s248 = sphi 0, %s250
      %s251 = sphi 0, %s248
      %s252 = sphi 0, %s251
      %s268 = sphi 0, %s252
      %s274 = sphi 0, %s276
      %s277 = sphi 0, %s274
      %s278 = sphi 0, %s277
      %s294 = sphi 0, %s278
      %s300 = sphi 0, %s302
      %s303 = sphi 0, %s300
      %s304 = sphi 0, %s303
      %s320 = sphi 0, %s304
      %s326 = sphi 0, %s328
      %s329 = sphi 0, %s326
      %s330 = sphi 0, %s329
      %s346 = sphi 0, %s330
      %s352 = sphi 0, %s354
      %s355 = sphi 0, %s352
      %s356 = sphi 0, %s355
      %s372 = sphi 0, %s356
      %s378 = sphi 0, %s380
      %s381 = sphi 0, %s378
      %s382 = sphi 0, %s381
      %s398 = sphi 0, %s382
      %s404 = sphi 0, %s406
      %s407 = sphi 0, %s404
      %s408 = sphi 0, %s407
      %s424 = sphi 0, %s408
      %s430 = sphi 0, %s432
      %s433 = sphi 0, %s430
      %s434 = sphi 0, %s433
      %s450 = sphi 0, %s434
      %s456 = sphi 0, %s458
      %s459 = sphi 0, %s456
      %s460 = sphi 0, %s459
      %s476 = sphi 0, %s460
      %s482 = sphi 0, %s484
      %s485 = sphi 0, %s482
      %s486 = sphi 0, %s485
      %s502 = sphi 0, %s486
      %s506 = sphi 0, %s506
      %s508 = sphi 0, %s506
      %s509 = sphi 0, %s508
      %s523 = sphi 0, %s509
      %s527 = sphi 0, %s527
      %s529 = sphi 0, %s527
      %s530 = sphi 0, %s529
      %s544 = sphi 0, %s530
      %s548 = sphi 0, %s548
      %s550 = sphi 0, %s548
      %s551 = sphi 0, %s550
      %s565 = sphi 0, %s551
      %s569 = sphi 0, %s569
      %s571 = sphi 0, %s569
      %s572 = sphi 0, %s571
      %s586 = sphi 0, %s572
      %s592 = sphi 0, %s594
      %s595 = sphi 0, %s592
      %s596 = sphi 0, %s595
      %s612 = sphi 0, %s596
    $region4: #{tpu_custom_call.1} parent=1 // loop_header_branch
      %36 = sbr.rel (%p34) target = $region8
    $region5: #{tpu_custom_call.1} parent=1 // loop_body
      %s38 = ssub.s32 %s33, 1
      %s39 = ssub.s32 %s33, 2
      %s46 = sadd.s32 1, %s41
      %p47 = scmp.ge.s32.totalorder %s46, 2
      %s48 = scalar_select %p47, 0, %s46
      %s49 = sadd.s32 1, %s40
      %s50 = scalar_select %p47, %s49, %s40
      %p51 = scmp.ge.s32.totalorder %s50, 1
      %s52 = scalar_select %p51, 0, %s50
      %s53 = ssub.s32 %s40, %s52
      %p54 = scmp.eq.s32.totalorder %s53, 0
      %s56 = sadd.s32 %s55, 1
      %s57 = scalar_select %p54, %s55, %s56
      %p60 = pneg %p54
      %p61 = scmp.eq.s32.totalorder %s33, 1
      %p62 = por %p60, %p61
      %p63 = scmp.ne.s32.totalorder %s55, %s58
      %p64 = scmp.eq.s32.totalorder %s33, 0
      %p65 = por %p63, %p64
      %p66 = scmp.ne.s32.totalorder %s55, %s58
      %p67 = scmp.eq.s32.totalorder %s38, 1
      %p68 = por %p66, %p67
      %p69 = scmp.ne.s32.totalorder %s58, %s59
      %p70 = scmp.eq.s32.totalorder %s38, 0
      %p71 = por %p69, %p70
      %p72 = scmp.ne.s32.totalorder %s58, %s59
      %p73 = scmp.eq.s32.totalorder %s39, 1
      %p74 = por %p72, %p73
      %p76 = scmp.ne.s32.totalorder %s59, %s75
      %p77 = scmp.eq.s32.totalorder %s39, 0
      %p78 = por %p76, %p77
      %s80 = sadd.s32 %s79, 1
      %p83 = scmp.eq.s32.totalorder %s33, 1
      %p84 = scmp.ne.s32.totalorder %s79, %s81
      %p85 = scmp.eq.s32.totalorder %s33, 0
      %p86 = por %p84, %p85
      %p87 = scmp.ne.s32.totalorder %s79, %s81
      %p88 = scmp.eq.s32.totalorder %s38, 1
      %p89 = por %p87, %p88
      %p90 = scmp.ne.s32.totalorder %s81, %s82
      %p91 = scmp.eq.s32.totalorder %s38, 0
      %p92 = por %p90, %p91
      %p93 = scmp.ne.s32.totalorder %s81, %s82
      %p94 = scmp.eq.s32.totalorder %s39, 1
      %p95 = por %p93, %p94
      %p97 = scmp.ne.s32.totalorder %s82, %s96
      %p98 = scmp.eq.s32.totalorder %s39, 0
      %p99 = por %p97, %p98
      %s100 = ssub.s32 %s40, %s52
      %p101 = scmp.eq.s32.totalorder %s100, 0
      %s103 = sadd.s32 %s102, 1
      %s104 = scalar_select %p101, %s102, %s103
      %p107 = pneg %p101
      %p108 = scmp.eq.s32.totalorder %s33, 1
      %p109 = por %p107, %p108
      %p110 = scmp.ne.s32.totalorder %s102, %s105
      %p111 = scmp.eq.s32.totalorder %s33, 0
      %p112 = por %p110, %p111
      %p113 = scmp.ne.s32.totalorder %s102, %s105
      %p114 = scmp.eq.s32.totalorder %s38, 1
      %p115 = por %p113, %p114
      %p116 = scmp.ne.s32.totalorder %s105, %s106
      %p117 = scmp.eq.s32.totalorder %s38, 0
      %p118 = por %p116, %p117
      %p119 = scmp.ne.s32.totalorder %s105, %s106
      %p120 = scmp.eq.s32.totalorder %s39, 1
      %p121 = por %p119, %p120
      %p123 = scmp.ne.s32.totalorder %s106, %s122
      %p124 = scmp.eq.s32.totalorder %s39, 0
      %p125 = por %p123, %p124
      %s127 = sadd.s32 %s126, 1
      %p130 = scmp.eq.s32.totalorder %s33, 1
      %p131 = scmp.ne.s32.totalorder %s126, %s128
      %p132 = scmp.eq.s32.totalorder %s33, 0
      %p133 = por %p131, %p132
      %p134 = scmp.ne.s32.totalorder %s126, %s128
      %p135 = scmp.eq.s32.totalorder %s38, 1
      %p136 = por %p134, %p135
      %p137 = scmp.ne.s32.totalorder %s128, %s129
      %p138 = scmp.eq.s32.totalorder %s38, 0
      %p139 = por %p137, %p138
      %p140 = scmp.ne.s32.totalorder %s128, %s129
      %p141 = scmp.eq.s32.totalorder %s39, 1
      %p142 = por %p140, %p141
      %p144 = scmp.ne.s32.totalorder %s129, %s143
      %p145 = scmp.eq.s32.totalorder %s39, 0
      %p146 = por %p144, %p145
      %s148 = sadd.s32 %s147, 1
      %p151 = scmp.eq.s32.totalorder %s33, 1
      %p152 = scmp.ne.s32.totalorder %s147, %s149
      %p153 = scmp.eq.s32.totalorder %s33, 0
      %p154 = por %p152, %p153
      %p155 = scmp.ne.s32.totalorder %s147, %s149
      %p156 = scmp.eq.s32.totalorder %s38, 1
      %p157 = por %p155, %p156
      %p158 = scmp.ne.s32.totalorder %s149, %s150
      %p159 = scmp.eq.s32.totalorder %s38, 0
      %p160 = por %p158, %p159
      %p161 = scmp.ne.s32.totalorder %s149, %s150
      %p162 = scmp.eq.s32.totalorder %s39, 1
      %p163 = por %p161, %p162
      %p165 = scmp.ne.s32.totalorder %s150, %s164
      %p166 = scmp.eq.s32.totalorder %s39, 0
      %p167 = por %p165, %p166
      %s168 = ssub.s32 %s40, %s52
      %p169 = scmp.eq.s32.totalorder %s168, 0
      %s171 = sadd.s32 %s170, 1
      %s172 = scalar_select %p169, %s170, %s171
      %p175 = pneg %p169
      %p176 = scmp.eq.s32.totalorder %s33, 1
      %p177 = por %p175, %p176
      %p178 = scmp.ne.s32.totalorder %s170, %s173
      %p179 = scmp.eq.s32.totalorder %s33, 0
      %p180 = por %p178, %p179
      %p181 = scmp.ne.s32.totalorder %s170, %s173
      %p182 = scmp.eq.s32.totalorder %s38, 1
      %p183 = por %p181, %p182
      %p184 = scmp.ne.s32.totalorder %s173, %s174
      %p185 = scmp.eq.s32.totalorder %s38, 0
      %p186 = por %p184, %p185
      %p187 = scmp.ne.s32.totalorder %s173, %s174
      %p188 = scmp.eq.s32.totalorder %s39, 1
      %p189 = por %p187, %p188
      %p191 = scmp.ne.s32.totalorder %s174, %s190
      %p192 = scmp.eq.s32.totalorder %s39, 0
      %p193 = por %p191, %p192
      %s194 = ssub.s32 %s41, %s48
      %p195 = scmp.eq.s32.totalorder %s194, 0
      %s197 = sadd.s32 %s196, 1
      %s198 = scalar_select %p195, %s196, %s197
      %p201 = pneg %p195
      %p202 = scmp.eq.s32.totalorder %s33, 1
      %p203 = por %p201, %p202
      %p204 = scmp.ne.s32.totalorder %s196, %s199
      %p205 = scmp.eq.s32.totalorder %s33, 0
      %p206 = por %p204, %p205
      %p207 = scmp.ne.s32.totalorder %s196, %s199
      %p208 = scmp.eq.s32.totalorder %s38, 1
      %p209 = por %p207, %p208
      %p210 = scmp.ne.s32.totalorder %s199, %s200
      %p211 = scmp.eq.s32.totalorder %s38, 0
      %p212 = por %p210, %p211
      %p213 = scmp.ne.s32.totalorder %s199, %s200
      %p214 = scmp.eq.s32.totalorder %s39, 1
      %p215 = por %p213, %p214
      %p217 = scmp.ne.s32.totalorder %s200, %s216
      %p218 = scmp.eq.s32.totalorder %s39, 0
      %p219 = por %p217, %p218
      %s220 = ssub.s32 %s41, %s48
      %p221 = scmp.eq.s32.totalorder %s220, 0
      %s223 = sadd.s32 %s222, 1
      %s224 = scalar_select %p221, %s222, %s223
      %p227 = pneg %p221
      %p228 = scmp.eq.s32.totalorder %s33, 1
      %p229 = por %p227, %p228
      %p230 = scmp.ne.s32.totalorder %s222, %s225
      %p231 = scmp.eq.s32.totalorder %s33, 0
      %p232 = por %p230, %p231
      %p233 = scmp.ne.s32.totalorder %s222, %s225
      %p234 = scmp.eq.s32.totalorder %s38, 1
      %p235 = por %p233, %p234
      %p236 = scmp.ne.s32.totalorder %s225, %s226
      %p237 = scmp.eq.s32.totalorder %s38, 0
      %p238 = por %p236, %p237
      %p239 = scmp.ne.s32.totalorder %s225, %s226
      %p240 = scmp.eq.s32.totalorder %s39, 1
      %p241 = por %p239, %p240
      %p243 = scmp.ne.s32.totalorder %s226, %s242
      %p244 = scmp.eq.s32.totalorder %s39, 0
      %p245 = por %p243, %p244
      %s246 = ssub.s32 %s41, %s48
      %p247 = scmp.eq.s32.totalorder %s246, 0
      %s249 = sadd.s32 %s248, 1
      %s250 = scalar_select %p247, %s248, %s249
      %p253 = pneg %p247
      %p254 = scmp.eq.s32.totalorder %s33, 1
      %p255 = por %p253, %p254
      %p256 = scmp.ne.s32.totalorder %s248, %s251
      %p257 = scmp.eq.s32.totalorder %s33, 0
      %p258 = por %p256, %p257
      %p259 = scmp.ne.s32.totalorder %s248, %s251
      %p260 = scmp.eq.s32.totalorder %s38, 1
      %p261 = por %p259, %p260
      %p262 = scmp.ne.s32.totalorder %s251, %s252
      %p263 = scmp.eq.s32.totalorder %s38, 0
      %p264 = por %p262, %p263
      %p265 = scmp.ne.s32.totalorder %s251, %s252
      %p266 = scmp.eq.s32.totalorder %s39, 1
      %p267 = por %p265, %p266
      %p269 = scmp.ne.s32.totalorder %s252, %s268
      %p270 = scmp.eq.s32.totalorder %s39, 0
      %p271 = por %p269, %p270
      %s272 = ssub.s32 %s41, %s48
      %p273 = scmp.eq.s32.totalorder %s272, 0
      %s275 = sadd.s32 %s274, 1
      %s276 = scalar_select %p273, %s274, %s275
      %p279 = pneg %p273
      %p280 = scmp.eq.s32.totalorder %s33, 1
      %p281 = por %p279, %p280
      %p282 = scmp.ne.s32.totalorder %s274, %s277
      %p283 = scmp.eq.s32.totalorder %s33, 0
      %p284 = por %p282, %p283
      %p285 = scmp.ne.s32.totalorder %s274, %s277
      %p286 = scmp.eq.s32.totalorder %s38, 1
      %p287 = por %p285, %p286
      %p288 = scmp.ne.s32.totalorder %s277, %s278
      %p289 = scmp.eq.s32.totalorder %s38, 0
      %p290 = por %p288, %p289
      %p291 = scmp.ne.s32.totalorder %s277, %s278
      %p292 = scmp.eq.s32.totalorder %s39, 1
      %p293 = por %p291, %p292
      %p295 = scmp.ne.s32.totalorder %s278, %s294
      %p296 = scmp.eq.s32.totalorder %s39, 0
      %p297 = por %p295, %p296
      %s298 = ssub.s32 %s41, %s48
      %p299 = scmp.eq.s32.totalorder %s298, 0
      %s301 = sadd.s32 %s300, 1
      %s302 = scalar_select %p299, %s300, %s301
      %p305 = pneg %p299
      %p306 = scmp.eq.s32.totalorder %s33, 1
      %p307 = por %p305, %p306
      %p308 = scmp.ne.s32.totalorder %s300, %s303
      %p309 = scmp.eq.s32.totalorder %s33, 0
      %p310 = por %p308, %p309
      %p311 = scmp.ne.s32.totalorder %s300, %s303
      %p312 = scmp.eq.s32.totalorder %s38, 1
      %p313 = por %p311, %p312
      %p314 = scmp.ne.s32.totalorder %s303, %s304
      %p315 = scmp.eq.s32.totalorder %s38, 0
      %p316 = por %p314, %p315
      %p317 = scmp.ne.s32.totalorder %s303, %s304
      %p318 = scmp.eq.s32.totalorder %s39, 1
      %p319 = por %p317, %p318
      %p321 = scmp.ne.s32.totalorder %s304, %s320
      %p322 = scmp.eq.s32.totalorder %s39, 0
      %p323 = por %p321, %p322
      %s324 = ssub.s32 %s41, %s48
      %p325 = scmp.eq.s32.totalorder %s324, 0
      %s327 = sadd.s32 %s326, 1
      %s328 = scalar_select %p325, %s326, %s327
      %p331 = pneg %p325
      %p332 = scmp.eq.s32.totalorder %s33, 1
      %p333 = por %p331, %p332
      %p334 = scmp.ne.s32.totalorder %s326, %s329
      %p335 = scmp.eq.s32.totalorder %s33, 0
      %p336 = por %p334, %p335
      %p337 = scmp.ne.s32.totalorder %s326, %s329
      %p338 = scmp.eq.s32.totalorder %s38, 1
      %p339 = por %p337, %p338
      %p340 = scmp.ne.s32.totalorder %s329, %s330
      %p341 = scmp.eq.s32.totalorder %s38, 0
      %p342 = por %p340, %p341
      %p343 = scmp.ne.s32.totalorder %s329, %s330
      %p344 = scmp.eq.s32.totalorder %s39, 1
      %p345 = por %p343, %p344
      %p347 = scmp.ne.s32.totalorder %s330, %s346
      %p348 = scmp.eq.s32.totalorder %s39, 0
      %p349 = por %p347, %p348
      %s350 = ssub.s32 %s41, %s48
      %p351 = scmp.eq.s32.totalorder %s350, 0
      %s353 = sadd.s32 %s352, 1
      %s354 = scalar_select %p351, %s352, %s353
      %p357 = pneg %p351
      %p358 = scmp.eq.s32.totalorder %s33, 1
      %p359 = por %p357, %p358
      %p360 = scmp.ne.s32.totalorder %s352, %s355
      %p361 = scmp.eq.s32.totalorder %s33, 0
      %p362 = por %p360, %p361
      %p363 = scmp.ne.s32.totalorder %s352, %s355
      %p364 = scmp.eq.s32.totalorder %s38, 1
      %p365 = por %p363, %p364
      %p366 = scmp.ne.s32.totalorder %s355, %s356
      %p367 = scmp.eq.s32.totalorder %s38, 0
      %p368 = por %p366, %p367
      %p369 = scmp.ne.s32.totalorder %s355, %s356
      %p370 = scmp.eq.s32.totalorder %s39, 1
      %p371 = por %p369, %p370
      %p373 = scmp.ne.s32.totalorder %s356, %s372
      %p374 = scmp.eq.s32.totalorder %s39, 0
      %p375 = por %p373, %p374
      %s376 = ssub.s32 %s41, %s48
      %p377 = scmp.eq.s32.totalorder %s376, 0
      %s379 = sadd.s32 %s378, 1
      %s380 = scalar_select %p377, %s378, %s379
      %p383 = pneg %p377
      %p384 = scmp.eq.s32.totalorder %s33, 1
      %p385 = por %p383, %p384
      %p386 = scmp.ne.s32.totalorder %s378, %s381
      %p387 = scmp.eq.s32.totalorder %s33, 0
      %p388 = por %p386, %p387
      %p389 = scmp.ne.s32.totalorder %s378, %s381
      %p390 = scmp.eq.s32.totalorder %s38, 1
      %p391 = por %p389, %p390
      %p392 = scmp.ne.s32.totalorder %s381, %s382
      %p393 = scmp.eq.s32.totalorder %s38, 0
      %p394 = por %p392, %p393
      %p395 = scmp.ne.s32.totalorder %s381, %s382
      %p396 = scmp.eq.s32.totalorder %s39, 1
      %p397 = por %p395, %p396
      %p399 = scmp.ne.s32.totalorder %s382, %s398
      %p400 = scmp.eq.s32.totalorder %s39, 0
      %p401 = por %p399, %p400
      %s402 = ssub.s32 %s41, %s48
      %p403 = scmp.eq.s32.totalorder %s402, 0
      %s405 = sadd.s32 %s404, 1
      %s406 = scalar_select %p403, %s404, %s405
      %p409 = pneg %p403
      %p410 = scmp.eq.s32.totalorder %s33, 1
      %p411 = por %p409, %p410
      %p412 = scmp.ne.s32.totalorder %s404, %s407
      %p413 = scmp.eq.s32.totalorder %s33, 0
      %p414 = por %p412, %p413
      %p415 = scmp.ne.s32.totalorder %s404, %s407
      %p416 = scmp.eq.s32.totalorder %s38, 1
      %p417 = por %p415, %p416
      %p418 = scmp.ne.s32.totalorder %s407, %s408
      %p419 = scmp.eq.s32.totalorder %s38, 0
      %p420 = por %p418, %p419
      %p421 = scmp.ne.s32.totalorder %s407, %s408
      %p422 = scmp.eq.s32.totalorder %s39, 1
      %p423 = por %p421, %p422
      %p425 = scmp.ne.s32.totalorder %s408, %s424
      %p426 = scmp.eq.s32.totalorder %s39, 0
      %p427 = por %p425, %p426
      %s428 = ssub.s32 %s41, %s48
      %p429 = scmp.eq.s32.totalorder %s428, 0
      %s431 = sadd.s32 %s430, 1
      %s432 = scalar_select %p429, %s430, %s431
      %p435 = pneg %p429
      %p436 = scmp.eq.s32.totalorder %s33, 1
      %p437 = por %p435, %p436
      %p438 = scmp.ne.s32.totalorder %s430, %s433
      %p439 = scmp.eq.s32.totalorder %s33, 0
      %p440 = por %p438, %p439
      %p441 = scmp.ne.s32.totalorder %s430, %s433
      %p442 = scmp.eq.s32.totalorder %s38, 1
      %p443 = por %p441, %p442
      %p444 = scmp.ne.s32.totalorder %s433, %s434
      %p445 = scmp.eq.s32.totalorder %s38, 0
      %p446 = por %p444, %p445
      %p447 = scmp.ne.s32.totalorder %s433, %s434
      %p448 = scmp.eq.s32.totalorder %s39, 1
      %p449 = por %p447, %p448
      %p451 = scmp.ne.s32.totalorder %s434, %s450
      %p452 = scmp.eq.s32.totalorder %s39, 0
      %p453 = por %p451, %p452
      %s454 = ssub.s32 %s41, %s48
      %p455 = scmp.eq.s32.totalorder %s454, 0
      %s457 = sadd.s32 %s456, 1
      %s458 = scalar_select %p455, %s456, %s457
      %p461 = pneg %p455
      %p462 = scmp.eq.s32.totalorder %s33, 1
      %p463 = por %p461, %p462
      %p464 = scmp.ne.s32.totalorder %s456, %s459
      %p465 = scmp.eq.s32.totalorder %s33, 0
      %p466 = por %p464, %p465
      %p467 = scmp.ne.s32.totalorder %s456, %s459
      %p468 = scmp.eq.s32.totalorder %s38, 1
      %p469 = por %p467, %p468
      %p470 = scmp.ne.s32.totalorder %s459, %s460
      %p471 = scmp.eq.s32.totalorder %s38, 0
      %p472 = por %p470, %p471
      %p473 = scmp.ne.s32.totalorder %s459, %s460
      %p474 = scmp.eq.s32.totalorder %s39, 1
      %p475 = por %p473, %p474
      %p477 = scmp.ne.s32.totalorder %s460, %s476
      %p478 = scmp.eq.s32.totalorder %s39, 0
      %p479 = por %p477, %p478
      %s480 = ssub.s32 %s41, %s48
      %p481 = scmp.eq.s32.totalorder %s480, 0
      %s483 = sadd.s32 %s482, 1
      %s484 = scalar_select %p481, %s482, %s483
      %p487 = pneg %p481
      %p488 = scmp.eq.s32.totalorder %s33, 1
      %p489 = por %p487, %p488
      %p490 = scmp.ne.s32.totalorder %s482, %s485
      %p491 = scmp.eq.s32.totalorder %s33, 0
      %p492 = por %p490, %p491
      %p493 = scmp.ne.s32.totalorder %s482, %s485
      %p494 = scmp.eq.s32.totalorder %s38, 1
      %p495 = por %p493, %p494
      %p496 = scmp.ne.s32.totalorder %s485, %s486
      %p497 = scmp.eq.s32.totalorder %s38, 0
      %p498 = por %p496, %p497
      %p499 = scmp.ne.s32.totalorder %s485, %s486
      %p500 = scmp.eq.s32.totalorder %s39, 1
      %p501 = por %p499, %p500
      %p503 = scmp.ne.s32.totalorder %s486, %s502
      %p504 = scmp.eq.s32.totalorder %s39, 0
      %p505 = por %p503, %p504
      %s507 = sadd.s32 %s506, 1
      %p510 = scmp.eq.s32.totalorder %s33, 1
      %p511 = scmp.ne.s32.totalorder %s506, %s508
      %p512 = scmp.eq.s32.totalorder %s33, 0
      %p513 = por %p511, %p512
      %p514 = scmp.ne.s32.totalorder %s506, %s508
      %p515 = scmp.eq.s32.totalorder %s38, 1
      %p516 = por %p514, %p515
      %p517 = scmp.ne.s32.totalorder %s508, %s509
      %p518 = scmp.eq.s32.totalorder %s38, 0
      %p519 = por %p517, %p518
      %p520 = scmp.ne.s32.totalorder %s508, %s509
      %p521 = scmp.eq.s32.totalorder %s39, 1
      %p522 = por %p520, %p521
      %p524 = scmp.ne.s32.totalorder %s509, %s523
      %p525 = scmp.eq.s32.totalorder %s39, 0
      %p526 = por %p524, %p525
      %s528 = sadd.s32 %s527, 1
      %p531 = scmp.eq.s32.totalorder %s33, 1
      %p532 = scmp.ne.s32.totalorder %s527, %s529
      %p533 = scmp.eq.s32.totalorder %s33, 0
      %p534 = por %p532, %p533
      %p535 = scmp.ne.s32.totalorder %s527, %s529
      %p536 = scmp.eq.s32.totalorder %s38, 1
      %p537 = por %p535, %p536
      %p538 = scmp.ne.s32.totalorder %s529, %s530
      %p539 = scmp.eq.s32.totalorder %s38, 0
      %p540 = por %p538, %p539
      %p541 = scmp.ne.s32.totalorder %s529, %s530
      %p542 = scmp.eq.s32.totalorder %s39, 1
      %p543 = por %p541, %p542
      %p545 = scmp.ne.s32.totalorder %s530, %s544
      %p546 = scmp.eq.s32.totalorder %s39, 0
      %p547 = por %p545, %p546
      %s549 = sadd.s32 %s548, 1
      %p552 = scmp.eq.s32.totalorder %s33, 1
      %p553 = scmp.ne.s32.totalorder %s548, %s550
      %p554 = scmp.eq.s32.totalorder %s33, 0
      %p555 = por %p553, %p554
      %p556 = scmp.ne.s32.totalorder %s548, %s550
      %p557 = scmp.eq.s32.totalorder %s38, 1
      %p558 = por %p556, %p557
      %p559 = scmp.ne.s32.totalorder %s550, %s551
      %p560 = scmp.eq.s32.totalorder %s38, 0
      %p561 = por %p559, %p560
      %p562 = scmp.ne.s32.totalorder %s550, %s551
      %p563 = scmp.eq.s32.totalorder %s39, 1
      %p564 = por %p562, %p563
      %p566 = scmp.ne.s32.totalorder %s551, %s565
      %p567 = scmp.eq.s32.totalorder %s39, 0
      %p568 = por %p566, %p567
      %s570 = sadd.s32 %s569, 1
      %p573 = scmp.eq.s32.totalorder %s33, 1
      %p574 = scmp.ne.s32.totalorder %s569, %s571
      %p575 = scmp.eq.s32.totalorder %s33, 0
      %p576 = por %p574, %p575
      %p577 = scmp.ne.s32.totalorder %s569, %s571
      %p578 = scmp.eq.s32.totalorder %s38, 1
      %p579 = por %p577, %p578
      %p580 = scmp.ne.s32.totalorder %s571, %s572
      %p581 = scmp.eq.s32.totalorder %s38, 0
      %p582 = por %p580, %p581
      %p583 = scmp.ne.s32.totalorder %s571, %s572
      %p584 = scmp.eq.s32.totalorder %s39, 1
      %p585 = por %p583, %p584
      %p587 = scmp.ne.s32.totalorder %s572, %s586
      %p588 = scmp.eq.s32.totalorder %s39, 0
      %p589 = por %p587, %p588
      %s590 = ssub.s32 %s40, %s52
      %p591 = scmp.eq.s32.totalorder %s590, 0
      %s593 = sadd.s32 %s592, 1
      %s594 = scalar_select %p591, %s592, %s593
      %p597 = pneg %p591
      %p598 = scmp.eq.s32.totalorder %s33, 1
      %p599 = por %p597, %p598
      %p600 = scmp.ne.s32.totalorder %s592, %s595
      %p601 = scmp.eq.s32.totalorder %s33, 0
      %p602 = por %p600, %p601
      %p603 = scmp.ne.s32.totalorder %s592, %s595
      %p604 = scmp.eq.s32.totalorder %s38, 1
      %p605 = por %p603, %p604
      %p606 = scmp.ne.s32.totalorder %s595, %s596
      %p607 = scmp.eq.s32.totalorder %s38, 0
      %p608 = por %p606, %p607
      %p609 = scmp.ne.s32.totalorder %s595, %s596
      %p610 = scmp.eq.s32.totalorder %s39, 1
      %p611 = por %p609, %p610
      %p613 = scmp.ne.s32.totalorder %s596, %s612
      %p614 = scmp.eq.s32.totalorder %s39, 0
      %p615 = por %p613, %p614
      %p616 = scmp.le.s32.totalorder 1, %s33
      %p617 = scmp.lt.s32.totalorder %s33, 3
      %p618 = pnand %p616, %p617
      %p619 = pneg %p618
      // Predicated region
      $region9: #{tpu_custom_call.1} parent=5 // pred_check
        _
      $region10: #{tpu_custom_call.1} parent=5 // pred_check_branch
        %621 = sbr.rel (%p618) target = $region12
      $region11: #{tpu_custom_call.1} parent=5 // pred_region
        %s622 = ssub.s32 %s33, 1
        // Predicated region
        $region13: #{tpu_custom_call.1} parent=11 // pred_check
          %p623 = pneg %p71
        $region14: #{tpu_custom_call.1} parent=11 // pred_check_branch
          %625 = sbr.rel (%p623) target = $region16
        $region15: #{tpu_custom_call.1} parent=11 // pred_region
          %s626 = smul.u32 2, %s42
          %628 = vsyncadd [#allocation5], 0
          %s629 = smul.addr %s626, 2
          %s630 = smul.addr %s629, 8
          %s631 = scalar_lea.hbm %s0, %s630
          %s632 = sshll.u32 %s631, 4
          %s633 = int_to_ptr.hbm [resolvable:$true] %s632
          %s634 = sshll.u32 [#allocation4], 4
          %s635 = int_to_ptr.vmem [resolvable:$true] %s634
          %640 = dma.hbm_to_vmem [thread:$0]  %s633, 512, %s635, [#allocation5], 128, 128, 8
        $region16: #{tpu_custom_call.1} parent=11 // pred_fallthru
          _
        // Predicated region
        $region17: #{tpu_custom_call.1} parent=11 // pred_check
          %p641 = pneg %p92
        $region18: #{tpu_custom_call.1} parent=11 // pred_check_branch
          %643 = sbr.rel (%p641) target = $region20
        $region19: #{tpu_custom_call.1} parent=11 // pred_region
          %645 = vsyncadd [#allocation8], 0
          %s646 = sshll.u32 %s1, 4
          %s647 = int_to_ptr.hbm [resolvable:$true] %s646
          %s648 = sshll.u32 [#allocation7], 4
          %s649 = int_to_ptr.vmem [resolvable:$true] %s648
          %654 = dma.hbm_to_vmem [thread:$0]  %s647, 256, %s649, [#allocation8], 128, 128, 8
        $region20: #{tpu_custom_call.1} parent=11 // pred_fallthru
          _
        // Predicated region
        $region21: #{tpu_custom_call.1} parent=11 // pred_check
          %p655 = pneg %p118
        $region22: #{tpu_custom_call.1} parent=11 // pred_check_branch
          %657 = sbr.rel (%p655) target = $region24
        $region23: #{tpu_custom_call.1} parent=11 // pred_region
          %s658 = smul.u32 2, %s42
          %660 = vsyncadd [#allocation8], 0
          %s661 = smul.addr %s658, 2
          %s662 = smul.addr %s661, 8
          %s663 = scalar_lea.hbm %s2, %s662
          %s664 = sshll.u32 %s663, 4
          %s665 = int_to_ptr.hbm [resolvable:$true] %s664
          %s666 = sshll.u32 [#allocation9], 4
          %s667 = int_to_ptr.vmem [resolvable:$true] %s666
          %672 = dma.hbm_to_vmem [thread:$0]  %s665, 512, %s667, [#allocation8], 128, 128, 8
        $region24: #{tpu_custom_call.1} parent=11 // pred_fallthru
          _
        // Predicated region
        $region25: #{tpu_custom_call.1} parent=11 // pred_check
          %p673 = pneg %p139
        $region26: #{tpu_custom_call.1} parent=11 // pred_check_branch
          %675 = sbr.rel (%p673) target = $region28
        $region27: #{tpu_custom_call.1} parent=11 // pred_region
          %677 = vsyncadd [#allocation11], 0
          %s679 = sshll.u32 %s3, 4
          %s680 = int_to_ptr.hbm [resolvable:$true] %s679
          %s681 = sshll.u32 [#allocation10], 4
          %s682 = int_to_ptr.vmem [resolvable:$true] %s681
          %684 = dma.hbm_to_vmem [thread:$0]  %s680, 16, %s682, [#allocation11]
        $region28: #{tpu_custom_call.1} parent=11 // pred_fallthru
          _
        // Predicated region
        $region29: #{tpu_custom_call.1} parent=11 // pred_check
          %p685 = pneg %p160
        $region30: #{tpu_custom_call.1} parent=11 // pred_check_branch
          %687 = sbr.rel (%p685) target = $region32
        $region31: #{tpu_custom_call.1} parent=11 // pred_region
          %689 = vsyncadd [#allocation11], 0
          %s691 = sshll.u32 %s4, 4
          %s692 = int_to_ptr.hbm [resolvable:$true] %s691
          %s693 = sshll.u32 [#allocation12], 4
          %s694 = int_to_ptr.vmem [resolvable:$true] %s693
          %696 = dma.hbm_to_vmem [thread:$0]  %s692, 16, %s694, [#allocation11]
        $region32: #{tpu_custom_call.1} parent=11 // pred_fallthru
          _
        // Predicated region
        $region33: #{tpu_custom_call.1} parent=11 // pred_check
          %p697 = pneg %p186
        $region34: #{tpu_custom_call.1} parent=11 // pred_check_branch
          %699 = sbr.rel (%p697) target = $region36
        $region35: #{tpu_custom_call.1} parent=11 // pred_region
          %s700 = smul.u32 2, %s42
          %702 = vsyncadd [#allocation14], 0
          %s703 = scalar_lea.hbm %s5, %s700
          %s704 = sshll.u32 %s703, 4
          %s705 = int_to_ptr.hbm [resolvable:$true] %s704
          %s706 = sshll.u32 [#allocation13], 4
          %s707 = int_to_ptr.vmem [resolvable:$true] %s706
          %712 = dma.hbm_to_vmem [thread:$0]  %s705, 32, %s707, [#allocation14], 16, 16, 1
        $region36: #{tpu_custom_call.1} parent=11 // pred_fallthru
          _
        // Predicated region
        $region37: #{tpu_custom_call.1} parent=11 // pred_check
          %p713 = pneg %p519
        $region38: #{tpu_custom_call.1} parent=11 // pred_check_branch
          %715 = sbr.rel (%p713) target = $region40
        $region39: #{tpu_custom_call.1} parent=11 // pred_region
          %717 = vsyncadd [#allocation8], 0
          %s718 = sshll.u32 %s18, 4
          %s719 = int_to_ptr.hbm [resolvable:$true] %s718
          %s720 = sshll.u32 [#allocation22], 4
          %s721 = int_to_ptr.vmem [resolvable:$true] %s720
          %726 = dma.hbm_to_vmem [thread:$0]  %s719, 1024, %s721, [#allocation8], 64, 64, 4
        $region40: #{tpu_custom_call.1} parent=11 // pred_fallthru
          _
        // Predicated region
        $region41: #{tpu_custom_call.1} parent=11 // pred_check
          %p727 = pneg %p540
        $region42: #{tpu_custom_call.1} parent=11 // pred_check_branch
          %729 = sbr.rel (%p727) target = $region44
        $region43: #{tpu_custom_call.1} parent=11 // pred_region
          _
        $region44: #{tpu_custom_call.1} parent=11 // pred_fallthru
          _
        // Predicated region
        $region45: #{tpu_custom_call.1} parent=11 // pred_check
          %p730 = pneg %p561
        $region46: #{tpu_custom_call.1} parent=11 // pred_check_branch
          %732 = sbr.rel (%p730) target = $region48
        $region47: #{tpu_custom_call.1} parent=11 // pred_region
          _
        $region48: #{tpu_custom_call.1} parent=11 // pred_fallthru
          _
        // Predicated region
        $region49: #{tpu_custom_call.1} parent=11 // pred_check
          %p733 = pneg %p582
        $region50: #{tpu_custom_call.1} parent=11 // pred_check_branch
          %735 = sbr.rel (%p733) target = $region52
        $region51: #{tpu_custom_call.1} parent=11 // pred_region
          _
        $region52: #{tpu_custom_call.1} parent=11 // pred_fallthru
          _
      $region12: #{tpu_custom_call.1} parent=5 // pred_fallthru
        _
      %p736 = scmp.lt.s32.totalorder %s33, 2
      // Predicated region
      $region53: #{tpu_custom_call.1} parent=5 // pred_check
        %p737 = pneg %p736
      $region54: #{tpu_custom_call.1} parent=5 // pred_check_branch
        %739 = sbr.rel (%p737) target = $region56
      $region55: #{tpu_custom_call.1} parent=5 // pred_region
        // Predicated region
        $region57: #{tpu_custom_call.1} parent=55 // pred_check
          %p740 = pneg %p206
        $region58: #{tpu_custom_call.1} parent=55 // pred_check_branch
          %742 = sbr.rel (%p740) target = $region60
        $region59: #{tpu_custom_call.1} parent=55 // pred_region
          %s743 = sand.u32 %s33, 1
          %s744 = scalar_lea.sflag [#allocation5], %s743
          %s745 = sand.u32 %s196, 1
          %s746 = smul.addr %s745, 192
          %s747 = scalar_lea.vmem [#allocation15], %s746
          %749 = vsyncadd %s744, 0
          %s750 = smul.addr %s41, 48
          %s751 = smul.addr %s750, 4
          %s752 = scalar_lea.hbm %s6, %s751
          %s753 = sshll.u32 %s752, 4
          %s754 = int_to_ptr.hbm [resolvable:$true] %s753
          %s755 = sshll.u32 %s747, 4
          %s756 = int_to_ptr.vmem [resolvable:$true] %s755
          %761 = dma.hbm_to_vmem [thread:$0]  %s754, 3072, %s756, %s744, 192, 192, 12
        $region60: #{tpu_custom_call.1} parent=55 // pred_fallthru
          _
        // Predicated region
        $region61: #{tpu_custom_call.1} parent=55 // pred_check
          %p762 = pneg %p232
        $region62: #{tpu_custom_call.1} parent=55 // pred_check_branch
          %764 = sbr.rel (%p762) target = $region64
        $region63: #{tpu_custom_call.1} parent=55 // pred_region
          %p765 = scmp.lt.s32.totalorder %s41, 1
          %s766 = scalar_select %p765, %s41, 1
          %s767 = smul.addr %s766, 3
          %s768 = scalar_lea.vmem %s7, %s767
        $region64: #{tpu_custom_call.1} parent=55 // pred_fallthru
          _
        // Predicated region
        $region65: #{tpu_custom_call.1} parent=55 // pred_check
          %p769 = pneg %p258
        $region66: #{tpu_custom_call.1} parent=55 // pred_check_branch
          %771 = sbr.rel (%p769) target = $region68
        $region67: #{tpu_custom_call.1} parent=55 // pred_region
          %s772 = sand.u32 %s33, 1
          %s773 = scalar_lea.sflag [#allocation5], %s772
          %s774 = sand.u32 %s248, 1
          %s775 = smul.addr %s774, 64
          %s776 = scalar_lea.vmem [#allocation16], %s775
          %778 = vsyncadd %s773, 0
          %s779 = smul.addr %s41, 16
          %s780 = smul.addr %s779, 4
          %s781 = scalar_lea.hbm %s8, %s780
          %s782 = sshll.u32 %s781, 4
          %s783 = int_to_ptr.hbm [resolvable:$true] %s782
          %s784 = sshll.u32 %s776, 4
          %s785 = int_to_ptr.vmem [resolvable:$true] %s784
          %790 = dma.hbm_to_vmem [thread:$0]  %s783, 1024, %s785, %s773, 64, 64, 4
        $region68: #{tpu_custom_call.1} parent=55 // pred_fallthru
          _
        // Predicated region
        $region69: #{tpu_custom_call.1} parent=55 // pred_check
          %p791 = pneg %p284
        $region70: #{tpu_custom_call.1} parent=55 // pred_check_branch
          %793 = sbr.rel (%p791) target = $region72
        $region71: #{tpu_custom_call.1} parent=55 // pred_region
          %s794 = sand.u32 %s33, 1
          %s795 = scalar_lea.sflag [#allocation5], %s794
          %s796 = sand.u32 %s274, 1
          %s797 = scalar_lea.vmem [#allocation17], %s796
          %799 = vsyncadd %s795, 0
          %s800 = scalar_lea.hbm %s9, %s41
          %s802 = sshll.u32 %s800, 4
          %s803 = int_to_ptr.hbm [resolvable:$true] %s802
          %s804 = sshll.u32 %s797, 4
          %s805 = int_to_ptr.vmem [resolvable:$true] %s804
          %807 = dma.hbm_to_vmem [thread:$0]  %s803, 16, %s805, %s795
        $region72: #{tpu_custom_call.1} parent=55 // pred_fallthru
          _
        // Predicated region
        $region73: #{tpu_custom_call.1} parent=55 // pred_check
          %p808 = pneg %p310
        $region74: #{tpu_custom_call.1} parent=55 // pred_check_branch
          %810 = sbr.rel (%p808) target = $region76
        $region75: #{tpu_custom_call.1} parent=55 // pred_region
          %s811 = sand.u32 %s33, 1
          %s812 = scalar_lea.sflag [#allocation5], %s811
          %s813 = sand.u32 %s300, 1
          %s814 = scalar_lea.vmem [#allocation18], %s813
          %816 = vsyncadd %s812, 0
          %s817 = scalar_lea.hbm %s10, %s41
          %s819 = sshll.u32 %s817, 4
          %s820 = int_to_ptr.hbm [resolvable:$true] %s819
          %s821 = sshll.u32 %s814, 4
          %s822 = int_to_ptr.vmem [resolvable:$true] %s821
          %824 = dma.hbm_to_vmem [thread:$0]  %s820, 16, %s822, %s812
        $region76: #{tpu_custom_call.1} parent=55 // pred_fallthru
          _
        // Predicated region
        $region77: #{tpu_custom_call.1} parent=55 // pred_check
          %p825 = pneg %p336
        $region78: #{tpu_custom_call.1} parent=55 // pred_check_branch
          %827 = sbr.rel (%p825) target = $region80
        $region79: #{tpu_custom_call.1} parent=55 // pred_region
          %s828 = sand.u32 %s33, 1
          %s829 = scalar_lea.sflag [#allocation5], %s828
          %s830 = sand.u32 %s326, 1
          %s831 = scalar_lea.vmem [#allocation19], %s830
          %833 = vsyncadd %s829, 0
          %s834 = scalar_lea.hbm %s11, %s41
          %s836 = sshll.u32 %s834, 4
          %s837 = int_to_ptr.hbm [resolvable:$true] %s836
          %s838 = sshll.u32 %s831, 4
          %s839 = int_to_ptr.vmem [resolvable:$true] %s838
          %841 = dma.hbm_to_vmem [thread:$0]  %s837, 16, %s839, %s829
        $region80: #{tpu_custom_call.1} parent=55 // pred_fallthru
          _
        // Predicated region
        $region81: #{tpu_custom_call.1} parent=55 // pred_check
          %p842 = pneg %p362
        $region82: #{tpu_custom_call.1} parent=55 // pred_check_branch
          %844 = sbr.rel (%p842) target = $region84
        $region83: #{tpu_custom_call.1} parent=55 // pred_region
          %s845 = sand.u32 %s33, 1
          %s846 = scalar_lea.sflag [#allocation5], %s845
          %s847 = sand.u32 %s352, 1
          %s848 = smul.addr %s847, 128
          %s849 = scalar_lea.vmem [#allocation20], %s848
          %851 = vsyncadd %s846, 0
          %s852 = smul.addr %s41, 32
          %s853 = smul.addr %s852, 4
          %s854 = scalar_lea.hbm %s12, %s853
          %s855 = sshll.u32 %s854, 4
          %s856 = int_to_ptr.hbm [resolvable:$true] %s855
          %s857 = sshll.u32 %s849, 4
          %s858 = int_to_ptr.vmem [resolvable:$true] %s857
          %863 = dma.hbm_to_vmem [thread:$0]  %s856, 2048, %s858, %s846, 128, 128, 8
        $region84: #{tpu_custom_call.1} parent=55 // pred_fallthru
          _
        // Predicated region
        $region85: #{tpu_custom_call.1} parent=55 // pred_check
          %p864 = pneg %p388
        $region86: #{tpu_custom_call.1} parent=55 // pred_check_branch
          %866 = sbr.rel (%p864) target = $region88
        $region87: #{tpu_custom_call.1} parent=55 // pred_region
          %p867 = scmp.lt.s32.totalorder %s41, 1
          %s868 = scalar_select %p867, %s41, 1
          %s869 = smul.addr %s868, 2
          %s870 = scalar_lea.vmem %s13, %s869
        $region88: #{tpu_custom_call.1} parent=55 // pred_fallthru
          _
        // Predicated region
        $region89: #{tpu_custom_call.1} parent=55 // pred_check
          %p871 = pneg %p414
        $region90: #{tpu_custom_call.1} parent=55 // pred_check_branch
          %873 = sbr.rel (%p871) target = $region92
        $region91: #{tpu_custom_call.1} parent=55 // pred_region
          %s874 = sand.u32 %s33, 1
          %s875 = scalar_lea.sflag [#allocation5], %s874
          %s876 = sand.u32 %s404, 1
          %s877 = smul.addr %s876, 128
          %s878 = scalar_lea.vmem [#allocation21], %s877
          %880 = vsyncadd %s875, 0
          %s881 = smul.addr %s41, 32
          %s882 = smul.addr %s881, 4
          %s883 = scalar_lea.hbm %s14, %s882
          %s884 = sshll.u32 %s883, 4
          %s885 = int_to_ptr.hbm [resolvable:$true] %s884
          %s886 = sshll.u32 %s878, 4
          %s887 = int_to_ptr.vmem [resolvable:$true] %s886
          %892 = dma.hbm_to_vmem [thread:$0]  %s885, 2048, %s887, %s875, 64, 64, 4
        $region92: #{tpu_custom_call.1} parent=55 // pred_fallthru
          _
        // Predicated region
        $region93: #{tpu_custom_call.1} parent=55 // pred_check
          %p893 = pneg %p440
        $region94: #{tpu_custom_call.1} parent=55 // pred_check_branch
          %895 = sbr.rel (%p893) target = $region96
        $region95: #{tpu_custom_call.1} parent=55 // pred_region
          %p896 = scmp.lt.s32.totalorder %s41, 1
          %s897 = scalar_select %p896, %s41, 1
          %s898 = scalar_lea.vmem %s15, %s897
        $region96: #{tpu_custom_call.1} parent=55 // pred_fallthru
          _
        // Predicated region
        $region97: #{tpu_custom_call.1} parent=55 // pred_check
          %p899 = pneg %p466
        $region98: #{tpu_custom_call.1} parent=55 // pred_check_branch
          %901 = sbr.rel (%p899) target = $region100
        $region99: #{tpu_custom_call.1} parent=55 // pred_region
          %p902 = scmp.lt.s32.totalorder %s41, 1
          %s903 = scalar_select %p902, %s41, 1
          %s904 = scalar_lea.vmem %s16, %s903
        $region100: #{tpu_custom_call.1} parent=55 // pred_fallthru
          _
        // Predicated region
        $region101: #{tpu_custom_call.1} parent=55 // pred_check
          %p905 = pneg %p492
        $region102: #{tpu_custom_call.1} parent=55 // pred_check_branch
          %907 = sbr.rel (%p905) target = $region104
        $region103: #{tpu_custom_call.1} parent=55 // pred_region
          %p908 = scmp.lt.s32.totalorder %s41, 1
          %s909 = scalar_select %p908, %s41, 1
          %s910 = scalar_lea.vmem %s17, %s909
        $region104: #{tpu_custom_call.1} parent=55 // pred_fallthru
          _
      $region56: #{tpu_custom_call.1} parent=5 // pred_fallthru
        _
      %p911 = scmp.le.s32.totalorder 1, %s33
      %p912 = scmp.lt.s32.totalorder %s33, 3
      %p913 = pnand %p911, %p912
      %p914 = pneg %p913
      // Predicated region
      $region105: #{tpu_custom_call.1} parent=5 // pred_check
        _
      $region106: #{tpu_custom_call.1} parent=5 // pred_check_branch
        %916 = sbr.rel (%p913) target = $region108
      $region107: #{tpu_custom_call.1} parent=5 // pred_region
        %s917 = ssub.s32 %s33, 1
        // Predicated region
        $region109: #{tpu_custom_call.1} parent=107 // pred_check
          %p918 = pneg %p71
        $region110: #{tpu_custom_call.1} parent=107 // pred_check_branch
          %920 = sbr.rel (%p918) target = $region112
        $region111: #{tpu_custom_call.1} parent=107 // pred_region
          %922 = dma.done [#allocation5], 512
        $region112: #{tpu_custom_call.1} parent=107 // pred_fallthru
          _
        // Predicated region
        $region113: #{tpu_custom_call.1} parent=107 // pred_check
          %p923 = pneg %p92
        $region114: #{tpu_custom_call.1} parent=107 // pred_check_branch
          %925 = sbr.rel (%p923) target = $region116
        $region115: #{tpu_custom_call.1} parent=107 // pred_region
          %927 = dma.done [#allocation8], 256
        $region116: #{tpu_custom_call.1} parent=107 // pred_fallthru
          _
        // Predicated region
        $region117: #{tpu_custom_call.1} parent=107 // pred_check
          %p928 = pneg %p118
        $region118: #{tpu_custom_call.1} parent=107 // pred_check_branch
          %930 = sbr.rel (%p928) target = $region120
        $region119: #{tpu_custom_call.1} parent=107 // pred_region
          %932 = dma.done [#allocation8], 512
        $region120: #{tpu_custom_call.1} parent=107 // pred_fallthru
          _
        // Predicated region
        $region121: #{tpu_custom_call.1} parent=107 // pred_check
          %p933 = pneg %p139
        $region122: #{tpu_custom_call.1} parent=107 // pred_check_branch
          %935 = sbr.rel (%p933) target = $region124
        $region123: #{tpu_custom_call.1} parent=107 // pred_region
          %937 = dma.done [#allocation11], 16
        $region124: #{tpu_custom_call.1} parent=107 // pred_fallthru
          _
        // Predicated region
        $region125: #{tpu_custom_call.1} parent=107 // pred_check
          %p938 = pneg %p160
        $region126: #{tpu_custom_call.1} parent=107 // pred_check_branch
          %940 = sbr.rel (%p938) target = $region128
        $region127: #{tpu_custom_call.1} parent=107 // pred_region
          %942 = dma.done [#allocation11], 16
        $region128: #{tpu_custom_call.1} parent=107 // pred_fallthru
          _
        // Predicated region
        $region129: #{tpu_custom_call.1} parent=107 // pred_check
          %p943 = pneg %p186
        $region130: #{tpu_custom_call.1} parent=107 // pred_check_branch
          %945 = sbr.rel (%p943) target = $region132
        $region131: #{tpu_custom_call.1} parent=107 // pred_region
          %947 = dma.done [#allocation14], 32
        $region132: #{tpu_custom_call.1} parent=107 // pred_fallthru
          _
        %s948 = sand.u32 %s38, 1
        %s949 = scalar_lea.sflag [#allocation5], %s948
        %s950 = sand.u32 %s199, 1
        %s951 = smul.addr %s950, 192
        %s952 = scalar_lea.vmem [#allocation15], %s951
        // Predicated region
        $region133: #{tpu_custom_call.1} parent=107 // pred_check
          %p953 = pneg %p212
        $region134: #{tpu_custom_call.1} parent=107 // pred_check_branch
          %955 = sbr.rel (%p953) target = $region136
        $region135: #{tpu_custom_call.1} parent=107 // pred_region
          %957 = dma.done %s949, 3072
        $region136: #{tpu_custom_call.1} parent=107 // pred_fallthru
          _
        %s958 = sand.u32 %s38, 1
        %s959 = scalar_lea.sflag [#allocation5], %s958
        %s960 = sand.u32 %s251, 1
        %s961 = smul.addr %s960, 64
        %s962 = scalar_lea.vmem [#allocation16], %s961
        // Predicated region
        $region137: #{tpu_custom_call.1} parent=107 // pred_check
          %p963 = pneg %p264
        $region138: #{tpu_custom_call.1} parent=107 // pred_check_branch
          %965 = sbr.rel (%p963) target = $region140
        $region139: #{tpu_custom_call.1} parent=107 // pred_region
          %967 = dma.done %s959, 1024
        $region140: #{tpu_custom_call.1} parent=107 // pred_fallthru
          _
        %s968 = sand.u32 %s38, 1
        %s969 = scalar_lea.sflag [#allocation5], %s968
        %s970 = sand.u32 %s277, 1
        %s971 = scalar_lea.vmem [#allocation17], %s970
        // Predicated region
        $region141: #{tpu_custom_call.1} parent=107 // pred_check
          %p972 = pneg %p290
        $region142: #{tpu_custom_call.1} parent=107 // pred_check_branch
          %974 = sbr.rel (%p972) target = $region144
        $region143: #{tpu_custom_call.1} parent=107 // pred_region
          %976 = dma.done %s969, 16
        $region144: #{tpu_custom_call.1} parent=107 // pred_fallthru
          _
        %s977 = sand.u32 %s38, 1
        %s978 = scalar_lea.sflag [#allocation5], %s977
        %s979 = sand.u32 %s303, 1
        %s980 = scalar_lea.vmem [#allocation18], %s979
        // Predicated region
        $region145: #{tpu_custom_call.1} parent=107 // pred_check
          %p981 = pneg %p316
        $region146: #{tpu_custom_call.1} parent=107 // pred_check_branch
          %983 = sbr.rel (%p981) target = $region148
        $region147: #{tpu_custom_call.1} parent=107 // pred_region
          %985 = dma.done %s978, 16
        $region148: #{tpu_custom_call.1} parent=107 // pred_fallthru
          _
        %s986 = sand.u32 %s38, 1
        %s987 = scalar_lea.sflag [#allocation5], %s986
        %s988 = sand.u32 %s329, 1
        %s989 = scalar_lea.vmem [#allocation19], %s988
        // Predicated region
        $region149: #{tpu_custom_call.1} parent=107 // pred_check
          %p990 = pneg %p342
        $region150: #{tpu_custom_call.1} parent=107 // pred_check_branch
          %992 = sbr.rel (%p990) target = $region152
        $region151: #{tpu_custom_call.1} parent=107 // pred_region
          %994 = dma.done %s987, 16
        $region152: #{tpu_custom_call.1} parent=107 // pred_fallthru
          _
        %s995 = sand.u32 %s38, 1
        %s996 = scalar_lea.sflag [#allocation5], %s995
        %s997 = sand.u32 %s355, 1
        %s998 = smul.addr %s997, 128
        %s999 = scalar_lea.vmem [#allocation20], %s998
        // Predicated region
        $region153: #{tpu_custom_call.1} parent=107 // pred_check
          %p1000 = pneg %p368
        $region154: #{tpu_custom_call.1} parent=107 // pred_check_branch
          %1002 = sbr.rel (%p1000) target = $region156
        $region155: #{tpu_custom_call.1} parent=107 // pred_region
          %1004 = dma.done %s996, 2048
        $region156: #{tpu_custom_call.1} parent=107 // pred_fallthru
          _
        %s1005 = sand.u32 %s38, 1
        %s1006 = scalar_lea.sflag [#allocation5], %s1005
        %s1007 = sand.u32 %s407, 1
        %s1008 = smul.addr %s1007, 128
        %s1009 = scalar_lea.vmem [#allocation21], %s1008
        // Predicated region
        $region157: #{tpu_custom_call.1} parent=107 // pred_check
          %p1010 = pneg %p420
        $region158: #{tpu_custom_call.1} parent=107 // pred_check_branch
          %1012 = sbr.rel (%p1010) target = $region160
        $region159: #{tpu_custom_call.1} parent=107 // pred_region
          %1014 = dma.done %s1006, 2048
        $region160: #{tpu_custom_call.1} parent=107 // pred_fallthru
          _
        // Predicated region
        $region161: #{tpu_custom_call.1} parent=107 // pred_check
          %p1015 = pneg %p519
        $region162: #{tpu_custom_call.1} parent=107 // pred_check_branch
          %1017 = sbr.rel (%p1015) target = $region164
        $region163: #{tpu_custom_call.1} parent=107 // pred_region
          %1019 = dma.done [#allocation8], 1024
        $region164: #{tpu_custom_call.1} parent=107 // pred_fallthru
          _
        %p1020 = pneg %p71
        %p1021 = pneg %p68
        %p1022 = pneg %p92
        %p1023 = pneg %p89
        %p1024 = pneg %p118
        %p1025 = pneg %p115
        %p1026 = pneg %p139
        %p1027 = pneg %p136
        %p1028 = pneg %p160
        %p1029 = pneg %p157
        %p1030 = pneg %p186
        %p1031 = pneg %p183
        %s1032 = sand.u32 %s38, 1
        %s1033 = scalar_lea.sflag [#allocation5], %s1032
        %s1034 = sand.u32 %s199, 1
        %s1035 = smul.addr %s1034, 192
        %s1036 = scalar_lea.vmem [#allocation15], %s1035
        %p1037 = pneg %p212
        %p1038 = pneg %p209
        %p1039 = scmp.lt.s32.totalorder %s43, 1
        %s1040 = scalar_select %p1039, %s43, 1
        %s1041 = smul.addr %s1040, 3
        %s1042 = scalar_lea.vmem %s7, %s1041
        %p1043 = pneg %p238
        %p1044 = pneg %p235
        %s1045 = sand.u32 %s38, 1
        %s1046 = scalar_lea.sflag [#allocation5], %s1045
        %s1047 = sand.u32 %s251, 1
        %s1048 = smul.addr %s1047, 64
        %s1049 = scalar_lea.vmem [#allocation16], %s1048
        %p1050 = pneg %p264
        %p1051 = pneg %p261
        %s1052 = sand.u32 %s38, 1
        %s1053 = scalar_lea.sflag [#allocation5], %s1052
        %s1054 = sand.u32 %s277, 1
        %s1055 = scalar_lea.vmem [#allocation17], %s1054
        %p1056 = pneg %p290
        %p1057 = pneg %p287
        %s1058 = sand.u32 %s38, 1
        %s1059 = scalar_lea.sflag [#allocation5], %s1058
        %s1060 = sand.u32 %s303, 1
        %s1061 = scalar_lea.vmem [#allocation18], %s1060
        %p1062 = pneg %p316
        %p1063 = pneg %p313
        %s1064 = sand.u32 %s38, 1
        %s1065 = scalar_lea.sflag [#allocation5], %s1064
        %s1066 = sand.u32 %s329, 1
        %s1067 = scalar_lea.vmem [#allocation19], %s1066
        %p1068 = pneg %p342
        %p1069 = pneg %p339
        %s1070 = sand.u32 %s38, 1
        %s1071 = scalar_lea.sflag [#allocation5], %s1070
        %s1072 = sand.u32 %s355, 1
        %s1073 = smul.addr %s1072, 128
        %s1074 = scalar_lea.vmem [#allocation20], %s1073
        %p1075 = pneg %p368
        %p1076 = pneg %p365
        %p1077 = scmp.lt.s32.totalorder %s43, 1
        %s1078 = scalar_select %p1077, %s43, 1
        %s1079 = smul.addr %s1078, 2
        %s1080 = scalar_lea.vmem %s13, %s1079
        %p1081 = pneg %p394
        %p1082 = pneg %p391
        %s1083 = sand.u32 %s38, 1
        %s1084 = scalar_lea.sflag [#allocation5], %s1083
        %s1085 = sand.u32 %s407, 1
        %s1086 = smul.addr %s1085, 128
        %s1087 = scalar_lea.vmem [#allocation21], %s1086
        %p1088 = pneg %p420
        %p1089 = pneg %p417
        %p1090 = scmp.lt.s32.totalorder %s43, 1
        %s1091 = scalar_select %p1090, %s43, 1
        %s1092 = scalar_lea.vmem %s15, %s1091
        %p1093 = pneg %p446
        %p1094 = pneg %p443
        %p1095 = scmp.lt.s32.totalorder %s43, 1
        %s1096 = scalar_select %p1095, %s43, 1
        %s1097 = scalar_lea.vmem %s16, %s1096
        %p1098 = pneg %p472
        %p1099 = pneg %p469
        %p1100 = scmp.lt.s32.totalorder %s43, 1
        %s1101 = scalar_select %p1100, %s43, 1
        %s1102 = scalar_lea.vmem %s17, %s1101
        %p1103 = pneg %p498
        %p1104 = pneg %p495
        %p1105 = pneg %p519
        %p1106 = pneg %p516
        %p1107 = pneg %p540
        %p1108 = pneg %p537
        %p1109 = pneg %p561
        %p1110 = pneg %p558
        %p1111 = pneg %p582
        %p1112 = pneg %p579
        %p1113 = pneg %p608
        %p1114 = pneg %p605
        %s1115 = smul.u32 2, %s42
        %s1116 = smul.u32 2, %s42
        %s1117 = smul.u32 2, %s42
        %p1118 = scmp.lt.s32.totalorder %s43, 1
        %s1119 = scalar_select %p1118, %s43, 1
        %s1120 = smul.addr %s1119, 3
        %s1121 = scalar_lea.vmem %s7, %s1120
        %p1122 = scmp.lt.s32.totalorder %s43, 1
        %s1123 = scalar_select %p1122, %s43, 1
        %s1124 = smul.addr %s1123, 2
        %s1125 = scalar_lea.vmem %s13, %s1124
        %p1126 = scmp.lt.s32.totalorder %s43, 1
        %s1127 = scalar_select %p1126, %s43, 1
        %s1128 = scalar_lea.vmem %s15, %s1127
        %p1129 = scmp.lt.s32.totalorder %s43, 1
        %s1130 = scalar_select %p1129, %s43, 1
        %s1131 = scalar_lea.vmem %s16, %s1130
        %p1132 = scmp.lt.s32.totalorder %s43, 1
        %s1133 = scalar_select %p1132, %s43, 1
        %s1134 = scalar_lea.vmem %s17, %s1133
        %s1135 = smul.u32 2, %s42
        %p1137 = scmp.eq.s32.totalorder %s43, 0
        // Predicated region
        $region165: #{tpu_custom_call.1} parent=107 // pred_check
          %p1138 = pneg %p1137
        $region166: #{tpu_custom_call.1} parent=107 // pred_check_branch
          %1140 = sbr.rel (%p1138) target = $region168
        $region167: #{tpu_custom_call.1} parent=107 // pred_region
          %v1141 = vld [vmem:[#allocation4] sm:$0xff]
          %v1142 = vld [vmem:[#allocation4 + $0x8] sm:$0xff]
          %v1143 = vld [vmem:[#allocation9] sm:$0xff]
          %v1144 = vld [vmem:[#allocation9 + $0x8] sm:$0xff]
          %v1145 = vadd.f32 %v1141, %v1143
          %v1146 = vadd.f32 %v1142, %v1144
          %v1147 = vld [vmem:[#allocation7] sm:$0xff]
          %v1148 = vld [vmem:[#allocation7 + $0x8] sm:$0xff]
          %v1149 = vadd.f32 %v1145, %v1147
          %v1150 = vadd.f32 %v1146, %v1148
          %v1151 = vld [vmem:[#allocation10] sm:$0x1]
          %v1152 = vld [vmem:[#allocation12] sm:$0x1]
          %1153 = vadd.xlane.f32.xlu0 %v1149
          %v1154 = vpop.xlane.xlu0 %1153
          %1155 = vadd.xlane.f32.xlu0 %v1150
          %v1156 = vpop.xlane.xlu0 %1155
          %v1157 = vrcp.pop 128.0
          %v1158 = vmul.f32 128.0, %v1157
          %v1159 = vsub.f32 1.0, %v1158
          %v1160 = vmul.f32 %v1157, %v1159
          %v1161 = vadd.f32 %v1157, %v1160
          %vm1162 = vweird.f32 %v1157
          %v1163 = vsel %vm1162, %v1157, %v1161
          %v1164 = vmul.f32 %v1154, %v1163
          %v1165 = vmul.f32 %v1156, %v1163
          %v1166 = vsub.f32 %v1149, %v1164
          %v1167 = vsub.f32 %v1150, %v1165
          %v1168 = vmul.f32 %v1166, %v1166
          %v1169 = vmul.f32 %v1167, %v1167
          %1170 = vadd.xlane.f32.xlu0 %v1168
          %v1171 = vpop.xlane.xlu0 %1170
          %1172 = vadd.xlane.f32.xlu0 %v1169
          %v1173 = vpop.xlane.xlu0 %1172
          %v1174 = vmul.f32 %v1171, %v1163
          %v1175 = vmul.f32 %v1173, %v1163
          %v1176 = vadd.f32 %v1174, 1e-05
          %v1177 = vadd.f32 %v1175, 1e-05
          %v1178 = vrsqrt.pop %v1176
          %v1179 = vmul.f32 %v1178, %v1176
          %v1180 = vmul.f32 %v1179, %v1178
          %v1181 = vmul.f32 0.5, %v1180
          %v1182 = vsub.f32 1.5, %v1181
          %v1183 = vmul.f32 %v1178, %v1182
          %vm1184 = vweird.f32 %v1176
          %vm1185 = vweird.f32 %v1178
          %vm1186 = vmor %vm1184, %vm1185
          %v1187 = vsel %vm1186, %v1178, %v1183
          %v1188 = vrsqrt.pop %v1177
          %v1189 = vmul.f32 %v1188, %v1177
          %v1190 = vmul.f32 %v1189, %v1188
          %v1191 = vmul.f32 0.5, %v1190
          %v1192 = vsub.f32 1.5, %v1191
          %v1193 = vmul.f32 %v1188, %v1192
          %vm1194 = vweird.f32 %v1177
          %vm1195 = vweird.f32 %v1188
          %vm1196 = vmor %vm1194, %vm1195
          %v1197 = vsel %vm1196, %v1188, %v1193
          %v1198 = vmul.f32 %v1166, %v1187
          %v1199 = vmul.f32 %v1167, %v1197
          %v1201 = vperm.slane %v1151, 0
          %v1203 = vmul.f32 %v1198, %v1201
          %v1204 = vmul.f32 %v1199, %v1201
          %v1206 = vperm.slane %v1152, 0
          %v1208 = vadd.f32 %v1203, %v1206
          %v1209 = vadd.f32 %v1204, %v1206
          %1210 = vst [vmem:[#allocation2] sm:$0xff] %v1208
          %1211 = vst [vmem:[#allocation2 + $0x8] sm:$0xff] %v1209
          %s1212 = scalar_lea.vmem [#allocation4], 16
          %v1213 = vld [vmem:[%s1212] sm:$0xff]
          %v1214 = vld [vmem:[%s1212 + $0x8] sm:$0xff]
          %s1215 = scalar_lea.vmem [#allocation9], 16
          %v1216 = vld [vmem:[%s1215] sm:$0xff]
          %v1217 = vld [vmem:[%s1215 + $0x8] sm:$0xff]
          %v1218 = vadd.f32 %v1213, %v1216
          %v1219 = vadd.f32 %v1214, %v1217
          %v1220 = vld [vmem:[#allocation7] sm:$0xff]
          %v1221 = vld [vmem:[#allocation7 + $0x8] sm:$0xff]
          %v1222 = vadd.f32 %v1218, %v1220
          %v1223 = vadd.f32 %v1219, %v1221
          %v1224 = vld [vmem:[#allocation10] sm:$0x1]
          %v1225 = vld [vmem:[#allocation12] sm:$0x1]
          %1226 = vadd.xlane.f32.xlu0 %v1222
          %v1227 = vpop.xlane.xlu0 %1226
          %1228 = vadd.xlane.f32.xlu0 %v1223
          %v1229 = vpop.xlane.xlu0 %1228
          %v1230 = vmul.f32 %v1227, %v1163
          %v1231 = vmul.f32 %v1229, %v1163
          %v1232 = vsub.f32 %v1222, %v1230
          %v1233 = vsub.f32 %v1223, %v1231
          %v1234 = vmul.f32 %v1232, %v1232
          %v1235 = vmul.f32 %v1233, %v1233
          %1236 = vadd.xlane.f32.xlu0 %v1234
          %v1237 = vpop.xlane.xlu0 %1236
          %1238 = vadd.xlane.f32.xlu0 %v1235
          %v1239 = vpop.xlane.xlu0 %1238
          %v1240 = vmul.f32 %v1237, %v1163
          %v1241 = vmul.f32 %v1239, %v1163
          %v1242 = vadd.f32 %v1240, 1e-05
          %v1243 = vadd.f32 %v1241, 1e-05
          %v1244 = vrsqrt.pop %v1242
          %v1245 = vmul.f32 %v1244, %v1242
          %v1246 = vmul.f32 %v1245, %v1244
          %v1247 = vmul.f32 0.5, %v1246
          %v1248 = vsub.f32 1.5, %v1247
          %v1249 = vmul.f32 %v1244, %v1248
          %vm1250 = vweird.f32 %v1242
          %vm1251 = vweird.f32 %v1244
          %vm1252 = vmor %vm1250, %vm1251
          %v1253 = vsel %vm1252, %v1244, %v1249
          %v1254 = vrsqrt.pop %v1243
          %v1255 = vmul.f32 %v1254, %v1243
          %v1256 = vmul.f32 %v1255, %v1254
          %v1257 = vmul.f32 0.5, %v1256
          %v1258 = vsub.f32 1.5, %v1257
          %v1259 = vmul.f32 %v1254, %v1258
          %vm1260 = vweird.f32 %v1243
          %vm1261 = vweird.f32 %v1254
          %vm1262 = vmor %vm1260, %vm1261
          %v1263 = vsel %vm1262, %v1254, %v1259
          %v1264 = vmul.f32 %v1232, %v1253
          %v1265 = vmul.f32 %v1233, %v1263
          %v1267 = vperm.slane %v1224, 0
          %v1269 = vmul.f32 %v1264, %v1267
          %v1270 = vmul.f32 %v1265, %v1267
          %v1272 = vperm.slane %v1225, 0
          %v1274 = vadd.f32 %v1269, %v1272
          %v1275 = vadd.f32 %v1270, %v1272
          %1276 = vst [vmem:[#allocation2 + $0x10] sm:$0xff] %v1274
          %1277 = vst [vmem:[#allocation2 + $0x18] sm:$0xff] %v1275
        $region168: #{tpu_custom_call.1} parent=107 // pred_fallthru
          _
        %v1278 = vld [vmem:[#allocation2] sm:$0xff]
        %v1279 = vld [vmem:[#allocation2 + $0x8] sm:$0xff]
        %v1280 = vld [vmem:[#allocation2 + $0x10] sm:$0xff]
        %v1281 = vld [vmem:[#allocation2 + $0x18] sm:$0xff]
        %v1282 = vpack.c.bf16 %v1279, %v1278
        %v1283 = vpack.c.bf16 %v1281, %v1280
        %v1284 = vld [vmem:[%s952] sm:$0xff]
        %v1285 = vld [vmem:[%s952 + $0x8] sm:$0xf]
        %v1286 = vld [vmem:[%s952 + $0xc] sm:$0xff]
        %v1287 = vld [vmem:[%s952 + $0x14] sm:$0xf]
        %v1288 = vld [vmem:[%s952 + $0x18] sm:$0xff]
        %v1289 = vld [vmem:[%s952 + $0x20] sm:$0xf]
        %v1290 = vld [vmem:[%s952 + $0x24] sm:$0xff]
        %v1291 = vld [vmem:[%s952 + $0x2c] sm:$0xf]
        %v1292 = vld [vmem:[%s952 + $0x30] sm:$0xff]
        %v1293 = vld [vmem:[%s952 + $0x38] sm:$0xf]
        %v1294 = vld [vmem:[%s952 + $0x3c] sm:$0xff]
        %v1295 = vld [vmem:[%s952 + $0x44] sm:$0xf]
        %v1296 = vld [vmem:[%s952 + $0x48] sm:$0xff]
        %v1297 = vld [vmem:[%s952 + $0x50] sm:$0xf]
        %v1298 = vld [vmem:[%s952 + $0x54] sm:$0xff]
        %v1299 = vld [vmem:[%s952 + $0x5c] sm:$0xf]
        %v1300 = vld [vmem:[%s952 + $0x60] sm:$0xff]
        %v1301 = vld [vmem:[%s952 + $0x68] sm:$0xf]
        %v1302 = vld [vmem:[%s952 + $0x6c] sm:$0xff]
        %v1303 = vld [vmem:[%s952 + $0x74] sm:$0xf]
        %v1304 = vld [vmem:[%s952 + $0x78] sm:$0xff]
        %v1305 = vld [vmem:[%s952 + $0x80] sm:$0xf]
        %v1306 = vld [vmem:[%s952 + $0x84] sm:$0xff]
        %v1307 = vld [vmem:[%s952 + $0x8c] sm:$0xf]
        %v1308 = vld [vmem:[%s952 + $0x90] sm:$0xff]
        %v1309 = vld [vmem:[%s952 + $0x98] sm:$0xf]
        %v1310 = vld [vmem:[%s952 + $0x9c] sm:$0xff]
        %v1311 = vld [vmem:[%s952 + $0xa4] sm:$0xf]
        %v1312 = vld [vmem:[%s952 + $0xa8] sm:$0xff]
        %v1313 = vld [vmem:[%s952 + $0xb0] sm:$0xf]
        %v1314 = vld [vmem:[%s952 + $0xb4] sm:$0xff]
        %v1315 = vld [vmem:[%s952 + $0xbc] sm:$0xf]
        %v1316 = vld [vmem:[%s1121] sm:$0x7]
        %v1318 = vperm.slane %v1316, 0
        %v1319 = vperm.slane %v1316, 1
        %v1320 = vperm.slane %v1316, 2
        %v1356 = vunpack.c.l.b16 %v1284
        %v1357 = vunpack.c.h.b16 %v1284
        %v1358 = vunpack.c.l.b16 %v1285
        %v1359 = vunpack.c.l.b16 %v1286
        %v1360 = vunpack.c.h.b16 %v1286
        %v1361 = vunpack.c.l.b16 %v1287
        %v1362 = vunpack.c.l.b16 %v1288
        %v1363 = vunpack.c.h.b16 %v1288
        %v1364 = vunpack.c.l.b16 %v1289
        %v1365 = vunpack.c.l.b16 %v1290
        %v1366 = vunpack.c.h.b16 %v1290
        %v1367 = vunpack.c.l.b16 %v1291
        %v1368 = vunpack.c.l.b16 %v1292
        %v1369 = vunpack.c.h.b16 %v1292
        %v1370 = vunpack.c.l.b16 %v1293
        %v1371 = vunpack.c.l.b16 %v1294
        %v1372 = vunpack.c.h.b16 %v1294
        %v1373 = vunpack.c.l.b16 %v1295
        %v1374 = vunpack.c.l.b16 %v1296
        %v1375 = vunpack.c.h.b16 %v1296
        %v1376 = vunpack.c.l.b16 %v1297
        %v1377 = vunpack.c.l.b16 %v1298
        %v1378 = vunpack.c.h.b16 %v1298
        %v1379 = vunpack.c.l.b16 %v1299
        %v1380 = vunpack.c.l.b16 %v1300
        %v1381 = vunpack.c.h.b16 %v1300
        %v1382 = vunpack.c.l.b16 %v1301
        %v1383 = vunpack.c.l.b16 %v1302
        %v1384 = vunpack.c.h.b16 %v1302
        %v1385 = vunpack.c.l.b16 %v1303
        %v1386 = vunpack.c.l.b16 %v1304
        %v1387 = vunpack.c.h.b16 %v1304
        %v1388 = vunpack.c.l.b16 %v1305
        %v1389 = vunpack.c.l.b16 %v1306
        %v1390 = vunpack.c.h.b16 %v1306
        %v1391 = vunpack.c.l.b16 %v1307
        %v1392 = vunpack.c.l.b16 %v1308
        %v1393 = vunpack.c.h.b16 %v1308
        %v1394 = vunpack.c.l.b16 %v1309
        %v1395 = vunpack.c.l.b16 %v1310
        %v1396 = vunpack.c.h.b16 %v1310
        %v1397 = vunpack.c.l.b16 %v1311
        %v1398 = vunpack.c.l.b16 %v1312
        %v1399 = vunpack.c.h.b16 %v1312
        %v1400 = vunpack.c.l.b16 %v1313
        %v1401 = vunpack.c.l.b16 %v1314
        %v1402 = vunpack.c.h.b16 %v1314
        %v1403 = vunpack.c.l.b16 %v1315
        %v1404 = vpack.c.b16 %v1359, %v1356
        %v1405 = vpack.c.b16 %v1360, %v1357
        %v1406 = vpack.c.b16 %v1361, %v1358
        %v1407 = vpack.c.b16 %v1365, %v1362
        %v1408 = vpack.c.b16 %v1366, %v1363
        %v1409 = vpack.c.b16 %v1367, %v1364
        %v1410 = vpack.c.b16 %v1371, %v1368
        %v1411 = vpack.c.b16 %v1372, %v1369
        %v1412 = vpack.c.b16 %v1373, %v1370
        %v1413 = vpack.c.b16 %v1377, %v1374
        %v1414 = vpack.c.b16 %v1378, %v1375
        %v1415 = vpack.c.b16 %v1379, %v1376
        %v1416 = vpack.c.b16 %v1383, %v1380
        %v1417 = vpack.c.b16 %v1384, %v1381
        %v1418 = vpack.c.b16 %v1385, %v1382
        %v1419 = vpack.c.b16 %v1389, %v1386
        %v1420 = vpack.c.b16 %v1390, %v1387
        %v1421 = vpack.c.b16 %v1391, %v1388
        %v1422 = vpack.c.b16 %v1395, %v1392
        %v1423 = vpack.c.b16 %v1396, %v1393
        %v1424 = vpack.c.b16 %v1397, %v1394
        %v1425 = vpack.c.b16 %v1401, %v1398
        %v1426 = vpack.c.b16 %v1402, %v1399
        %v1427 = vpack.c.b16 %v1403, %v1400
        %1452 = vmatpush.bf16.msra.mxu0 %v1425
        %1453 = vmatpush.bf16.msra.mxu0 %v1422
        %1454 = vmatpush.bf16.msra.mxu0 %v1419
        %1455 = vmatpush.bf16.msra.mxu0 %v1416
        %1456 = vmatpush.bf16.msra.mxu0 %v1413
        %1457 = vmatpush.bf16.msra.mxu0 %v1410
        %1458 = vmatpush.bf16.msra.mxu0 %v1407
        %1459 = vmatpush.bf16.msra.mxu0 %v1404
        %1460 = vmatmul.bf16.gmra.mxu0 %v1282
        %v1461 = vpop.f32.mrf.mxu0
        %v1462 = vadd.f32 %v1318, %v1461
        %v1463 = vpop.f32.mrf.mxu0
        %v1464 = vadd.f32 %v1318, %v1463
        %1465 = vmatmul.bf16.gmra.mxu0 %v1283
        %v1466 = vpop.f32.mrf.mxu0
        %v1467 = vadd.f32 %v1318, %v1466
        %v1468 = vpop.f32.mrf.mxu0
        %v1469 = vadd.f32 %v1318, %v1468
        %1470 = vdwg.mxu0
        %1471 = vmatpush.bf16.msra.mxu0 %v1426
        %1472 = vmatpush.bf16.msra.mxu0 %v1423
        %1473 = vmatpush.bf16.msra.mxu0 %v1420
        %1474 = vmatpush.bf16.msra.mxu0 %v1417
        %1475 = vmatpush.bf16.msra.mxu0 %v1414
        %1476 = vmatpush.bf16.msra.mxu0 %v1411
        %1477 = vmatpush.bf16.msra.mxu0 %v1408
        %1478 = vmatpush.bf16.msra.mxu0 %v1405
        %1479 = vmatmul.bf16.gmra.mxu0 %v1282
        %v1480 = vpop.f32.mrf.mxu0
        %v1481 = vadd.f32 %v1319, %v1480
        %v1482 = vpop.f32.mrf.mxu0
        %v1483 = vadd.f32 %v1319, %v1482
        %1484 = vmatmul.bf16.gmra.mxu0 %v1283
        %v1485 = vpop.f32.mrf.mxu0
        %v1486 = vadd.f32 %v1319, %v1485
        %v1487 = vpop.f32.mrf.mxu0
        %v1488 = vadd.f32 %v1319, %v1487
        %1489 = vdwg.mxu0
        %1490 = vmatpush.bf16.msra.mxu0 %v1427
        %1491 = vmatpush.bf16.msra.mxu0 %v1424
        %1492 = vmatpush.bf16.msra.mxu0 %v1421
        %1493 = vmatpush.bf16.msra.mxu0 %v1418
        %1494 = vmatpush.bf16.msra.mxu0 %v1415
        %1495 = vmatpush.bf16.msra.mxu0 %v1412
        %1496 = vmatpush.bf16.msra.mxu0 %v1409
        %1497 = vmatpush.bf16.msra.mxu0 %v1406
        %1498 = vmatmul.bf16.gmra.mxu0 %v1282
        %v1499 = vpop.f32.mrf.mxu0
        %v1500 = vadd.f32 %v1320, %v1499
        %v1501 = vpop.f32.mrf.mxu0
        %v1502 = vadd.f32 %v1320, %v1501
        %1503 = vmatmul.bf16.gmra.mxu0 %v1283
        %v1504 = vpop.f32.mrf.mxu0
        %v1505 = vadd.f32 %v1320, %v1504
        %v1506 = vpop.f32.mrf.mxu0
        %v1507 = vadd.f32 %v1320, %v1506
        %1508 = vdwg.mxu0
        %v1509 = vpack.c.bf16 %v1462, %v1462
        %v1510 = vpack.c.bf16 %v1464, %v1464
        %v1511 = vpack.c.bf16 %v1481, %v1481
        %v1512 = vpack.c.bf16 %v1483, %v1483
        %v1513 = vpack.c.bf16 %v1500, %v1500
        %v1514 = vpack.c.bf16 %v1502, %v1502
        %v1515 = vld [vmem:[#allocation13] sm:$0x1]
        %v1518 = vunpack.c.l.b16 %v1509
        %v1519 = vunpack.c.l.b16 %v1510
        %v1520 = vpack.c.b16 %v1519, %v1518
        %v1523 = vunpack.c.l.b16 %v1511
        %v1524 = vunpack.c.l.b16 %v1512
        %v1525 = vpack.c.b16 %v1524, %v1523
        %vm1526 = vcmask 523264
        %v1528 = vsel %vm1526, %v1520, 0
        %v1531 = vsel %vm1526, %v1525, 0
        %1533 = vmatpush.bf16.xpose.msra.mxu0 0
        %1534 = vmatpush.bf16.xpose.msra.mxu0 0
        %1535 = vmatpush.bf16.xpose.msra.mxu0 0
        %1536 = vmatpush.bf16.xpose.msra.mxu0 0
        %1537 = vmatpush.bf16.xpose.msra.mxu0 0
        %1538 = vmatpush.bf16.xpose.msra.mxu0 0
        %1539 = vmatpush.bf16.xpose.msra.mxu0 0
        %1540 = vmatpush.bf16.xpose.msra.mxu0 %v1531
        %1541 = vmatmul.bf16.gmra.mxu0 %v1528
        %v1542 = vpop.f32.mrf.mxu0
        %v1543 = vadd.f32 0.0, %v1542
        %v1544 = vpop.f32.mrf.mxu0
        %v1545 = vadd.f32 0.0, %v1544
        %1546 = vdwg.mxu0
        %v1547 = vmul.f32 %v1543, 0.125
        %v1548 = vmul.f32 %v1545, 0.125
        %v1550 = vperm.slane %v1515, 0
        %v1552 = vadd.f32 %v1547, %v1550
        %v1553 = vadd.f32 %v1548, %v1550
        %vm1554 = vcmask 130048
        %v1555 = vsel %vm1554, %v1552, -inf
        %1556 = vmax.xlane.f32.xlu0 %v1555
        %v1557 = vpop.xlane.xlu0 %1556
        %v1558 = vsel %vm1554, %v1553, -inf
        %1559 = vmax.xlane.f32.xlu0 %v1558
        %v1560 = vpop.xlane.xlu0 %1559
        %v1561 = vsub.f32 %v1552, %v1557
        %v1562 = vsub.f32 %v1553, %v1560
        %v1563 = vmul.f32 %v1561, 1.442695
        %v1564 = vpow.pop %v1563
        %v1565 = vmul.f32 %v1562, 1.442695
        %v1566 = vpow.pop %v1565
        %v1567 = vsel %vm1554, %v1564, 0.0
        %1568 = vadd.xlane.f32.xlu0 %v1567
        %v1569 = vpop.xlane.xlu0 %1568
        %v1570 = vsel %vm1554, %v1566, 0.0
        %1571 = vadd.xlane.f32.xlu0 %v1570
        %v1572 = vpop.xlane.xlu0 %1571
        %v1573 = vrcp.pop %v1569
        %v1574 = vrcp.pop %v1572
        %v1575 = vmul.f32 %v1564, %v1573
        %v1576 = vmul.f32 %v1566, %v1574
        %v1577 = vpack.c.bf16 %v1576, %v1575
        %v1580 = vunpack.c.l.b16 %v1513
        %v1581 = vunpack.c.l.b16 %v1514
        %v1582 = vpack.c.b16 %v1581, %v1580
        %v1585 = vsel %vm1554, %v1577, 0
        %1587 = vmatpush.bf16.msra.mxu0 0
        %1588 = vmatpush.bf16.msra.mxu0 0
        %1589 = vmatpush.bf16.msra.mxu0 0
        %1590 = vmatpush.bf16.msra.mxu0 0
        %1591 = vmatpush.bf16.msra.mxu0 0
        %1592 = vmatpush.bf16.msra.mxu0 0
        %1593 = vmatpush.bf16.msra.mxu0 0
        %1594 = vmatpush.bf16.msra.mxu0 %v1582
        %1595 = vmatmul.bf16.gmra.mxu0 %v1585
        %v1596 = vpop.f32.mrf.mxu0
        %v1597 = vadd.f32 0.0, %v1596
        %v1598 = vpop.f32.mrf.mxu0
        %v1599 = vadd.f32 0.0, %v1598
        %1600 = vdwg.mxu0
        %v1601 = vpack.c.bf16 %v1597, %v1597
        %v1602 = vpack.c.bf16 %v1599, %v1599
        %vm1603 = vcmask 519168
        %1604 = vst.msk [vmem:[#allocation3] sm:$0xf] %vm1603, %v1601
        %1605 = vst.msk [vmem:[#allocation3 + $0x4] sm:$0xf] %vm1603, %v1602
        %1606 = vrot.lane.b32.xlu0 %v1520, 64
        %v1607 = vpop.permute.xlu0 %1606
        %1608 = vrot.lane.b32.xlu0 %v1525, 64
        %v1609 = vpop.permute.xlu0 %1608
        %v1611 = vsel %vm1526, %v1607, 0
        %v1614 = vsel %vm1526, %v1609, 0
        %1616 = vmatpush.bf16.xpose.msra.mxu0 0
        %1617 = vmatpush.bf16.xpose.msra.mxu0 0
        %1618 = vmatpush.bf16.xpose.msra.mxu0 0
        %1619 = vmatpush.bf16.xpose.msra.mxu0 0
        %1620 = vmatpush.bf16.xpose.msra.mxu0 0
        %1621 = vmatpush.bf16.xpose.msra.mxu0 0
        %1622 = vmatpush.bf16.xpose.msra.mxu0 0
        %1623 = vmatpush.bf16.xpose.msra.mxu0 %v1614
        %1624 = vmatmul.bf16.gmra.mxu0 %v1611
        %v1625 = vpop.f32.mrf.mxu0
        %v1626 = vadd.f32 0.0, %v1625
        %v1627 = vpop.f32.mrf.mxu0
        %v1628 = vadd.f32 0.0, %v1627
        %1629 = vdwg.mxu0
        %v1630 = vmul.f32 %v1626, 0.125
        %v1631 = vmul.f32 %v1628, 0.125
        %v1632 = vadd.f32 %v1630, %v1550
        %v1633 = vadd.f32 %v1631, %v1550
        %v1634 = vsel %vm1554, %v1632, -inf
        %1635 = vmax.xlane.f32.xlu0 %v1634
        %v1636 = vpop.xlane.xlu0 %1635
        %v1637 = vsel %vm1554, %v1633, -inf
        %1638 = vmax.xlane.f32.xlu0 %v1637
        %v1639 = vpop.xlane.xlu0 %1638
        %v1640 = vsub.f32 %v1632, %v1636
        %v1641 = vsub.f32 %v1633, %v1639
        %v1642 = vmul.f32 %v1640, 1.442695
        %v1643 = vpow.pop %v1642
        %v1644 = vmul.f32 %v1641, 1.442695
        %v1645 = vpow.pop %v1644
        %v1646 = vsel %vm1554, %v1643, 0.0
        %1647 = vadd.xlane.f32.xlu0 %v1646
        %v1648 = vpop.xlane.xlu0 %1647
        %v1649 = vsel %vm1554, %v1645, 0.0
        %1650 = vadd.xlane.f32.xlu0 %v1649
        %v1651 = vpop.xlane.xlu0 %1650
        %v1652 = vrcp.pop %v1648
        %v1653 = vrcp.pop %v1651
        %v1654 = vmul.f32 %v1643, %v1652
        %v1655 = vmul.f32 %v1645, %v1653
        %v1656 = vpack.c.bf16 %v1655, %v1654
        %1657 = vrot.lane.b32.xlu0 %v1582, 64
        %v1658 = vpop.permute.xlu0 %1657
        %v1661 = vsel %vm1554, %v1656, 0
        %1663 = vmatpush.bf16.msra.mxu0 0
        %1664 = vmatpush.bf16.msra.mxu0 0
        %1665 = vmatpush.bf16.msra.mxu0 0
        %1666 = vmatpush.bf16.msra.mxu0 0
        %1667 = vmatpush.bf16.msra.mxu0 0
        %1668 = vmatpush.bf16.msra.mxu0 0
        %1669 = vmatpush.bf16.msra.mxu0 0
        %1670 = vmatpush.bf16.msra.mxu0 %v1658
        %1671 = vmatmul.bf16.gmra.mxu0 %v1661
        %v1672 = vpop.f32.mrf.mxu0
        %v1673 = vadd.f32 0.0, %v1672
        %v1674 = vpop.f32.mrf.mxu0
        %v1675 = vadd.f32 0.0, %v1674
        %1676 = vdwg.mxu0
        %v1677 = vpack.c.bf16 %v1673, %v1673
        %v1678 = vpack.c.bf16 %v1675, %v1675
        %1681 = vrot.lane.b32.xlu0 %v1677, 64
        %v1682 = vpop.permute.xlu0 %1681
        %1683 = vrot.lane.b32.xlu0 %v1678, 64
        %v1684 = vpop.permute.xlu0 %1683
        %vm1687 = vcmask 1043968
        %1688 = vst.msk [vmem:[#allocation3] sm:$0xf] %vm1687, %v1682
        %1689 = vst.msk [vmem:[#allocation3 + $0x4] sm:$0xf] %vm1687, %v1684
        %v1690 = vpack.c.bf16 %v1467, %v1467
        %v1691 = vpack.c.bf16 %v1469, %v1469
        %v1692 = vpack.c.bf16 %v1486, %v1486
        %v1693 = vpack.c.bf16 %v1488, %v1488
        %v1694 = vpack.c.bf16 %v1505, %v1505
        %v1695 = vpack.c.bf16 %v1507, %v1507
        %s1696 = scalar_lea.vmem [#allocation13], 1
        %v1697 = vld [vmem:[%s1696] sm:$0x1]
        %v1700 = vunpack.c.l.b16 %v1690
        %v1701 = vunpack.c.l.b16 %v1691
        %v1702 = vpack.c.b16 %v1701, %v1700
        %v1705 = vunpack.c.l.b16 %v1692
        %v1706 = vunpack.c.l.b16 %v1693
        %v1707 = vpack.c.b16 %v1706, %v1705
        %v1709 = vsel %vm1526, %v1702, 0
        %v1712 = vsel %vm1526, %v1707, 0
        %1714 = vmatpush.bf16.xpose.msra.mxu0 0
        %1715 = vmatpush.bf16.xpose.msra.mxu0 0
        %1716 = vmatpush.bf16.xpose.msra.mxu0 0
        %1717 = vmatpush.bf16.xpose.msra.mxu0 0
        %1718 = vmatpush.bf16.xpose.msra.mxu0 0
        %1719 = vmatpush.bf16.xpose.msra.mxu0 0
        %1720 = vmatpush.bf16.xpose.msra.mxu0 0
        %1721 = vmatpush.bf16.xpose.msra.mxu0 %v1712
        %1722 = vmatmul.bf16.gmra.mxu0 %v1709
        %v1723 = vpop.f32.mrf.mxu0
        %v1724 = vadd.f32 0.0, %v1723
        %v1725 = vpop.f32.mrf.mxu0
        %v1726 = vadd.f32 0.0, %v1725
        %1727 = vdwg.mxu0
        %v1728 = vmul.f32 %v1724, 0.125
        %v1729 = vmul.f32 %v1726, 0.125
        %v1731 = vperm.slane %v1697, 0
        %v1733 = vadd.f32 %v1728, %v1731
        %v1734 = vadd.f32 %v1729, %v1731
        %v1735 = vsel %vm1554, %v1733, -inf
        %1736 = vmax.xlane.f32.xlu0 %v1735
        %v1737 = vpop.xlane.xlu0 %1736
        %v1738 = vsel %vm1554, %v1734, -inf
        %1739 = vmax.xlane.f32.xlu0 %v1738
        %v1740 = vpop.xlane.xlu0 %1739
        %v1741 = vsub.f32 %v1733, %v1737
        %v1742 = vsub.f32 %v1734, %v1740
        %v1743 = vmul.f32 %v1741, 1.442695
        %v1744 = vpow.pop %v1743
        %v1745 = vmul.f32 %v1742, 1.442695
        %v1746 = vpow.pop %v1745
        %v1747 = vsel %vm1554, %v1744, 0.0
        %1748 = vadd.xlane.f32.xlu0 %v1747
        %v1749 = vpop.xlane.xlu0 %1748
        %v1750 = vsel %vm1554, %v1746, 0.0
        %1751 = vadd.xlane.f32.xlu0 %v1750
        %v1752 = vpop.xlane.xlu0 %1751
        %v1753 = vrcp.pop %v1749
        %v1754 = vrcp.pop %v1752
        %v1755 = vmul.f32 %v1744, %v1753
        %v1756 = vmul.f32 %v1746, %v1754
        %v1757 = vpack.c.bf16 %v1756, %v1755
        %v1760 = vunpack.c.l.b16 %v1694
        %v1761 = vunpack.c.l.b16 %v1695
        %v1762 = vpack.c.b16 %v1761, %v1760
        %v1765 = vsel %vm1554, %v1757, 0
        %1767 = vmatpush.bf16.msra.mxu0 0
        %1768 = vmatpush.bf16.msra.mxu0 0
        %1769 = vmatpush.bf16.msra.mxu0 0
        %1770 = vmatpush.bf16.msra.mxu0 0
        %1771 = vmatpush.bf16.msra.mxu0 0
        %1772 = vmatpush.bf16.msra.mxu0 0
        %1773 = vmatpush.bf16.msra.mxu0 0
        %1774 = vmatpush.bf16.msra.mxu0 %v1762
        %1775 = vmatmul.bf16.gmra.mxu0 %v1765
        %v1776 = vpop.f32.mrf.mxu0
        %v1777 = vadd.f32 0.0, %v1776
        %v1778 = vpop.f32.mrf.mxu0
        %v1779 = vadd.f32 0.0, %v1778
        %1780 = vdwg.mxu0
        %v1781 = vpack.c.bf16 %v1777, %v1777
        %v1782 = vpack.c.bf16 %v1779, %v1779
        %1783 = vst.msk [vmem:[#allocation3 + $0x8] sm:$0xf] %vm1603, %v1781
        %1784 = vst.msk [vmem:[#allocation3 + $0xc] sm:$0xf] %vm1603, %v1782
        %1785 = vrot.lane.b32.xlu0 %v1702, 64
        %v1786 = vpop.permute.xlu0 %1785
        %1787 = vrot.lane.b32.xlu0 %v1707, 64
        %v1788 = vpop.permute.xlu0 %1787
        %v1790 = vsel %vm1526, %v1786, 0
        %v1793 = vsel %vm1526, %v1788, 0
        %1795 = vmatpush.bf16.xpose.msra.mxu0 0
        %1796 = vmatpush.bf16.xpose.msra.mxu0 0
        %1797 = vmatpush.bf16.xpose.msra.mxu0 0
        %1798 = vmatpush.bf16.xpose.msra.mxu0 0
        %1799 = vmatpush.bf16.xpose.msra.mxu0 0
        %1800 = vmatpush.bf16.xpose.msra.mxu0 0
        %1801 = vmatpush.bf16.xpose.msra.mxu0 0
        %1802 = vmatpush.bf16.xpose.msra.mxu0 %v1793
        %1803 = vmatmul.bf16.gmra.mxu0 %v1790
        %v1804 = vpop.f32.mrf.mxu0
        %v1805 = vadd.f32 0.0, %v1804
        %v1806 = vpop.f32.mrf.mxu0
        %v1807 = vadd.f32 0.0, %v1806
        %1808 = vdwg.mxu0
        %v1809 = vmul.f32 %v1805, 0.125
        %v1810 = vmul.f32 %v1807, 0.125
        %v1811 = vadd.f32 %v1809, %v1731
        %v1812 = vadd.f32 %v1810, %v1731
        %v1813 = vsel %vm1554, %v1811, -inf
        %1814 = vmax.xlane.f32.xlu0 %v1813
        %v1815 = vpop.xlane.xlu0 %1814
        %v1816 = vsel %vm1554, %v1812, -inf
        %1817 = vmax.xlane.f32.xlu0 %v1816
        %v1818 = vpop.xlane.xlu0 %1817
        %v1819 = vsub.f32 %v1811, %v1815
        %v1820 = vsub.f32 %v1812, %v1818
        %v1821 = vmul.f32 %v1819, 1.442695
        %v1822 = vpow.pop %v1821
        %v1823 = vmul.f32 %v1820, 1.442695
        %v1824 = vpow.pop %v1823
        %v1825 = vsel %vm1554, %v1822, 0.0
        %1826 = vadd.xlane.f32.xlu0 %v1825
        %v1827 = vpop.xlane.xlu0 %1826
        %v1828 = vsel %vm1554, %v1824, 0.0
        %1829 = vadd.xlane.f32.xlu0 %v1828
        %v1830 = vpop.xlane.xlu0 %1829
        %v1831 = vrcp.pop %v1827
        %v1832 = vrcp.pop %v1830
        %v1833 = vmul.f32 %v1822, %v1831
        %v1834 = vmul.f32 %v1824, %v1832
        %v1835 = vpack.c.bf16 %v1834, %v1833
        %1836 = vrot.lane.b32.xlu0 %v1762, 64
        %v1837 = vpop.permute.xlu0 %1836
        %v1840 = vsel %vm1554, %v1835, 0
        %1842 = vmatpush.bf16.msra.mxu0 0
        %1843 = vmatpush.bf16.msra.mxu0 0
        %1844 = vmatpush.bf16.msra.mxu0 0
        %1845 = vmatpush.bf16.msra.mxu0 0
        %1846 = vmatpush.bf16.msra.mxu0 0
        %1847 = vmatpush.bf16.msra.mxu0 0
        %1848 = vmatpush.bf16.msra.mxu0 0
        %1849 = vmatpush.bf16.msra.mxu0 %v1837
        %1850 = vmatmul.bf16.gmra.mxu0 %v1840
        %v1851 = vpop.f32.mrf.mxu0
        %v1852 = vadd.f32 0.0, %v1851
        %v1853 = vpop.f32.mrf.mxu0
        %v1854 = vadd.f32 0.0, %v1853
        %1855 = vdwg.mxu0
        %v1856 = vpack.c.bf16 %v1852, %v1852
        %v1857 = vpack.c.bf16 %v1854, %v1854
        %1860 = vrot.lane.b32.xlu0 %v1856, 64
        %v1861 = vpop.permute.xlu0 %1860
        %1862 = vrot.lane.b32.xlu0 %v1857, 64
        %v1863 = vpop.permute.xlu0 %1862
        %1866 = vst.msk [vmem:[#allocation3 + $0x8] sm:$0xf] %vm1687, %v1861
        %1867 = vst.msk [vmem:[#allocation3 + $0xc] sm:$0xf] %vm1687, %v1863
        %v1868 = vld [vmem:[#allocation3] sm:$0xf]
        %v1869 = vld [vmem:[#allocation3 + $0x4] sm:$0xf]
        %v1870 = vld [vmem:[#allocation3 + $0x8] sm:$0xf]
        %v1871 = vld [vmem:[#allocation3 + $0xc] sm:$0xf]
        %v1872 = vld [vmem:[%s962] sm:$0xf]
        %v1873 = vld [vmem:[%s962 + $0x4] sm:$0xf]
        %v1874 = vld [vmem:[%s962 + $0x8] sm:$0xf]
        %v1875 = vld [vmem:[%s962 + $0xc] sm:$0xf]
        %v1876 = vld [vmem:[%s962 + $0x10] sm:$0xf]
        %v1877 = vld [vmem:[%s962 + $0x14] sm:$0xf]
        %v1878 = vld [vmem:[%s962 + $0x18] sm:$0xf]
        %v1879 = vld [vmem:[%s962 + $0x1c] sm:$0xf]
        %v1880 = vld [vmem:[%s962 + $0x20] sm:$0xf]
        %v1881 = vld [vmem:[%s962 + $0x24] sm:$0xf]
        %v1882 = vld [vmem:[%s962 + $0x28] sm:$0xf]
        %v1883 = vld [vmem:[%s962 + $0x2c] sm:$0xf]
        %v1884 = vld [vmem:[%s962 + $0x30] sm:$0xf]
        %v1885 = vld [vmem:[%s962 + $0x34] sm:$0xf]
        %v1886 = vld [vmem:[%s962 + $0x38] sm:$0xf]
        %v1887 = vld [vmem:[%s962 + $0x3c] sm:$0xf]
        %v1888 = vld [vmem:[%s971] sm:$0x1]
        %v1890 = vperm.slane %v1888, 0
        %v1896 = vunpack.c.l.b16 %v1868
        %v1897 = vunpack.c.l.b16 %v1869
        %v1898 = vunpack.c.l.b16 %v1870
        %v1899 = vunpack.c.l.b16 %v1871
        %v1900 = vpack.c.b16 %v1897, %v1896
        %v1901 = vpack.c.b16 %v1899, %v1898
        %v1920 = vunpack.c.l.b16 %v1872
        %v1921 = vunpack.c.l.b16 %v1873
        %v1922 = vunpack.c.l.b16 %v1874
        %v1923 = vunpack.c.l.b16 %v1875
        %v1924 = vunpack.c.l.b16 %v1876
        %v1925 = vunpack.c.l.b16 %v1877
        %v1926 = vunpack.c.l.b16 %v1878
        %v1927 = vunpack.c.l.b16 %v1879
        %v1928 = vunpack.c.l.b16 %v1880
        %v1929 = vunpack.c.l.b16 %v1881
        %v1930 = vunpack.c.l.b16 %v1882
        %v1931 = vunpack.c.l.b16 %v1883
        %v1932 = vunpack.c.l.b16 %v1884
        %v1933 = vunpack.c.l.b16 %v1885
        %v1934 = vunpack.c.l.b16 %v1886
        %v1935 = vunpack.c.l.b16 %v1887
        %v1936 = vpack.c.b16 %v1921, %v1920
        %v1937 = vpack.c.b16 %v1923, %v1922
        %v1938 = vpack.c.b16 %v1925, %v1924
        %v1939 = vpack.c.b16 %v1927, %v1926
        %v1940 = vpack.c.b16 %v1929, %v1928
        %v1941 = vpack.c.b16 %v1931, %v1930
        %v1942 = vpack.c.b16 %v1933, %v1932
        %v1943 = vpack.c.b16 %v1935, %v1934
        %1952 = vmatpush.bf16.msra.mxu0 %v1943
        %1953 = vmatpush.bf16.msra.mxu0 %v1942
        %1954 = vmatpush.bf16.msra.mxu0 %v1941
        %1955 = vmatpush.bf16.msra.mxu0 %v1940
        %1956 = vmatpush.bf16.msra.mxu0 %v1939
        %1957 = vmatpush.bf16.msra.mxu0 %v1938
        %1958 = vmatpush.bf16.msra.mxu0 %v1937
        %1959 = vmatpush.bf16.msra.mxu0 %v1936
        %1960 = vmatmul.bf16.gmra.mxu0 %v1900
        %v1961 = vpop.f32.mrf.mxu0
        %v1962 = vadd.f32 %v1890, %v1961
        %v1963 = vpop.f32.mrf.mxu0
        %v1964 = vadd.f32 %v1890, %v1963
        %1965 = vmatmul.bf16.gmra.mxu0 %v1901
        %v1966 = vpop.f32.mrf.mxu0
        %v1967 = vadd.f32 %v1890, %v1966
        %v1968 = vpop.f32.mrf.mxu0
        %v1969 = vadd.f32 %v1890, %v1968
        %1970 = vdwg.mxu0
        %v1971 = vadd.f32 %v1962, %v1278
        %v1972 = vadd.f32 %v1964, %v1279
        %v1973 = vadd.f32 %v1967, %v1280
        %v1974 = vadd.f32 %v1969, %v1281
        %v1975 = vld [vmem:[%s980] sm:$0x1]
        %v1976 = vld [vmem:[%s989] sm:$0x1]
        %1977 = vadd.xlane.f32.xlu0 %v1971
        %v1978 = vpop.xlane.xlu0 %1977
        %1979 = vadd.xlane.f32.xlu0 %v1972
        %v1980 = vpop.xlane.xlu0 %1979
        %1981 = vadd.xlane.f32.xlu0 %v1973
        %v1982 = vpop.xlane.xlu0 %1981
        %1983 = vadd.xlane.f32.xlu0 %v1974
        %v1984 = vpop.xlane.xlu0 %1983
        %v1985 = vrcp.pop 128.0
        %v1986 = vmul.f32 128.0, %v1985
        %v1987 = vsub.f32 1.0, %v1986
        %v1988 = vmul.f32 %v1985, %v1987
        %v1989 = vadd.f32 %v1985, %v1988
        %vm1990 = vweird.f32 %v1985
        %v1991 = vsel %vm1990, %v1985, %v1989
        %v1992 = vmul.f32 %v1978, %v1991
        %v1993 = vmul.f32 %v1980, %v1991
        %v1994 = vmul.f32 %v1982, %v1991
        %v1995 = vmul.f32 %v1984, %v1991
        %v1996 = vsub.f32 %v1971, %v1992
        %v1997 = vsub.f32 %v1972, %v1993
        %v1998 = vsub.f32 %v1973, %v1994
        %v1999 = vsub.f32 %v1974, %v1995
        %v2000 = vmul.f32 %v1996, %v1996
        %v2001 = vmul.f32 %v1997, %v1997
        %v2002 = vmul.f32 %v1998, %v1998
        %v2003 = vmul.f32 %v1999, %v1999
        %2004 = vadd.xlane.f32.xlu0 %v2000
        %v2005 = vpop.xlane.xlu0 %2004
        %2006 = vadd.xlane.f32.xlu0 %v2001
        %v2007 = vpop.xlane.xlu0 %2006
        %2008 = vadd.xlane.f32.xlu0 %v2002
        %v2009 = vpop.xlane.xlu0 %2008
        %2010 = vadd.xlane.f32.xlu0 %v2003
        %v2011 = vpop.xlane.xlu0 %2010
        %v2012 = vmul.f32 %v2005, %v1991
        %v2013 = vmul.f32 %v2007, %v1991
        %v2014 = vmul.f32 %v2009, %v1991
        %v2015 = vmul.f32 %v2011, %v1991
        %v2016 = vadd.f32 %v2012, 1e-05
        %v2017 = vadd.f32 %v2013, 1e-05
        %v2018 = vadd.f32 %v2014, 1e-05
        %v2019 = vadd.f32 %v2015, 1e-05
        %v2020 = vrsqrt.pop %v2016
        %v2021 = vmul.f32 %v2020, %v2016
        %v2022 = vmul.f32 %v2021, %v2020
        %v2023 = vmul.f32 0.5, %v2022
        %v2024 = vsub.f32 1.5, %v2023
        %v2025 = vmul.f32 %v2020, %v2024
        %vm2026 = vweird.f32 %v2016
        %vm2027 = vweird.f32 %v2020
        %vm2028 = vmor %vm2026, %vm2027
        %v2029 = vsel %vm2028, %v2020, %v2025
        %v2030 = vrsqrt.pop %v2017
        %v2031 = vmul.f32 %v2030, %v2017
        %v2032 = vmul.f32 %v2031, %v2030
        %v2033 = vmul.f32 0.5, %v2032
        %v2034 = vsub.f32 1.5, %v2033
        %v2035 = vmul.f32 %v2030, %v2034
        %vm2036 = vweird.f32 %v2017
        %vm2037 = vweird.f32 %v2030
        %vm2038 = vmor %vm2036, %vm2037
        %v2039 = vsel %vm2038, %v2030, %v2035
        %v2040 = vrsqrt.pop %v2018
        %v2041 = vmul.f32 %v2040, %v2018
        %v2042 = vmul.f32 %v2041, %v2040
        %v2043 = vmul.f32 0.5, %v2042
        %v2044 = vsub.f32 1.5, %v2043
        %v2045 = vmul.f32 %v2040, %v2044
        %vm2046 = vweird.f32 %v2018
        %vm2047 = vweird.f32 %v2040
        %vm2048 = vmor %vm2046, %vm2047
        %v2049 = vsel %vm2048, %v2040, %v2045
        %v2050 = vrsqrt.pop %v2019
        %v2051 = vmul.f32 %v2050, %v2019
        %v2052 = vmul.f32 %v2051, %v2050
        %v2053 = vmul.f32 0.5, %v2052
        %v2054 = vsub.f32 1.5, %v2053
        %v2055 = vmul.f32 %v2050, %v2054
        %vm2056 = vweird.f32 %v2019
        %vm2057 = vweird.f32 %v2050
        %vm2058 = vmor %vm2056, %vm2057
        %v2059 = vsel %vm2058, %v2050, %v2055
        %v2060 = vmul.f32 %v1996, %v2029
        %v2061 = vmul.f32 %v1997, %v2039
        %v2062 = vmul.f32 %v1998, %v2049
        %v2063 = vmul.f32 %v1999, %v2059
        %v2065 = vperm.slane %v1975, 0
        %v2067 = vmul.f32 %v2060, %v2065
        %v2068 = vmul.f32 %v2061, %v2065
        %v2069 = vmul.f32 %v2062, %v2065
        %v2070 = vmul.f32 %v2063, %v2065
        %v2072 = vperm.slane %v1976, 0
        %v2074 = vadd.f32 %v2067, %v2072
        %v2075 = vadd.f32 %v2068, %v2072
        %v2076 = vadd.f32 %v2069, %v2072
        %v2077 = vadd.f32 %v2070, %v2072
        %v2078 = vpack.c.bf16 %v2075, %v2074
        %v2079 = vpack.c.bf16 %v2077, %v2076
        %v2080 = vld [vmem:[%s999] sm:$0xff]
        %v2081 = vld [vmem:[%s999 + $0x8] sm:$0xff]
        %v2082 = vld [vmem:[%s999 + $0x10] sm:$0xff]
        %v2083 = vld [vmem:[%s999 + $0x18] sm:$0xff]
        %v2084 = vld [vmem:[%s999 + $0x20] sm:$0xff]
        %v2085 = vld [vmem:[%s999 + $0x28] sm:$0xff]
        %v2086 = vld [vmem:[%s999 + $0x30] sm:$0xff]
        %v2087 = vld [vmem:[%s999 + $0x38] sm:$0xff]
        %v2088 = vld [vmem:[%s999 + $0x40] sm:$0xff]
        %v2089 = vld [vmem:[%s999 + $0x48] sm:$0xff]
        %v2090 = vld [vmem:[%s999 + $0x50] sm:$0xff]
        %v2091 = vld [vmem:[%s999 + $0x58] sm:$0xff]
        %v2092 = vld [vmem:[%s999 + $0x60] sm:$0xff]
        %v2093 = vld [vmem:[%s999 + $0x68] sm:$0xff]
        %v2094 = vld [vmem:[%s999 + $0x70] sm:$0xff]
        %v2095 = vld [vmem:[%s999 + $0x78] sm:$0xff]
        %v2096 = vld [vmem:[%s1125] sm:$0x3]
        %v2098 = vperm.slane %v2096, 0
        %v2099 = vperm.slane %v2096, 1
        %v2118 = vunpack.c.l.b16 %v2080
        %v2119 = vunpack.c.h.b16 %v2080
        %v2120 = vunpack.c.l.b16 %v2081
        %v2121 = vunpack.c.h.b16 %v2081
        %v2122 = vunpack.c.l.b16 %v2082
        %v2123 = vunpack.c.h.b16 %v2082
        %v2124 = vunpack.c.l.b16 %v2083
        %v2125 = vunpack.c.h.b16 %v2083
        %v2126 = vunpack.c.l.b16 %v2084
        %v2127 = vunpack.c.h.b16 %v2084
        %v2128 = vunpack.c.l.b16 %v2085
        %v2129 = vunpack.c.h.b16 %v2085
        %v2130 = vunpack.c.l.b16 %v2086
        %v2131 = vunpack.c.h.b16 %v2086
        %v2132 = vunpack.c.l.b16 %v2087
        %v2133 = vunpack.c.h.b16 %v2087
        %v2134 = vunpack.c.l.b16 %v2088
        %v2135 = vunpack.c.h.b16 %v2088
        %v2136 = vunpack.c.l.b16 %v2089
        %v2137 = vunpack.c.h.b16 %v2089
        %v2138 = vunpack.c.l.b16 %v2090
        %v2139 = vunpack.c.h.b16 %v2090
        %v2140 = vunpack.c.l.b16 %v2091
        %v2141 = vunpack.c.h.b16 %v2091
        %v2142 = vunpack.c.l.b16 %v2092
        %v2143 = vunpack.c.h.b16 %v2092
        %v2144 = vunpack.c.l.b16 %v2093
        %v2145 = vunpack.c.h.b16 %v2093
        %v2146 = vunpack.c.l.b16 %v2094
        %v2147 = vunpack.c.h.b16 %v2094
        %v2148 = vunpack.c.l.b16 %v2095
        %v2149 = vunpack.c.h.b16 %v2095
        %v2150 = vpack.c.b16 %v2120, %v2118
        %v2151 = vpack.c.b16 %v2121, %v2119
        %v2152 = vpack.c.b16 %v2124, %v2122
        %v2153 = vpack.c.b16 %v2125, %v2123
        %v2154 = vpack.c.b16 %v2128, %v2126
        %v2155 = vpack.c.b16 %v2129, %v2127
        %v2156 = vpack.c.b16 %v2132, %v2130
        %v2157 = vpack.c.b16 %v2133, %v2131
        %v2158 = vpack.c.b16 %v2136, %v2134
        %v2159 = vpack.c.b16 %v2137, %v2135
        %v2160 = vpack.c.b16 %v2140, %v2138
        %v2161 = vpack.c.b16 %v2141, %v2139
        %v2162 = vpack.c.b16 %v2144, %v2142
        %v2163 = vpack.c.b16 %v2145, %v2143
        %v2164 = vpack.c.b16 %v2148, %v2146
        %v2165 = vpack.c.b16 %v2149, %v2147
        %2182 = vmatpush.bf16.msra.mxu0 %v2164
        %2183 = vmatpush.bf16.msra.mxu0 %v2162
        %2184 = vmatpush.bf16.msra.mxu0 %v2160
        %2185 = vmatpush.bf16.msra.mxu0 %v2158
        %2186 = vmatpush.bf16.msra.mxu0 %v2156
        %2187 = vmatpush.bf16.msra.mxu0 %v2154
        %2188 = vmatpush.bf16.msra.mxu0 %v2152
        %2189 = vmatpush.bf16.msra.mxu0 %v2150
        %2190 = vmatmul.bf16.gmra.mxu0 %v2078
        %v2191 = vpop.f32.mrf.mxu0
        %v2192 = vadd.f32 %v2098, %v2191
        %v2193 = vpop.f32.mrf.mxu0
        %v2194 = vadd.f32 %v2098, %v2193
        %2195 = vmatmul.bf16.gmra.mxu0 %v2079
        %v2196 = vpop.f32.mrf.mxu0
        %v2197 = vadd.f32 %v2098, %v2196
        %v2198 = vpop.f32.mrf.mxu0
        %v2199 = vadd.f32 %v2098, %v2198
        %2200 = vdwg.mxu0
        %2201 = vmatpush.bf16.msra.mxu0 %v2165
        %2202 = vmatpush.bf16.msra.mxu0 %v2163
        %2203 = vmatpush.bf16.msra.mxu0 %v2161
        %2204 = vmatpush.bf16.msra.mxu0 %v2159
        %2205 = vmatpush.bf16.msra.mxu0 %v2157
        %2206 = vmatpush.bf16.msra.mxu0 %v2155
        %2207 = vmatpush.bf16.msra.mxu0 %v2153
        %2208 = vmatpush.bf16.msra.mxu0 %v2151
        %2209 = vmatmul.bf16.gmra.mxu0 %v2078
        %v2210 = vpop.f32.mrf.mxu0
        %v2211 = vadd.f32 %v2099, %v2210
        %v2212 = vpop.f32.mrf.mxu0
        %v2213 = vadd.f32 %v2099, %v2212
        %2214 = vmatmul.bf16.gmra.mxu0 %v2079
        %v2215 = vpop.f32.mrf.mxu0
        %v2216 = vadd.f32 %v2099, %v2215
        %v2217 = vpop.f32.mrf.mxu0
        %v2218 = vadd.f32 %v2099, %v2217
        %2219 = vdwg.mxu0
        %v2220 = vmul.f32 %v2192, 0.5
        %v2221 = vmul.f32 %v2211, 0.5
        %v2222 = vmul.f32 %v2194, 0.5
        %v2223 = vmul.f32 %v2213, 0.5
        %v2224 = vmul.f32 %v2197, 0.5
        %v2225 = vmul.f32 %v2216, 0.5
        %v2226 = vmul.f32 %v2199, 0.5
        %v2227 = vmul.f32 %v2218, 0.5
        %v2228 = vrcp.pop 1.4142135
        %v2229 = vmul.f32 1.4142135, %v2228
        %v2230 = vsub.f32 1.0, %v2229
        %v2231 = vmul.f32 %v2228, %v2230
        %v2232 = vadd.f32 %v2228, %v2231
        %vm2233 = vweird.f32 %v2228
        %v2234 = vsel %vm2233, %v2228, %v2232
        %v2235 = vmul.f32 %v2192, %v2234
        %v2236 = vmul.f32 %v2211, %v2234
        %v2237 = vmul.f32 %v2194, %v2234
        %v2238 = vmul.f32 %v2213, %v2234
        %v2239 = vmul.f32 %v2197, %v2234
        %v2240 = vmul.f32 %v2216, %v2234
        %v2241 = vmul.f32 %v2199, %v2234
        %v2242 = vmul.f32 %v2218, %v2234
        %v2243 = vmul.f32 %v2235, %v2235
        %v2244 = vmin.f32 16.0, %v2243
        %v2245 = vmul.f32 %v2244, 2.1237322e-06
        %v2246 = vadd.f32 %v2245, 0.00028619796
        %v2247 = vmul.f32 %v2244, %v2246
        %v2248 = vadd.f32 %v2247, 0.0036580483
        %v2249 = vmul.f32 %v2244, %v2248
        %v2250 = vadd.f32 %v2249, 0.05243302
        %v2251 = vmul.f32 %v2244, %v2250
        %v2252 = vadd.f32 %v2251, 0.18741608
        %v2253 = vmul.f32 %v2244, %v2252
        %v2254 = vadd.f32 %v2253, 1.1283791
        %v2255 = vmul.f32 %v2235, %v2254
        %v2256 = vmul.f32 %v2244, 3.8918573e-05
        %v2257 = vadd.f32 %v2256, 0.001143296
        %v2258 = vmul.f32 %v2244, %v2257
        %v2259 = vadd.f32 %v2258, 0.014752088
        %v2260 = vmul.f32 %v2244, %v2259
        %v2261 = vadd.f32 %v2260, 0.112945676
        %v2262 = vmul.f32 %v2244, %v2261
        %v2263 = vadd.f32 %v2262, 0.4994258
        %v2264 = vmul.f32 %v2244, %v2263
        %v2265 = vadd.f32 %v2264, 1.0
        %v2266 = vrcp.pop %v2265
        %v2267 = vmul.f32 %v2265, %v2266
        %v2268 = vsub.f32 1.0, %v2267
        %v2269 = vmul.f32 %v2266, %v2268
        %v2270 = vadd.f32 %v2266, %v2269
        %vm2271 = vweird.f32 %v2265
        %vm2272 = vweird.f32 %v2266
        %vm2273 = vmor %vm2271, %vm2272
        %v2274 = vsel %vm2273, %v2266, %v2270
        %v2275 = vand.u32 2147483647, %v2265
        %vm2276 = vcmp.eq.f32.partialorder %v2275, 8.507059e+37
        %v2277 = vand.u32 %v2265, 2147483648
        %v2278 = vor.u32 1.1754944e-38, %v2277
        %v2279 = vsel %vm2276, %v2278, %v2274
        %v2280 = vmul.f32 %v2255, %v2279
        %v2281 = vmin.f32 %v2280, 1.0
        %v2282 = vmax.f32 %v2281, -1.0
        %v2283 = vmul.f32 %v2236, %v2236
        %v2284 = vmin.f32 16.0, %v2283
        %v2285 = vmul.f32 %v2284, 2.1237322e-06
        %v2286 = vadd.f32 %v2285, 0.00028619796
        %v2287 = vmul.f32 %v2284, %v2286
        %v2288 = vadd.f32 %v2287, 0.0036580483
        %v2289 = vmul.f32 %v2284, %v2288
        %v2290 = vadd.f32 %v2289, 0.05243302
        %v2291 = vmul.f32 %v2284, %v2290
        %v2292 = vadd.f32 %v2291, 0.18741608
        %v2293 = vmul.f32 %v2284, %v2292
        %v2294 = vadd.f32 %v2293, 1.1283791
        %v2295 = vmul.f32 %v2236, %v2294
        %v2296 = vmul.f32 %v2284, 3.8918573e-05
        %v2297 = vadd.f32 %v2296, 0.001143296
        %v2298 = vmul.f32 %v2284, %v2297
        %v2299 = vadd.f32 %v2298, 0.014752088
        %v2300 = vmul.f32 %v2284, %v2299
        %v2301 = vadd.f32 %v2300, 0.112945676
        %v2302 = vmul.f32 %v2284, %v2301
        %v2303 = vadd.f32 %v2302, 0.4994258
        %v2304 = vmul.f32 %v2284, %v2303
        %v2305 = vadd.f32 %v2304, 1.0
        %v2306 = vrcp.pop %v2305
        %v2307 = vmul.f32 %v2305, %v2306
        %v2308 = vsub.f32 1.0, %v2307
        %v2309 = vmul.f32 %v2306, %v2308
        %v2310 = vadd.f32 %v2306, %v2309
        %vm2311 = vweird.f32 %v2305
        %vm2312 = vweird.f32 %v2306
        %vm2313 = vmor %vm2311, %vm2312
        %v2314 = vsel %vm2313, %v2306, %v2310
        %v2315 = vand.u32 2147483647, %v2305
        %vm2316 = vcmp.eq.f32.partialorder %v2315, 8.507059e+37
        %v2317 = vand.u32 %v2305, 2147483648
        %v2318 = vor.u32 1.1754944e-38, %v2317
        %v2319 = vsel %vm2316, %v2318, %v2314
        %v2320 = vmul.f32 %v2295, %v2319
        %v2321 = vmin.f32 %v2320, 1.0
        %v2322 = vmax.f32 %v2321, -1.0
        %v2323 = vmul.f32 %v2237, %v2237
        %v2324 = vmin.f32 16.0, %v2323
        %v2325 = vmul.f32 %v2324, 2.1237322e-06
        %v2326 = vadd.f32 %v2325, 0.00028619796
        %v2327 = vmul.f32 %v2324, %v2326
        %v2328 = vadd.f32 %v2327, 0.0036580483
        %v2329 = vmul.f32 %v2324, %v2328
        %v2330 = vadd.f32 %v2329, 0.05243302
        %v2331 = vmul.f32 %v2324, %v2330
        %v2332 = vadd.f32 %v2331, 0.18741608
        %v2333 = vmul.f32 %v2324, %v2332
        %v2334 = vadd.f32 %v2333, 1.1283791
        %v2335 = vmul.f32 %v2237, %v2334
        %v2336 = vmul.f32 %v2324, 3.8918573e-05
        %v2337 = vadd.f32 %v2336, 0.001143296
        %v2338 = vmul.f32 %v2324, %v2337
        %v2339 = vadd.f32 %v2338, 0.014752088
        %v2340 = vmul.f32 %v2324, %v2339
        %v2341 = vadd.f32 %v2340, 0.112945676
        %v2342 = vmul.f32 %v2324, %v2341
        %v2343 = vadd.f32 %v2342, 0.4994258
        %v2344 = vmul.f32 %v2324, %v2343
        %v2345 = vadd.f32 %v2344, 1.0
        %v2346 = vrcp.pop %v2345
        %v2347 = vmul.f32 %v2345, %v2346
        %v2348 = vsub.f32 1.0, %v2347
        %v2349 = vmul.f32 %v2346, %v2348
        %v2350 = vadd.f32 %v2346, %v2349
        %vm2351 = vweird.f32 %v2345
        %vm2352 = vweird.f32 %v2346
        %vm2353 = vmor %vm2351, %vm2352
        %v2354 = vsel %vm2353, %v2346, %v2350
        %v2355 = vand.u32 2147483647, %v2345
        %vm2356 = vcmp.eq.f32.partialorder %v2355, 8.507059e+37
        %v2357 = vand.u32 %v2345, 2147483648
        %v2358 = vor.u32 1.1754944e-38, %v2357
        %v2359 = vsel %vm2356, %v2358, %v2354
        %v2360 = vmul.f32 %v2335, %v2359
        %v2361 = vmin.f32 %v2360, 1.0
        %v2362 = vmax.f32 %v2361, -1.0
        %v2363 = vmul.f32 %v2238, %v2238
        %v2364 = vmin.f32 16.0, %v2363
        %v2365 = vmul.f32 %v2364, 2.1237322e-06
        %v2366 = vadd.f32 %v2365, 0.00028619796
        %v2367 = vmul.f32 %v2364, %v2366
        %v2368 = vadd.f32 %v2367, 0.0036580483
        %v2369 = vmul.f32 %v2364, %v2368
        %v2370 = vadd.f32 %v2369, 0.05243302
        %v2371 = vmul.f32 %v2364, %v2370
        %v2372 = vadd.f32 %v2371, 0.18741608
        %v2373 = vmul.f32 %v2364, %v2372
        %v2374 = vadd.f32 %v2373, 1.1283791
        %v2375 = vmul.f32 %v2238, %v2374
        %v2376 = vmul.f32 %v2364, 3.8918573e-05
        %v2377 = vadd.f32 %v2376, 0.001143296
        %v2378 = vmul.f32 %v2364, %v2377
        %v2379 = vadd.f32 %v2378, 0.014752088
        %v2380 = vmul.f32 %v2364, %v2379
        %v2381 = vadd.f32 %v2380, 0.112945676
        %v2382 = vmul.f32 %v2364, %v2381
        %v2383 = vadd.f32 %v2382, 0.4994258
        %v2384 = vmul.f32 %v2364, %v2383
        %v2385 = vadd.f32 %v2384, 1.0
        %v2386 = vrcp.pop %v2385
        %v2387 = vmul.f32 %v2385, %v2386
        %v2388 = vsub.f32 1.0, %v2387
        %v2389 = vmul.f32 %v2386, %v2388
        %v2390 = vadd.f32 %v2386, %v2389
        %vm2391 = vweird.f32 %v2385
        %vm2392 = vweird.f32 %v2386
        %vm2393 = vmor %vm2391, %vm2392
        %v2394 = vsel %vm2393, %v2386, %v2390
        %v2395 = vand.u32 2147483647, %v2385
        %vm2396 = vcmp.eq.f32.partialorder %v2395, 8.507059e+37
        %v2397 = vand.u32 %v2385, 2147483648
        %v2398 = vor.u32 1.1754944e-38, %v2397
        %v2399 = vsel %vm2396, %v2398, %v2394
        %v2400 = vmul.f32 %v2375, %v2399
        %v2401 = vmin.f32 %v2400, 1.0
        %v2402 = vmax.f32 %v2401, -1.0
        %v2403 = vmul.f32 %v2239, %v2239
        %v2404 = vmin.f32 16.0, %v2403
        %v2405 = vmul.f32 %v2404, 2.1237322e-06
        %v2406 = vadd.f32 %v2405, 0.00028619796
        %v2407 = vmul.f32 %v2404, %v2406
        %v2408 = vadd.f32 %v2407, 0.0036580483
        %v2409 = vmul.f32 %v2404, %v2408
        %v2410 = vadd.f32 %v2409, 0.05243302
        %v2411 = vmul.f32 %v2404, %v2410
        %v2412 = vadd.f32 %v2411, 0.18741608
        %v2413 = vmul.f32 %v2404, %v2412
        %v2414 = vadd.f32 %v2413, 1.1283791
        %v2415 = vmul.f32 %v2239, %v2414
        %v2416 = vmul.f32 %v2404, 3.8918573e-05
        %v2417 = vadd.f32 %v2416, 0.001143296
        %v2418 = vmul.f32 %v2404, %v2417
        %v2419 = vadd.f32 %v2418, 0.014752088
        %v2420 = vmul.f32 %v2404, %v2419
        %v2421 = vadd.f32 %v2420, 0.112945676
        %v2422 = vmul.f32 %v2404, %v2421
        %v2423 = vadd.f32 %v2422, 0.4994258
        %v2424 = vmul.f32 %v2404, %v2423
        %v2425 = vadd.f32 %v2424, 1.0
        %v2426 = vrcp.pop %v2425
        %v2427 = vmul.f32 %v2425, %v2426
        %v2428 = vsub.f32 1.0, %v2427
        %v2429 = vmul.f32 %v2426, %v2428
        %v2430 = vadd.f32 %v2426, %v2429
        %vm2431 = vweird.f32 %v2425
        %vm2432 = vweird.f32 %v2426
        %vm2433 = vmor %vm2431, %vm2432
        %v2434 = vsel %vm2433, %v2426, %v2430
        %v2435 = vand.u32 2147483647, %v2425
        %vm2436 = vcmp.eq.f32.partialorder %v2435, 8.507059e+37
        %v2437 = vand.u32 %v2425, 2147483648
        %v2438 = vor.u32 1.1754944e-38, %v2437
        %v2439 = vsel %vm2436, %v2438, %v2434
        %v2440 = vmul.f32 %v2415, %v2439
        %v2441 = vmin.f32 %v2440, 1.0
        %v2442 = vmax.f32 %v2441, -1.0
        %v2443 = vmul.f32 %v2240, %v2240
        %v2444 = vmin.f32 16.0, %v2443
        %v2445 = vmul.f32 %v2444, 2.1237322e-06
        %v2446 = vadd.f32 %v2445, 0.00028619796
        %v2447 = vmul.f32 %v2444, %v2446
        %v2448 = vadd.f32 %v2447, 0.0036580483
        %v2449 = vmul.f32 %v2444, %v2448
        %v2450 = vadd.f32 %v2449, 0.05243302
        %v2451 = vmul.f32 %v2444, %v2450
        %v2452 = vadd.f32 %v2451, 0.18741608
        %v2453 = vmul.f32 %v2444, %v2452
        %v2454 = vadd.f32 %v2453, 1.1283791
        %v2455 = vmul.f32 %v2240, %v2454
        %v2456 = vmul.f32 %v2444, 3.8918573e-05
        %v2457 = vadd.f32 %v2456, 0.001143296
        %v2458 = vmul.f32 %v2444, %v2457
        %v2459 = vadd.f32 %v2458, 0.014752088
        %v2460 = vmul.f32 %v2444, %v2459
        %v2461 = vadd.f32 %v2460, 0.112945676
        %v2462 = vmul.f32 %v2444, %v2461
        %v2463 = vadd.f32 %v2462, 0.4994258
        %v2464 = vmul.f32 %v2444, %v2463
        %v2465 = vadd.f32 %v2464, 1.0
        %v2466 = vrcp.pop %v2465
        %v2467 = vmul.f32 %v2465, %v2466
        %v2468 = vsub.f32 1.0, %v2467
        %v2469 = vmul.f32 %v2466, %v2468
        %v2470 = vadd.f32 %v2466, %v2469
        %vm2471 = vweird.f32 %v2465
        %vm2472 = vweird.f32 %v2466
        %vm2473 = vmor %vm2471, %vm2472
        %v2474 = vsel %vm2473, %v2466, %v2470
        %v2475 = vand.u32 2147483647, %v2465
        %vm2476 = vcmp.eq.f32.partialorder %v2475, 8.507059e+37
        %v2477 = vand.u32 %v2465, 2147483648
        %v2478 = vor.u32 1.1754944e-38, %v2477
        %v2479 = vsel %vm2476, %v2478, %v2474
        %v2480 = vmul.f32 %v2455, %v2479
        %v2481 = vmin.f32 %v2480, 1.0
        %v2482 = vmax.f32 %v2481, -1.0
        %v2483 = vmul.f32 %v2241, %v2241
        %v2484 = vmin.f32 16.0, %v2483
        %v2485 = vmul.f32 %v2484, 2.1237322e-06
        %v2486 = vadd.f32 %v2485, 0.00028619796
        %v2487 = vmul.f32 %v2484, %v2486
        %v2488 = vadd.f32 %v2487, 0.0036580483
        %v2489 = vmul.f32 %v2484, %v2488
        %v2490 = vadd.f32 %v2489, 0.05243302
        %v2491 = vmul.f32 %v2484, %v2490
        %v2492 = vadd.f32 %v2491, 0.18741608
        %v2493 = vmul.f32 %v2484, %v2492
        %v2494 = vadd.f32 %v2493, 1.1283791
        %v2495 = vmul.f32 %v2241, %v2494
        %v2496 = vmul.f32 %v2484, 3.8918573e-05
        %v2497 = vadd.f32 %v2496, 0.001143296
        %v2498 = vmul.f32 %v2484, %v2497
        %v2499 = vadd.f32 %v2498, 0.014752088
        %v2500 = vmul.f32 %v2484, %v2499
        %v2501 = vadd.f32 %v2500, 0.112945676
        %v2502 = vmul.f32 %v2484, %v2501
        %v2503 = vadd.f32 %v2502, 0.4994258
        %v2504 = vmul.f32 %v2484, %v2503
        %v2505 = vadd.f32 %v2504, 1.0
        %v2506 = vrcp.pop %v2505
        %v2507 = vmul.f32 %v2505, %v2506
        %v2508 = vsub.f32 1.0, %v2507
        %v2509 = vmul.f32 %v2506, %v2508
        %v2510 = vadd.f32 %v2506, %v2509
        %vm2511 = vweird.f32 %v2505
        %vm2512 = vweird.f32 %v2506
        %vm2513 = vmor %vm2511, %vm2512
        %v2514 = vsel %vm2513, %v2506, %v2510
        %v2515 = vand.u32 2147483647, %v2505
        %vm2516 = vcmp.eq.f32.partialorder %v2515, 8.507059e+37
        %v2517 = vand.u32 %v2505, 2147483648
        %v2518 = vor.u32 1.1754944e-38, %v2517
        %v2519 = vsel %vm2516, %v2518, %v2514
        %v2520 = vmul.f32 %v2495, %v2519
        %v2521 = vmin.f32 %v2520, 1.0
        %v2522 = vmax.f32 %v2521, -1.0
        %v2523 = vmul.f32 %v2242, %v2242
        %v2524 = vmin.f32 16.0, %v2523
        %v2525 = vmul.f32 %v2524, 2.1237322e-06
        %v2526 = vadd.f32 %v2525, 0.00028619796
        %v2527 = vmul.f32 %v2524, %v2526
        %v2528 = vadd.f32 %v2527, 0.0036580483
        %v2529 = vmul.f32 %v2524, %v2528
        %v2530 = vadd.f32 %v2529, 0.05243302
        %v2531 = vmul.f32 %v2524, %v2530
        %v2532 = vadd.f32 %v2531, 0.18741608
        %v2533 = vmul.f32 %v2524, %v2532
        %v2534 = vadd.f32 %v2533, 1.1283791
        %v2535 = vmul.f32 %v2242, %v2534
        %v2536 = vmul.f32 %v2524, 3.8918573e-05
        %v2537 = vadd.f32 %v2536, 0.001143296
        %v2538 = vmul.f32 %v2524, %v2537
        %v2539 = vadd.f32 %v2538, 0.014752088
        %v2540 = vmul.f32 %v2524, %v2539
        %v2541 = vadd.f32 %v2540, 0.112945676
        %v2542 = vmul.f32 %v2524, %v2541
        %v2543 = vadd.f32 %v2542, 0.4994258
        %v2544 = vmul.f32 %v2524, %v2543
        %v2545 = vadd.f32 %v2544, 1.0
        %v2546 = vrcp.pop %v2545
        %v2547 = vmul.f32 %v2545, %v2546
        %v2548 = vsub.f32 1.0, %v2547
        %v2549 = vmul.f32 %v2546, %v2548
        %v2550 = vadd.f32 %v2546, %v2549
        %vm2551 = vweird.f32 %v2545
        %vm2552 = vweird.f32 %v2546
        %vm2553 = vmor %vm2551, %vm2552
        %v2554 = vsel %vm2553, %v2546, %v2550
        %v2555 = vand.u32 2147483647, %v2545
        %vm2556 = vcmp.eq.f32.partialorder %v2555, 8.507059e+37
        %v2557 = vand.u32 %v2545, 2147483648
        %v2558 = vor.u32 1.1754944e-38, %v2557
        %v2559 = vsel %vm2556, %v2558, %v2554
        %v2560 = vmul.f32 %v2535, %v2559
        %v2561 = vmin.f32 %v2560, 1.0
        %v2562 = vmax.f32 %v2561, -1.0
        %v2563 = vadd.f32 %v2282, 1.0
        %v2564 = vadd.f32 %v2322, 1.0
        %v2565 = vadd.f32 %v2362, 1.0
        %v2566 = vadd.f32 %v2402, 1.0
        %v2567 = vadd.f32 %v2442, 1.0
        %v2568 = vadd.f32 %v2482, 1.0
        %v2569 = vadd.f32 %v2522, 1.0
        %v2570 = vadd.f32 %v2562, 1.0
        %v2571 = vmul.f32 %v2220, %v2563
        %v2572 = vmul.f32 %v2221, %v2564
        %v2573 = vmul.f32 %v2222, %v2565
        %v2574 = vmul.f32 %v2223, %v2566
        %v2575 = vmul.f32 %v2224, %v2567
        %v2576 = vmul.f32 %v2225, %v2568
        %v2577 = vmul.f32 %v2226, %v2569
        %v2578 = vmul.f32 %v2227, %v2570
        %v2579 = vpack.c.bf16 %v2573, %v2571
        %v2580 = vpack.c.bf16 %v2574, %v2572
        %v2581 = vpack.c.bf16 %v2577, %v2575
        %v2582 = vpack.c.bf16 %v2578, %v2576
        %v2583 = vld [vmem:[%s1009] sm:$0xf]
        %v2584 = vld [vmem:[%s1009 + $0x4] sm:$0xf]
        %v2585 = vld [vmem:[%s1009 + $0x8] sm:$0xf]
        %v2586 = vld [vmem:[%s1009 + $0xc] sm:$0xf]
        %v2587 = vld [vmem:[%s1009 + $0x10] sm:$0xf]
        %v2588 = vld [vmem:[%s1009 + $0x14] sm:$0xf]
        %v2589 = vld [vmem:[%s1009 + $0x18] sm:$0xf]
        %v2590 = vld [vmem:[%s1009 + $0x1c] sm:$0xf]
        %v2591 = vld [vmem:[%s1009 + $0x20] sm:$0xf]
        %v2592 = vld [vmem:[%s1009 + $0x24] sm:$0xf]
        %v2593 = vld [vmem:[%s1009 + $0x28] sm:$0xf]
        %v2594 = vld [vmem:[%s1009 + $0x2c] sm:$0xf]
        %v2595 = vld [vmem:[%s1009 + $0x30] sm:$0xf]
        %v2596 = vld [vmem:[%s1009 + $0x34] sm:$0xf]
        %v2597 = vld [vmem:[%s1009 + $0x38] sm:$0xf]
        %v2598 = vld [vmem:[%s1009 + $0x3c] sm:$0xf]
        %v2599 = vld [vmem:[%s1009 + $0x40] sm:$0xf]
        %v2600 = vld [vmem:[%s1009 + $0x44] sm:$0xf]
        %v2601 = vld [vmem:[%s1009 + $0x48] sm:$0xf]
        %v2602 = vld [vmem:[%s1009 + $0x4c] sm:$0xf]
        %v2603 = vld [vmem:[%s1009 + $0x50] sm:$0xf]
        %v2604 = vld [vmem:[%s1009 + $0x54] sm:$0xf]
        %v2605 = vld [vmem:[%s1009 + $0x58] sm:$0xf]
        %v2606 = vld [vmem:[%s1009 + $0x5c] sm:$0xf]
        %v2607 = vld [vmem:[%s1009 + $0x60] sm:$0xf]
        %v2608 = vld [vmem:[%s1009 + $0x64] sm:$0xf]
        %v2609 = vld [vmem:[%s1009 + $0x68] sm:$0xf]
        %v2610 = vld [vmem:[%s1009 + $0x6c] sm:$0xf]
        %v2611 = vld [vmem:[%s1009 + $0x70] sm:$0xf]
        %v2612 = vld [vmem:[%s1009 + $0x74] sm:$0xf]
        %v2613 = vld [vmem:[%s1009 + $0x78] sm:$0xf]
        %v2614 = vld [vmem:[%s1009 + $0x7c] sm:$0xf]
        %v2615 = vld [vmem:[%s1128] sm:$0x1]
        %v2617 = vperm.slane %v2615, 0
        %v2651 = vunpack.c.l.b16 %v2583
        %v2652 = vunpack.c.l.b16 %v2584
        %v2653 = vunpack.c.l.b16 %v2585
        %v2654 = vunpack.c.l.b16 %v2586
        %v2655 = vunpack.c.l.b16 %v2587
        %v2656 = vunpack.c.l.b16 %v2588
        %v2657 = vunpack.c.l.b16 %v2589
        %v2658 = vunpack.c.l.b16 %v2590
        %v2659 = vunpack.c.l.b16 %v2591
        %v2660 = vunpack.c.l.b16 %v2592
        %v2661 = vunpack.c.l.b16 %v2593
        %v2662 = vunpack.c.l.b16 %v2594
        %v2663 = vunpack.c.l.b16 %v2595
        %v2664 = vunpack.c.l.b16 %v2596
        %v2665 = vunpack.c.l.b16 %v2597
        %v2666 = vunpack.c.l.b16 %v2598
        %v2667 = vunpack.c.l.b16 %v2599
        %v2668 = vunpack.c.l.b16 %v2600
        %v2669 = vunpack.c.l.b16 %v2601
        %v2670 = vunpack.c.l.b16 %v2602
        %v2671 = vunpack.c.l.b16 %v2603
        %v2672 = vunpack.c.l.b16 %v2604
        %v2673 = vunpack.c.l.b16 %v2605
        %v2674 = vunpack.c.l.b16 %v2606
        %v2675 = vunpack.c.l.b16 %v2607
        %v2676 = vunpack.c.l.b16 %v2608
        %v2677 = vunpack.c.l.b16 %v2609
        %v2678 = vunpack.c.l.b16 %v2610
        %v2679 = vunpack.c.l.b16 %v2611
        %v2680 = vunpack.c.l.b16 %v2612
        %v2681 = vunpack.c.l.b16 %v2613
        %v2682 = vunpack.c.l.b16 %v2614
        %v2683 = vpack.c.b16 %v2652, %v2651
        %v2684 = vpack.c.b16 %v2654, %v2653
        %v2685 = vpack.c.b16 %v2656, %v2655
        %v2686 = vpack.c.b16 %v2658, %v2657
        %v2687 = vpack.c.b16 %v2660, %v2659
        %v2688 = vpack.c.b16 %v2662, %v2661
        %v2689 = vpack.c.b16 %v2664, %v2663
        %v2690 = vpack.c.b16 %v2666, %v2665
        %v2691 = vpack.c.b16 %v2668, %v2667
        %v2692 = vpack.c.b16 %v2670, %v2669
        %v2693 = vpack.c.b16 %v2672, %v2671
        %v2694 = vpack.c.b16 %v2674, %v2673
        %v2695 = vpack.c.b16 %v2676, %v2675
        %v2696 = vpack.c.b16 %v2678, %v2677
        %v2697 = vpack.c.b16 %v2680, %v2679
        %v2698 = vpack.c.b16 %v2682, %v2681
        %2715 = vmatpush.bf16.msra.mxu0 %v2690
        %2716 = vmatpush.bf16.msra.mxu0 %v2689
        %2717 = vmatpush.bf16.msra.mxu0 %v2688
        %2718 = vmatpush.bf16.msra.mxu0 %v2687
        %2719 = vmatpush.bf16.msra.mxu0 %v2686
        %2720 = vmatpush.bf16.msra.mxu0 %v2685
        %2721 = vmatpush.bf16.msra.mxu0 %v2684
        %2722 = vmatpush.bf16.msra.mxu0 %v2683
        %2723 = vmatmul.bf16.gmra.mxu0 %v2579
        %v2724 = vpop.f32.mrf.mxu0
        %v2725 = vadd.f32 %v2617, %v2724
        %v2726 = vpop.f32.mrf.mxu0
        %v2727 = vadd.f32 %v2617, %v2726
        %2728 = vmatmul.bf16.gmra.mxu0 %v2581
        %v2729 = vpop.f32.mrf.mxu0
        %v2730 = vadd.f32 %v2617, %v2729
        %v2731 = vpop.f32.mrf.mxu0
        %v2732 = vadd.f32 %v2617, %v2731
        %2733 = vdwg.mxu0
        %2734 = vmatpush.bf16.msra.mxu0 %v2698
        %2735 = vmatpush.bf16.msra.mxu0 %v2697
        %2736 = vmatpush.bf16.msra.mxu0 %v2696
        %2737 = vmatpush.bf16.msra.mxu0 %v2695
        %2738 = vmatpush.bf16.msra.mxu0 %v2694
        %2739 = vmatpush.bf16.msra.mxu0 %v2693
        %2740 = vmatpush.bf16.msra.mxu0 %v2692
        %2741 = vmatpush.bf16.msra.mxu0 %v2691
        %2742 = vmatmul.bf16.gmra.mxu0 %v2580
        %v2743 = vpop.f32.mrf.mxu0
        %v2744 = vadd.f32 %v2725, %v2743
        %v2745 = vpop.f32.mrf.mxu0
        %v2746 = vadd.f32 %v2727, %v2745
        %2747 = vmatmul.bf16.gmra.mxu0 %v2582
        %v2748 = vpop.f32.mrf.mxu0
        %v2749 = vadd.f32 %v2730, %v2748
        %v2750 = vpop.f32.mrf.mxu0
        %v2751 = vadd.f32 %v2732, %v2750
        %2752 = vdwg.mxu0
        %v2753 = vadd.f32 %v2744, %v2074
        %v2754 = vadd.f32 %v2746, %v2075
        %v2755 = vadd.f32 %v2749, %v2076
        %v2756 = vadd.f32 %v2751, %v2077
        %v2757 = vld [vmem:[%s1131] sm:$0x1]
        %v2758 = vld [vmem:[%s1134] sm:$0x1]
        %2759 = vadd.xlane.f32.xlu0 %v2753
        %v2760 = vpop.xlane.xlu0 %2759
        %2761 = vadd.xlane.f32.xlu0 %v2754
        %v2762 = vpop.xlane.xlu0 %2761
        %2763 = vadd.xlane.f32.xlu0 %v2755
        %v2764 = vpop.xlane.xlu0 %2763
        %2765 = vadd.xlane.f32.xlu0 %v2756
        %v2766 = vpop.xlane.xlu0 %2765
        %v2767 = vmul.f32 %v2760, %v1991
        %v2768 = vmul.f32 %v2762, %v1991
        %v2769 = vmul.f32 %v2764, %v1991
        %v2770 = vmul.f32 %v2766, %v1991
        %v2771 = vsub.f32 %v2753, %v2767
        %v2772 = vsub.f32 %v2754, %v2768
        %v2773 = vsub.f32 %v2755, %v2769
        %v2774 = vsub.f32 %v2756, %v2770
        %v2775 = vmul.f32 %v2771, %v2771
        %v2776 = vmul.f32 %v2772, %v2772
        %v2777 = vmul.f32 %v2773, %v2773
        %v2778 = vmul.f32 %v2774, %v2774
        %2779 = vadd.xlane.f32.xlu0 %v2775
        %v2780 = vpop.xlane.xlu0 %2779
        %2781 = vadd.xlane.f32.xlu0 %v2776
        %v2782 = vpop.xlane.xlu0 %2781
        %2783 = vadd.xlane.f32.xlu0 %v2777
        %v2784 = vpop.xlane.xlu0 %2783
        %2785 = vadd.xlane.f32.xlu0 %v2778
        %v2786 = vpop.xlane.xlu0 %2785
        %v2787 = vmul.f32 %v2780, %v1991
        %v2788 = vmul.f32 %v2782, %v1991
        %v2789 = vmul.f32 %v2784, %v1991
        %v2790 = vmul.f32 %v2786, %v1991
        %v2791 = vadd.f32 %v2787, 1e-05
        %v2792 = vadd.f32 %v2788, 1e-05
        %v2793 = vadd.f32 %v2789, 1e-05
        %v2794 = vadd.f32 %v2790, 1e-05
        %v2795 = vrsqrt.pop %v2791
        %v2796 = vmul.f32 %v2795, %v2791
        %v2797 = vmul.f32 %v2796, %v2795
        %v2798 = vmul.f32 0.5, %v2797
        %v2799 = vsub.f32 1.5, %v2798
        %v2800 = vmul.f32 %v2795, %v2799
        %vm2801 = vweird.f32 %v2791
        %vm2802 = vweird.f32 %v2795
        %vm2803 = vmor %vm2801, %vm2802
        %v2804 = vsel %vm2803, %v2795, %v2800
        %v2805 = vrsqrt.pop %v2792
        %v2806 = vmul.f32 %v2805, %v2792
        %v2807 = vmul.f32 %v2806, %v2805
        %v2808 = vmul.f32 0.5, %v2807
        %v2809 = vsub.f32 1.5, %v2808
        %v2810 = vmul.f32 %v2805, %v2809
        %vm2811 = vweird.f32 %v2792
        %vm2812 = vweird.f32 %v2805
        %vm2813 = vmor %vm2811, %vm2812
        %v2814 = vsel %vm2813, %v2805, %v2810
        %v2815 = vrsqrt.pop %v2793
        %v2816 = vmul.f32 %v2815, %v2793
        %v2817 = vmul.f32 %v2816, %v2815
        %v2818 = vmul.f32 0.5, %v2817
        %v2819 = vsub.f32 1.5, %v2818
        %v2820 = vmul.f32 %v2815, %v2819
        %vm2821 = vweird.f32 %v2793
        %vm2822 = vweird.f32 %v2815
        %vm2823 = vmor %vm2821, %vm2822
        %v2824 = vsel %vm2823, %v2815, %v2820
        %v2825 = vrsqrt.pop %v2794
        %v2826 = vmul.f32 %v2825, %v2794
        %v2827 = vmul.f32 %v2826, %v2825
        %v2828 = vmul.f32 0.5, %v2827
        %v2829 = vsub.f32 1.5, %v2828
        %v2830 = vmul.f32 %v2825, %v2829
        %vm2831 = vweird.f32 %v2794
        %vm2832 = vweird.f32 %v2825
        %vm2833 = vmor %vm2831, %vm2832
        %v2834 = vsel %vm2833, %v2825, %v2830
        %v2835 = vmul.f32 %v2771, %v2804
        %v2836 = vmul.f32 %v2772, %v2814
        %v2837 = vmul.f32 %v2773, %v2824
        %v2838 = vmul.f32 %v2774, %v2834
        %v2840 = vperm.slane %v2757, 0
        %v2842 = vmul.f32 %v2835, %v2840
        %v2843 = vmul.f32 %v2836, %v2840
        %v2844 = vmul.f32 %v2837, %v2840
        %v2845 = vmul.f32 %v2838, %v2840
        %v2847 = vperm.slane %v2758, 0
        %v2849 = vadd.f32 %v2842, %v2847
        %v2850 = vadd.f32 %v2843, %v2847
        %v2851 = vadd.f32 %v2844, %v2847
        %v2852 = vadd.f32 %v2845, %v2847
        %2853 = vst [vmem:[#allocation2] sm:$0xff] %v2849
        %2854 = vst [vmem:[#allocation2 + $0x8] sm:$0xff] %v2850
        %2855 = vst [vmem:[#allocation2 + $0x10] sm:$0xff] %v2851
        %2856 = vst [vmem:[#allocation2 + $0x18] sm:$0xff] %v2852
        %p2857 = scmp.eq.s32.totalorder %s43, 1
        // Predicated region
        $region169: #{tpu_custom_call.1} parent=107 // pred_check
          %p2858 = pneg %p2857
        $region170: #{tpu_custom_call.1} parent=107 // pred_check_branch
          %2860 = sbr.rel (%p2858) target = $region172
        $region171: #{tpu_custom_call.1} parent=107 // pred_region
          %v2861 = vpack.c.bf16 %v2850, %v2849
          %v2862 = vpack.c.bf16 %v2852, %v2851
          %v2863 = vld [vmem:[#allocation22] sm:$0xf]
          %v2864 = vld [vmem:[#allocation22 + $0x4] sm:$0xf]
          %v2865 = vld [vmem:[#allocation22 + $0x8] sm:$0xf]
          %v2866 = vld [vmem:[#allocation22 + $0xc] sm:$0xf]
          %v2867 = vld [vmem:[#allocation22 + $0x10] sm:$0xf]
          %v2868 = vld [vmem:[#allocation22 + $0x14] sm:$0xf]
          %v2869 = vld [vmem:[#allocation22 + $0x18] sm:$0xf]
          %v2870 = vld [vmem:[#allocation22 + $0x1c] sm:$0xf]
          %v2871 = vld [vmem:[#allocation22 + $0x20] sm:$0xf]
          %v2872 = vld [vmem:[#allocation22 + $0x24] sm:$0xf]
          %v2873 = vld [vmem:[#allocation22 + $0x28] sm:$0xf]
          %v2874 = vld [vmem:[#allocation22 + $0x2c] sm:$0xf]
          %v2875 = vld [vmem:[#allocation22 + $0x30] sm:$0xf]
          %v2876 = vld [vmem:[#allocation22 + $0x34] sm:$0xf]
          %v2877 = vld [vmem:[#allocation22 + $0x38] sm:$0xf]
          %v2878 = vld [vmem:[#allocation22 + $0x3c] sm:$0xf]
          %v2879 = vld [vmem:[%s19] sm:$0x1]
          %v2881 = vperm.slane %v2879, 0
          %v2899 = vunpack.c.l.b16 %v2863
          %v2900 = vunpack.c.l.b16 %v2864
          %v2901 = vunpack.c.l.b16 %v2865
          %v2902 = vunpack.c.l.b16 %v2866
          %v2903 = vunpack.c.l.b16 %v2867
          %v2904 = vunpack.c.l.b16 %v2868
          %v2905 = vunpack.c.l.b16 %v2869
          %v2906 = vunpack.c.l.b16 %v2870
          %v2907 = vunpack.c.l.b16 %v2871
          %v2908 = vunpack.c.l.b16 %v2872
          %v2909 = vunpack.c.l.b16 %v2873
          %v2910 = vunpack.c.l.b16 %v2874
          %v2911 = vunpack.c.l.b16 %v2875
          %v2912 = vunpack.c.l.b16 %v2876
          %v2913 = vunpack.c.l.b16 %v2877
          %v2914 = vunpack.c.l.b16 %v2878
          %v2915 = vpack.c.b16 %v2900, %v2899
          %v2916 = vpack.c.b16 %v2902, %v2901
          %v2917 = vpack.c.b16 %v2904, %v2903
          %v2918 = vpack.c.b16 %v2906, %v2905
          %v2919 = vpack.c.b16 %v2908, %v2907
          %v2920 = vpack.c.b16 %v2910, %v2909
          %v2921 = vpack.c.b16 %v2912, %v2911
          %v2922 = vpack.c.b16 %v2914, %v2913
          %2931 = vmatpush.bf16.msra.mxu0 %v2922
          %2932 = vmatpush.bf16.msra.mxu0 %v2921
          %2933 = vmatpush.bf16.msra.mxu0 %v2920
          %2934 = vmatpush.bf16.msra.mxu0 %v2919
          %2935 = vmatpush.bf16.msra.mxu0 %v2918
          %2936 = vmatpush.bf16.msra.mxu0 %v2917
          %2937 = vmatpush.bf16.msra.mxu0 %v2916
          %2938 = vmatpush.bf16.msra.mxu0 %v2915
          %2939 = vmatmul.bf16.gmra.mxu0 %v2861
          %v2940 = vpop.f32.mrf.mxu0
          %v2941 = vadd.f32 %v2881, %v2940
          %v2942 = vpop.f32.mrf.mxu0
          %v2943 = vadd.f32 %v2881, %v2942
          %2944 = vmatmul.bf16.gmra.mxu0 %v2862
          %v2945 = vpop.f32.mrf.mxu0
          %v2946 = vadd.f32 %v2881, %v2945
          %v2947 = vpop.f32.mrf.mxu0
          %v2948 = vadd.f32 %v2881, %v2947
          %2949 = vdwg.mxu0
          %v2950 = vmul.f32 %v2941, 0.5
          %v2951 = vmul.f32 %v2943, 0.5
          %v2952 = vmul.f32 %v2946, 0.5
          %v2953 = vmul.f32 %v2948, 0.5
          %v2954 = vmul.f32 %v2941, %v2234
          %v2955 = vmul.f32 %v2943, %v2234
          %v2956 = vmul.f32 %v2946, %v2234
          %v2957 = vmul.f32 %v2948, %v2234
          %v2958 = vmul.f32 %v2954, %v2954
          %v2959 = vmin.f32 16.0, %v2958
          %v2960 = vmul.f32 %v2959, 2.1237322e-06
          %v2961 = vadd.f32 %v2960, 0.00028619796
          %v2962 = vmul.f32 %v2959, %v2961
          %v2963 = vadd.f32 %v2962, 0.0036580483
          %v2964 = vmul.f32 %v2959, %v2963
          %v2965 = vadd.f32 %v2964, 0.05243302
          %v2966 = vmul.f32 %v2959, %v2965
          %v2967 = vadd.f32 %v2966, 0.18741608
          %v2968 = vmul.f32 %v2959, %v2967
          %v2969 = vadd.f32 %v2968, 1.1283791
          %v2970 = vmul.f32 %v2954, %v2969
          %v2971 = vmul.f32 %v2959, 3.8918573e-05
          %v2972 = vadd.f32 %v2971, 0.001143296
          %v2973 = vmul.f32 %v2959, %v2972
          %v2974 = vadd.f32 %v2973, 0.014752088
          %v2975 = vmul.f32 %v2959, %v2974
          %v2976 = vadd.f32 %v2975, 0.112945676
          %v2977 = vmul.f32 %v2959, %v2976
          %v2978 = vadd.f32 %v2977, 0.4994258
          %v2979 = vmul.f32 %v2959, %v2978
          %v2980 = vadd.f32 %v2979, 1.0
          %v2981 = vrcp.pop %v2980
          %v2982 = vmul.f32 %v2980, %v2981
          %v2983 = vsub.f32 1.0, %v2982
          %v2984 = vmul.f32 %v2981, %v2983
          %v2985 = vadd.f32 %v2981, %v2984
          %vm2986 = vweird.f32 %v2980
          %vm2987 = vweird.f32 %v2981
          %vm2988 = vmor %vm2986, %vm2987
          %v2989 = vsel %vm2988, %v2981, %v2985
          %v2990 = vand.u32 2147483647, %v2980
          %vm2991 = vcmp.eq.f32.partialorder %v2990, 8.507059e+37
          %v2992 = vand.u32 %v2980, 2147483648
          %v2993 = vor.u32 1.1754944e-38, %v2992
          %v2994 = vsel %vm2991, %v2993, %v2989
          %v2995 = vmul.f32 %v2970, %v2994
          %v2996 = vmin.f32 %v2995, 1.0
          %v2997 = vmax.f32 %v2996, -1.0
          %v2998 = vmul.f32 %v2955, %v2955
          %v2999 = vmin.f32 16.0, %v2998
          %v3000 = vmul.f32 %v2999, 2.1237322e-06
          %v3001 = vadd.f32 %v3000, 0.00028619796
          %v3002 = vmul.f32 %v2999, %v3001
          %v3003 = vadd.f32 %v3002, 0.0036580483
          %v3004 = vmul.f32 %v2999, %v3003
          %v3005 = vadd.f32 %v3004, 0.05243302
          %v3006 = vmul.f32 %v2999, %v3005
          %v3007 = vadd.f32 %v3006, 0.18741608
          %v3008 = vmul.f32 %v2999, %v3007
          %v3009 = vadd.f32 %v3008, 1.1283791
          %v3010 = vmul.f32 %v2955, %v3009
          %v3011 = vmul.f32 %v2999, 3.8918573e-05
          %v3012 = vadd.f32 %v3011, 0.001143296
          %v3013 = vmul.f32 %v2999, %v3012
          %v3014 = vadd.f32 %v3013, 0.014752088
          %v3015 = vmul.f32 %v2999, %v3014
          %v3016 = vadd.f32 %v3015, 0.112945676
          %v3017 = vmul.f32 %v2999, %v3016
          %v3018 = vadd.f32 %v3017, 0.4994258
          %v3019 = vmul.f32 %v2999, %v3018
          %v3020 = vadd.f32 %v3019, 1.0
          %v3021 = vrcp.pop %v3020
          %v3022 = vmul.f32 %v3020, %v3021
          %v3023 = vsub.f32 1.0, %v3022
          %v3024 = vmul.f32 %v3021, %v3023
          %v3025 = vadd.f32 %v3021, %v3024
          %vm3026 = vweird.f32 %v3020
          %vm3027 = vweird.f32 %v3021
          %vm3028 = vmor %vm3026, %vm3027
          %v3029 = vsel %vm3028, %v3021, %v3025
          %v3030 = vand.u32 2147483647, %v3020
          %vm3031 = vcmp.eq.f32.partialorder %v3030, 8.507059e+37
          %v3032 = vand.u32 %v3020, 2147483648
          %v3033 = vor.u32 1.1754944e-38, %v3032
          %v3034 = vsel %vm3031, %v3033, %v3029
          %v3035 = vmul.f32 %v3010, %v3034
          %v3036 = vmin.f32 %v3035, 1.0
          %v3037 = vmax.f32 %v3036, -1.0
          %v3038 = vmul.f32 %v2956, %v2956
          %v3039 = vmin.f32 16.0, %v3038
          %v3040 = vmul.f32 %v3039, 2.1237322e-06
          %v3041 = vadd.f32 %v3040, 0.00028619796
          %v3042 = vmul.f32 %v3039, %v3041
          %v3043 = vadd.f32 %v3042, 0.0036580483
          %v3044 = vmul.f32 %v3039, %v3043
          %v3045 = vadd.f32 %v3044, 0.05243302
          %v3046 = vmul.f32 %v3039, %v3045
          %v3047 = vadd.f32 %v3046, 0.18741608
          %v3048 = vmul.f32 %v3039, %v3047
          %v3049 = vadd.f32 %v3048, 1.1283791
          %v3050 = vmul.f32 %v2956, %v3049
          %v3051 = vmul.f32 %v3039, 3.8918573e-05
          %v3052 = vadd.f32 %v3051, 0.001143296
          %v3053 = vmul.f32 %v3039, %v3052
          %v3054 = vadd.f32 %v3053, 0.014752088
          %v3055 = vmul.f32 %v3039, %v3054
          %v3056 = vadd.f32 %v3055, 0.112945676
          %v3057 = vmul.f32 %v3039, %v3056
          %v3058 = vadd.f32 %v3057, 0.4994258
          %v3059 = vmul.f32 %v3039, %v3058
          %v3060 = vadd.f32 %v3059, 1.0
          %v3061 = vrcp.pop %v3060
          %v3062 = vmul.f32 %v3060, %v3061
          %v3063 = vsub.f32 1.0, %v3062
          %v3064 = vmul.f32 %v3061, %v3063
          %v3065 = vadd.f32 %v3061, %v3064
          %vm3066 = vweird.f32 %v3060
          %vm3067 = vweird.f32 %v3061
          %vm3068 = vmor %vm3066, %vm3067
          %v3069 = vsel %vm3068, %v3061, %v3065
          %v3070 = vand.u32 2147483647, %v3060
          %vm3071 = vcmp.eq.f32.partialorder %v3070, 8.507059e+37
          %v3072 = vand.u32 %v3060, 2147483648
          %v3073 = vor.u32 1.1754944e-38, %v3072
          %v3074 = vsel %vm3071, %v3073, %v3069
          %v3075 = vmul.f32 %v3050, %v3074
          %v3076 = vmin.f32 %v3075, 1.0
          %v3077 = vmax.f32 %v3076, -1.0
          %v3078 = vmul.f32 %v2957, %v2957
          %v3079 = vmin.f32 16.0, %v3078
          %v3080 = vmul.f32 %v3079, 2.1237322e-06
          %v3081 = vadd.f32 %v3080, 0.00028619796
          %v3082 = vmul.f32 %v3079, %v3081
          %v3083 = vadd.f32 %v3082, 0.0036580483
          %v3084 = vmul.f32 %v3079, %v3083
          %v3085 = vadd.f32 %v3084, 0.05243302
          %v3086 = vmul.f32 %v3079, %v3085
          %v3087 = vadd.f32 %v3086, 0.18741608
          %v3088 = vmul.f32 %v3079, %v3087
          %v3089 = vadd.f32 %v3088, 1.1283791
          %v3090 = vmul.f32 %v2957, %v3089
          %v3091 = vmul.f32 %v3079, 3.8918573e-05
          %v3092 = vadd.f32 %v3091, 0.001143296
          %v3093 = vmul.f32 %v3079, %v3092
          %v3094 = vadd.f32 %v3093, 0.014752088
          %v3095 = vmul.f32 %v3079, %v3094
          %v3096 = vadd.f32 %v3095, 0.112945676
          %v3097 = vmul.f32 %v3079, %v3096
          %v3098 = vadd.f32 %v3097, 0.4994258
          %v3099 = vmul.f32 %v3079, %v3098
          %v3100 = vadd.f32 %v3099, 1.0
          %v3101 = vrcp.pop %v3100
          %v3102 = vmul.f32 %v3100, %v3101
          %v3103 = vsub.f32 1.0, %v3102
          %v3104 = vmul.f32 %v3101, %v3103
          %v3105 = vadd.f32 %v3101, %v3104
          %vm3106 = vweird.f32 %v3100
          %vm3107 = vweird.f32 %v3101
          %vm3108 = vmor %vm3106, %vm3107
          %v3109 = vsel %vm3108, %v3101, %v3105
          %v3110 = vand.u32 2147483647, %v3100
          %vm3111 = vcmp.eq.f32.partialorder %v3110, 8.507059e+37
          %v3112 = vand.u32 %v3100, 2147483648
          %v3113 = vor.u32 1.1754944e-38, %v3112
          %v3114 = vsel %vm3111, %v3113, %v3109
          %v3115 = vmul.f32 %v3090, %v3114
          %v3116 = vmin.f32 %v3115, 1.0
          %v3117 = vmax.f32 %v3116, -1.0
          %v3118 = vadd.f32 %v2997, 1.0
          %v3119 = vadd.f32 %v3037, 1.0
          %v3120 = vadd.f32 %v3077, 1.0
          %v3121 = vadd.f32 %v3117, 1.0
          %v3122 = vmul.f32 %v2950, %v3118
          %v3123 = vmul.f32 %v2951, %v3119
          %v3124 = vmul.f32 %v2952, %v3120
          %v3125 = vmul.f32 %v2953, %v3121
          %v3126 = vld [vmem:[%s20] sm:$0x1]
          %v3127 = vld [vmem:[%s21] sm:$0x1]
          %3128 = vadd.xlane.f32.xlu0 %v3122
          %v3129 = vpop.xlane.xlu0 %3128
          %3130 = vadd.xlane.f32.xlu0 %v3123
          %v3131 = vpop.xlane.xlu0 %3130
          %3132 = vadd.xlane.f32.xlu0 %v3124
          %v3133 = vpop.xlane.xlu0 %3132
          %3134 = vadd.xlane.f32.xlu0 %v3125
          %v3135 = vpop.xlane.xlu0 %3134
          %v3136 = vmul.f32 %v3129, %v1991
          %v3137 = vmul.f32 %v3131, %v1991
          %v3138 = vmul.f32 %v3133, %v1991
          %v3139 = vmul.f32 %v3135, %v1991
          %v3140 = vsub.f32 %v3122, %v3136
          %v3141 = vsub.f32 %v3123, %v3137
          %v3142 = vsub.f32 %v3124, %v3138
          %v3143 = vsub.f32 %v3125, %v3139
          %v3144 = vmul.f32 %v3140, %v3140
          %v3145 = vmul.f32 %v3141, %v3141
          %v3146 = vmul.f32 %v3142, %v3142
          %v3147 = vmul.f32 %v3143, %v3143
          %3148 = vadd.xlane.f32.xlu0 %v3144
          %v3149 = vpop.xlane.xlu0 %3148
          %3150 = vadd.xlane.f32.xlu0 %v3145
          %v3151 = vpop.xlane.xlu0 %3150
          %3152 = vadd.xlane.f32.xlu0 %v3146
          %v3153 = vpop.xlane.xlu0 %3152
          %3154 = vadd.xlane.f32.xlu0 %v3147
          %v3155 = vpop.xlane.xlu0 %3154
          %v3156 = vmul.f32 %v3149, %v1991
          %v3157 = vmul.f32 %v3151, %v1991
          %v3158 = vmul.f32 %v3153, %v1991
          %v3159 = vmul.f32 %v3155, %v1991
          %v3160 = vadd.f32 %v3156, 1e-05
          %v3161 = vadd.f32 %v3157, 1e-05
          %v3162 = vadd.f32 %v3158, 1e-05
          %v3163 = vadd.f32 %v3159, 1e-05
          %v3164 = vrsqrt.pop %v3160
          %v3165 = vmul.f32 %v3164, %v3160
          %v3166 = vmul.f32 %v3165, %v3164
          %v3167 = vmul.f32 0.5, %v3166
          %v3168 = vsub.f32 1.5, %v3167
          %v3169 = vmul.f32 %v3164, %v3168
          %vm3170 = vweird.f32 %v3160
          %vm3171 = vweird.f32 %v3164
          %vm3172 = vmor %vm3170, %vm3171
          %v3173 = vsel %vm3172, %v3164, %v3169
          %v3174 = vrsqrt.pop %v3161
          %v3175 = vmul.f32 %v3174, %v3161
          %v3176 = vmul.f32 %v3175, %v3174
          %v3177 = vmul.f32 0.5, %v3176
          %v3178 = vsub.f32 1.5, %v3177
          %v3179 = vmul.f32 %v3174, %v3178
          %vm3180 = vweird.f32 %v3161
          %vm3181 = vweird.f32 %v3174
          %vm3182 = vmor %vm3180, %vm3181
          %v3183 = vsel %vm3182, %v3174, %v3179
          %v3184 = vrsqrt.pop %v3162
          %v3185 = vmul.f32 %v3184, %v3162
          %v3186 = vmul.f32 %v3185, %v3184
          %v3187 = vmul.f32 0.5, %v3186
          %v3188 = vsub.f32 1.5, %v3187
          %v3189 = vmul.f32 %v3184, %v3188
          %vm3190 = vweird.f32 %v3162
          %vm3191 = vweird.f32 %v3184
          %vm3192 = vmor %vm3190, %vm3191
          %v3193 = vsel %vm3192, %v3184, %v3189
          %v3194 = vrsqrt.pop %v3163
          %v3195 = vmul.f32 %v3194, %v3163
          %v3196 = vmul.f32 %v3195, %v3194
          %v3197 = vmul.f32 0.5, %v3196
          %v3198 = vsub.f32 1.5, %v3197
          %v3199 = vmul.f32 %v3194, %v3198
          %vm3200 = vweird.f32 %v3163
          %vm3201 = vweird.f32 %v3194
          %vm3202 = vmor %vm3200, %vm3201
          %v3203 = vsel %vm3202, %v3194, %v3199
          %v3204 = vmul.f32 %v3140, %v3173
          %v3205 = vmul.f32 %v3141, %v3183
          %v3206 = vmul.f32 %v3142, %v3193
          %v3207 = vmul.f32 %v3143, %v3203
          %v3209 = vperm.slane %v3126, 0
          %v3211 = vmul.f32 %v3204, %v3209
          %v3212 = vmul.f32 %v3205, %v3209
          %v3213 = vmul.f32 %v3206, %v3209
          %v3214 = vmul.f32 %v3207, %v3209
          %v3216 = vperm.slane %v3127, 0
          %v3218 = vadd.f32 %v3211, %v3216
          %v3219 = vadd.f32 %v3212, %v3216
          %v3220 = vadd.f32 %v3213, %v3216
          %v3221 = vadd.f32 %v3214, %v3216
          %v3222 = vpack.c.bf16 %v3218, %v3218
          %v3223 = vpack.c.bf16 %v3219, %v3219
          %v3224 = vpack.c.bf16 %v3220, %v3220
          %v3225 = vpack.c.bf16 %v3221, %v3221
          %3226 = vst [vmem:[#allocation23] sm:$0xf] %v3222
          %3227 = vst [vmem:[#allocation23 + $0x4] sm:$0xf] %v3223
          %s3228 = scalar_lea.vmem [#allocation23], 8
          %3229 = vst [vmem:[%s3228] sm:$0xf] %v3224
          %3230 = vst [vmem:[%s3228 + $0x4] sm:$0xf] %v3225
        $region172: #{tpu_custom_call.1} parent=107 // pred_fallthru
          _
        // Predicated region
        $region173: #{tpu_custom_call.1} parent=107 // pred_check
          %p3231 = pneg %p605
        $region174: #{tpu_custom_call.1} parent=107 // pred_check_branch
          %3233 = sbr.rel (%p3231) target = $region176
        $region175: #{tpu_custom_call.1} parent=107 // pred_region
          %s3234 = smul.u32 2, %s42
          %3236 = vsyncadd [#allocation6], 0
          %s3237 = smul.addr %s3234, 2
          %s3238 = smul.addr %s3237, 4
          %s3239 = scalar_lea.hbm %s22, %s3238
          %s3240 = sshll.u32 [#allocation23], 4
          %s3241 = int_to_ptr.vmem [resolvable:$true] %s3240
          %s3242 = sshll.u32 %s3239, 4
          %s3243 = int_to_ptr.hbm [resolvable:$true] %s3242
          %3248 = dma.vmem_to_hbm [thread:$0]  %s3241, 256, %s3243, [#allocation6], 64, 64, 4
        $region176: #{tpu_custom_call.1} parent=107 // pred_fallthru
          _
        // Predicated region
        $region177: #{tpu_custom_call.1} parent=107 // pred_check
          %p3249 = pneg %p605
        $region178: #{tpu_custom_call.1} parent=107 // pred_check_branch
          %3251 = sbr.rel (%p3249) target = $region180
        $region179: #{tpu_custom_call.1} parent=107 // pred_region
          %3253 = dma.done [#allocation6], 256
        $region180: #{tpu_custom_call.1} parent=107 // pred_fallthru
          _
      $region108: #{tpu_custom_call.1} parent=5 // pred_fallthru
        _
      %p3254 = scmp.le.s32.totalorder 2, %s33
      // Predicated region
      $region181: #{tpu_custom_call.1} parent=5 // pred_check
        %p3255 = pneg %p3254
      $region182: #{tpu_custom_call.1} parent=5 // pred_check_branch
        %3257 = sbr.rel (%p3255) target = $region184
      $region183: #{tpu_custom_call.1} parent=5 // pred_region
        %s3258 = ssub.s32 %s33, 2
      $region184: #{tpu_custom_call.1} parent=5 // pred_fallthru
        _
    $region6: #{tpu_custom_call.1} parent=1 // loop_footer
      %s37 = sadd.s32 1, %s33
    $region7: #{tpu_custom_call.1} parent=1 // loop_footer_branch
      %32 = sbr.rel target = $region3
    $region8: #{tpu_custom_call.1} parent=1 // loop_exit
      _
    %3259 = vsyncpa [#allocation5], 1
    %s3260 = scalar_lea.sflag [#allocation5], 1
    %3261 = vsyncpa %s3260, 1
    %3262 = vsyncpa [#allocation8], 1
    %3263 = vsyncpa [#allocation11], 1
    %3264 = vsyncpa [#allocation14], 1
    %3265 = vsyncpa [#allocation6], 1
    %s3266 = scalar_lea.sflag [#allocation6], 1
    %3267 = vsyncpa %s3266, 1

</llo_original>
